<compile_context>
chip_gen: v6e
topology: v6e:2x2x1
jax: 0.10.0
libtpu: 0.0.40
codegen_flags: <defaults>
</compile_context>

<pallas_src>
import functools
import math

import jax
import jax.numpy as jnp
from jax import lax
from jax.experimental import pallas as pl
from jax.experimental.pallas import tpu as pltpu


_MXU_DTYPE = jnp.bfloat16          # set to jnp.float32 for bit-faithful f32
_VMEM_LIMIT = 32 * 1024 * 1024     # scoped VMEM limit, safe on v5e/v6e/v7x

# TODO(synk): training-mode dropout (p=0.1) is identity here (inference only).


# ---------------------------------------------------------------------------
# in-kernel helpers
# ---------------------------------------------------------------------------
def _mm(a, b):
    """a @ b on the MXU, f32 accumulation."""
    return jnp.dot(a.astype(_MXU_DTYPE), b.astype(_MXU_DTYPE),
                   preferred_element_type=jnp.float32)


def _mm_nt(a, b):
    """a @ b.T (contract last dims) without materializing a transpose."""
    return lax.dot_general(a.astype(_MXU_DTYPE), b.astype(_MXU_DTYPE),
                           (((1,), (1,)), ((), ())),
                           preferred_element_type=jnp.float32)


def _layernorm(x, g, b, eps):
    mean = jnp.mean(x, axis=-1, keepdims=True)
    xc = x - mean
    var = jnp.mean(xc * xc, axis=-1, keepdims=True)
    return xc * lax.rsqrt(var + eps) * g + b


def _gelu(x):                                  # exact erf GELU (nn.GELU default)
    return 0.5 * x * (1.0 + lax.erf(x * (1.0 / math.sqrt(2.0))))


# ---------------------------------------------------------------------------
# kernel 1: fused projection + positional embedding + ALL transformer blocks
# grid = (batch, num_blocks); per-batch activation carried in VMEM scratch.
# ---------------------------------------------------------------------------
def _encoder_kernel(y_ref, pw_ref, pb_ref, pos_ref,
                    ln1g, ln1b, wqkv, bqkv, wo, bo,
                    ln2g, ln2b, w1, b1, w2, b2, ln3g, ln3b,
                    o_ref, x_scr, *, num_patches, heads, eps):
    layer = pl.program_id(1)
    D = x_scr.shape[-1]
    dh = D // heads
    scale = 1.0 / math.sqrt(dh)

    # ---- layer step 0 only: fused linear_proj + positional embedding ------
    @pl.when(layer == 0)
    def _():
        yb = y_ref[0]                                        # (1, M)
        # per-patch weight pw[n] is (M, D): builds the (N, D) block directly,
        # no in-kernel lane->sublane reshape needed.
        rows = [_mm(yb, pw_ref[n]) for n in range(num_patches)]
        x_scr[...] = (jnp.concatenate(rows, axis=0)          # (N, D)
                      + pb_ref[...] + pos_ref[...])          # dropout = identity

    x = x_scr[...]                                           # (N, D) f32

    # ---- self-attention sublayer -------------------------------------------
    h = _layernorm(x, ln1g[0], ln1b[0], eps)
    qkv = _mm(h, wqkv[0]) + bqkv[0]                          # (N, 3D)
    attn = None
    for hd in range(heads):                                  # heads-only unroll
        c0 = hd * dh
        q = qkv[:, c0:c0 + dh]
        k = qkv[:, D + c0:D + c0 + dh]
        v = qkv[:, 2 * D + c0:2 * D + c0 + dh]
        s = _mm_nt(q, k) * scale                             # (N, N)
        s = s - jnp.max(s, axis=-1, keepdims=True)
        p = jnp.exp(s)
        p = p * pl.reciprocal(jnp.sum(p, axis=-1, keepdims=True), approx=True)
        # fold this head's output straight into its slice of the out-proj
        # weight (lane-dense (N, D) contribution, accumulated in registers).
        contrib = _mm(_mm(p, v), wo[0, hd])
        attn = contrib if attn is None else attn + contrib
    x = x + attn + bo[0]                                     # residual (dropout=id)

    # ---- MLP sublayer --------------------------------------------------------
    h = _layernorm(x, ln2g[0], ln2b[0], eps)
    h = _gelu(_mm(h, w1[0]) + b1[0])
    h = _mm(h, w2[0]) + b2[0]
    x = x + h

    x = _layernorm(x, ln3g[0], ln3b[0], eps)
    x_scr[...] = x                                           # carry to next layer
    o_ref[0] = x.astype(o_ref.dtype)


def encoder_forward(y, params, *, num_patches, embed_dim, heads, eps=1e-5):
    B, M = y.shape
    D = embed_dim
    L = params["ln1_g"].shape[0]
    assert D % heads == 0, "embed_dim must be divisible by heads"
    assert params["proj_w"].shape == (num_patches, M, D)
    # TODO(synk): for very large measurement_dim the resident projection
    # weight (N, M, D) should be tiled (extra grid axis) instead of resident.

    y3 = y.reshape(B, 1, M)

    stacked_names = ("ln1_g", "ln1_b", "attn_in_w", "attn_in_b", "attn_out_w",
                     "attn_out_b", "ln2_g", "ln2_b", "mlp_w1", "mlp_b1",
                     "mlp_w2", "mlp_b2", "ln3_g", "ln3_b")
    stacked = [params[n] for n in stacked_names]

    def const_spec(a):                      # resident in VMEM across the grid
        return pl.BlockSpec(a.shape, lambda b, l, n=a.ndim: (0,) * n)

    def layer_spec(a):                      # per-layer slice of stacked weights
        return pl.BlockSpec((1,) + a.shape[1:],
                            lambda b, l, n=a.ndim - 1: (l,) + (0,) * n)

    in_specs = ([pl.BlockSpec((1, 1, M), lambda b, l: (b, 0, 0)),
                 const_spec(params["proj_w"]),
                 const_spec(params["proj_b"]),
                 const_spec(params["pos"])]
                + [layer_spec(a) for a in stacked])

    kernel = functools.partial(_encoder_kernel, num_patches=num_patches,
                               heads=heads, eps=eps)

    return pl.pallas_call(
        kernel,
        out_shape=jax.ShapeDtypeStruct((B, num_patches, D), jnp.float32),
        grid_spec=pltpu.PrefetchScalarGridSpec(
            num_scalar_prefetch=0,
            grid=(B, L),
            in_specs=in_specs,
            out_specs=pl.BlockSpec((1, num_patches, D),
                                   lambda b, l: (b, 0, 0)),
            scratch_shapes=[pltpu.VMEM((num_patches, D), jnp.float32)]),
        compiler_params=pltpu.CompilerParams(
            dimension_semantics=("parallel", "arbitrary"),
            vmem_limit_bytes=_VMEM_LIMIT),
    )(y3, params["proj_w"], params["proj_b"], params["pos"], *stacked)


# ---------------------------------------------------------------------------
# kernel 2: whole ConvTranspose2d(k=2, s=2) decoder, row-tiled grid.
# Each stage is a matmul whose columns are ordered (kh, kw, c_out); the 2x2
# pixel shuffles are deferred, so later stages run group-wise on 128-aligned
# column blocks.  The final HBM store is lane-dense (256*out_channels lanes).
# ---------------------------------------------------------------------------
def _decoder_kernel(x_ref, w1, b1, w2, b2, w3, b3, w4, b4, o_ref):
    def relu(t):
        return jnp.maximum(t, 0.0)

    # stage 1: rows = (b, i0, j0); columns become (kh1, kw1, c1)
    h1 = relu(_mm(x_ref[...], w1[...]) + b1[...])

    # stage 2: group-wise over the deferred (kh1, kw1) positions
    w2v, b2v = w2[...], b2[...]
    ci2 = w2v.shape[0]
    h2 = jnp.concatenate(
        [relu(_mm(h1[:, g * ci2:(g + 1) * ci2], w2v) + b2v)
         for g in range(h1.shape[1] // ci2)], axis=1)

    # stage 3: group-wise over the deferred (kh1, kw1, kh2, kw2) positions
    w3v, b3v = w3[...], b3[...]
    ci3 = w3v.shape[0]
    h3 = jnp.concatenate(
        [relu(_mm(h2[:, g * ci3:(g + 1) * ci3], w3v) + b3v)
         for g in range(h2.shape[1] // ci3)], axis=1)

    # stage 4: block-diagonal super-groups (>=128-lane-wide outputs).
    w4v, b4v = w4[...], b4[...]
    ci4 = w4v.shape[0]
    outs = []
    for g in range(h3.shape[1] // ci4):
        z = _mm(h3[:, g * ci4:(g + 1) * ci4], w4v) + b4v
        outs.append(0.5 * (1.0 + jnp.tanh(0.5 * z)))     # sigmoid via one tanh
    o_ref[...] = jnp.concatenate(outs, axis=1).astype(o_ref.dtype)


def decoder_forward(x_rows, dec_params, *, batch, h0, w0, out_channels):
    rows, D = x_rows.shape
    assert rows == batch * h0 * w0
    out_cols = 256 * out_channels            # 4^4 deferred (kh, kw) positions

    # Row tile: largest divisor of rows that is <= 256 (keeps f32 intermediates
    # well under VMEM limits on all generations and gives the pipeline /
    # megacore a parallel axis to split).
    row_tile = rows
    for cand in (256, 128, 64, 32, 16, 8):
        if rows % cand == 0:
            row_tile = cand
            break

    (w1, b1), (w2, b2), (w3, b3), (w4, b4) = dec_params
    weights = [w1, b1, w2, b2, w3, b3, w4, b4]

    def wspec(a):                            # weights resident across row tiles
        return pl.BlockSpec(a.shape, lambda i, n=a.ndim: (0,) * n)

    out = pl.pallas_call(
        _decoder_kernel,
        out_shape=jax.ShapeDtypeStruct((rows, out_cols), jnp.float32),
        grid_spec=pltpu.PrefetchScalarGridSpec(
            num_scalar_prefetch=0,
            grid=(rows // row_tile,),
            in_specs=[pl.BlockSpec((row_tile, D), lambda i: (i, 0))]
                     + [wspec(a) for a in weights],
            out_specs=pl.BlockSpec((row_tile, out_cols), lambda i: (i, 0))),
        compiler_params=pltpu.CompilerParams(
            dimension_semantics=("parallel",),
            vmem_limit_bytes=_VMEM_LIMIT),
    )(x_rows, *weights)

    # Reassemble the four deferred 2x2 pixel shuffles + NCHW permute.
    # rows = (b, i0, j0); columns = (kh1,kw1,kh2,kw2,kh3,kw3,kh4,kw4,co).
    # TODO(synk): this XLA transpose could be skipped if downstream takes NHWC.
    out = out.reshape(batch, h0, w0, 2, 2, 2, 2, 2, 2, 2, 2, out_channels)
    out = out.transpose(0, 11, 1, 3, 5, 7, 9, 2, 4, 6, 8, 10)
    return out.reshape(batch, out_channels, h0 * 16, w0 * 16)


# ---------------------------------------------------------------------------
# full forward pass (matches TransformerCSNet.forward, eval mode)
# ---------------------------------------------------------------------------
def transformer_csnet_forward(y, params, *, embed_dim, num_patches, heads,
                              img_size, out_channels):
    B = y.shape[0]
    h0 = w0 = img_size // 16
    assert num_patches == h0 * w0
    x = encoder_forward(y, params, num_patches=num_patches,
                        embed_dim=embed_dim, heads=heads)    # (B, N, D)
    x_rows = x.reshape(B * num_patches, embed_dim)           # contiguous view
    return decoder_forward(x_rows, params["decoder"], batch=B, h0=h0, w0=w0,
                           out_channels=out_channels)


# ---------------------------------------------------------------------------
# Deterministic parameter init: synthetic torch-layout weights, pre-packed
# ONCE into kernel layout.
# ---------------------------------------------------------------------------
def init_params(key, measurement_dim, embed_dim, num_patches, heads, blocks,
                out_channels):
    keys = iter(jax.random.split(key, 128))

    def nrm(shape, scale=0.02):
        return scale * jax.random.normal(next(keys), shape, dtype=jnp.float32)

    D, M, N, L = embed_dim, measurement_dim, num_patches, blocks
    dh = D // heads
    mxu = _MXU_DTYPE

    # linear_proj: torch Linear(M, N*D) weight (N*D, M); output feature
    # f = n*D + d.  Packed per patch: pw[n, m, d] = W[n*D + d, m].
    w_t = nrm((N * D, M))
    params = {
        "proj_w": w_t.reshape(N, D, M).transpose(0, 2, 1).astype(mxu),
        "proj_b": nrm((N * D,)).reshape(N, D),
        "pos": jax.random.normal(next(keys), (1, N, D),
                                 dtype=jnp.float32).reshape(N, D),
        "ln1_g": jnp.ones((L, 1, D), jnp.float32),
        "ln1_b": jnp.zeros((L, 1, D), jnp.float32),
        "ln2_g": jnp.ones((L, 1, D), jnp.float32),
        "ln2_b": jnp.zeros((L, 1, D), jnp.float32),
        "ln3_g": jnp.ones((L, 1, D), jnp.float32),
        "ln3_b": jnp.zeros((L, 1, D), jnp.float32),
        # in-proj (D, 3D), out-proj split per head (heads, dh, D), MLP (in,out)
        "attn_in_w": jnp.stack([nrm((3 * D, D)).T for _ in range(L)]).astype(mxu),
        "attn_in_b": jnp.stack([nrm((3 * D,)).reshape(1, -1) for _ in range(L)]),
        "attn_out_w": jnp.stack([nrm((D, D)).T.reshape(heads, dh, D)
                                 for _ in range(L)]).astype(mxu),
        "attn_out_b": jnp.stack([nrm((D,)).reshape(1, -1) for _ in range(L)]),
        "mlp_w1": jnp.stack([nrm((4 * D, D)).T for _ in range(L)]).astype(mxu),
        "mlp_b1": jnp.stack([nrm((4 * D,)).reshape(1, -1) for _ in range(L)]),
        "mlp_w2": jnp.stack([nrm((D, 4 * D)).T for _ in range(L)]).astype(mxu),
        "mlp_b2": jnp.stack([nrm((D,)).reshape(1, -1) for _ in range(L)]),
    }

    # decoder ConvTranspose2d(k=2, s=2) weights as (Cin, 4*Cout) matmuls with
    # column order (kh, kw, cout); biases tiled over the 4 (kh, kw) copies.
    dec_channels = [D, 256, 128, 64, out_channels]
    dec = []
    for cin, cout in zip(dec_channels[:-1], dec_channels[1:]):
        wt = nrm((cin, cout, 2, 2))                          # torch ConvT layout
        bt = nrm((cout,))
        dec.append([wt.transpose(0, 2, 3, 1).reshape(cin, 4 * cout),
                    jnp.tile(bt, 4).reshape(1, -1)])
    # Last stage: smallest block-diagonal super-group keeping >=128 out lanes.
    g4 = 1
    while 4 * out_channels * g4 < 128 and g4 < 64:
        g4 *= 2
    w4, b4 = dec[3]
    dec[3] = [jnp.kron(jnp.eye(g4, dtype=jnp.float32), w4),
              jnp.tile(b4, (1, g4))]
    params["decoder"] = [(w.astype(mxu), b) for w, b in dec]
    return params


# ---------------------------------------------------------------------------
if __name__ == "__main__":
    B = 2
    measurement_dim = 16
    embed_dim = 32
    img_size = 32            # -> num_patches = (32/16)^2 = 4, H0 = W0 = 2
    heads = 4
    blocks = 2
    out_channels = 1
    num_patches = (img_size // 16) ** 2

    key = jax.random.PRNGKey(0)
    pkey, dkey = jax.random.split(key)
    params = init_params(pkey, measurement_dim, embed_dim, num_patches, heads,
                         blocks, out_channels)
    y = jax.random.normal(dkey, (B, measurement_dim), dtype=jnp.float32)

    fwd = jax.jit(functools.partial(
        transformer_csnet_forward,
        embed_dim=embed_dim, num_patches=num_patches,
        heads=heads, img_size=img_size, out_channels=out_channels))
    out = jax.block_until_ready(fwd(y, params))

    assert out.shape == (B, out_channels, img_size, img_size), out.shape
    assert bool(jnp.all(jnp.isfinite(out)))
    assert bool(jnp.all((out >= 0.0) & (out <= 1.0)))   # sigmoid output range
    print("KERNEL_OK")
</pallas_src>

<mosaic_0001>
module attributes {stable_mosaic.version = 11 : i64} {
  func.func @_decoder_kernel(%arg0: i32, %arg1: memref<8x32xf32, #tpu.memory_space<vmem>>, %arg2: memref<32x1024xbf16, #tpu.memory_space<vmem>>, %arg3: memref<1x1024xf32, #tpu.memory_space<vmem>>, %arg4: memref<256x512xbf16, #tpu.memory_space<vmem>>, %arg5: memref<1x512xf32, #tpu.memory_space<vmem>>, %arg6: memref<128x256xbf16, #tpu.memory_space<vmem>>, %arg7: memref<1x256xf32, #tpu.memory_space<vmem>>, %arg8: memref<2048x128xbf16, #tpu.memory_space<vmem>>, %arg9: memref<1x128xf32, #tpu.memory_space<vmem>>, %arg10: memref<8x256xf32, #tpu.memory_space<vmem>>) attributes {dimension_semantics = [#tpu.dimension_semantics<parallel>], iteration_bounds = array<i64: 1>, scalar_prefetch = 0 : i64, scratch_operands = 0 : i64, tpu.core_type = #tpu.core_type<tc>, window_params = [{transform_indices = @transform_0, window_bounds = array<i64: 8, 32>}, {pipeline_mode = #tpu.pipeline_mode<synchronous>, transform_indices = @transform_1, window_bounds = array<i64: 32, 1024>}, {pipeline_mode = #tpu.pipeline_mode<synchronous>, transform_indices = @transform_2, window_bounds = array<i64: 1, 1024>}, {pipeline_mode = #tpu.pipeline_mode<synchronous>, transform_indices = @transform_3, window_bounds = array<i64: 256, 512>}, {pipeline_mode = #tpu.pipeline_mode<synchronous>, transform_indices = @transform_4, window_bounds = array<i64: 1, 512>}, {pipeline_mode = #tpu.pipeline_mode<synchronous>, transform_indices = @transform_5, window_bounds = array<i64: 128, 256>}, {pipeline_mode = #tpu.pipeline_mode<synchronous>, transform_indices = @transform_6, window_bounds = array<i64: 1, 256>}, {pipeline_mode = #tpu.pipeline_mode<synchronous>, transform_indices = @transform_7, window_bounds = array<i64: 2048, 128>}, {pipeline_mode = #tpu.pipeline_mode<synchronous>, transform_indices = @transform_8, window_bounds = array<i64: 1, 128>}, {transform_indices = @transform_9, window_bounds = array<i64: 8, 256>}]} {
    %c0 = arith.constant 0 : index
    %c0_0 = arith.constant 0 : index
    %0 = vector.load %arg1[%c0, %c0_0] : memref<8x32xf32, #tpu.memory_space<vmem>>, vector<8x32xf32>
    %c0_1 = arith.constant 0 : index
    %c0_2 = arith.constant 0 : index
    %1 = vector.load %arg2[%c0_1, %c0_2] : memref<32x1024xbf16, #tpu.memory_space<vmem>>, vector<32x1024xbf16>
    %2 = arith.truncf %0 : vector<8x32xf32> to vector<8x32xbf16>
    %cst = arith.constant dense<0.000000e+00> : vector<8x1024xf32>
    %3 = tpu.matmul %2, %1, %cst {dimension_numbers = #tpu.dot_dimension_numbers<[1], [0], [0], [1], [0, 0, 1, 1], [], []>} : vector<8x32xbf16>, vector<32x1024xbf16>, vector<8x1024xf32> -> vector<8x1024xf32>
    %c0_3 = arith.constant 0 : index
    %c0_4 = arith.constant 0 : index
    %4 = vector.load %arg3[%c0_3, %c0_4] : memref<1x1024xf32, #tpu.memory_space<vmem>>, vector<1x1024xf32>
    %5 = vector.broadcast %4 : vector<1x1024xf32> to vector<8x1024xf32>
    %6 = arith.addf %3, %5 : vector<8x1024xf32>
    %cst_5 = arith.constant 0.000000e+00 : f32
    %7 = vector.broadcast %cst_5 : f32 to vector<8x1024xf32>
    %8 = arith.maximumf %6, %7 : vector<8x1024xf32>
    %c0_6 = arith.constant 0 : index
    %c0_7 = arith.constant 0 : index
    %9 = vector.load %arg4[%c0_6, %c0_7] : memref<256x512xbf16, #tpu.memory_space<vmem>>, vector<256x512xbf16>
    %c0_8 = arith.constant 0 : index
    %c0_9 = arith.constant 0 : index
    %10 = vector.load %arg5[%c0_8, %c0_9] : memref<1x512xf32, #tpu.memory_space<vmem>>, vector<1x512xf32>
    %11 = vector.extract_strided_slice %8 {offsets = [0, 0], sizes = [8, 256], strides = [1, 1]} : vector<8x1024xf32> to vector<8x256xf32>
    %12 = arith.truncf %11 : vector<8x256xf32> to vector<8x256xbf16>
    %cst_10 = arith.constant dense<0.000000e+00> : vector<8x512xf32>
    %13 = tpu.matmul %12, %9, %cst_10 {dimension_numbers = #tpu.dot_dimension_numbers<[1], [0], [0], [1], [0, 0, 1, 1], [], []>} : vector<8x256xbf16>, vector<256x512xbf16>, vector<8x512xf32> -> vector<8x512xf32>
    %14 = vector.broadcast %10 : vector<1x512xf32> to vector<8x512xf32>
    %15 = arith.addf %13, %14 : vector<8x512xf32>
    %cst_11 = arith.constant 0.000000e+00 : f32
    %16 = vector.broadcast %cst_11 : f32 to vector<8x512xf32>
    %17 = arith.maximumf %15, %16 : vector<8x512xf32>
    %18 = vector.extract_strided_slice %8 {offsets = [0, 256], sizes = [8, 256], strides = [1, 1]} : vector<8x1024xf32> to vector<8x256xf32>
    %19 = arith.truncf %18 : vector<8x256xf32> to vector<8x256xbf16>
    %cst_12 = arith.constant dense<0.000000e+00> : vector<8x512xf32>
    %20 = tpu.matmul %19, %9, %cst_12 {dimension_numbers = #tpu.dot_dimension_numbers<[1], [0], [0], [1], [0, 0, 1, 1], [], []>} : vector<8x256xbf16>, vector<256x512xbf16>, vector<8x512xf32> -> vector<8x512xf32>
    %21 = vector.broadcast %10 : vector<1x512xf32> to vector<8x512xf32>
    %22 = arith.addf %20, %21 : vector<8x512xf32>
    %cst_13 = arith.constant 0.000000e+00 : f32
    %23 = vector.broadcast %cst_13 : f32 to vector<8x512xf32>
    %24 = arith.maximumf %22, %23 : vector<8x512xf32>
    %25 = vector.extract_strided_slice %8 {offsets = [0, 512], sizes = [8, 256], strides = [1, 1]} : vector<8x1024xf32> to vector<8x256xf32>
    %26 = arith.truncf %25 : vector<8x256xf32> to vector<8x256xbf16>
    %cst_14 = arith.constant dense<0.000000e+00> : vector<8x512xf32>
    %27 = tpu.matmul %26, %9, %cst_14 {dimension_numbers = #tpu.dot_dimension_numbers<[1], [0], [0], [1], [0, 0, 1, 1], [], []>} : vector<8x256xbf16>, vector<256x512xbf16>, vector<8x512xf32> -> vector<8x512xf32>
    %28 = vector.broadcast %10 : vector<1x512xf32> to vector<8x512xf32>
    %29 = arith.addf %27, %28 : vector<8x512xf32>
    %cst_15 = arith.constant 0.000000e+00 : f32
    %30 = vector.broadcast %cst_15 : f32 to vector<8x512xf32>
    %31 = arith.maximumf %29, %30 : vector<8x512xf32>
    %32 = vector.extract_strided_slice %8 {offsets = [0, 768], sizes = [8, 256], strides = [1, 1]} : vector<8x1024xf32> to vector<8x256xf32>
    %33 = arith.truncf %32 : vector<8x256xf32> to vector<8x256xbf16>
    %cst_16 = arith.constant dense<0.000000e+00> : vector<8x512xf32>
    %34 = tpu.matmul %33, %9, %cst_16 {dimension_numbers = #tpu.dot_dimension_numbers<[1], [0], [0], [1], [0, 0, 1, 1], [], []>} : vector<8x256xbf16>, vector<256x512xbf16>, vector<8x512xf32> -> vector<8x512xf32>
    %35 = vector.broadcast %10 : vector<1x512xf32> to vector<8x512xf32>
    %36 = arith.addf %34, %35 : vector<8x512xf32>
    %cst_17 = arith.constant 0.000000e+00 : f32
    %37 = vector.broadcast %cst_17 : f32 to vector<8x512xf32>
    %38 = arith.maximumf %36, %37 : vector<8x512xf32>
    %39 = tpu.concatenate %17, %24, %31, %38 in 1 : vector<8x512xf32>, vector<8x512xf32>, vector<8x512xf32>, vector<8x512xf32> -> vector<8x2048xf32>
    %c0_18 = arith.constant 0 : index
    %c0_19 = arith.constant 0 : index
    %40 = vector.load %arg6[%c0_18, %c0_19] : memref<128x256xbf16, #tpu.memory_space<vmem>>, vector<128x256xbf16>
    %c0_20 = arith.constant 0 : index
    %c0_21 = arith.constant 0 : index
    %41 = vector.load %arg7[%c0_20, %c0_21] : memref<1x256xf32, #tpu.memory_space<vmem>>, vector<1x256xf32>
    %42 = vector.extract_strided_slice %39 {offsets = [0, 0], sizes = [8, 128], strides = [1, 1]} : vector<8x2048xf32> to vector<8x128xf32>
    %43 = arith.truncf %42 : vector<8x128xf32> to vector<8x128xbf16>
    %cst_22 = arith.constant dense<0.000000e+00> : vector<8x256xf32>
    %44 = tpu.matmul %43, %40, %cst_22 {dimension_numbers = #tpu.dot_dimension_numbers<[1], [0], [0], [1], [0, 0, 1, 1], [], []>} : vector<8x128xbf16>, vector<128x256xbf16>, vector<8x256xf32> -> vector<8x256xf32>
    %45 = vector.broadcast %41 : vector<1x256xf32> to vector<8x256xf32>
    %46 = arith.addf %44, %45 : vector<8x256xf32>
    %cst_23 = arith.constant 0.000000e+00 : f32
    %47 = vector.broadcast %cst_23 : f32 to vector<8x256xf32>
    %48 = arith.maximumf %46, %47 : vector<8x256xf32>
    %49 = vector.extract_strided_slice %39 {offsets = [0, 128], sizes = [8, 128], strides = [1, 1]} : vector<8x2048xf32> to vector<8x128xf32>
    %50 = arith.truncf %49 : vector<8x128xf32> to vector<8x128xbf16>
    %cst_24 = arith.constant dense<0.000000e+00> : vector<8x256xf32>
    %51 = tpu.matmul %50, %40, %cst_24 {dimension_numbers = #tpu.dot_dimension_numbers<[1], [0], [0], [1], [0, 0, 1, 1], [], []>} : vector<8x128xbf16>, vector<128x256xbf16>, vector<8x256xf32> -> vector<8x256xf32>
    %52 = vector.broadcast %41 : vector<1x256xf32> to vector<8x256xf32>
    %53 = arith.addf %51, %52 : vector<8x256xf32>
    %cst_25 = arith.constant 0.000000e+00 : f32
    %54 = vector.broadcast %cst_25 : f32 to vector<8x256xf32>
    %55 = arith.maximumf %53, %54 : vector<8x256xf32>
    %56 = vector.extract_strided_slice %39 {offsets = [0, 256], sizes = [8, 128], strides = [1, 1]} : vector<8x2048xf32> to vector<8x128xf32>
    %57 = arith.truncf %56 : vector<8x128xf32> to vector<8x128xbf16>
    %cst_26 = arith.constant dense<0.000000e+00> : vector<8x256xf32>
    %58 = tpu.matmul %57, %40, %cst_26 {dimension_numbers = #tpu.dot_dimension_numbers<[1], [0], [0], [1], [0, 0, 1, 1], [], []>} : vector<8x128xbf16>, vector<128x256xbf16>, vector<8x256xf32> -> vector<8x256xf32>
    %59 = vector.broadcast %41 : vector<1x256xf32> to vector<8x256xf32>
    %60 = arith.addf %58, %59 : vector<8x256xf32>
    %cst_27 = arith.constant 0.000000e+00 : f32
    %61 = vector.broadcast %cst_27 : f32 to vector<8x256xf32>
    %62 = arith.maximumf %60, %61 : vector<8x256xf32>
    %63 = vector.extract_strided_slice %39 {offsets = [0, 384], sizes = [8, 128], strides = [1, 1]} : vector<8x2048xf32> to vector<8x128xf32>
    %64 = arith.truncf %63 : vector<8x128xf32> to vector<8x128xbf16>
    %cst_28 = arith.constant dense<0.000000e+00> : vector<8x256xf32>
    %65 = tpu.matmul %64, %40, %cst_28 {dimension_numbers = #tpu.dot_dimension_numbers<[1], [0], [0], [1], [0, 0, 1, 1], [], []>} : vector<8x128xbf16>, vector<128x256xbf16>, vector<8x256xf32> -> vector<8x256xf32>
    %66 = vector.broadcast %41 : vector<1x256xf32> to vector<8x256xf32>
    %67 = arith.addf %65, %66 : vector<8x256xf32>
    %cst_29 = arith.constant 0.000000e+00 : f32
    %68 = vector.broadcast %cst_29 : f32 to vector<8x256xf32>
    %69 = arith.maximumf %67, %68 : vector<8x256xf32>
    %70 = vector.extract_strided_slice %39 {offsets = [0, 512], sizes = [8, 128], strides = [1, 1]} : vector<8x2048xf32> to vector<8x128xf32>
    %71 = arith.truncf %70 : vector<8x128xf32> to vector<8x128xbf16>
    %cst_30 = arith.constant dense<0.000000e+00> : vector<8x256xf32>
    %72 = tpu.matmul %71, %40, %cst_30 {dimension_numbers = #tpu.dot_dimension_numbers<[1], [0], [0], [1], [0, 0, 1, 1], [], []>} : vector<8x128xbf16>, vector<128x256xbf16>, vector<8x256xf32> -> vector<8x256xf32>
    %73 = vector.broadcast %41 : vector<1x256xf32> to vector<8x256xf32>
    %74 = arith.addf %72, %73 : vector<8x256xf32>
    %cst_31 = arith.constant 0.000000e+00 : f32
    %75 = vector.broadcast %cst_31 : f32 to vector<8x256xf32>
    %76 = arith.maximumf %74, %75 : vector<8x256xf32>
    %77 = vector.extract_strided_slice %39 {offsets = [0, 640], sizes = [8, 128], strides = [1, 1]} : vector<8x2048xf32> to vector<8x128xf32>
    %78 = arith.truncf %77 : vector<8x128xf32> to vector<8x128xbf16>
    %cst_32 = arith.constant dense<0.000000e+00> : vector<8x256xf32>
    %79 = tpu.matmul %78, %40, %cst_32 {dimension_numbers = #tpu.dot_dimension_numbers<[1], [0], [0], [1], [0, 0, 1, 1], [], []>} : vector<8x128xbf16>, vector<128x256xbf16>, vector<8x256xf32> -> vector<8x256xf32>
    %80 = vector.broadcast %41 : vector<1x256xf32> to vector<8x256xf32>
    %81 = arith.addf %79, %80 : vector<8x256xf32>
    %cst_33 = arith.constant 0.000000e+00 : f32
    %82 = vector.broadcast %cst_33 : f32 to vector<8x256xf32>
    %83 = arith.maximumf %81, %82 : vector<8x256xf32>
    %84 = vector.extract_strided_slice %39 {offsets = [0, 768], sizes = [8, 128], strides = [1, 1]} : vector<8x2048xf32> to vector<8x128xf32>
    %85 = arith.truncf %84 : vector<8x128xf32> to vector<8x128xbf16>
    %cst_34 = arith.constant dense<0.000000e+00> : vector<8x256xf32>
    %86 = tpu.matmul %85, %40, %cst_34 {dimension_numbers = #tpu.dot_dimension_numbers<[1], [0], [0], [1], [0, 0, 1, 1], [], []>} : vector<8x128xbf16>, vector<128x256xbf16>, vector<8x256xf32> -> vector<8x256xf32>
    %87 = vector.broadcast %41 : vector<1x256xf32> to vector<8x256xf32>
    %88 = arith.addf %86, %87 : vector<8x256xf32>
    %cst_35 = arith.constant 0.000000e+00 : f32
    %89 = vector.broadcast %cst_35 : f32 to vector<8x256xf32>
    %90 = arith.maximumf %88, %89 : vector<8x256xf32>
    %91 = vector.extract_strided_slice %39 {offsets = [0, 896], sizes = [8, 128], strides = [1, 1]} : vector<8x2048xf32> to vector<8x128xf32>
    %92 = arith.truncf %91 : vector<8x128xf32> to vector<8x128xbf16>
    %cst_36 = arith.constant dense<0.000000e+00> : vector<8x256xf32>
    %93 = tpu.matmul %92, %40, %cst_36 {dimension_numbers = #tpu.dot_dimension_numbers<[1], [0], [0], [1], [0, 0, 1, 1], [], []>} : vector<8x128xbf16>, vector<128x256xbf16>, vector<8x256xf32> -> vector<8x256xf32>
    %94 = vector.broadcast %41 : vector<1x256xf32> to vector<8x256xf32>
    %95 = arith.addf %93, %94 : vector<8x256xf32>
    %cst_37 = arith.constant 0.000000e+00 : f32
    %96 = vector.broadcast %cst_37 : f32 to vector<8x256xf32>
    %97 = arith.maximumf %95, %96 : vector<8x256xf32>
    %98 = vector.extract_strided_slice %39 {offsets = [0, 1024], sizes = [8, 128], strides = [1, 1]} : vector<8x2048xf32> to vector<8x128xf32>
    %99 = arith.truncf %98 : vector<8x128xf32> to vector<8x128xbf16>
    %cst_38 = arith.constant dense<0.000000e+00> : vector<8x256xf32>
    %100 = tpu.matmul %99, %40, %cst_38 {dimension_numbers = #tpu.dot_dimension_numbers<[1], [0], [0], [1], [0, 0, 1, 1], [], []>} : vector<8x128xbf16>, vector<128x256xbf16>, vector<8x256xf32> -> vector<8x256xf32>
    %101 = vector.broadcast %41 : vector<1x256xf32> to vector<8x256xf32>
    %102 = arith.addf %100, %101 : vector<8x256xf32>
    %cst_39 = arith.constant 0.000000e+00 : f32
    %103 = vector.broadcast %cst_39 : f32 to vector<8x256xf32>
    %104 = arith.maximumf %102, %103 : vector<8x256xf32>
    %105 = vector.extract_strided_slice %39 {offsets = [0, 1152], sizes = [8, 128], strides = [1, 1]} : vector<8x2048xf32> to vector<8x128xf32>
    %106 = arith.truncf %105 : vector<8x128xf32> to vector<8x128xbf16>
    %cst_40 = arith.constant dense<0.000000e+00> : vector<8x256xf32>
    %107 = tpu.matmul %106, %40, %cst_40 {dimension_numbers = #tpu.dot_dimension_numbers<[1], [0], [0], [1], [0, 0, 1, 1], [], []>} : vector<8x128xbf16>, vector<128x256xbf16>, vector<8x256xf32> -> vector<8x256xf32>
    %108 = vector.broadcast %41 : vector<1x256xf32> to vector<8x256xf32>
    %109 = arith.addf %107, %108 : vector<8x256xf32>
    %cst_41 = arith.constant 0.000000e+00 : f32
    %110 = vector.broadcast %cst_41 : f32 to vector<8x256xf32>
    %111 = arith.maximumf %109, %110 : vector<8x256xf32>
    %112 = vector.extract_strided_slice %39 {offsets = [0, 1280], sizes = [8, 128], strides = [1, 1]} : vector<8x2048xf32> to vector<8x128xf32>
    %113 = arith.truncf %112 : vector<8x128xf32> to vector<8x128xbf16>
    %cst_42 = arith.constant dense<0.000000e+00> : vector<8x256xf32>
    %114 = tpu.matmul %113, %40, %cst_42 {dimension_numbers = #tpu.dot_dimension_numbers<[1], [0], [0], [1], [0, 0, 1, 1], [], []>} : vector<8x128xbf16>, vector<128x256xbf16>, vector<8x256xf32> -> vector<8x256xf32>
    %115 = vector.broadcast %41 : vector<1x256xf32> to vector<8x256xf32>
    %116 = arith.addf %114, %115 : vector<8x256xf32>
    %cst_43 = arith.constant 0.000000e+00 : f32
    %117 = vector.broadcast %cst_43 : f32 to vector<8x256xf32>
    %118 = arith.maximumf %116, %117 : vector<8x256xf32>
    %119 = vector.extract_strided_slice %39 {offsets = [0, 1408], sizes = [8, 128], strides = [1, 1]} : vector<8x2048xf32> to vector<8x128xf32>
    %120 = arith.truncf %119 : vector<8x128xf32> to vector<8x128xbf16>
    %cst_44 = arith.constant dense<0.000000e+00> : vector<8x256xf32>
    %121 = tpu.matmul %120, %40, %cst_44 {dimension_numbers = #tpu.dot_dimension_numbers<[1], [0], [0], [1], [0, 0, 1, 1], [], []>} : vector<8x128xbf16>, vector<128x256xbf16>, vector<8x256xf32> -> vector<8x256xf32>
    %122 = vector.broadcast %41 : vector<1x256xf32> to vector<8x256xf32>
    %123 = arith.addf %121, %122 : vector<8x256xf32>
    %cst_45 = arith.constant 0.000000e+00 : f32
    %124 = vector.broadcast %cst_45 : f32 to vector<8x256xf32>
    %125 = arith.maximumf %123, %124 : vector<8x256xf32>
    %126 = vector.extract_strided_slice %39 {offsets = [0, 1536], sizes = [8, 128], strides = [1, 1]} : vector<8x2048xf32> to vector<8x128xf32>
    %127 = arith.truncf %126 : vector<8x128xf32> to vector<8x128xbf16>
    %cst_46 = arith.constant dense<0.000000e+00> : vector<8x256xf32>
    %128 = tpu.matmul %127, %40, %cst_46 {dimension_numbers = #tpu.dot_dimension_numbers<[1], [0], [0], [1], [0, 0, 1, 1], [], []>} : vector<8x128xbf16>, vector<128x256xbf16>, vector<8x256xf32> -> vector<8x256xf32>
    %129 = vector.broadcast %41 : vector<1x256xf32> to vector<8x256xf32>
    %130 = arith.addf %128, %129 : vector<8x256xf32>
    %cst_47 = arith.constant 0.000000e+00 : f32
    %131 = vector.broadcast %cst_47 : f32 to vector<8x256xf32>
    %132 = arith.maximumf %130, %131 : vector<8x256xf32>
    %133 = vector.extract_strided_slice %39 {offsets = [0, 1664], sizes = [8, 128], strides = [1, 1]} : vector<8x2048xf32> to vector<8x128xf32>
    %134 = arith.truncf %133 : vector<8x128xf32> to vector<8x128xbf16>
    %cst_48 = arith.constant dense<0.000000e+00> : vector<8x256xf32>
    %135 = tpu.matmul %134, %40, %cst_48 {dimension_numbers = #tpu.dot_dimension_numbers<[1], [0], [0], [1], [0, 0, 1, 1], [], []>} : vector<8x128xbf16>, vector<128x256xbf16>, vector<8x256xf32> -> vector<8x256xf32>
    %136 = vector.broadcast %41 : vector<1x256xf32> to vector<8x256xf32>
    %137 = arith.addf %135, %136 : vector<8x256xf32>
    %cst_49 = arith.constant 0.000000e+00 : f32
    %138 = vector.broadcast %cst_49 : f32 to vector<8x256xf32>
    %139 = arith.maximumf %137, %138 : vector<8x256xf32>
    %140 = vector.extract_strided_slice %39 {offsets = [0, 1792], sizes = [8, 128], strides = [1, 1]} : vector<8x2048xf32> to vector<8x128xf32>
    %141 = arith.truncf %140 : vector<8x128xf32> to vector<8x128xbf16>
    %cst_50 = arith.constant dense<0.000000e+00> : vector<8x256xf32>
    %142 = tpu.matmul %141, %40, %cst_50 {dimension_numbers = #tpu.dot_dimension_numbers<[1], [0], [0], [1], [0, 0, 1, 1], [], []>} : vector<8x128xbf16>, vector<128x256xbf16>, vector<8x256xf32> -> vector<8x256xf32>
    %143 = vector.broadcast %41 : vector<1x256xf32> to vector<8x256xf32>
    %144 = arith.addf %142, %143 : vector<8x256xf32>
    %cst_51 = arith.constant 0.000000e+00 : f32
    %145 = vector.broadcast %cst_51 : f32 to vector<8x256xf32>
    %146 = arith.maximumf %144, %145 : vector<8x256xf32>
    %147 = vector.extract_strided_slice %39 {offsets = [0, 1920], sizes = [8, 128], strides = [1, 1]} : vector<8x2048xf32> to vector<8x128xf32>
    %148 = arith.truncf %147 : vector<8x128xf32> to vector<8x128xbf16>
    %cst_52 = arith.constant dense<0.000000e+00> : vector<8x256xf32>
    %149 = tpu.matmul %148, %40, %cst_52 {dimension_numbers = #tpu.dot_dimension_numbers<[1], [0], [0], [1], [0, 0, 1, 1], [], []>} : vector<8x128xbf16>, vector<128x256xbf16>, vector<8x256xf32> -> vector<8x256xf32>
    %150 = vector.broadcast %41 : vector<1x256xf32> to vector<8x256xf32>
    %151 = arith.addf %149, %150 : vector<8x256xf32>
    %cst_53 = arith.constant 0.000000e+00 : f32
    %152 = vector.broadcast %cst_53 : f32 to vector<8x256xf32>
    %153 = arith.maximumf %151, %152 : vector<8x256xf32>
    %154 = tpu.concatenate %48, %55, %62, %69, %76, %83, %90, %97, %104, %111, %118, %125, %132, %139, %146, %153 in 1 : vector<8x256xf32>, vector<8x256xf32>, vector<8x256xf32>, vector<8x256xf32>, vector<8x256xf32>, vector<8x256xf32>, vector<8x256xf32>, vector<8x256xf32>, vector<8x256xf32>, vector<8x256xf32>, vector<8x256xf32>, vector<8x256xf32>, vector<8x256xf32>, vector<8x256xf32>, vector<8x256xf32>, vector<8x256xf32> -> vector<8x4096xf32>
    %c0_54 = arith.constant 0 : index
    %c0_55 = arith.constant 0 : index
    %155 = vector.load %arg8[%c0_54, %c0_55] : memref<2048x128xbf16, #tpu.memory_space<vmem>>, vector<2048x128xbf16>
    %c0_56 = arith.constant 0 : index
    %c0_57 = arith.constant 0 : index
    %156 = vector.load %arg9[%c0_56, %c0_57] : memref<1x128xf32, #tpu.memory_space<vmem>>, vector<1x128xf32>
    %157 = vector.extract_strided_slice %154 {offsets = [0, 0], sizes = [8, 2048], strides = [1, 1]} : vector<8x4096xf32> to vector<8x2048xf32>
    %158 = arith.truncf %157 : vector<8x2048xf32> to vector<8x2048xbf16>
    %cst_58 = arith.constant dense<0.000000e+00> : vector<8x128xf32>
    %159 = tpu.matmul %158, %155, %cst_58 {dimension_numbers = #tpu.dot_dimension_numbers<[1], [0], [0], [1], [0, 0, 1, 1], [], []>} : vector<8x2048xbf16>, vector<2048x128xbf16>, vector<8x128xf32> -> vector<8x128xf32>
    %160 = vector.broadcast %156 : vector<1x128xf32> to vector<8x128xf32>
    %161 = arith.addf %159, %160 : vector<8x128xf32>
    %cst_59 = arith.constant 5.000000e-01 : f32
    %162 = vector.broadcast %cst_59 : f32 to vector<8x128xf32>
    %163 = arith.mulf %162, %161 : vector<8x128xf32>
    %164 = math.tanh %163 : vector<8x128xf32>
    %cst_60 = arith.constant 1.000000e+00 : f32
    %165 = vector.broadcast %cst_60 : f32 to vector<8x128xf32>
    %166 = arith.addf %165, %164 : vector<8x128xf32>
    %cst_61 = arith.constant 5.000000e-01 : f32
    %167 = vector.broadcast %cst_61 : f32 to vector<8x128xf32>
    %168 = arith.mulf %167, %166 : vector<8x128xf32>
    %169 = vector.extract_strided_slice %154 {offsets = [0, 2048], sizes = [8, 2048], strides = [1, 1]} : vector<8x4096xf32> to vector<8x2048xf32>
    %170 = arith.truncf %169 : vector<8x2048xf32> to vector<8x2048xbf16>
    %cst_62 = arith.constant dense<0.000000e+00> : vector<8x128xf32>
    %171 = tpu.matmul %170, %155, %cst_62 {dimension_numbers = #tpu.dot_dimension_numbers<[1], [0], [0], [1], [0, 0, 1, 1], [], []>} : vector<8x2048xbf16>, vector<2048x128xbf16>, vector<8x128xf32> -> vector<8x128xf32>
    %172 = vector.broadcast %156 : vector<1x128xf32> to vector<8x128xf32>
    %173 = arith.addf %171, %172 : vector<8x128xf32>
    %cst_63 = arith.constant 5.000000e-01 : f32
    %174 = vector.broadcast %cst_63 : f32 to vector<8x128xf32>
    %175 = arith.mulf %174, %173 : vector<8x128xf32>
    %176 = math.tanh %175 : vector<8x128xf32>
    %cst_64 = arith.constant 1.000000e+00 : f32
    %177 = vector.broadcast %cst_64 : f32 to vector<8x128xf32>
    %178 = arith.addf %177, %176 : vector<8x128xf32>
    %cst_65 = arith.constant 5.000000e-01 : f32
    %179 = vector.broadcast %cst_65 : f32 to vector<8x128xf32>
    %180 = arith.mulf %179, %178 : vector<8x128xf32>
    %181 = tpu.concatenate %168, %180 in 1 : vector<8x128xf32>, vector<8x128xf32> -> vector<8x256xf32>
    %c0_66 = arith.constant 0 : index
    %c0_67 = arith.constant 0 : index
    %182 = vector.load %arg10[%c0_66, %c0_67] : memref<8x256xf32, #tpu.memory_space<vmem>>, vector<8x256xf32>
    tpu.vector_store %arg10[%c0_66, %c0_67], %181 {strides = array<i32>} : memref<8x256xf32, #tpu.memory_space<vmem>>, vector<8x256xf32>,
    return
  }
  func.func @transform_0(%arg0: i32) -> (i32, i32) {
    %c0_i32 = arith.constant 0 : i32
    %c0_i32_0 = arith.constant 0 : i32
    return %arg0, %c0_i32 : i32, i32
  }
  func.func @transform_1(%arg0: i32) -> (i32, i32) {
    %c0_i32 = arith.constant 0 : i32
    %c0_i32_0 = arith.constant 0 : i32
    %c0_i32_1 = arith.constant 0 : i32
    return %c0_i32, %c0_i32_0 : i32, i32
  }
  func.func @transform_2(%arg0: i32) -> (i32, i32) {
    %c0_i32 = arith.constant 0 : i32
    %c0_i32_0 = arith.constant 0 : i32
    %c0_i32_1 = arith.constant 0 : i32
    return %c0_i32, %c0_i32_0 : i32, i32
  }
  func.func @transform_3(%arg0: i32) -> (i32, i32) {
    %c0_i32 = arith.constant 0 : i32
    %c0_i32_0 = arith.constant 0 : i32
    %c0_i32_1 = arith.constant 0 : i32
    return %c0_i32, %c0_i32_0 : i32, i32
  }
  func.func @transform_4(%arg0: i32) -> (i32, i32) {
    %c0_i32 = arith.constant 0 : i32
    %c0_i32_0 = arith.constant 0 : i32
    %c0_i32_1 = arith.constant 0 : i32
    return %c0_i32, %c0_i32_0 : i32, i32
  }
  func.func @transform_5(%arg0: i32) -> (i32, i32) {
    %c0_i32 = arith.constant 0 : i32
    %c0_i32_0 = arith.constant 0 : i32
    %c0_i32_1 = arith.constant 0 : i32
    return %c0_i32, %c0_i32_0 : i32, i32
  }
  func.func @transform_6(%arg0: i32) -> (i32, i32) {
    %c0_i32 = arith.constant 0 : i32
    %c0_i32_0 = arith.constant 0 : i32
    %c0_i32_1 = arith.constant 0 : i32
    return %c0_i32, %c0_i32_0 : i32, i32
  }
  func.func @transform_7(%arg0: i32) -> (i32, i32) {
    %c0_i32 = arith.constant 0 : i32
    %c0_i32_0 = arith.constant 0 : i32
    %c0_i32_1 = arith.constant 0 : i32
    return %c0_i32, %c0_i32_0 : i32, i32
  }
  func.func @transform_8(%arg0: i32) -> (i32, i32) {
    %c0_i32 = arith.constant 0 : i32
    %c0_i32_0 = arith.constant 0 : i32
    %c0_i32_1 = arith.constant 0 : i32
    return %c0_i32, %c0_i32_0 : i32, i32
  }
  func.func @transform_9(%arg0: i32) -> (i32, i32) {
    %c0_i32 = arith.constant 0 : i32
    %c0_i32_0 = arith.constant 0 : i32
    return %arg0, %c0_i32 : i32, i32
  }
}

module attributes {stable_mosaic.version = 11 : i64} {
  func.func @_encoder_kernel(%arg0: i32, %arg1: i32, %arg2: memref<1x1x16xf32, #tpu.memory_space<vmem>>, %arg3: memref<4x16x32xbf16, #tpu.memory_space<vmem>>, %arg4: memref<4x32xf32, #tpu.memory_space<vmem>>, %arg5: memref<4x32xf32, #tpu.memory_space<vmem>>, %arg6: memref<1x1x32xf32, #tpu.memory_space<vmem>>, %arg7: memref<1x1x32xf32, #tpu.memory_space<vmem>>, %arg8: memref<1x32x96xbf16, #tpu.memory_space<vmem>>, %arg9: memref<1x1x96xf32, #tpu.memory_space<vmem>>, %arg10: memref<1x4x8x32xbf16, #tpu.memory_space<vmem>>, %arg11: memref<1x1x32xf32, #tpu.memory_space<vmem>>, %arg12: memref<1x1x32xf32, #tpu.memory_space<vmem>>, %arg13: memref<1x1x32xf32, #tpu.memory_space<vmem>>, %arg14: memref<1x32x128xbf16, #tpu.memory_space<vmem>>, %arg15: memref<1x1x128xf32, #tpu.memory_space<vmem>>, %arg16: memref<1x128x32xbf16, #tpu.memory_space<vmem>>, %arg17: memref<1x1x32xf32, #tpu.memory_space<vmem>>, %arg18: memref<1x1x32xf32, #tpu.memory_space<vmem>>, %arg19: memref<1x1x32xf32, #tpu.memory_space<vmem>>, %arg20: memref<1x4x32xf32, #tpu.memory_space<vmem>>, %arg21: memref<4x32xf32, #tpu.memory_space<vmem>>) attributes {dimension_semantics = [#tpu.dimension_semantics<parallel>, #tpu.dimension_semantics<arbitrary>], iteration_bounds = array<i64: 2, 2>, scalar_prefetch = 0 : i64, scratch_operands = 1 : i64, tpu.core_type = #tpu.core_type<tc>, window_params = [{transform_indices = @transform_0, window_bounds = array<i64: 1, 1, 16>}, {pipeline_mode = #tpu.pipeline_mode<synchronous>, transform_indices = @transform_1, window_bounds = array<i64: 4, 16, 32>}, {pipeline_mode = #tpu.pipeline_mode<synchronous>, transform_indices = @transform_2, window_bounds = array<i64: 4, 32>}, {pipeline_mode = #tpu.pipeline_mode<synchronous>, transform_indices = @transform_3, window_bounds = array<i64: 4, 32>}, {transform_indices = @transform_4, window_bounds = array<i64: 1, 1, 32>}, {transform_indices = @transform_5, window_bounds = array<i64: 1, 1, 32>}, {transform_indices = @transform_6, window_bounds = array<i64: 1, 32, 96>}, {transform_indices = @transform_7, window_bounds = array<i64: 1, 1, 96>}, {transform_indices = @transform_8, window_bounds = array<i64: 1, 4, 8, 32>}, {transform_indices = @transform_9, window_bounds = array<i64: 1, 1, 32>}, {transform_indices = @transform_10, window_bounds = array<i64: 1, 1, 32>}, {transform_indices = @transform_11, window_bounds = array<i64: 1, 1, 32>}, {transform_indices = @transform_12, window_bounds = array<i64: 1, 32, 128>}, {transform_indices = @transform_13, window_bounds = array<i64: 1, 1, 128>}, {transform_indices = @transform_14, window_bounds = array<i64: 1, 128, 32>}, {transform_indices = @transform_15, window_bounds = array<i64: 1, 1, 32>}, {transform_indices = @transform_16, window_bounds = array<i64: 1, 1, 32>}, {transform_indices = @transform_17, window_bounds = array<i64: 1, 1, 32>}, {transform_indices = @transform_18, window_bounds = array<i64: 1, 4, 32>}]} {
    %c0_i32 = arith.constant 0 : i32
    %0 = arith.cmpi eq, %arg1, %c0_i32 : i32
    %1 = arith.extui %0 : i1 to i32
    %c0_i32_0 = arith.constant 0 : i32
    %2 = arith.cmpi ne, %1, %c0_i32_0 : i32
    scf.if %2 {
      %c0_103 = arith.constant 0 : index
      %c0_104 = arith.constant 0 : index
      %c0_105 = arith.constant 0 : index
      %221 = vector.load %arg2[%c0_103, %c0_104, %c0_105] : memref<1x1x16xf32, #tpu.memory_space<vmem>>, vector<1x1x16xf32>
      %222 = vector.shape_cast %221 : vector<1x1x16xf32> to vector<1x16xf32>
      %c0_106 = arith.constant 0 : index
      %c0_107 = arith.constant 0 : index
      %c0_108 = arith.constant 0 : index
      %223 = vector.load %arg3[%c0_106, %c0_107, %c0_108] : memref<4x16x32xbf16, #tpu.memory_space<vmem>>, vector<1x16x32xbf16>
      %224 = vector.shape_cast %223 : vector<1x16x32xbf16> to vector<16x32xbf16>
      %225 = arith.truncf %222 : vector<1x16xf32> to vector<1x16xbf16>
      %cst_109 = arith.constant dense<0.000000e+00> : vector<1x32xf32>
      %226 = tpu.matmul %225, %224, %cst_109 {dimension_numbers = #tpu.dot_dimension_numbers<[1], [0], [0], [1], [0, 0, 1, 1], [], []>} : vector<1x16xbf16>, vector<16x32xbf16>, vector<1x32xf32> -> vector<1x32xf32>
      %c1_110 = arith.constant 1 : index
      %c0_111 = arith.constant 0 : index
      %c0_112 = arith.constant 0 : index
      %227 = vector.load %arg3[%c1_110, %c0_111, %c0_112] : memref<4x16x32xbf16, #tpu.memory_space<vmem>>, vector<1x16x32xbf16>
      %228 = vector.shape_cast %227 : vector<1x16x32xbf16> to vector<16x32xbf16>
      %229 = arith.truncf %222 : vector<1x16xf32> to vector<1x16xbf16>
      %cst_113 = arith.constant dense<0.000000e+00> : vector<1x32xf32>
      %230 = tpu.matmul %229, %228, %cst_113 {dimension_numbers = #tpu.dot_dimension_numbers<[1], [0], [0], [1], [0, 0, 1, 1], [], []>} : vector<1x16xbf16>, vector<16x32xbf16>, vector<1x32xf32> -> vector<1x32xf32>
      %c2_114 = arith.constant 2 : index
      %c0_115 = arith.constant 0 : index
      %c0_116 = arith.constant 0 : index
      %231 = vector.load %arg3[%c2_114, %c0_115, %c0_116] : memref<4x16x32xbf16, #tpu.memory_space<vmem>>, vector<1x16x32xbf16>
      %232 = vector.shape_cast %231 : vector<1x16x32xbf16> to vector<16x32xbf16>
      %233 = arith.truncf %222 : vector<1x16xf32> to vector<1x16xbf16>
      %cst_117 = arith.constant dense<0.000000e+00> : vector<1x32xf32>
      %234 = tpu.matmul %233, %232, %cst_117 {dimension_numbers = #tpu.dot_dimension_numbers<[1], [0], [0], [1], [0, 0, 1, 1], [], []>} : vector<1x16xbf16>, vector<16x32xbf16>, vector<1x32xf32> -> vector<1x32xf32>
      %c3_118 = arith.constant 3 : index
      %c0_119 = arith.constant 0 : index
      %c0_120 = arith.constant 0 : index
      %235 = vector.load %arg3[%c3_118, %c0_119, %c0_120] : memref<4x16x32xbf16, #tpu.memory_space<vmem>>, vector<1x16x32xbf16>
      %236 = vector.shape_cast %235 : vector<1x16x32xbf16> to vector<16x32xbf16>
      %237 = arith.truncf %222 : vector<1x16xf32> to vector<1x16xbf16>
      %cst_121 = arith.constant dense<0.000000e+00> : vector<1x32xf32>
      %238 = tpu.matmul %237, %236, %cst_121 {dimension_numbers = #tpu.dot_dimension_numbers<[1], [0], [0], [1], [0, 0, 1, 1], [], []>} : vector<1x16xbf16>, vector<16x32xbf16>, vector<1x32xf32> -> vector<1x32xf32>
      %239 = tpu.concatenate %226, %230, %234, %238 in 0 : vector<1x32xf32>, vector<1x32xf32>, vector<1x32xf32>, vector<1x32xf32> -> vector<4x32xf32>
      %c0_122 = arith.constant 0 : index
      %c0_123 = arith.constant 0 : index
      %240 = vector.load %arg4[%c0_122, %c0_123] : memref<4x32xf32, #tpu.memory_space<vmem>>, vector<4x32xf32>
      %241 = arith.addf %239, %240 : vector<4x32xf32>
      %c0_124 = arith.constant 0 : index
      %c0_125 = arith.constant 0 : index
      %242 = vector.load %arg5[%c0_124, %c0_125] : memref<4x32xf32, #tpu.memory_space<vmem>>, vector<4x32xf32>
      %243 = arith.addf %241, %242 : vector<4x32xf32>
      %c0_126 = arith.constant 0 : index
      %c0_127 = arith.constant 0 : index
      %244 = vector.load %arg21[%c0_126, %c0_127] : memref<4x32xf32, #tpu.memory_space<vmem>>, vector<4x32xf32>
      tpu.vector_store %arg21[%c0_126, %c0_127], %243 {strides = array<i32>} : memref<4x32xf32, #tpu.memory_space<vmem>>, vector<4x32xf32>,
    } else {
    }
    %c0 = arith.constant 0 : index
    %c0_1 = arith.constant 0 : index
    %3 = vector.load %arg21[%c0, %c0_1] : memref<4x32xf32, #tpu.memory_space<vmem>>, vector<4x32xf32>
    %c0_2 = arith.constant 0 : index
    %c0_3 = arith.constant 0 : index
    %c0_4 = arith.constant 0 : index
    %4 = vector.load %arg6[%c0_2, %c0_3, %c0_4] : memref<1x1x32xf32, #tpu.memory_space<vmem>>, vector<1x1x32xf32>
    %5 = vector.shape_cast %4 : vector<1x1x32xf32> to vector<1x32xf32>
    %c0_5 = arith.constant 0 : index
    %c0_6 = arith.constant 0 : index
    %c0_7 = arith.constant 0 : index
    %6 = vector.load %arg7[%c0_5, %c0_6, %c0_7] : memref<1x1x32xf32, #tpu.memory_space<vmem>>, vector<1x1x32xf32>
    %7 = vector.shape_cast %6 : vector<1x1x32xf32> to vector<1x32xf32>
    %cst = arith.constant dense<0.000000e+00> : vector<4xf32>
    %8 = vector.multi_reduction <add>, %3, %cst [1] : vector<4x32xf32> to vector<4xf32>
    %9 = vector.shape_cast %8 : vector<4xf32> to vector<4x1xf32>
    %cst_8 = arith.constant 3.200000e+01 : f32
    %10 = vector.broadcast %cst_8 : f32 to vector<4x1xf32>
    %11 = arith.divf %9, %10 : vector<4x1xf32>
    %12 = vector.broadcast %11 : vector<4x1xf32> to vector<4x32xf32>
    %13 = arith.subf %3, %12 : vector<4x32xf32>
    %14 = arith.mulf %13, %13 : vector<4x32xf32>
    %cst_9 = arith.constant dense<0.000000e+00> : vector<4xf32>
    %15 = vector.multi_reduction <add>, %14, %cst_9 [1] : vector<4x32xf32> to vector<4xf32>
    %16 = vector.shape_cast %15 : vector<4xf32> to vector<4x1xf32>
    %cst_10 = arith.constant 3.200000e+01 : f32
    %17 = vector.broadcast %cst_10 : f32 to vector<4x1xf32>
    %18 = arith.divf %16, %17 : vector<4x1xf32>
    %cst_11 = arith.constant 9.99999974E-6 : f32
    %19 = vector.broadcast %cst_11 : f32 to vector<4x1xf32>
    %20 = arith.addf %18, %19 : vector<4x1xf32>
    %21 = math.rsqrt %20 : vector<4x1xf32>
    %22 = vector.broadcast %21 : vector<4x1xf32> to vector<4x32xf32>
    %23 = arith.mulf %13, %22 : vector<4x32xf32>
    %24 = vector.broadcast %5 : vector<1x32xf32> to vector<4x32xf32>
    %25 = arith.mulf %23, %24 : vector<4x32xf32>
    %26 = vector.broadcast %7 : vector<1x32xf32> to vector<4x32xf32>
    %27 = arith.addf %25, %26 : vector<4x32xf32>
    %c0_12 = arith.constant 0 : index
    %c0_13 = arith.constant 0 : index
    %c0_14 = arith.constant 0 : index
    %28 = vector.load %arg8[%c0_12, %c0_13, %c0_14] : memref<1x32x96xbf16, #tpu.memory_space<vmem>>, vector<1x32x96xbf16>
    %29 = vector.shape_cast %28 : vector<1x32x96xbf16> to vector<32x96xbf16>
    %30 = arith.truncf %27 : vector<4x32xf32> to vector<4x32xbf16>
    %cst_15 = arith.constant dense<0.000000e+00> : vector<4x96xf32>
    %31 = tpu.matmul %30, %29, %cst_15 {dimension_numbers = #tpu.dot_dimension_numbers<[1], [0], [0], [1], [0, 0, 1, 1], [], []>} : vector<4x32xbf16>, vector<32x96xbf16>, vector<4x96xf32> -> vector<4x96xf32>
    %c0_16 = arith.constant 0 : index
    %c0_17 = arith.constant 0 : index
    %c0_18 = arith.constant 0 : index
    %32 = vector.load %arg9[%c0_16, %c0_17, %c0_18] : memref<1x1x96xf32, #tpu.memory_space<vmem>>, vector<1x1x96xf32>
    %33 = vector.shape_cast %32 : vector<1x1x96xf32> to vector<1x96xf32>
    %34 = vector.broadcast %33 : vector<1x96xf32> to vector<4x96xf32>
    %35 = arith.addf %31, %34 : vector<4x96xf32>
    %36 = vector.extract_strided_slice %35 {offsets = [0, 0], sizes = [4, 8], strides = [1, 1]} : vector<4x96xf32> to vector<4x8xf32>
    %37 = vector.extract_strided_slice %35 {offsets = [0, 32], sizes = [4, 8], strides = [1, 1]} : vector<4x96xf32> to vector<4x8xf32>
    %38 = vector.extract_strided_slice %35 {offsets = [0, 64], sizes = [4, 8], strides = [1, 1]} : vector<4x96xf32> to vector<4x8xf32>
    %39 = arith.truncf %36 : vector<4x8xf32> to vector<4x8xbf16>
    %40 = arith.truncf %37 : vector<4x8xf32> to vector<4x8xbf16>
    %cst_19 = arith.constant dense<0.000000e+00> : vector<4x4xf32>
    %41 = tpu.matmul %39, %40, %cst_19 {dimension_numbers = #tpu.dot_dimension_numbers<[1], [1], [0], [0], [0, 0, 1, 0], [], []>} : vector<4x8xbf16>, vector<4x8xbf16>, vector<4x4xf32> -> vector<4x4xf32>
    %cst_20 = arith.constant 0.353553385 : f32
    %42 = vector.broadcast %cst_20 : f32 to vector<4x4xf32>
    %43 = arith.mulf %41, %42 : vector<4x4xf32>
    %cst_21 = arith.constant dense<0xFF800000> : vector<4xf32>
    %44 = vector.multi_reduction <maximumf>, %43, %cst_21 [1] : vector<4x4xf32> to vector<4xf32>
    %45 = vector.shape_cast %44 : vector<4xf32> to vector<4x1xf32>
    %46 = vector.broadcast %45 : vector<4x1xf32> to vector<4x4xf32>
    %47 = arith.subf %43, %46 : vector<4x4xf32>
    %48 = math.exp %47 : vector<4x4xf32>
    %cst_22 = arith.constant dense<0.000000e+00> : vector<4xf32>
    %49 = vector.multi_reduction <add>, %48, %cst_22 [1] : vector<4x4xf32> to vector<4xf32>
    %50 = vector.shape_cast %49 : vector<4xf32> to vector<4x1xf32>
    %51 = tpu.reciprocal %50 {approx = true} : vector<4x1xf32> -> vector<4x1xf32>
    %52 = vector.broadcast %51 : vector<4x1xf32> to vector<4x4xf32>
    %53 = arith.mulf %48, %52 : vector<4x4xf32>
    %54 = arith.truncf %53 : vector<4x4xf32> to vector<4x4xbf16>
    %55 = arith.truncf %38 : vector<4x8xf32> to vector<4x8xbf16>
    %cst_23 = arith.constant dense<0.000000e+00> : vector<4x8xf32>
    %56 = tpu.matmul %54, %55, %cst_23 {dimension_numbers = #tpu.dot_dimension_numbers<[1], [0], [0], [1], [0, 0, 1, 1], [], []>} : vector<4x4xbf16>, vector<4x8xbf16>, vector<4x8xf32> -> vector<4x8xf32>
    %c0_24 = arith.constant 0 : index
    %c0_25 = arith.constant 0 : index
    %c0_26 = arith.constant 0 : index
    %c0_27 = arith.constant 0 : index
    %57 = vector.load %arg10[%c0_24, %c0_25, %c0_26, %c0_27] : memref<1x4x8x32xbf16, #tpu.memory_space<vmem>>, vector<1x1x8x32xbf16>
    %58 = vector.shape_cast %57 : vector<1x1x8x32xbf16> to vector<8x32xbf16>
    %59 = arith.truncf %56 : vector<4x8xf32> to vector<4x8xbf16>
    %cst_28 = arith.constant dense<0.000000e+00> : vector<4x32xf32>
    %60 = tpu.matmul %59, %58, %cst_28 {dimension_numbers = #tpu.dot_dimension_numbers<[1], [0], [0], [1], [0, 0, 1, 1], [], []>} : vector<4x8xbf16>, vector<8x32xbf16>, vector<4x32xf32> -> vector<4x32xf32>
    %61 = vector.extract_strided_slice %35 {offsets = [0, 8], sizes = [4, 8], strides = [1, 1]} : vector<4x96xf32> to vector<4x8xf32>
    %62 = vector.extract_strided_slice %35 {offsets = [0, 40], sizes = [4, 8], strides = [1, 1]} : vector<4x96xf32> to vector<4x8xf32>
    %63 = vector.extract_strided_slice %35 {offsets = [0, 72], sizes = [4, 8], strides = [1, 1]} : vector<4x96xf32> to vector<4x8xf32>
    %64 = arith.truncf %61 : vector<4x8xf32> to vector<4x8xbf16>
    %65 = arith.truncf %62 : vector<4x8xf32> to vector<4x8xbf16>
    %cst_29 = arith.constant dense<0.000000e+00> : vector<4x4xf32>
    %66 = tpu.matmul %64, %65, %cst_29 {dimension_numbers = #tpu.dot_dimension_numbers<[1], [1], [0], [0], [0, 0, 1, 0], [], []>} : vector<4x8xbf16>, vector<4x8xbf16>, vector<4x4xf32> -> vector<4x4xf32>
    %cst_30 = arith.constant 0.353553385 : f32
    %67 = vector.broadcast %cst_30 : f32 to vector<4x4xf32>
    %68 = arith.mulf %66, %67 : vector<4x4xf32>
    %cst_31 = arith.constant dense<0xFF800000> : vector<4xf32>
    %69 = vector.multi_reduction <maximumf>, %68, %cst_31 [1] : vector<4x4xf32> to vector<4xf32>
    %70 = vector.shape_cast %69 : vector<4xf32> to vector<4x1xf32>
    %71 = vector.broadcast %70 : vector<4x1xf32> to vector<4x4xf32>
    %72 = arith.subf %68, %71 : vector<4x4xf32>
    %73 = math.exp %72 : vector<4x4xf32>
    %cst_32 = arith.constant dense<0.000000e+00> : vector<4xf32>
    %74 = vector.multi_reduction <add>, %73, %cst_32 [1] : vector<4x4xf32> to vector<4xf32>
    %75 = vector.shape_cast %74 : vector<4xf32> to vector<4x1xf32>
    %76 = tpu.reciprocal %75 {approx = true} : vector<4x1xf32> -> vector<4x1xf32>
    %77 = vector.broadcast %76 : vector<4x1xf32> to vector<4x4xf32>
    %78 = arith.mulf %73, %77 : vector<4x4xf32>
    %79 = arith.truncf %78 : vector<4x4xf32> to vector<4x4xbf16>
    %80 = arith.truncf %63 : vector<4x8xf32> to vector<4x8xbf16>
    %cst_33 = arith.constant dense<0.000000e+00> : vector<4x8xf32>
    %81 = tpu.matmul %79, %80, %cst_33 {dimension_numbers = #tpu.dot_dimension_numbers<[1], [0], [0], [1], [0, 0, 1, 1], [], []>} : vector<4x4xbf16>, vector<4x8xbf16>, vector<4x8xf32> -> vector<4x8xf32>
    %c0_34 = arith.constant 0 : index
    %c1 = arith.constant 1 : index
    %c0_35 = arith.constant 0 : index
    %c0_36 = arith.constant 0 : index
    %82 = vector.load %arg10[%c0_34, %c1, %c0_35, %c0_36] : memref<1x4x8x32xbf16, #tpu.memory_space<vmem>>, vector<1x1x8x32xbf16>
    %83 = vector.shape_cast %82 : vector<1x1x8x32xbf16> to vector<8x32xbf16>
    %84 = arith.truncf %81 : vector<4x8xf32> to vector<4x8xbf16>
    %cst_37 = arith.constant dense<0.000000e+00> : vector<4x32xf32>
    %85 = tpu.matmul %84, %83, %cst_37 {dimension_numbers = #tpu.dot_dimension_numbers<[1], [0], [0], [1], [0, 0, 1, 1], [], []>} : vector<4x8xbf16>, vector<8x32xbf16>, vector<4x32xf32> -> vector<4x32xf32>
    %86 = arith.addf %60, %85 : vector<4x32xf32>
    %87 = vector.extract_strided_slice %35 {offsets = [0, 16], sizes = [4, 8], strides = [1, 1]} : vector<4x96xf32> to vector<4x8xf32>
    %88 = vector.extract_strided_slice %35 {offsets = [0, 48], sizes = [4, 8], strides = [1, 1]} : vector<4x96xf32> to vector<4x8xf32>
    %89 = vector.extract_strided_slice %35 {offsets = [0, 80], sizes = [4, 8], strides = [1, 1]} : vector<4x96xf32> to vector<4x8xf32>
    %90 = arith.truncf %87 : vector<4x8xf32> to vector<4x8xbf16>
    %91 = arith.truncf %88 : vector<4x8xf32> to vector<4x8xbf16>
    %cst_38 = arith.constant dense<0.000000e+00> : vector<4x4xf32>
    %92 = tpu.matmul %90, %91, %cst_38 {dimension_numbers = #tpu.dot_dimension_numbers<[1], [1], [0], [0], [0, 0, 1, 0], [], []>} : vector<4x8xbf16>, vector<4x8xbf16>, vector<4x4xf32> -> vector<4x4xf32>
    %cst_39 = arith.constant 0.353553385 : f32
    %93 = vector.broadcast %cst_39 : f32 to vector<4x4xf32>
    %94 = arith.mulf %92, %93 : vector<4x4xf32>
    %cst_40 = arith.constant dense<0xFF800000> : vector<4xf32>
    %95 = vector.multi_reduction <maximumf>, %94, %cst_40 [1] : vector<4x4xf32> to vector<4xf32>
    %96 = vector.shape_cast %95 : vector<4xf32> to vector<4x1xf32>
    %97 = vector.broadcast %96 : vector<4x1xf32> to vector<4x4xf32>
    %98 = arith.subf %94, %97 : vector<4x4xf32>
    %99 = math.exp %98 : vector<4x4xf32>
    %cst_41 = arith.constant dense<0.000000e+00> : vector<4xf32>
    %100 = vector.multi_reduction <add>, %99, %cst_41 [1] : vector<4x4xf32> to vector<4xf32>
    %101 = vector.shape_cast %100 : vector<4xf32> to vector<4x1xf32>
    %102 = tpu.reciprocal %101 {approx = true} : vector<4x1xf32> -> vector<4x1xf32>
    %103 = vector.broadcast %102 : vector<4x1xf32> to vector<4x4xf32>
    %104 = arith.mulf %99, %103 : vector<4x4xf32>
    %105 = arith.truncf %104 : vector<4x4xf32> to vector<4x4xbf16>
    %106 = arith.truncf %89 : vector<4x8xf32> to vector<4x8xbf16>
    %cst_42 = arith.constant dense<0.000000e+00> : vector<4x8xf32>
    %107 = tpu.matmul %105, %106, %cst_42 {dimension_numbers = #tpu.dot_dimension_numbers<[1], [0], [0], [1], [0, 0, 1, 1], [], []>} : vector<4x4xbf16>, vector<4x8xbf16>, vector<4x8xf32> -> vector<4x8xf32>
    %c0_43 = arith.constant 0 : index
    %c2 = arith.constant 2 : index
    %c0_44 = arith.constant 0 : index
    %c0_45 = arith.constant 0 : index
    %108 = vector.load %arg10[%c0_43, %c2, %c0_44, %c0_45] : memref<1x4x8x32xbf16, #tpu.memory_space<vmem>>, vector<1x1x8x32xbf16>
    %109 = vector.shape_cast %108 : vector<1x1x8x32xbf16> to vector<8x32xbf16>
    %110 = arith.truncf %107 : vector<4x8xf32> to vector<4x8xbf16>
    %cst_46 = arith.constant dense<0.000000e+00> : vector<4x32xf32>
    %111 = tpu.matmul %110, %109, %cst_46 {dimension_numbers = #tpu.dot_dimension_numbers<[1], [0], [0], [1], [0, 0, 1, 1], [], []>} : vector<4x8xbf16>, vector<8x32xbf16>, vector<4x32xf32> -> vector<4x32xf32>
    %112 = arith.addf %86, %111 : vector<4x32xf32>
    %113 = vector.extract_strided_slice %35 {offsets = [0, 24], sizes = [4, 8], strides = [1, 1]} : vector<4x96xf32> to vector<4x8xf32>
    %114 = vector.extract_strided_slice %35 {offsets = [0, 56], sizes = [4, 8], strides = [1, 1]} : vector<4x96xf32> to vector<4x8xf32>
    %115 = vector.extract_strided_slice %35 {offsets = [0, 88], sizes = [4, 8], strides = [1, 1]} : vector<4x96xf32> to vector<4x8xf32>
    %116 = arith.truncf %113 : vector<4x8xf32> to vector<4x8xbf16>
    %117 = arith.truncf %114 : vector<4x8xf32> to vector<4x8xbf16>
    %cst_47 = arith.constant dense<0.000000e+00> : vector<4x4xf32>
    %118 = tpu.matmul %116, %117, %cst_47 {dimension_numbers = #tpu.dot_dimension_numbers<[1], [1], [0], [0], [0, 0, 1, 0], [], []>} : vector<4x8xbf16>, vector<4x8xbf16>, vector<4x4xf32> -> vector<4x4xf32>
    %cst_48 = arith.constant 0.353553385 : f32
    %119 = vector.broadcast %cst_48 : f32 to vector<4x4xf32>
    %120 = arith.mulf %118, %119 : vector<4x4xf32>
    %cst_49 = arith.constant dense<0xFF800000> : vector<4xf32>
    %121 = vector.multi_reduction <maximumf>, %120, %cst_49 [1] : vector<4x4xf32> to vector<4xf32>
    %122 = vector.shape_cast %121 : vector<4xf32> to vector<4x1xf32>
    %123 = vector.broadcast %122 : vector<4x1xf32> to vector<4x4xf32>
    %124 = arith.subf %120, %123 : vector<4x4xf32>
    %125 = math.exp %124 : vector<4x4xf32>
    %cst_50 = arith.constant dense<0.000000e+00> : vector<4xf32>
    %126 = vector.multi_reduction <add>, %125, %cst_50 [1] : vector<4x4xf32> to vector<4xf32>
    %127 = vector.shape_cast %126 : vector<4xf32> to vector<4x1xf32>
    %128 = tpu.reciprocal %127 {approx = true} : vector<4x1xf32> -> vector<4x1xf32>
    %129 = vector.broadcast %128 : vector<4x1xf32> to vector<4x4xf32>
    %130 = arith.mulf %125, %129 : vector<4x4xf32>
    %131 = arith.truncf %130 : vector<4x4xf32> to vector<4x4xbf16>
    %132 = arith.truncf %115 : vector<4x8xf32> to vector<4x8xbf16>
    %cst_51 = arith.constant dense<0.000000e+00> : vector<4x8xf32>
    %133 = tpu.matmul %131, %132, %cst_51 {dimension_numbers = #tpu.dot_dimension_numbers<[1], [0], [0], [1], [0, 0, 1, 1], [], []>} : vector<4x4xbf16>, vector<4x8xbf16>, vector<4x8xf32> -> vector<4x8xf32>
    %c0_52 = arith.constant 0 : index
    %c3 = arith.constant 3 : index
    %c0_53 = arith.constant 0 : index
    %c0_54 = arith.constant 0 : index
    %134 = vector.load %arg10[%c0_52, %c3, %c0_53, %c0_54] : memref<1x4x8x32xbf16, #tpu.memory_space<vmem>>, vector<1x1x8x32xbf16>
    %135 = vector.shape_cast %134 : vector<1x1x8x32xbf16> to vector<8x32xbf16>
    %136 = arith.truncf %133 : vector<4x8xf32> to vector<4x8xbf16>
    %cst_55 = arith.constant dense<0.000000e+00> : vector<4x32xf32>
    %137 = tpu.matmul %136, %135, %cst_55 {dimension_numbers = #tpu.dot_dimension_numbers<[1], [0], [0], [1], [0, 0, 1, 1], [], []>} : vector<4x8xbf16>, vector<8x32xbf16>, vector<4x32xf32> -> vector<4x32xf32>
    %138 = arith.addf %112, %137 : vector<4x32xf32>
    %139 = arith.addf %3, %138 : vector<4x32xf32>
    %c0_56 = arith.constant 0 : index
    %c0_57 = arith.constant 0 : index
    %c0_58 = arith.constant 0 : index
    %140 = vector.load %arg11[%c0_56, %c0_57, %c0_58] : memref<1x1x32xf32, #tpu.memory_space<vmem>>, vector<1x1x32xf32>
    %141 = vector.shape_cast %140 : vector<1x1x32xf32> to vector<1x32xf32>
    %142 = vector.broadcast %141 : vector<1x32xf32> to vector<4x32xf32>
    %143 = arith.addf %139, %142 : vector<4x32xf32>
    %c0_59 = arith.constant 0 : index
    %c0_60 = arith.constant 0 : index
    %c0_61 = arith.constant 0 : index
    %144 = vector.load %arg12[%c0_59, %c0_60, %c0_61] : memref<1x1x32xf32, #tpu.memory_space<vmem>>, vector<1x1x32xf32>
    %145 = vector.shape_cast %144 : vector<1x1x32xf32> to vector<1x32xf32>
    %c0_62 = arith.constant 0 : index
    %c0_63 = arith.constant 0 : index
    %c0_64 = arith.constant 0 : index
    %146 = vector.load %arg13[%c0_62, %c0_63, %c0_64] : memref<1x1x32xf32, #tpu.memory_space<vmem>>, vector<1x1x32xf32>
    %147 = vector.shape_cast %146 : vector<1x1x32xf32> to vector<1x32xf32>
    %cst_65 = arith.constant dense<0.000000e+00> : vector<4xf32>
    %148 = vector.multi_reduction <add>, %143, %cst_65 [1] : vector<4x32xf32> to vector<4xf32>
    %149 = vector.shape_cast %148 : vector<4xf32> to vector<4x1xf32>
    %cst_66 = arith.constant 3.200000e+01 : f32
    %150 = vector.broadcast %cst_66 : f32 to vector<4x1xf32>
    %151 = arith.divf %149, %150 : vector<4x1xf32>
    %152 = vector.broadcast %151 : vector<4x1xf32> to vector<4x32xf32>
    %153 = arith.subf %143, %152 : vector<4x32xf32>
    %154 = arith.mulf %153, %153 : vector<4x32xf32>
    %cst_67 = arith.constant dense<0.000000e+00> : vector<4xf32>
    %155 = vector.multi_reduction <add>, %154, %cst_67 [1] : vector<4x32xf32> to vector<4xf32>
    %156 = vector.shape_cast %155 : vector<4xf32> to vector<4x1xf32>
    %cst_68 = arith.constant 3.200000e+01 : f32
    %157 = vector.broadcast %cst_68 : f32 to vector<4x1xf32>
    %158 = arith.divf %156, %157 : vector<4x1xf32>
    %cst_69 = arith.constant 9.99999974E-6 : f32
    %159 = vector.broadcast %cst_69 : f32 to vector<4x1xf32>
    %160 = arith.addf %158, %159 : vector<4x1xf32>
    %161 = math.rsqrt %160 : vector<4x1xf32>
    %162 = vector.broadcast %161 : vector<4x1xf32> to vector<4x32xf32>
    %163 = arith.mulf %153, %162 : vector<4x32xf32>
    %164 = vector.broadcast %145 : vector<1x32xf32> to vector<4x32xf32>
    %165 = arith.mulf %163, %164 : vector<4x32xf32>
    %166 = vector.broadcast %147 : vector<1x32xf32> to vector<4x32xf32>
    %167 = arith.addf %165, %166 : vector<4x32xf32>
    %c0_70 = arith.constant 0 : index
    %c0_71 = arith.constant 0 : index
    %c0_72 = arith.constant 0 : index
    %168 = vector.load %arg14[%c0_70, %c0_71, %c0_72] : memref<1x32x128xbf16, #tpu.memory_space<vmem>>, vector<1x32x128xbf16>
    %169 = vector.shape_cast %168 : vector<1x32x128xbf16> to vector<32x128xbf16>
    %170 = arith.truncf %167 : vector<4x32xf32> to vector<4x32xbf16>
    %cst_73 = arith.constant dense<0.000000e+00> : vector<4x128xf32>
    %171 = tpu.matmul %170, %169, %cst_73 {dimension_numbers = #tpu.dot_dimension_numbers<[1], [0], [0], [1], [0, 0, 1, 1], [], []>} : vector<4x32xbf16>, vector<32x128xbf16>, vector<4x128xf32> -> vector<4x128xf32>
    %c0_74 = arith.constant 0 : index
    %c0_75 = arith.constant 0 : index
    %c0_76 = arith.constant 0 : index
    %172 = vector.load %arg15[%c0_74, %c0_75, %c0_76] : memref<1x1x128xf32, #tpu.memory_space<vmem>>, vector<1x1x128xf32>
    %173 = vector.shape_cast %172 : vector<1x1x128xf32> to vector<1x128xf32>
    %174 = vector.broadcast %173 : vector<1x128xf32> to vector<4x128xf32>
    %175 = arith.addf %171, %174 : vector<4x128xf32>
    %cst_77 = arith.constant 5.000000e-01 : f32
    %176 = vector.broadcast %cst_77 : f32 to vector<4x128xf32>
    %177 = arith.mulf %176, %175 : vector<4x128xf32>
    %cst_78 = arith.constant 0.707106769 : f32
    %178 = vector.broadcast %cst_78 : f32 to vector<4x128xf32>
    %179 = arith.mulf %175, %178 : vector<4x128xf32>
    %180 = math.erf %179 : vector<4x128xf32>
    %cst_79 = arith.constant 1.000000e+00 : f32
    %181 = vector.broadcast %cst_79 : f32 to vector<4x128xf32>
    %182 = arith.addf %181, %180 : vector<4x128xf32>
    %183 = arith.mulf %177, %182 : vector<4x128xf32>
    %c0_80 = arith.constant 0 : index
    %c0_81 = arith.constant 0 : index
    %c0_82 = arith.constant 0 : index
    %184 = vector.load %arg16[%c0_80, %c0_81, %c0_82] : memref<1x128x32xbf16, #tpu.memory_space<vmem>>, vector<1x128x32xbf16>
    %185 = vector.shape_cast %184 : vector<1x128x32xbf16> to vector<128x32xbf16>
    %186 = arith.truncf %183 : vector<4x128xf32> to vector<4x128xbf16>
    %cst_83 = arith.constant dense<0.000000e+00> : vector<4x32xf32>
    %187 = tpu.matmul %186, %185, %cst_83 {dimension_numbers = #tpu.dot_dimension_numbers<[1], [0], [0], [1], [0, 0, 1, 1], [], []>} : vector<4x128xbf16>, vector<128x32xbf16>, vector<4x32xf32> -> vector<4x32xf32>
    %c0_84 = arith.constant 0 : index
    %c0_85 = arith.constant 0 : index
    %c0_86 = arith.constant 0 : index
    %188 = vector.load %arg17[%c0_84, %c0_85, %c0_86] : memref<1x1x32xf32, #tpu.memory_space<vmem>>, vector<1x1x32xf32>
    %189 = vector.shape_cast %188 : vector<1x1x32xf32> to vector<1x32xf32>
    %190 = vector.broadcast %189 : vector<1x32xf32> to vector<4x32xf32>
    %191 = arith.addf %187, %190 : vector<4x32xf32>
    %192 = arith.addf %143, %191 : vector<4x32xf32>
    %c0_87 = arith.constant 0 : index
    %c0_88 = arith.constant 0 : index
    %c0_89 = arith.constant 0 : index
    %193 = vector.load %arg18[%c0_87, %c0_88, %c0_89] : memref<1x1x32xf32, #tpu.memory_space<vmem>>, vector<1x1x32xf32>
    %194 = vector.shape_cast %193 : vector<1x1x32xf32> to vector<1x32xf32>
    %c0_90 = arith.constant 0 : index
    %c0_91 = arith.constant 0 : index
    %c0_92 = arith.constant 0 : index
    %195 = vector.load %arg19[%c0_90, %c0_91, %c0_92] : memref<1x1x32xf32, #tpu.memory_space<vmem>>, vector<1x1x32xf32>
    %196 = vector.shape_cast %195 : vector<1x1x32xf32> to vector<1x32xf32>
    %cst_93 = arith.constant dense<0.000000e+00> : vector<4xf32>
    %197 = vector.multi_reduction <add>, %192, %cst_93 [1] : vector<4x32xf32> to vector<4xf32>
    %198 = vector.shape_cast %197 : vector<4xf32> to vector<4x1xf32>
    %cst_94 = arith.constant 3.200000e+01 : f32
    %199 = vector.broadcast %cst_94 : f32 to vector<4x1xf32>
    %200 = arith.divf %198, %199 : vector<4x1xf32>
    %201 = vector.broadcast %200 : vector<4x1xf32> to vector<4x32xf32>
    %202 = arith.subf %192, %201 : vector<4x32xf32>
    %203 = arith.mulf %202, %202 : vector<4x32xf32>
    %cst_95 = arith.constant dense<0.000000e+00> : vector<4xf32>
    %204 = vector.multi_reduction <add>, %203, %cst_95 [1] : vector<4x32xf32> to vector<4xf32>
    %205 = vector.shape_cast %204 : vector<4xf32> to vector<4x1xf32>
    %cst_96 = arith.constant 3.200000e+01 : f32
    %206 = vector.broadcast %cst_96 : f32 to vector<4x1xf32>
    %207 = arith.divf %205, %206 : vector<4x1xf32>
    %cst_97 = arith.constant 9.99999974E-6 : f32
    %208 = vector.broadcast %cst_97 : f32 to vector<4x1xf32>
    %209 = arith.addf %207, %208 : vector<4x1xf32>
    %210 = math.rsqrt %209 : vector<4x1xf32>
    %211 = vector.broadcast %210 : vector<4x1xf32> to vector<4x32xf32>
    %212 = arith.mulf %202, %211 : vector<4x32xf32>
    %213 = vector.broadcast %194 : vector<1x32xf32> to vector<4x32xf32>
    %214 = arith.mulf %212, %213 : vector<4x32xf32>
    %215 = vector.broadcast %196 : vector<1x32xf32> to vector<4x32xf32>
    %216 = arith.addf %214, %215 : vector<4x32xf32>
    %c0_98 = arith.constant 0 : index
    %c0_99 = arith.constant 0 : index
    %217 = vector.load %arg21[%c0_98, %c0_99] : memref<4x32xf32, #tpu.memory_space<vmem>>, vector<4x32xf32>
    tpu.vector_store %arg21[%c0_98, %c0_99], %216 {strides = array<i32>} : memref<4x32xf32, #tpu.memory_space<vmem>>, vector<4x32xf32>,
    %c0_100 = arith.constant 0 : index
    %c0_101 = arith.constant 0 : index
    %c0_102 = arith.constant 0 : index
    %218 = vector.load %arg20[%c0_100, %c0_101, %c0_102] : memref<1x4x32xf32, #tpu.memory_space<vmem>>, vector<1x4x32xf32>
    %219 = vector.shape_cast %218 : vector<1x4x32xf32> to vector<4x32xf32>
    %220 = vector.shape_cast %216 : vector<4x32xf32> to vector<1x4x32xf32>
    tpu.vector_store %arg20[%c0_100, %c0_101, %c0_102], %220 {strides = array<i32>} : memref<1x4x32xf32, #tpu.memory_space<vmem>>, vector<1x4x32xf32>,
    return
  }
  func.func @transform_0(%arg0: i32, %arg1: i32) -> (i32, i32, i32) {
    %c0_i32 = arith.constant 0 : i32
    %c0_i32_0 = arith.constant 0 : i32
    %c0_i32_1 = arith.constant 0 : i32
    return %arg0, %c0_i32, %c0_i32_0 : i32, i32, i32
  }
  func.func @transform_1(%arg0: i32, %arg1: i32) -> (i32, i32, i32) {
    %c0_i32 = arith.constant 0 : i32
    %c0_i32_0 = arith.constant 0 : i32
    %c0_i32_1 = arith.constant 0 : i32
    %c0_i32_2 = arith.constant 0 : i32
    return %c0_i32, %c0_i32_0, %c0_i32_1 : i32, i32, i32
  }
  func.func @transform_2(%arg0: i32, %arg1: i32) -> (i32, i32) {
    %c0_i32 = arith.constant 0 : i32
    %c0_i32_0 = arith.constant 0 : i32
    %c0_i32_1 = arith.constant 0 : i32
    return %c0_i32, %c0_i32_0 : i32, i32
  }
  func.func @transform_3(%arg0: i32, %arg1: i32) -> (i32, i32) {
    %c0_i32 = arith.constant 0 : i32
    %c0_i32_0 = arith.constant 0 : i32
    %c0_i32_1 = arith.constant 0 : i32
    return %c0_i32, %c0_i32_0 : i32, i32
  }
  func.func @transform_4(%arg0: i32, %arg1: i32) -> (i32, i32, i32) {
    %c0_i32 = arith.constant 0 : i32
    %c0_i32_0 = arith.constant 0 : i32
    %c0_i32_1 = arith.constant 0 : i32
    return %arg1, %c0_i32, %c0_i32_0 : i32, i32, i32
  }
  func.func @transform_5(%arg0: i32, %arg1: i32) -> (i32, i32, i32) {
    %c0_i32 = arith.constant 0 : i32
    %c0_i32_0 = arith.constant 0 : i32
    %c0_i32_1 = arith.constant 0 : i32
    return %arg1, %c0_i32, %c0_i32_0 : i32, i32, i32
  }
  func.func @transform_6(%arg0: i32, %arg1: i32) -> (i32, i32, i32) {
    %c0_i32 = arith.constant 0 : i32
    %c0_i32_0 = arith.constant 0 : i32
    %c0_i32_1 = arith.constant 0 : i32
    return %arg1, %c0_i32, %c0_i32_0 : i32, i32, i32
  }
  func.func @transform_7(%arg0: i32, %arg1: i32) -> (i32, i32, i32) {
    %c0_i32 = arith.constant 0 : i32
    %c0_i32_0 = arith.constant 0 : i32
    %c0_i32_1 = arith.constant 0 : i32
    return %arg1, %c0_i32, %c0_i32_0 : i32, i32, i32
  }
  func.func @transform_8(%arg0: i32, %arg1: i32) -> (i32, i32, i32, i32) {
    %c0_i32 = arith.constant 0 : i32
    %c0_i32_0 = arith.constant 0 : i32
    %c0_i32_1 = arith.constant 0 : i32
    %c0_i32_2 = arith.constant 0 : i32
    return %arg1, %c0_i32, %c0_i32_0, %c0_i32_1 : i32, i32, i32, i32
  }
  func.func @transform_9(%arg0: i32, %arg1: i32) -> (i32, i32, i32) {
    %c0_i32 = arith.constant 0 : i32
    %c0_i32_0 = arith.constant 0 : i32
    %c0_i32_1 = arith.constant 0 : i32
    return %arg1, %c0_i32, %c0_i32_0 : i32, i32, i32
  }
  func.func @transform_10(%arg0: i32, %arg1: i32) -> (i32, i32, i32) {
    %c0_i32 = arith.constant 0 : i32
    %c0_i32_0 = arith.constant 0 : i32
    %c0_i32_1 = arith.constant 0 : i32
    return %arg1, %c0_i32, %c0_i32_0 : i32, i32, i32
  }
  func.func @transform_11(%arg0: i32, %arg1: i32) -> (i32, i32, i32) {
    %c0_i32 = arith.constant 0 : i32
    %c0_i32_0 = arith.constant 0 : i32
    %c0_i32_1 = arith.constant 0 : i32
    return %arg1, %c0_i32, %c0_i32_0 : i32, i32, i32
  }
  func.func @transform_12(%arg0: i32, %arg1: i32) -> (i32, i32, i32) {
    %c0_i32 = arith.constant 0 : i32
    %c0_i32_0 = arith.constant 0 : i32
    %c0_i32_1 = arith.constant 0 : i32
    return %arg1, %c0_i32, %c0_i32_0 : i32, i32, i32
  }
  func.func @transform_13(%arg0: i32, %arg1: i32) -> (i32, i32, i32) {
    %c0_i32 = arith.constant 0 : i32
    %c0_i32_0 = arith.constant 0 : i32
    %c0_i32_1 = arith.constant 0 : i32
    return %arg1, %c0_i32, %c0_i32_0 : i32, i32, i32
  }
  func.func @transform_14(%arg0: i32, %arg1: i32) -> (i32, i32, i32) {
    %c0_i32 = arith.constant 0 : i32
    %c0_i32_0 = arith.constant 0 : i32
    %c0_i32_1 = arith.constant 0 : i32
    return %arg1, %c0_i32, %c0_i32_0 : i32, i32, i32
  }
  func.func @transform_15(%arg0: i32, %arg1: i32) -> (i32, i32, i32) {
    %c0_i32 = arith.constant 0 : i32
    %c0_i32_0 = arith.constant 0 : i32
    %c0_i32_1 = arith.constant 0 : i32
    return %arg1, %c0_i32, %c0_i32_0 : i32, i32, i32
  }
  func.func @transform_16(%arg0: i32, %arg1: i32) -> (i32, i32, i32) {
    %c0_i32 = arith.constant 0 : i32
    %c0_i32_0 = arith.constant 0 : i32
    %c0_i32_1 = arith.constant 0 : i32
    return %arg1, %c0_i32, %c0_i32_0 : i32, i32, i32
  }
  func.func @transform_17(%arg0: i32, %arg1: i32) -> (i32, i32, i32) {
    %c0_i32 = arith.constant 0 : i32
    %c0_i32_0 = arith.constant 0 : i32
    %c0_i32_1 = arith.constant 0 : i32
    return %arg1, %c0_i32, %c0_i32_0 : i32, i32, i32
  }
  func.func @transform_18(%arg0: i32, %arg1: i32) -> (i32, i32, i32) {
    %c0_i32 = arith.constant 0 : i32
    %c0_i32_0 = arith.constant 0 : i32
    %c0_i32_1 = arith.constant 0 : i32
    return %arg0, %c0_i32, %c0_i32_0 : i32, i32, i32
  }
}

</mosaic_0001>

<llo_original>
// kernel: transformer_csnet_forward.2
$region0: #{transformer_csnet_forward.2}
  #allocation0 [shape = 'u32[]', space=smem, size = 0x4, offset = 0x4, fixed_abs, tag = 'smem constant byte address 0x4 - core index']
  #allocation1 [shape = 'u32[144,128]{1,0:T(1,128)}', space=vmem, size = 0x12000, scoped, tag = 'internal scratch']
  #allocation2 [shape = 'f32[4,32]{1,0:T(4,128)}', space=vmem, size = 0x800, scoped, tag = 'scratch operand']
  %s0 = inlined_call_operand.vmem [shape: f32[2,1,16], index: 0, kind: input, shape index: {}]
  %s1 = inlined_call_operand.vmem [shape: bf16[4,16,32], index: 1, kind: input, shape index: {}]
  %s2 = inlined_call_operand.vmem [shape: f32[4,32], index: 2, kind: input, shape index: {}]
  %s3 = inlined_call_operand.vmem [shape: f32[4,32], index: 3, kind: input, shape index: {}]
  %s4 = inlined_call_operand.vmem [shape: f32[2,1,32], index: 4, kind: input, shape index: {}]
  %s5 = inlined_call_operand.vmem [shape: f32[2,1,32], index: 5, kind: input, shape index: {}]
  %s6 = inlined_call_operand.vmem [shape: bf16[2,32,96], index: 6, kind: input, shape index: {}]
  %s7 = inlined_call_operand.vmem [shape: f32[2,1,96], index: 7, kind: input, shape index: {}]
  %s8 = inlined_call_operand.vmem [shape: bf16[2,4,8,32], index: 8, kind: input, shape index: {}]
  %s9 = inlined_call_operand.vmem [shape: f32[2,1,32], index: 9, kind: input, shape index: {}]
  %s10 = inlined_call_operand.vmem [shape: f32[2,1,32], index: 10, kind: input, shape index: {}]
  %s11 = inlined_call_operand.vmem [shape: f32[2,1,32], index: 11, kind: input, shape index: {}]
  %s12 = inlined_call_operand.vmem [shape: bf16[2,32,128], index: 12, kind: input, shape index: {}]
  %s13 = inlined_call_operand.vmem [shape: f32[2,1,128], index: 13, kind: input, shape index: {}]
  %s14 = inlined_call_operand.vmem [shape: bf16[2,128,32], index: 14, kind: input, shape index: {}]
  %s15 = inlined_call_operand.vmem [shape: f32[2,1,32], index: 15, kind: input, shape index: {}]
  %s16 = inlined_call_operand.vmem [shape: f32[2,1,32], index: 16, kind: input, shape index: {}]
  %s17 = inlined_call_operand.vmem [shape: f32[2,1,32], index: 17, kind: input, shape index: {}]
  %s18 = inlined_call_operand.vmem [shape: f32[2,4,32], index: 18, kind: output, shape index: {}]
  %s19 = sld [smem:[#allocation0]]
  $region109: #{transformer_csnet_forward.2} parent=0
    _
  %s21 = ssub.s32 1, %s19
  %s22 = scalar_select 0, %s21, %s19
  loop: start=0, step=1, limit=6
  $region2: #{transformer_csnet_forward.2} parent=0 // loop_pre_header
    _
  $region3: #{transformer_csnet_forward.2} parent=0 // loop_header
    %s24 = sphi 0, %s28
    %p25 = scmp.ge.s32.totalorder %s24, 6
    %s31 = sphi 0, %s43
    %s32 = sphi 0, %s39
    %s33 = sphi 0, %s31
    %s34 = sphi 0, %s32
    %s35 = sphi 0, %s33
    %s36 = sphi 0, %s34
    %s46 = sphi 0, %s48
    %s49 = sphi 0, %s46
    %s50 = sphi 0, %s49
    %s66 = sphi 0, %s50
    %s70 = sphi 0, %s70
    %s72 = sphi 0, %s70
    %s73 = sphi 0, %s72
    %s87 = sphi 0, %s73
    %s91 = sphi 0, %s91
    %s93 = sphi 0, %s91
    %s94 = sphi 0, %s93
    %s108 = sphi 0, %s94
    %s112 = sphi 0, %s112
    %s114 = sphi 0, %s112
    %s115 = sphi 0, %s114
    %s129 = sphi 0, %s115
    %s135 = sphi 0, %s137
    %s138 = sphi 0, %s135
    %s139 = sphi 0, %s138
    %s155 = sphi 0, %s139
    %s161 = sphi 0, %s163
    %s164 = sphi 0, %s161
    %s165 = sphi 0, %s164
    %s181 = sphi 0, %s165
    %s187 = sphi 0, %s189
    %s190 = sphi 0, %s187
    %s191 = sphi 0, %s190
    %s207 = sphi 0, %s191
    %s213 = sphi 0, %s215
    %s216 = sphi 0, %s213
    %s217 = sphi 0, %s216
    %s233 = sphi 0, %s217
    %s239 = sphi 0, %s241
    %s242 = sphi 0, %s239
    %s243 = sphi 0, %s242
    %s259 = sphi 0, %s243
    %s265 = sphi 0, %s267
    %s268 = sphi 0, %s265
    %s269 = sphi 0, %s268
    %s285 = sphi 0, %s269
    %s291 = sphi 0, %s293
    %s294 = sphi 0, %s291
    %s295 = sphi 0, %s294
    %s311 = sphi 0, %s295
    %s317 = sphi 0, %s319
    %s320 = sphi 0, %s317
    %s321 = sphi 0, %s320
    %s337 = sphi 0, %s321
    %s343 = sphi 0, %s345
    %s346 = sphi 0, %s343
    %s347 = sphi 0, %s346
    %s363 = sphi 0, %s347
    %s369 = sphi 0, %s371
    %s372 = sphi 0, %s369
    %s373 = sphi 0, %s372
    %s389 = sphi 0, %s373
    %s395 = sphi 0, %s397
    %s398 = sphi 0, %s395
    %s399 = sphi 0, %s398
    %s415 = sphi 0, %s399
    %s421 = sphi 0, %s423
    %s424 = sphi 0, %s421
    %s425 = sphi 0, %s424
    %s441 = sphi 0, %s425
    %s447 = sphi 0, %s449
    %s450 = sphi 0, %s447
    %s451 = sphi 0, %s450
    %s467 = sphi 0, %s451
    %s473 = sphi 0, %s475
    %s476 = sphi 0, %s473
    %s477 = sphi 0, %s476
    %s493 = sphi 0, %s477
    %s499 = sphi 0, %s501
    %s502 = sphi 0, %s499
    %s503 = sphi 0, %s502
    %s519 = sphi 0, %s503
  $region4: #{transformer_csnet_forward.2} parent=0 // loop_header_branch
    %27 = sbr.rel (%p25) target = $region8
  $region5: #{transformer_csnet_forward.2} parent=0 // loop_body
    %s29 = ssub.s32 %s24, 1
    %s30 = ssub.s32 %s24, 2
    %s37 = sadd.s32 1, %s32
    %p38 = scmp.ge.s32.totalorder %s37, 2
    %s39 = scalar_select %p38, 0, %s37
    %s40 = sadd.s32 1, %s31
    %s41 = scalar_select %p38, %s40, %s31
    %p42 = scmp.ge.s32.totalorder %s41, 2
    %s43 = scalar_select %p42, 0, %s41
    %s44 = ssub.s32 %s31, %s43
    %p45 = scmp.eq.s32.totalorder %s44, 0
    %s47 = sadd.s32 %s46, 1
    %s48 = scalar_select %p45, %s46, %s47
    %p51 = pneg %p45
    %p52 = scmp.eq.s32.totalorder %s24, 3
    %p53 = por %p51, %p52
    %p54 = scmp.ne.s32.totalorder %s46, %s49
    %p55 = scmp.eq.s32.totalorder %s24, 0
    %p56 = por %p54, %p55
    %p57 = scmp.ne.s32.totalorder %s46, %s49
    %p58 = scmp.eq.s32.totalorder %s29, 3
    %p59 = por %p57, %p58
    %p60 = scmp.ne.s32.totalorder %s49, %s50
    %p61 = scmp.eq.s32.totalorder %s29, 0
    %p62 = por %p60, %p61
    %p63 = scmp.ne.s32.totalorder %s49, %s50
    %p64 = scmp.eq.s32.totalorder %s30, 3
    %p65 = por %p63, %p64
    %p67 = scmp.ne.s32.totalorder %s50, %s66
    %p68 = scmp.eq.s32.totalorder %s30, 0
    %p69 = por %p67, %p68
    %s71 = sadd.s32 %s70, 1
    %p74 = scmp.eq.s32.totalorder %s24, 3
    %p75 = scmp.ne.s32.totalorder %s70, %s72
    %p76 = scmp.eq.s32.totalorder %s24, 0
    %p77 = por %p75, %p76
    %p78 = scmp.ne.s32.totalorder %s70, %s72
    %p79 = scmp.eq.s32.totalorder %s29, 3
    %p80 = por %p78, %p79
    %p81 = scmp.ne.s32.totalorder %s72, %s73
    %p82 = scmp.eq.s32.totalorder %s29, 0
    %p83 = por %p81, %p82
    %p84 = scmp.ne.s32.totalorder %s72, %s73
    %p85 = scmp.eq.s32.totalorder %s30, 3
    %p86 = por %p84, %p85
    %p88 = scmp.ne.s32.totalorder %s73, %s87
    %p89 = scmp.eq.s32.totalorder %s30, 0
    %p90 = por %p88, %p89
    %s92 = sadd.s32 %s91, 1
    %p95 = scmp.eq.s32.totalorder %s24, 3
    %p96 = scmp.ne.s32.totalorder %s91, %s93
    %p97 = scmp.eq.s32.totalorder %s24, 0
    %p98 = por %p96, %p97
    %p99 = scmp.ne.s32.totalorder %s91, %s93
    %p100 = scmp.eq.s32.totalorder %s29, 3
    %p101 = por %p99, %p100
    %p102 = scmp.ne.s32.totalorder %s93, %s94
    %p103 = scmp.eq.s32.totalorder %s29, 0
    %p104 = por %p102, %p103
    %p105 = scmp.ne.s32.totalorder %s93, %s94
    %p106 = scmp.eq.s32.totalorder %s30, 3
    %p107 = por %p105, %p106
    %p109 = scmp.ne.s32.totalorder %s94, %s108
    %p110 = scmp.eq.s32.totalorder %s30, 0
    %p111 = por %p109, %p110
    %s113 = sadd.s32 %s112, 1
    %p116 = scmp.eq.s32.totalorder %s24, 3
    %p117 = scmp.ne.s32.totalorder %s112, %s114
    %p118 = scmp.eq.s32.totalorder %s24, 0
    %p119 = por %p117, %p118
    %p120 = scmp.ne.s32.totalorder %s112, %s114
    %p121 = scmp.eq.s32.totalorder %s29, 3
    %p122 = por %p120, %p121
    %p123 = scmp.ne.s32.totalorder %s114, %s115
    %p124 = scmp.eq.s32.totalorder %s29, 0
    %p125 = por %p123, %p124
    %p126 = scmp.ne.s32.totalorder %s114, %s115
    %p127 = scmp.eq.s32.totalorder %s30, 3
    %p128 = por %p126, %p127
    %p130 = scmp.ne.s32.totalorder %s115, %s129
    %p131 = scmp.eq.s32.totalorder %s30, 0
    %p132 = por %p130, %p131
    %s133 = ssub.s32 %s32, %s39
    %p134 = scmp.eq.s32.totalorder %s133, 0
    %s136 = sadd.s32 %s135, 1
    %s137 = scalar_select %p134, %s135, %s136
    %p140 = pneg %p134
    %p141 = scmp.eq.s32.totalorder %s24, 3
    %p142 = por %p140, %p141
    %p143 = scmp.ne.s32.totalorder %s135, %s138
    %p144 = scmp.eq.s32.totalorder %s24, 0
    %p145 = por %p143, %p144
    %p146 = scmp.ne.s32.totalorder %s135, %s138
    %p147 = scmp.eq.s32.totalorder %s29, 3
    %p148 = por %p146, %p147
    %p149 = scmp.ne.s32.totalorder %s138, %s139
    %p150 = scmp.eq.s32.totalorder %s29, 0
    %p151 = por %p149, %p150
    %p152 = scmp.ne.s32.totalorder %s138, %s139
    %p153 = scmp.eq.s32.totalorder %s30, 3
    %p154 = por %p152, %p153
    %p156 = scmp.ne.s32.totalorder %s139, %s155
    %p157 = scmp.eq.s32.totalorder %s30, 0
    %p158 = por %p156, %p157
    %s159 = ssub.s32 %s32, %s39
    %p160 = scmp.eq.s32.totalorder %s159, 0
    %s162 = sadd.s32 %s161, 1
    %s163 = scalar_select %p160, %s161, %s162
    %p166 = pneg %p160
    %p167 = scmp.eq.s32.totalorder %s24, 3
    %p168 = por %p166, %p167
    %p169 = scmp.ne.s32.totalorder %s161, %s164
    %p170 = scmp.eq.s32.totalorder %s24, 0
    %p171 = por %p169, %p170
    %p172 = scmp.ne.s32.totalorder %s161, %s164
    %p173 = scmp.eq.s32.totalorder %s29, 3
    %p174 = por %p172, %p173
    %p175 = scmp.ne.s32.totalorder %s164, %s165
    %p176 = scmp.eq.s32.totalorder %s29, 0
    %p177 = por %p175, %p176
    %p178 = scmp.ne.s32.totalorder %s164, %s165
    %p179 = scmp.eq.s32.totalorder %s30, 3
    %p180 = por %p178, %p179
    %p182 = scmp.ne.s32.totalorder %s165, %s181
    %p183 = scmp.eq.s32.totalorder %s30, 0
    %p184 = por %p182, %p183
    %s185 = ssub.s32 %s32, %s39
    %p186 = scmp.eq.s32.totalorder %s185, 0
    %s188 = sadd.s32 %s187, 1
    %s189 = scalar_select %p186, %s187, %s188
    %p192 = pneg %p186
    %p193 = scmp.eq.s32.totalorder %s24, 3
    %p194 = por %p192, %p193
    %p195 = scmp.ne.s32.totalorder %s187, %s190
    %p196 = scmp.eq.s32.totalorder %s24, 0
    %p197 = por %p195, %p196
    %p198 = scmp.ne.s32.totalorder %s187, %s190
    %p199 = scmp.eq.s32.totalorder %s29, 3
    %p200 = por %p198, %p199
    %p201 = scmp.ne.s32.totalorder %s190, %s191
    %p202 = scmp.eq.s32.totalorder %s29, 0
    %p203 = por %p201, %p202
    %p204 = scmp.ne.s32.totalorder %s190, %s191
    %p205 = scmp.eq.s32.totalorder %s30, 3
    %p206 = por %p204, %p205
    %p208 = scmp.ne.s32.totalorder %s191, %s207
    %p209 = scmp.eq.s32.totalorder %s30, 0
    %p210 = por %p208, %p209
    %s211 = ssub.s32 %s32, %s39
    %p212 = scmp.eq.s32.totalorder %s211, 0
    %s214 = sadd.s32 %s213, 1
    %s215 = scalar_select %p212, %s213, %s214
    %p218 = pneg %p212
    %p219 = scmp.eq.s32.totalorder %s24, 3
    %p220 = por %p218, %p219
    %p221 = scmp.ne.s32.totalorder %s213, %s216
    %p222 = scmp.eq.s32.totalorder %s24, 0
    %p223 = por %p221, %p222
    %p224 = scmp.ne.s32.totalorder %s213, %s216
    %p225 = scmp.eq.s32.totalorder %s29, 3
    %p226 = por %p224, %p225
    %p227 = scmp.ne.s32.totalorder %s216, %s217
    %p228 = scmp.eq.s32.totalorder %s29, 0
    %p229 = por %p227, %p228
    %p230 = scmp.ne.s32.totalorder %s216, %s217
    %p231 = scmp.eq.s32.totalorder %s30, 3
    %p232 = por %p230, %p231
    %p234 = scmp.ne.s32.totalorder %s217, %s233
    %p235 = scmp.eq.s32.totalorder %s30, 0
    %p236 = por %p234, %p235
    %s237 = ssub.s32 %s32, %s39
    %p238 = scmp.eq.s32.totalorder %s237, 0
    %s240 = sadd.s32 %s239, 1
    %s241 = scalar_select %p238, %s239, %s240
    %p244 = pneg %p238
    %p245 = scmp.eq.s32.totalorder %s24, 3
    %p246 = por %p244, %p245
    %p247 = scmp.ne.s32.totalorder %s239, %s242
    %p248 = scmp.eq.s32.totalorder %s24, 0
    %p249 = por %p247, %p248
    %p250 = scmp.ne.s32.totalorder %s239, %s242
    %p251 = scmp.eq.s32.totalorder %s29, 3
    %p252 = por %p250, %p251
    %p253 = scmp.ne.s32.totalorder %s242, %s243
    %p254 = scmp.eq.s32.totalorder %s29, 0
    %p255 = por %p253, %p254
    %p256 = scmp.ne.s32.totalorder %s242, %s243
    %p257 = scmp.eq.s32.totalorder %s30, 3
    %p258 = por %p256, %p257
    %p260 = scmp.ne.s32.totalorder %s243, %s259
    %p261 = scmp.eq.s32.totalorder %s30, 0
    %p262 = por %p260, %p261
    %s263 = ssub.s32 %s32, %s39
    %p264 = scmp.eq.s32.totalorder %s263, 0
    %s266 = sadd.s32 %s265, 1
    %s267 = scalar_select %p264, %s265, %s266
    %p270 = pneg %p264
    %p271 = scmp.eq.s32.totalorder %s24, 3
    %p272 = por %p270, %p271
    %p273 = scmp.ne.s32.totalorder %s265, %s268
    %p274 = scmp.eq.s32.totalorder %s24, 0
    %p275 = por %p273, %p274
    %p276 = scmp.ne.s32.totalorder %s265, %s268
    %p277 = scmp.eq.s32.totalorder %s29, 3
    %p278 = por %p276, %p277
    %p279 = scmp.ne.s32.totalorder %s268, %s269
    %p280 = scmp.eq.s32.totalorder %s29, 0
    %p281 = por %p279, %p280
    %p282 = scmp.ne.s32.totalorder %s268, %s269
    %p283 = scmp.eq.s32.totalorder %s30, 3
    %p284 = por %p282, %p283
    %p286 = scmp.ne.s32.totalorder %s269, %s285
    %p287 = scmp.eq.s32.totalorder %s30, 0
    %p288 = por %p286, %p287
    %s289 = ssub.s32 %s32, %s39
    %p290 = scmp.eq.s32.totalorder %s289, 0
    %s292 = sadd.s32 %s291, 1
    %s293 = scalar_select %p290, %s291, %s292
    %p296 = pneg %p290
    %p297 = scmp.eq.s32.totalorder %s24, 3
    %p298 = por %p296, %p297
    %p299 = scmp.ne.s32.totalorder %s291, %s294
    %p300 = scmp.eq.s32.totalorder %s24, 0
    %p301 = por %p299, %p300
    %p302 = scmp.ne.s32.totalorder %s291, %s294
    %p303 = scmp.eq.s32.totalorder %s29, 3
    %p304 = por %p302, %p303
    %p305 = scmp.ne.s32.totalorder %s294, %s295
    %p306 = scmp.eq.s32.totalorder %s29, 0
    %p307 = por %p305, %p306
    %p308 = scmp.ne.s32.totalorder %s294, %s295
    %p309 = scmp.eq.s32.totalorder %s30, 3
    %p310 = por %p308, %p309
    %p312 = scmp.ne.s32.totalorder %s295, %s311
    %p313 = scmp.eq.s32.totalorder %s30, 0
    %p314 = por %p312, %p313
    %s315 = ssub.s32 %s32, %s39
    %p316 = scmp.eq.s32.totalorder %s315, 0
    %s318 = sadd.s32 %s317, 1
    %s319 = scalar_select %p316, %s317, %s318
    %p322 = pneg %p316
    %p323 = scmp.eq.s32.totalorder %s24, 3
    %p324 = por %p322, %p323
    %p325 = scmp.ne.s32.totalorder %s317, %s320
    %p326 = scmp.eq.s32.totalorder %s24, 0
    %p327 = por %p325, %p326
    %p328 = scmp.ne.s32.totalorder %s317, %s320
    %p329 = scmp.eq.s32.totalorder %s29, 3
    %p330 = por %p328, %p329
    %p331 = scmp.ne.s32.totalorder %s320, %s321
    %p332 = scmp.eq.s32.totalorder %s29, 0
    %p333 = por %p331, %p332
    %p334 = scmp.ne.s32.totalorder %s320, %s321
    %p335 = scmp.eq.s32.totalorder %s30, 3
    %p336 = por %p334, %p335
    %p338 = scmp.ne.s32.totalorder %s321, %s337
    %p339 = scmp.eq.s32.totalorder %s30, 0
    %p340 = por %p338, %p339
    %s341 = ssub.s32 %s32, %s39
    %p342 = scmp.eq.s32.totalorder %s341, 0
    %s344 = sadd.s32 %s343, 1
    %s345 = scalar_select %p342, %s343, %s344
    %p348 = pneg %p342
    %p349 = scmp.eq.s32.totalorder %s24, 3
    %p350 = por %p348, %p349
    %p351 = scmp.ne.s32.totalorder %s343, %s346
    %p352 = scmp.eq.s32.totalorder %s24, 0
    %p353 = por %p351, %p352
    %p354 = scmp.ne.s32.totalorder %s343, %s346
    %p355 = scmp.eq.s32.totalorder %s29, 3
    %p356 = por %p354, %p355
    %p357 = scmp.ne.s32.totalorder %s346, %s347
    %p358 = scmp.eq.s32.totalorder %s29, 0
    %p359 = por %p357, %p358
    %p360 = scmp.ne.s32.totalorder %s346, %s347
    %p361 = scmp.eq.s32.totalorder %s30, 3
    %p362 = por %p360, %p361
    %p364 = scmp.ne.s32.totalorder %s347, %s363
    %p365 = scmp.eq.s32.totalorder %s30, 0
    %p366 = por %p364, %p365
    %s367 = ssub.s32 %s32, %s39
    %p368 = scmp.eq.s32.totalorder %s367, 0
    %s370 = sadd.s32 %s369, 1
    %s371 = scalar_select %p368, %s369, %s370
    %p374 = pneg %p368
    %p375 = scmp.eq.s32.totalorder %s24, 3
    %p376 = por %p374, %p375
    %p377 = scmp.ne.s32.totalorder %s369, %s372
    %p378 = scmp.eq.s32.totalorder %s24, 0
    %p379 = por %p377, %p378
    %p380 = scmp.ne.s32.totalorder %s369, %s372
    %p381 = scmp.eq.s32.totalorder %s29, 3
    %p382 = por %p380, %p381
    %p383 = scmp.ne.s32.totalorder %s372, %s373
    %p384 = scmp.eq.s32.totalorder %s29, 0
    %p385 = por %p383, %p384
    %p386 = scmp.ne.s32.totalorder %s372, %s373
    %p387 = scmp.eq.s32.totalorder %s30, 3
    %p388 = por %p386, %p387
    %p390 = scmp.ne.s32.totalorder %s373, %s389
    %p391 = scmp.eq.s32.totalorder %s30, 0
    %p392 = por %p390, %p391
    %s393 = ssub.s32 %s32, %s39
    %p394 = scmp.eq.s32.totalorder %s393, 0
    %s396 = sadd.s32 %s395, 1
    %s397 = scalar_select %p394, %s395, %s396
    %p400 = pneg %p394
    %p401 = scmp.eq.s32.totalorder %s24, 3
    %p402 = por %p400, %p401
    %p403 = scmp.ne.s32.totalorder %s395, %s398
    %p404 = scmp.eq.s32.totalorder %s24, 0
    %p405 = por %p403, %p404
    %p406 = scmp.ne.s32.totalorder %s395, %s398
    %p407 = scmp.eq.s32.totalorder %s29, 3
    %p408 = por %p406, %p407
    %p409 = scmp.ne.s32.totalorder %s398, %s399
    %p410 = scmp.eq.s32.totalorder %s29, 0
    %p411 = por %p409, %p410
    %p412 = scmp.ne.s32.totalorder %s398, %s399
    %p413 = scmp.eq.s32.totalorder %s30, 3
    %p414 = por %p412, %p413
    %p416 = scmp.ne.s32.totalorder %s399, %s415
    %p417 = scmp.eq.s32.totalorder %s30, 0
    %p418 = por %p416, %p417
    %s419 = ssub.s32 %s32, %s39
    %p420 = scmp.eq.s32.totalorder %s419, 0
    %s422 = sadd.s32 %s421, 1
    %s423 = scalar_select %p420, %s421, %s422
    %p426 = pneg %p420
    %p427 = scmp.eq.s32.totalorder %s24, 3
    %p428 = por %p426, %p427
    %p429 = scmp.ne.s32.totalorder %s421, %s424
    %p430 = scmp.eq.s32.totalorder %s24, 0
    %p431 = por %p429, %p430
    %p432 = scmp.ne.s32.totalorder %s421, %s424
    %p433 = scmp.eq.s32.totalorder %s29, 3
    %p434 = por %p432, %p433
    %p435 = scmp.ne.s32.totalorder %s424, %s425
    %p436 = scmp.eq.s32.totalorder %s29, 0
    %p437 = por %p435, %p436
    %p438 = scmp.ne.s32.totalorder %s424, %s425
    %p439 = scmp.eq.s32.totalorder %s30, 3
    %p440 = por %p438, %p439
    %p442 = scmp.ne.s32.totalorder %s425, %s441
    %p443 = scmp.eq.s32.totalorder %s30, 0
    %p444 = por %p442, %p443
    %s445 = ssub.s32 %s32, %s39
    %p446 = scmp.eq.s32.totalorder %s445, 0
    %s448 = sadd.s32 %s447, 1
    %s449 = scalar_select %p446, %s447, %s448
    %p452 = pneg %p446
    %p453 = scmp.eq.s32.totalorder %s24, 3
    %p454 = por %p452, %p453
    %p455 = scmp.ne.s32.totalorder %s447, %s450
    %p456 = scmp.eq.s32.totalorder %s24, 0
    %p457 = por %p455, %p456
    %p458 = scmp.ne.s32.totalorder %s447, %s450
    %p459 = scmp.eq.s32.totalorder %s29, 3
    %p460 = por %p458, %p459
    %p461 = scmp.ne.s32.totalorder %s450, %s451
    %p462 = scmp.eq.s32.totalorder %s29, 0
    %p463 = por %p461, %p462
    %p464 = scmp.ne.s32.totalorder %s450, %s451
    %p465 = scmp.eq.s32.totalorder %s30, 3
    %p466 = por %p464, %p465
    %p468 = scmp.ne.s32.totalorder %s451, %s467
    %p469 = scmp.eq.s32.totalorder %s30, 0
    %p470 = por %p468, %p469
    %s471 = ssub.s32 %s32, %s39
    %p472 = scmp.eq.s32.totalorder %s471, 0
    %s474 = sadd.s32 %s473, 1
    %s475 = scalar_select %p472, %s473, %s474
    %p478 = pneg %p472
    %p479 = scmp.eq.s32.totalorder %s24, 3
    %p480 = por %p478, %p479
    %p481 = scmp.ne.s32.totalorder %s473, %s476
    %p482 = scmp.eq.s32.totalorder %s24, 0
    %p483 = por %p481, %p482
    %p484 = scmp.ne.s32.totalorder %s473, %s476
    %p485 = scmp.eq.s32.totalorder %s29, 3
    %p486 = por %p484, %p485
    %p487 = scmp.ne.s32.totalorder %s476, %s477
    %p488 = scmp.eq.s32.totalorder %s29, 0
    %p489 = por %p487, %p488
    %p490 = scmp.ne.s32.totalorder %s476, %s477
    %p491 = scmp.eq.s32.totalorder %s30, 3
    %p492 = por %p490, %p491
    %p494 = scmp.ne.s32.totalorder %s477, %s493
    %p495 = scmp.eq.s32.totalorder %s30, 0
    %p496 = por %p494, %p495
    %s497 = ssub.s32 %s31, %s43
    %p498 = scmp.eq.s32.totalorder %s497, 0
    %s500 = sadd.s32 %s499, 1
    %s501 = scalar_select %p498, %s499, %s500
    %p504 = pneg %p498
    %p505 = scmp.eq.s32.totalorder %s24, 3
    %p506 = por %p504, %p505
    %p507 = scmp.ne.s32.totalorder %s499, %s502
    %p508 = scmp.eq.s32.totalorder %s24, 0
    %p509 = por %p507, %p508
    %p510 = scmp.ne.s32.totalorder %s499, %s502
    %p511 = scmp.eq.s32.totalorder %s29, 3
    %p512 = por %p510, %p511
    %p513 = scmp.ne.s32.totalorder %s502, %s503
    %p514 = scmp.eq.s32.totalorder %s29, 0
    %p515 = por %p513, %p514
    %p516 = scmp.ne.s32.totalorder %s502, %s503
    %p517 = scmp.eq.s32.totalorder %s30, 3
    %p518 = por %p516, %p517
    %p520 = scmp.ne.s32.totalorder %s503, %s519
    %p521 = scmp.eq.s32.totalorder %s30, 0
    %p522 = por %p520, %p521
    %p523 = scmp.le.s32.totalorder 1, %s24
    %p524 = scmp.lt.s32.totalorder %s24, 5
    %p525 = pnand %p523, %p524
    %p526 = pneg %p525
    // Predicated region
    $region9: #{transformer_csnet_forward.2} parent=5 // pred_check
      _
    $region10: #{transformer_csnet_forward.2} parent=5 // pred_check_branch
      %528 = sbr.rel (%p525) target = $region12
    $region11: #{transformer_csnet_forward.2} parent=5 // pred_region
      %s529 = ssub.s32 %s24, 1
      // Predicated region
      $region13: #{transformer_csnet_forward.2} parent=11 // pred_check
        %p530 = pneg %p83
      $region14: #{transformer_csnet_forward.2} parent=11 // pred_check_branch
        %532 = sbr.rel (%p530) target = $region16
      $region15: #{transformer_csnet_forward.2} parent=11 // pred_region
        _
      $region16: #{transformer_csnet_forward.2} parent=11 // pred_fallthru
        _
      // Predicated region
      $region17: #{transformer_csnet_forward.2} parent=11 // pred_check
        %p533 = pneg %p104
      $region18: #{transformer_csnet_forward.2} parent=11 // pred_check_branch
        %535 = sbr.rel (%p533) target = $region20
      $region19: #{transformer_csnet_forward.2} parent=11 // pred_region
        _
      $region20: #{transformer_csnet_forward.2} parent=11 // pred_fallthru
        _
      // Predicated region
      $region21: #{transformer_csnet_forward.2} parent=11 // pred_check
        %p536 = pneg %p125
      $region22: #{transformer_csnet_forward.2} parent=11 // pred_check_branch
        %538 = sbr.rel (%p536) target = $region24
      $region23: #{transformer_csnet_forward.2} parent=11 // pred_region
        _
      $region24: #{transformer_csnet_forward.2} parent=11 // pred_fallthru
        _
    $region12: #{transformer_csnet_forward.2} parent=5 // pred_fallthru
      _
    %p539 = scmp.lt.s32.totalorder %s24, 4
    // Predicated region
    $region25: #{transformer_csnet_forward.2} parent=5 // pred_check
      %p540 = pneg %p539
    $region26: #{transformer_csnet_forward.2} parent=5 // pred_check_branch
      %542 = sbr.rel (%p540) target = $region28
    $region27: #{transformer_csnet_forward.2} parent=5 // pred_region
      // Predicated region
      $region29: #{transformer_csnet_forward.2} parent=27 // pred_check
        %p543 = pneg %p56
      $region30: #{transformer_csnet_forward.2} parent=27 // pred_check_branch
        %545 = sbr.rel (%p543) target = $region32
      $region31: #{transformer_csnet_forward.2} parent=27 // pred_region
        %p546 = scmp.lt.s32.totalorder %s31, 1
        %s547 = scalar_select %p546, %s31, 1
        %s548 = scalar_lea.vmem %s0, %s547
      $region32: #{transformer_csnet_forward.2} parent=27 // pred_fallthru
        _
      // Predicated region
      $region33: #{transformer_csnet_forward.2} parent=27 // pred_check
        %p549 = pneg %p145
      $region34: #{transformer_csnet_forward.2} parent=27 // pred_check_branch
        %551 = sbr.rel (%p549) target = $region36
      $region35: #{transformer_csnet_forward.2} parent=27 // pred_region
        %p552 = scmp.lt.s32.totalorder %s32, 1
        %s553 = scalar_select %p552, %s32, 1
        %s554 = scalar_lea.vmem %s4, %s553
      $region36: #{transformer_csnet_forward.2} parent=27 // pred_fallthru
        _
      // Predicated region
      $region37: #{transformer_csnet_forward.2} parent=27 // pred_check
        %p555 = pneg %p171
      $region38: #{transformer_csnet_forward.2} parent=27 // pred_check_branch
        %557 = sbr.rel (%p555) target = $region40
      $region39: #{transformer_csnet_forward.2} parent=27 // pred_region
        %p558 = scmp.lt.s32.totalorder %s32, 1
        %s559 = scalar_select %p558, %s32, 1
        %s560 = scalar_lea.vmem %s5, %s559
      $region40: #{transformer_csnet_forward.2} parent=27 // pred_fallthru
        _
      // Predicated region
      $region41: #{transformer_csnet_forward.2} parent=27 // pred_check
        %p561 = pneg %p197
      $region42: #{transformer_csnet_forward.2} parent=27 // pred_check_branch
        %563 = sbr.rel (%p561) target = $region44
      $region43: #{transformer_csnet_forward.2} parent=27 // pred_region
        %p564 = scmp.lt.s32.totalorder %s32, 1
        %s565 = scalar_select %p564, %s32, 1
        %s566 = smul.addr %s565, 4
        %s567 = smul.addr %s566, 4
        %s568 = scalar_lea.vmem %s6, %s567
      $region44: #{transformer_csnet_forward.2} parent=27 // pred_fallthru
        _
      // Predicated region
      $region45: #{transformer_csnet_forward.2} parent=27 // pred_check
        %p569 = pneg %p223
      $region46: #{transformer_csnet_forward.2} parent=27 // pred_check_branch
        %571 = sbr.rel (%p569) target = $region48
      $region47: #{transformer_csnet_forward.2} parent=27 // pred_region
        %p572 = scmp.lt.s32.totalorder %s32, 1
        %s573 = scalar_select %p572, %s32, 1
        %s574 = scalar_lea.vmem %s7, %s573
      $region48: #{transformer_csnet_forward.2} parent=27 // pred_fallthru
        _
      // Predicated region
      $region49: #{transformer_csnet_forward.2} parent=27 // pred_check
        %p575 = pneg %p249
      $region50: #{transformer_csnet_forward.2} parent=27 // pred_check_branch
        %577 = sbr.rel (%p575) target = $region52
      $region51: #{transformer_csnet_forward.2} parent=27 // pred_region
        %p578 = scmp.lt.s32.totalorder %s32, 1
        %s579 = scalar_select %p578, %s32, 1
        %s580 = smul.addr %s579, 4
        %s581 = smul.addr %s580, 4
        %s582 = scalar_lea.vmem %s8, %s581
      $region52: #{transformer_csnet_forward.2} parent=27 // pred_fallthru
        _
      // Predicated region
      $region53: #{transformer_csnet_forward.2} parent=27 // pred_check
        %p583 = pneg %p275
      $region54: #{transformer_csnet_forward.2} parent=27 // pred_check_branch
        %585 = sbr.rel (%p583) target = $region56
      $region55: #{transformer_csnet_forward.2} parent=27 // pred_region
        %p586 = scmp.lt.s32.totalorder %s32, 1
        %s587 = scalar_select %p586, %s32, 1
        %s588 = scalar_lea.vmem %s9, %s587
      $region56: #{transformer_csnet_forward.2} parent=27 // pred_fallthru
        _
      // Predicated region
      $region57: #{transformer_csnet_forward.2} parent=27 // pred_check
        %p589 = pneg %p301
      $region58: #{transformer_csnet_forward.2} parent=27 // pred_check_branch
        %591 = sbr.rel (%p589) target = $region60
      $region59: #{transformer_csnet_forward.2} parent=27 // pred_region
        %p592 = scmp.lt.s32.totalorder %s32, 1
        %s593 = scalar_select %p592, %s32, 1
        %s594 = scalar_lea.vmem %s10, %s593
      $region60: #{transformer_csnet_forward.2} parent=27 // pred_fallthru
        _
      // Predicated region
      $region61: #{transformer_csnet_forward.2} parent=27 // pred_check
        %p595 = pneg %p327
      $region62: #{transformer_csnet_forward.2} parent=27 // pred_check_branch
        %597 = sbr.rel (%p595) target = $region64
      $region63: #{transformer_csnet_forward.2} parent=27 // pred_region
        %p598 = scmp.lt.s32.totalorder %s32, 1
        %s599 = scalar_select %p598, %s32, 1
        %s600 = scalar_lea.vmem %s11, %s599
      $region64: #{transformer_csnet_forward.2} parent=27 // pred_fallthru
        _
      // Predicated region
      $region65: #{transformer_csnet_forward.2} parent=27 // pred_check
        %p601 = pneg %p353
      $region66: #{transformer_csnet_forward.2} parent=27 // pred_check_branch
        %603 = sbr.rel (%p601) target = $region68
      $region67: #{transformer_csnet_forward.2} parent=27 // pred_region
        %p604 = scmp.lt.s32.totalorder %s32, 1
        %s605 = scalar_select %p604, %s32, 1
        %s606 = smul.addr %s605, 4
        %s607 = smul.addr %s606, 4
        %s608 = scalar_lea.vmem %s12, %s607
      $region68: #{transformer_csnet_forward.2} parent=27 // pred_fallthru
        _
      // Predicated region
      $region69: #{transformer_csnet_forward.2} parent=27 // pred_check
        %p609 = pneg %p379
      $region70: #{transformer_csnet_forward.2} parent=27 // pred_check_branch
        %611 = sbr.rel (%p609) target = $region72
      $region71: #{transformer_csnet_forward.2} parent=27 // pred_region
        %p612 = scmp.lt.s32.totalorder %s32, 1
        %s613 = scalar_select %p612, %s32, 1
        %s614 = scalar_lea.vmem %s13, %s613
      $region72: #{transformer_csnet_forward.2} parent=27 // pred_fallthru
        _
      // Predicated region
      $region73: #{transformer_csnet_forward.2} parent=27 // pred_check
        %p615 = pneg %p405
      $region74: #{transformer_csnet_forward.2} parent=27 // pred_check_branch
        %617 = sbr.rel (%p615) target = $region76
      $region75: #{transformer_csnet_forward.2} parent=27 // pred_region
        %p618 = scmp.lt.s32.totalorder %s32, 1
        %s619 = scalar_select %p618, %s32, 1
        %s620 = smul.addr %s619, 16
        %s621 = smul.addr %s620, 4
        %s622 = scalar_lea.vmem %s14, %s621
      $region76: #{transformer_csnet_forward.2} parent=27 // pred_fallthru
        _
      // Predicated region
      $region77: #{transformer_csnet_forward.2} parent=27 // pred_check
        %p623 = pneg %p431
      $region78: #{transformer_csnet_forward.2} parent=27 // pred_check_branch
        %625 = sbr.rel (%p623) target = $region80
      $region79: #{transformer_csnet_forward.2} parent=27 // pred_region
        %p626 = scmp.lt.s32.totalorder %s32, 1
        %s627 = scalar_select %p626, %s32, 1
        %s628 = scalar_lea.vmem %s15, %s627
      $region80: #{transformer_csnet_forward.2} parent=27 // pred_fallthru
        _
      // Predicated region
      $region81: #{transformer_csnet_forward.2} parent=27 // pred_check
        %p629 = pneg %p457
      $region82: #{transformer_csnet_forward.2} parent=27 // pred_check_branch
        %631 = sbr.rel (%p629) target = $region84
      $region83: #{transformer_csnet_forward.2} parent=27 // pred_region
        %p632 = scmp.lt.s32.totalorder %s32, 1
        %s633 = scalar_select %p632, %s32, 1
        %s634 = scalar_lea.vmem %s16, %s633
      $region84: #{transformer_csnet_forward.2} parent=27 // pred_fallthru
        _
      // Predicated region
      $region85: #{transformer_csnet_forward.2} parent=27 // pred_check
        %p635 = pneg %p483
      $region86: #{transformer_csnet_forward.2} parent=27 // pred_check_branch
        %637 = sbr.rel (%p635) target = $region88
      $region87: #{transformer_csnet_forward.2} parent=27 // pred_region
        %p638 = scmp.lt.s32.totalorder %s32, 1
        %s639 = scalar_select %p638, %s32, 1
        %s640 = scalar_lea.vmem %s17, %s639
      $region88: #{transformer_csnet_forward.2} parent=27 // pred_fallthru
        _
    $region28: #{transformer_csnet_forward.2} parent=5 // pred_fallthru
      _
    %p641 = scmp.le.s32.totalorder 1, %s24
    %p642 = scmp.lt.s32.totalorder %s24, 5
    %p643 = pnand %p641, %p642
    %p644 = pneg %p643
    // Predicated region
    $region89: #{transformer_csnet_forward.2} parent=5 // pred_check
      _
    $region90: #{transformer_csnet_forward.2} parent=5 // pred_check_branch
      %646 = sbr.rel (%p643) target = $region92
    $region91: #{transformer_csnet_forward.2} parent=5 // pred_region
      %s647 = ssub.s32 %s24, 1
      %p648 = scmp.lt.s32.totalorder %s33, 1
      %s649 = scalar_select %p648, %s33, 1
      %s650 = scalar_lea.vmem %s0, %s649
      %p651 = pneg %p62
      %p652 = pneg %p59
      %p653 = pneg %p83
      %p654 = pneg %p80
      %p655 = pneg %p104
      %p656 = pneg %p101
      %p657 = pneg %p125
      %p658 = pneg %p122
      %p659 = scmp.lt.s32.totalorder %s34, 1
      %s660 = scalar_select %p659, %s34, 1
      %s661 = scalar_lea.vmem %s4, %s660
      %p662 = pneg %p151
      %p663 = pneg %p148
      %p664 = scmp.lt.s32.totalorder %s34, 1
      %s665 = scalar_select %p664, %s34, 1
      %s666 = scalar_lea.vmem %s5, %s665
      %p667 = pneg %p177
      %p668 = pneg %p174
      %p669 = scmp.lt.s32.totalorder %s34, 1
      %s670 = scalar_select %p669, %s34, 1
      %s671 = smul.addr %s670, 4
      %s672 = smul.addr %s671, 4
      %s673 = scalar_lea.vmem %s6, %s672
      %p674 = pneg %p203
      %p675 = pneg %p200
      %p676 = scmp.lt.s32.totalorder %s34, 1
      %s677 = scalar_select %p676, %s34, 1
      %s678 = scalar_lea.vmem %s7, %s677
      %p679 = pneg %p229
      %p680 = pneg %p226
      %p681 = scmp.lt.s32.totalorder %s34, 1
      %s682 = scalar_select %p681, %s34, 1
      %s683 = smul.addr %s682, 4
      %s684 = smul.addr %s683, 4
      %s685 = scalar_lea.vmem %s8, %s684
      %p686 = pneg %p255
      %p687 = pneg %p252
      %p688 = scmp.lt.s32.totalorder %s34, 1
      %s689 = scalar_select %p688, %s34, 1
      %s690 = scalar_lea.vmem %s9, %s689
      %p691 = pneg %p281
      %p692 = pneg %p278
      %p693 = scmp.lt.s32.totalorder %s34, 1
      %s694 = scalar_select %p693, %s34, 1
      %s695 = scalar_lea.vmem %s10, %s694
      %p696 = pneg %p307
      %p697 = pneg %p304
      %p698 = scmp.lt.s32.totalorder %s34, 1
      %s699 = scalar_select %p698, %s34, 1
      %s700 = scalar_lea.vmem %s11, %s699
      %p701 = pneg %p333
      %p702 = pneg %p330
      %p703 = scmp.lt.s32.totalorder %s34, 1
      %s704 = scalar_select %p703, %s34, 1
      %s705 = smul.addr %s704, 4
      %s706 = smul.addr %s705, 4
      %s707 = scalar_lea.vmem %s12, %s706
      %p708 = pneg %p359
      %p709 = pneg %p356
      %p710 = scmp.lt.s32.totalorder %s34, 1
      %s711 = scalar_select %p710, %s34, 1
      %s712 = scalar_lea.vmem %s13, %s711
      %p713 = pneg %p385
      %p714 = pneg %p382
      %p715 = scmp.lt.s32.totalorder %s34, 1
      %s716 = scalar_select %p715, %s34, 1
      %s717 = smul.addr %s716, 16
      %s718 = smul.addr %s717, 4
      %s719 = scalar_lea.vmem %s14, %s718
      %p720 = pneg %p411
      %p721 = pneg %p408
      %p722 = scmp.lt.s32.totalorder %s34, 1
      %s723 = scalar_select %p722, %s34, 1
      %s724 = scalar_lea.vmem %s15, %s723
      %p725 = pneg %p437
      %p726 = pneg %p434
      %p727 = scmp.lt.s32.totalorder %s34, 1
      %s728 = scalar_select %p727, %s34, 1
      %s729 = scalar_lea.vmem %s16, %s728
      %p730 = pneg %p463
      %p731 = pneg %p460
      %p732 = scmp.lt.s32.totalorder %s34, 1
      %s733 = scalar_select %p732, %s34, 1
      %s734 = scalar_lea.vmem %s17, %s733
      %p735 = pneg %p489
      %p736 = pneg %p486
      %p737 = pneg %p515
      %p738 = pneg %p512
      %p739 = scmp.lt.s32.totalorder %s33, 1
      %s740 = scalar_select %p739, %s33, 1
      %s741 = smul.addr %s740, 4
      %s742 = scalar_lea.vmem %s18, %s741
      %p743 = scmp.lt.s32.totalorder %s33, 1
      %s744 = scalar_select %p743, %s33, 1
      %s745 = scalar_lea.vmem %s0, %s744
      %p746 = scmp.lt.s32.totalorder %s34, 1
      %s747 = scalar_select %p746, %s34, 1
      %s748 = scalar_lea.vmem %s4, %s747
      %p749 = scmp.lt.s32.totalorder %s34, 1
      %s750 = scalar_select %p749, %s34, 1
      %s751 = scalar_lea.vmem %s5, %s750
      %p752 = scmp.lt.s32.totalorder %s34, 1
      %s753 = scalar_select %p752, %s34, 1
      %s754 = smul.addr %s753, 4
      %s755 = smul.addr %s754, 4
      %s756 = scalar_lea.vmem %s6, %s755
      %p757 = scmp.lt.s32.totalorder %s34, 1
      %s758 = scalar_select %p757, %s34, 1
      %s759 = scalar_lea.vmem %s7, %s758
      %p760 = scmp.lt.s32.totalorder %s34, 1
      %s761 = scalar_select %p760, %s34, 1
      %s762 = smul.addr %s761, 4
      %s763 = smul.addr %s762, 4
      %s764 = scalar_lea.vmem %s8, %s763
      %p765 = scmp.lt.s32.totalorder %s34, 1
      %s766 = scalar_select %p765, %s34, 1
      %s767 = scalar_lea.vmem %s9, %s766
      %p768 = scmp.lt.s32.totalorder %s34, 1
      %s769 = scalar_select %p768, %s34, 1
      %s770 = scalar_lea.vmem %s10, %s769
      %p771 = scmp.lt.s32.totalorder %s34, 1
      %s772 = scalar_select %p771, %s34, 1
      %s773 = scalar_lea.vmem %s11, %s772
      %p774 = scmp.lt.s32.totalorder %s34, 1
      %s775 = scalar_select %p774, %s34, 1
      %s776 = smul.addr %s775, 4
      %s777 = smul.addr %s776, 4
      %s778 = scalar_lea.vmem %s12, %s777
      %p779 = scmp.lt.s32.totalorder %s34, 1
      %s780 = scalar_select %p779, %s34, 1
      %s781 = scalar_lea.vmem %s13, %s780
      %p782 = scmp.lt.s32.totalorder %s34, 1
      %s783 = scalar_select %p782, %s34, 1
      %s784 = smul.addr %s783, 16
      %s785 = smul.addr %s784, 4
      %s786 = scalar_lea.vmem %s14, %s785
      %p787 = scmp.lt.s32.totalorder %s34, 1
      %s788 = scalar_select %p787, %s34, 1
      %s789 = scalar_lea.vmem %s15, %s788
      %p790 = scmp.lt.s32.totalorder %s34, 1
      %s791 = scalar_select %p790, %s34, 1
      %s792 = scalar_lea.vmem %s16, %s791
      %p793 = scmp.lt.s32.totalorder %s34, 1
      %s794 = scalar_select %p793, %s34, 1
      %s795 = scalar_lea.vmem %s17, %s794
      %p796 = scmp.lt.s32.totalorder %s33, 1
      %s797 = scalar_select %p796, %s33, 1
      %s798 = smul.addr %s797, 4
      %s799 = scalar_lea.vmem %s18, %s798
      %p801 = scmp.eq.s32.totalorder %s34, 0
      // Predicated region
      $region93: #{transformer_csnet_forward.2} parent=91 // pred_check
        %p802 = pneg %p801
      $region94: #{transformer_csnet_forward.2} parent=91 // pred_check_branch
        %804 = sbr.rel (%p802) target = $region96
      $region95: #{transformer_csnet_forward.2} parent=91 // pred_region
        %v805 = vld [vmem:[%s745] sm:$0x1]
        %v806 = vld [vmem:[%s1] sm:$0xf]
        %v807 = vld [vmem:[%s1 + $0x4] sm:$0xf]
        %v808 = vpack.c.bf16 %v805, %v805
        %v811 = vunpack.c.l.b16 %v806
        %v812 = vunpack.c.l.b16 %v807
        %v813 = vpack.c.b16 %v812, %v811
        %vm815 = vcmask 130048
        %v817 = vsel %vm815, %v808, 0
        %819 = vmatprep.subr.bf16.mxu0 0
        %820 = vmatpush1.bf16.msra.mxu0 0
        %821 = vmatprep.subr.bf16.mxu0 0
        %822 = vmatpush1.bf16.msra.mxu0 0
        %823 = vmatprep.subr.bf16.mxu0 0
        %824 = vmatpush1.bf16.msra.mxu0 0
        %825 = vmatprep.subr.bf16.mxu0 0
        %826 = vmatpush1.bf16.msra.mxu0 0
        %827 = vmatprep.subr.bf16.mxu0 0
        %828 = vmatpush1.bf16.msra.mxu0 0
        %829 = vmatprep.subr.bf16.mxu0 0
        %830 = vmatpush1.bf16.msra.mxu0 0
        %831 = vmatprep.subr.bf16.mxu0 0
        %832 = vmatpush1.bf16.msra.mxu0 0
        %833 = vmatprep.subr.bf16.mxu0 0
        %834 = vmatpush1.bf16.msra.mxu0 %v813
        %835 = vmatprep.subr.bf16.mxu0 0
        %836 = vmatpush2.bf16.msra.mxu0 0
        %837 = vmatprep.subr.bf16.mxu0 0
        %838 = vmatpush2.bf16.msra.mxu0 0
        %839 = vmatprep.subr.bf16.mxu0 0
        %840 = vmatpush2.bf16.msra.mxu0 0
        %841 = vmatprep.subr.bf16.mxu0 0
        %842 = vmatpush2.bf16.msra.mxu0 0
        %843 = vmatprep.subr.bf16.mxu0 0
        %844 = vmatpush2.bf16.msra.mxu0 0
        %845 = vmatprep.subr.bf16.mxu0 0
        %846 = vmatpush2.bf16.msra.mxu0 0
        %847 = vmatprep.subr.bf16.mxu0 0
        %848 = vmatpush2.bf16.msra.mxu0 0
        %849 = vmatprep.subr.bf16.mxu0 0
        %850 = vmatpush2.bf16.msra.mxu0 0
        %851 = vmatprep.mubr.bf16.mxu0 0
        %852 = vmatmul.mubr.bf16.gmra.mxu0 %v817
        %v853 = vpop.f32.mrf.mxu0
        %v854 = vadd.f32 0.0, %v853
        %v855 = vpop.f32.mrf.mxu0
        %v856 = vpop.f32.mrf.mxu0
        %v857 = vpop.f32.mrf.mxu0
        %858 = vdwg.mxu0
        %s859 = scalar_lea.vmem %s1, 8
        %v860 = vld [vmem:[%s859] sm:$0xf]
        %v861 = vld [vmem:[%s859 + $0x4] sm:$0xf]
        %v864 = vunpack.c.l.b16 %v860
        %v865 = vunpack.c.l.b16 %v861
        %v866 = vpack.c.b16 %v865, %v864
        %868 = vmatprep.subr.bf16.mxu0 0
        %869 = vmatpush1.bf16.msra.mxu0 0
        %870 = vmatprep.subr.bf16.mxu0 0
        %871 = vmatpush1.bf16.msra.mxu0 0
        %872 = vmatprep.subr.bf16.mxu0 0
        %873 = vmatpush1.bf16.msra.mxu0 0
        %874 = vmatprep.subr.bf16.mxu0 0
        %875 = vmatpush1.bf16.msra.mxu0 0
        %876 = vmatprep.subr.bf16.mxu0 0
        %877 = vmatpush1.bf16.msra.mxu0 0
        %878 = vmatprep.subr.bf16.mxu0 0
        %879 = vmatpush1.bf16.msra.mxu0 0
        %880 = vmatprep.subr.bf16.mxu0 0
        %881 = vmatpush1.bf16.msra.mxu0 0
        %882 = vmatprep.subr.bf16.mxu0 0
        %883 = vmatpush1.bf16.msra.mxu0 %v866
        %884 = vmatprep.subr.bf16.mxu0 0
        %885 = vmatpush2.bf16.msra.mxu0 0
        %886 = vmatprep.subr.bf16.mxu0 0
        %887 = vmatpush2.bf16.msra.mxu0 0
        %888 = vmatprep.subr.bf16.mxu0 0
        %889 = vmatpush2.bf16.msra.mxu0 0
        %890 = vmatprep.subr.bf16.mxu0 0
        %891 = vmatpush2.bf16.msra.mxu0 0
        %892 = vmatprep.subr.bf16.mxu0 0
        %893 = vmatpush2.bf16.msra.mxu0 0
        %894 = vmatprep.subr.bf16.mxu0 0
        %895 = vmatpush2.bf16.msra.mxu0 0
        %896 = vmatprep.subr.bf16.mxu0 0
        %897 = vmatpush2.bf16.msra.mxu0 0
        %898 = vmatprep.subr.bf16.mxu0 0
        %899 = vmatpush2.bf16.msra.mxu0 0
        %900 = vmatprep.mubr.bf16.mxu0 0
        %901 = vmatmul.mubr.bf16.gmra.mxu0 %v817
        %v902 = vpop.f32.mrf.mxu0
        %v903 = vadd.f32 0.0, %v902
        %v904 = vpop.f32.mrf.mxu0
        %v905 = vpop.f32.mrf.mxu0
        %v906 = vpop.f32.mrf.mxu0
        %907 = vdwg.mxu0
        %s908 = scalar_lea.vmem %s1, 16
        %v909 = vld [vmem:[%s908] sm:$0xf]
        %v910 = vld [vmem:[%s908 + $0x4] sm:$0xf]
        %v913 = vunpack.c.l.b16 %v909
        %v914 = vunpack.c.l.b16 %v910
        %v915 = vpack.c.b16 %v914, %v913
        %917 = vmatprep.subr.bf16.mxu0 0
        %918 = vmatpush1.bf16.msra.mxu0 0
        %919 = vmatprep.subr.bf16.mxu0 0
        %920 = vmatpush1.bf16.msra.mxu0 0
        %921 = vmatprep.subr.bf16.mxu0 0
        %922 = vmatpush1.bf16.msra.mxu0 0
        %923 = vmatprep.subr.bf16.mxu0 0
        %924 = vmatpush1.bf16.msra.mxu0 0
        %925 = vmatprep.subr.bf16.mxu0 0
        %926 = vmatpush1.bf16.msra.mxu0 0
        %927 = vmatprep.subr.bf16.mxu0 0
        %928 = vmatpush1.bf16.msra.mxu0 0
        %929 = vmatprep.subr.bf16.mxu0 0
        %930 = vmatpush1.bf16.msra.mxu0 0
        %931 = vmatprep.subr.bf16.mxu0 0
        %932 = vmatpush1.bf16.msra.mxu0 %v915
        %933 = vmatprep.subr.bf16.mxu0 0
        %934 = vmatpush2.bf16.msra.mxu0 0
        %935 = vmatprep.subr.bf16.mxu0 0
        %936 = vmatpush2.bf16.msra.mxu0 0
        %937 = vmatprep.subr.bf16.mxu0 0
        %938 = vmatpush2.bf16.msra.mxu0 0
        %939 = vmatprep.subr.bf16.mxu0 0
        %940 = vmatpush2.bf16.msra.mxu0 0
        %941 = vmatprep.subr.bf16.mxu0 0
        %942 = vmatpush2.bf16.msra.mxu0 0
        %943 = vmatprep.subr.bf16.mxu0 0
        %944 = vmatpush2.bf16.msra.mxu0 0
        %945 = vmatprep.subr.bf16.mxu0 0
        %946 = vmatpush2.bf16.msra.mxu0 0
        %947 = vmatprep.subr.bf16.mxu0 0
        %948 = vmatpush2.bf16.msra.mxu0 0
        %949 = vmatprep.mubr.bf16.mxu0 0
        %950 = vmatmul.mubr.bf16.gmra.mxu0 %v817
        %v951 = vpop.f32.mrf.mxu0
        %v952 = vadd.f32 0.0, %v951
        %v953 = vpop.f32.mrf.mxu0
        %v954 = vpop.f32.mrf.mxu0
        %v955 = vpop.f32.mrf.mxu0
        %956 = vdwg.mxu0
        %s957 = scalar_lea.vmem %s1, 24
        %v958 = vld [vmem:[%s957] sm:$0xf]
        %v959 = vld [vmem:[%s957 + $0x4] sm:$0xf]
        %v962 = vunpack.c.l.b16 %v958
        %v963 = vunpack.c.l.b16 %v959
        %v964 = vpack.c.b16 %v963, %v962
        %966 = vmatprep.subr.bf16.mxu0 0
        %967 = vmatpush1.bf16.msra.mxu0 0
        %968 = vmatprep.subr.bf16.mxu0 0
        %969 = vmatpush1.bf16.msra.mxu0 0
        %970 = vmatprep.subr.bf16.mxu0 0
        %971 = vmatpush1.bf16.msra.mxu0 0
        %972 = vmatprep.subr.bf16.mxu0 0
        %973 = vmatpush1.bf16.msra.mxu0 0
        %974 = vmatprep.subr.bf16.mxu0 0
        %975 = vmatpush1.bf16.msra.mxu0 0
        %976 = vmatprep.subr.bf16.mxu0 0
        %977 = vmatpush1.bf16.msra.mxu0 0
        %978 = vmatprep.subr.bf16.mxu0 0
        %979 = vmatpush1.bf16.msra.mxu0 0
        %980 = vmatprep.subr.bf16.mxu0 0
        %981 = vmatpush1.bf16.msra.mxu0 %v964
        %982 = vmatprep.subr.bf16.mxu0 0
        %983 = vmatpush2.bf16.msra.mxu0 0
        %984 = vmatprep.subr.bf16.mxu0 0
        %985 = vmatpush2.bf16.msra.mxu0 0
        %986 = vmatprep.subr.bf16.mxu0 0
        %987 = vmatpush2.bf16.msra.mxu0 0
        %988 = vmatprep.subr.bf16.mxu0 0
        %989 = vmatpush2.bf16.msra.mxu0 0
        %990 = vmatprep.subr.bf16.mxu0 0
        %991 = vmatpush2.bf16.msra.mxu0 0
        %992 = vmatprep.subr.bf16.mxu0 0
        %993 = vmatpush2.bf16.msra.mxu0 0
        %994 = vmatprep.subr.bf16.mxu0 0
        %995 = vmatpush2.bf16.msra.mxu0 0
        %996 = vmatprep.subr.bf16.mxu0 0
        %997 = vmatpush2.bf16.msra.mxu0 0
        %998 = vmatprep.mubr.bf16.mxu0 0
        %999 = vmatmul.mubr.bf16.gmra.mxu0 %v817
        %v1000 = vpop.f32.mrf.mxu0
        %v1001 = vadd.f32 0.0, %v1000
        %v1002 = vpop.f32.mrf.mxu0
        %v1003 = vpop.f32.mrf.mxu0
        %v1004 = vpop.f32.mrf.mxu0
        %1005 = vdwg.mxu0
        %v1007 = vrot.slane %v903, 7
        %v1010 = vrot.slane %v952, 6
        %v1013 = vrot.slane %v1001, 5
        %vm1015 = vcmask 1040384
        %v1016 = vsel %vm1015, %v854, %v1007
        %vm1017 = vcmask 1041408
        %v1018 = vsel %vm1017, %v1016, %v1010
        %vm1019 = vcmask 1042432
        %v1020 = vsel %vm1019, %v1018, %v1013
        %v1021 = vld [vmem:[%s2] sm:$0xf]
        %v1022 = vadd.f32 %v1020, %v1021
        %v1023 = vld [vmem:[%s3] sm:$0xf]
        %v1024 = vadd.f32 %v1022, %v1023
        %vm1025 = vcmask 257024
        %1026 = vst.msk [vmem:[#allocation2] sm:$0xf] %vm1025, %v1024
      $region96: #{transformer_csnet_forward.2} parent=91 // pred_fallthru
        _
      %v1027 = vld [vmem:[#allocation2] sm:$0xf]
      %v1028 = vld [vmem:[%s748] sm:$0x1]
      %v1029 = vld [vmem:[%s751] sm:$0x1]
      %vm1030 = vcmask 257024
      %v1031 = vsel %vm1030, %v1027, 0.0
      %1032 = vadd.xlane.f32.xlu0 %v1031
      %v1033 = vpop.xlane.xlu0 %1032
      %v1034 = vrcp.pop 32.0
      %v1035 = vmul.f32 %v1033, %v1034
      %v1036 = vsub.f32 %v1027, %v1035
      %v1037 = vmul.f32 %v1036, %v1036
      %v1038 = vsel %vm1030, %v1037, 0.0
      %1039 = vadd.xlane.f32.xlu0 %v1038
      %v1040 = vpop.xlane.xlu0 %1039
      %v1041 = vmul.f32 %v1040, %v1034
      %v1042 = vadd.f32 %v1041, 1e-05
      %v1043 = vrsqrt.pop %v1042
      %v1044 = vmul.f32 %v1036, %v1043
      %v1046 = vlaneseq
      %v1047 = vshrl.u32 %v1046, 7
      %v1048 = vsub.s32 0, %v1047
      %v1049 = vrot.slane %v1028, %v1048
      %v1051 = vmul.f32 %v1044, %v1049
      %v1053 = vlaneseq
      %v1054 = vshrl.u32 %v1053, 7
      %v1055 = vsub.s32 0, %v1054
      %v1056 = vrot.slane %v1029, %v1055
      %v1058 = vadd.f32 %v1051, %v1056
      %v1059 = vld [vmem:[%s756] sm:$0xf]
      %v1060 = vld [vmem:[%s756 + $0x4] sm:$0xf]
      %v1061 = vld [vmem:[%s756 + $0x8] sm:$0xf]
      %v1062 = vld [vmem:[%s756 + $0xc] sm:$0xf]
      %v1063 = vpack.c.bf16 %v1058, %v1058
      %v1064 = vld [vmem:[%s759] sm:$0x1]
      %v1066 = vlaneseq
      %v1067 = vshrl.u32 %v1066, 7
      %v1068 = vsub.s32 0, %v1067
      %v1069 = vrot.slane %v1064, %v1068
      %v1075 = vunpack.c.l.b16 %v1059
      %v1076 = vunpack.c.l.b16 %v1060
      %v1077 = vunpack.c.l.b16 %v1061
      %v1078 = vunpack.c.l.b16 %v1062
      %v1079 = vpack.c.b16 %v1076, %v1075
      %v1080 = vpack.c.b16 %v1078, %v1077
      %vm1083 = vcmask 261120
      %v1085 = vsel %vm1083, %v1063, 0
      %1087 = vmatprep.subr.bf16.mxu0 0
      %1088 = vmatpush1.bf16.msra.mxu0 0
      %1089 = vmatprep.subr.bf16.mxu0 0
      %1090 = vmatpush1.bf16.msra.mxu0 0
      %1091 = vmatprep.subr.bf16.mxu0 0
      %1092 = vmatpush1.bf16.msra.mxu0 0
      %1093 = vmatprep.subr.bf16.mxu0 0
      %1094 = vmatpush1.bf16.msra.mxu0 0
      %1095 = vmatprep.subr.bf16.mxu0 0
      %1096 = vmatpush1.bf16.msra.mxu0 0
      %1097 = vmatprep.subr.bf16.mxu0 0
      %1098 = vmatpush1.bf16.msra.mxu0 0
      %1099 = vmatprep.subr.bf16.mxu0 0
      %1100 = vmatpush1.bf16.msra.mxu0 %v1080
      %1101 = vmatprep.subr.bf16.mxu0 0
      %1102 = vmatpush1.bf16.msra.mxu0 %v1079
      %1103 = vmatprep.subr.bf16.mxu0 0
      %1104 = vmatpush2.bf16.msra.mxu0 0
      %1105 = vmatprep.subr.bf16.mxu0 0
      %1106 = vmatpush2.bf16.msra.mxu0 0
      %1107 = vmatprep.subr.bf16.mxu0 0
      %1108 = vmatpush2.bf16.msra.mxu0 0
      %1109 = vmatprep.subr.bf16.mxu0 0
      %1110 = vmatpush2.bf16.msra.mxu0 0
      %1111 = vmatprep.subr.bf16.mxu0 0
      %1112 = vmatpush2.bf16.msra.mxu0 0
      %1113 = vmatprep.subr.bf16.mxu0 0
      %1114 = vmatpush2.bf16.msra.mxu0 0
      %1115 = vmatprep.subr.bf16.mxu0 0
      %1116 = vmatpush2.bf16.msra.mxu0 0
      %1117 = vmatprep.subr.bf16.mxu0 0
      %1118 = vmatpush2.bf16.msra.mxu0 0
      %1119 = vmatprep.mubr.bf16.mxu0 0
      %1120 = vmatmul.mubr.bf16.gmra.mxu0 %v1085
      %v1121 = vpop.f32.mrf.mxu0
      %v1122 = vadd.f32 %v1069, %v1121
      %v1123 = vpop.f32.mrf.mxu0
      %v1124 = vpop.f32.mrf.mxu0
      %v1125 = vpop.f32.mrf.mxu0
      %1126 = vdwg.mxu0
      %v1127 = vpack.c.bf16 %v1122, %v1122
      %1129 = vrot.lane.b32.xlu0 %v1127, 96
      %v1130 = vpop.permute.xlu0 %1129
      %vm1131 = vcmask 64512
      %v1133 = vsel %vm1131, %v1127, 0
      %v1136 = vsel %vm1131, %v1130, 0
      %1138 = vmatprep.subr.bf16.mxu0 0
      %1139 = vmatpush1.bf16.xpose.msra.mxu0 0
      %1140 = vmatprep.subr.bf16.mxu0 0
      %1141 = vmatpush1.bf16.xpose.msra.mxu0 0
      %1142 = vmatprep.subr.bf16.mxu0 0
      %1143 = vmatpush1.bf16.xpose.msra.mxu0 0
      %1144 = vmatprep.subr.bf16.mxu0 0
      %1145 = vmatpush1.bf16.xpose.msra.mxu0 0
      %1146 = vmatprep.subr.bf16.mxu0 0
      %1147 = vmatpush1.bf16.xpose.msra.mxu0 0
      %1148 = vmatprep.subr.bf16.mxu0 0
      %1149 = vmatpush1.bf16.xpose.msra.mxu0 0
      %1150 = vmatprep.subr.bf16.mxu0 0
      %1151 = vmatpush1.bf16.xpose.msra.mxu0 0
      %1152 = vmatprep.subr.bf16.mxu0 0
      %1153 = vmatpush1.bf16.xpose.msra.mxu0 %v1136
      %1154 = vmatprep.subr.bf16.mxu0 0
      %1155 = vmatpush2.bf16.xpose.msra.mxu0 0
      %1156 = vmatprep.subr.bf16.mxu0 0
      %1157 = vmatpush2.bf16.xpose.msra.mxu0 0
      %1158 = vmatprep.subr.bf16.mxu0 0
      %1159 = vmatpush2.bf16.xpose.msra.mxu0 0
      %1160 = vmatprep.subr.bf16.mxu0 0
      %1161 = vmatpush2.bf16.xpose.msra.mxu0 0
      %1162 = vmatprep.subr.bf16.mxu0 0
      %1163 = vmatpush2.bf16.xpose.msra.mxu0 0
      %1164 = vmatprep.subr.bf16.mxu0 0
      %1165 = vmatpush2.bf16.xpose.msra.mxu0 0
      %1166 = vmatprep.subr.bf16.mxu0 0
      %1167 = vmatpush2.bf16.xpose.msra.mxu0 0
      %1168 = vmatprep.subr.bf16.mxu0 0
      %1169 = vmatpush2.bf16.xpose.msra.mxu0 0
      %1170 = vmatprep.mubr.bf16.mxu0 0
      %1171 = vmatmul.mubr.bf16.gmra.mxu0 %v1133
      %v1172 = vpop.f32.mrf.mxu0
      %v1173 = vadd.f32 0.0, %v1172
      %v1174 = vpop.f32.mrf.mxu0
      %v1175 = vpop.f32.mrf.mxu0
      %v1176 = vpop.f32.mrf.mxu0
      %1177 = vdwg.mxu0
      %v1178 = vmul.f32 %v1173, 0.35355338
      %vm1179 = vcmask 27648
      %v1180 = vsel %vm1179, %v1178, -inf
      %1181 = vmax.xlane.f32.xlu0 %v1180
      %v1182 = vpop.xlane.xlu0 %1181
      %v1183 = vsub.f32 %v1178, %v1182
      %v1184 = vmul.f32 %v1183, 1.442695
      %v1185 = vpow.pop %v1184
      %v1186 = vsel %vm1179, %v1185, 0.0
      %1187 = vadd.xlane.f32.xlu0 %v1186
      %v1188 = vpop.xlane.xlu0 %1187
      %v1189 = vrcp.pop %v1188
      %v1190 = vmul.f32 %v1185, %v1189
      %v1191 = vpack.c.bf16 %v1190, %v1190
      %1192 = vrot.lane.b32.xlu0 %v1127, 64
      %v1193 = vpop.permute.xlu0 %1192
      %vm1194 = vcmask 31744
      %v1196 = vsel %vm1194, %v1191, 0
      %vm1198 = vcmask 1041408
      %v1200 = vsel %vm1198, %v1193, 0
      %1202 = vmatprep.subr.bf16.mxu0 0
      %1203 = vmatpush1.bf16.msra.mxu0 0
      %1204 = vmatprep.subr.bf16.mxu0 0
      %1205 = vmatpush1.bf16.msra.mxu0 0
      %1206 = vmatprep.subr.bf16.mxu0 0
      %1207 = vmatpush1.bf16.msra.mxu0 0
      %1208 = vmatprep.subr.bf16.mxu0 0
      %1209 = vmatpush1.bf16.msra.mxu0 0
      %1210 = vmatprep.subr.bf16.mxu0 0
      %1211 = vmatpush1.bf16.msra.mxu0 0
      %1212 = vmatprep.subr.bf16.mxu0 0
      %1213 = vmatpush1.bf16.msra.mxu0 0
      %1214 = vmatprep.subr.bf16.mxu0 0
      %1215 = vmatpush1.bf16.msra.mxu0 0
      %1216 = vmatprep.subr.bf16.mxu0 0
      %1217 = vmatpush1.bf16.msra.mxu0 %v1200
      %1218 = vmatprep.subr.bf16.mxu0 0
      %1219 = vmatpush2.bf16.msra.mxu0 0
      %1220 = vmatprep.subr.bf16.mxu0 0
      %1221 = vmatpush2.bf16.msra.mxu0 0
      %1222 = vmatprep.subr.bf16.mxu0 0
      %1223 = vmatpush2.bf16.msra.mxu0 0
      %1224 = vmatprep.subr.bf16.mxu0 0
      %1225 = vmatpush2.bf16.msra.mxu0 0
      %1226 = vmatprep.subr.bf16.mxu0 0
      %1227 = vmatpush2.bf16.msra.mxu0 0
      %1228 = vmatprep.subr.bf16.mxu0 0
      %1229 = vmatpush2.bf16.msra.mxu0 0
      %1230 = vmatprep.subr.bf16.mxu0 0
      %1231 = vmatpush2.bf16.msra.mxu0 0
      %1232 = vmatprep.subr.bf16.mxu0 0
      %1233 = vmatpush2.bf16.msra.mxu0 0
      %1234 = vmatprep.mubr.bf16.mxu0 0
      %1235 = vmatmul.mubr.bf16.gmra.mxu0 %v1196
      %v1236 = vpop.f32.mrf.mxu0
      %v1237 = vadd.f32 0.0, %v1236
      %v1238 = vpop.f32.mrf.mxu0
      %v1239 = vpop.f32.mrf.mxu0
      %v1240 = vpop.f32.mrf.mxu0
      %1241 = vdwg.mxu0
      %v1242 = vld [vmem:[%s764] sm:$0xf]
      %v1243 = vpack.c.bf16 %v1237, %v1237
      %1244 = vrot.lane.b32.xlu0 %v1127, 120
      %v1245 = vpop.permute.xlu0 %1244
      %1246 = vrot.lane.b32.xlu0 %v1127, 88
      %v1247 = vpop.permute.xlu0 %1246
      %v1249 = vsel %vm1131, %v1245, 0
      %v1252 = vsel %vm1131, %v1247, 0
      %1254 = vmatprep.subr.bf16.mxu0 0
      %1255 = vmatpush1.bf16.xpose.msra.mxu0 0
      %1256 = vmatprep.subr.bf16.mxu0 0
      %1257 = vmatpush1.bf16.xpose.msra.mxu0 0
      %1258 = vmatprep.subr.bf16.mxu0 0
      %1259 = vmatpush1.bf16.xpose.msra.mxu0 0
      %1260 = vmatprep.subr.bf16.mxu0 0
      %1261 = vmatpush1.bf16.xpose.msra.mxu0 0
      %1262 = vmatprep.subr.bf16.mxu0 0
      %1263 = vmatpush1.bf16.xpose.msra.mxu0 0
      %1264 = vmatprep.subr.bf16.mxu0 0
      %1265 = vmatpush1.bf16.xpose.msra.mxu0 0
      %1266 = vmatprep.subr.bf16.mxu0 0
      %1267 = vmatpush1.bf16.xpose.msra.mxu0 0
      %1268 = vmatprep.subr.bf16.mxu0 0
      %1269 = vmatpush1.bf16.xpose.msra.mxu0 %v1252
      %1270 = vmatprep.subr.bf16.mxu0 0
      %1271 = vmatpush2.bf16.xpose.msra.mxu0 0
      %1272 = vmatprep.subr.bf16.mxu0 0
      %1273 = vmatpush2.bf16.xpose.msra.mxu0 0
      %1274 = vmatprep.subr.bf16.mxu0 0
      %1275 = vmatpush2.bf16.xpose.msra.mxu0 0
      %1276 = vmatprep.subr.bf16.mxu0 0
      %1277 = vmatpush2.bf16.xpose.msra.mxu0 0
      %1278 = vmatprep.subr.bf16.mxu0 0
      %1279 = vmatpush2.bf16.xpose.msra.mxu0 0
      %1280 = vmatprep.subr.bf16.mxu0 0
      %1281 = vmatpush2.bf16.xpose.msra.mxu0 0
      %1282 = vmatprep.subr.bf16.mxu0 0
      %1283 = vmatpush2.bf16.xpose.msra.mxu0 0
      %1284 = vmatprep.subr.bf16.mxu0 0
      %1285 = vmatpush2.bf16.xpose.msra.mxu0 0
      %1286 = vmatprep.mubr.bf16.mxu0 0
      %1287 = vmatmul.mubr.bf16.gmra.mxu0 %v1249
      %v1288 = vpop.f32.mrf.mxu0
      %v1289 = vadd.f32 0.0, %v1288
      %v1290 = vpop.f32.mrf.mxu0
      %v1291 = vpop.f32.mrf.mxu0
      %v1292 = vpop.f32.mrf.mxu0
      %1293 = vdwg.mxu0
      %v1294 = vmul.f32 %v1289, 0.35355338
      %v1295 = vsel %vm1179, %v1294, -inf
      %1296 = vmax.xlane.f32.xlu0 %v1295
      %v1297 = vpop.xlane.xlu0 %1296
      %v1298 = vsub.f32 %v1294, %v1297
      %v1299 = vmul.f32 %v1298, 1.442695
      %v1300 = vpow.pop %v1299
      %v1301 = vsel %vm1179, %v1300, 0.0
      %1302 = vadd.xlane.f32.xlu0 %v1301
      %v1303 = vpop.xlane.xlu0 %1302
      %v1304 = vrcp.pop %v1303
      %v1305 = vmul.f32 %v1300, %v1304
      %v1306 = vpack.c.bf16 %v1305, %v1305
      %1307 = vrot.lane.b32.xlu0 %v1127, 56
      %v1308 = vpop.permute.xlu0 %1307
      %v1310 = vsel %vm1194, %v1306, 0
      %v1313 = vsel %vm1198, %v1308, 0
      %1315 = vmatprep.subr.bf16.mxu0 0
      %1316 = vmatpush1.bf16.msra.mxu0 0
      %1317 = vmatprep.subr.bf16.mxu0 0
      %1318 = vmatpush1.bf16.msra.mxu0 0
      %1319 = vmatprep.subr.bf16.mxu0 0
      %1320 = vmatpush1.bf16.msra.mxu0 0
      %1321 = vmatprep.subr.bf16.mxu0 0
      %1322 = vmatpush1.bf16.msra.mxu0 0
      %1323 = vmatprep.subr.bf16.mxu0 0
      %1324 = vmatpush1.bf16.msra.mxu0 0
      %1325 = vmatprep.subr.bf16.mxu0 0
      %1326 = vmatpush1.bf16.msra.mxu0 0
      %1327 = vmatprep.subr.bf16.mxu0 0
      %1328 = vmatpush1.bf16.msra.mxu0 0
      %1329 = vmatprep.subr.bf16.mxu0 0
      %1330 = vmatpush1.bf16.msra.mxu0 %v1313
      %1331 = vmatprep.subr.bf16.mxu0 0
      %1332 = vmatpush2.bf16.msra.mxu0 0
      %1333 = vmatprep.subr.bf16.mxu0 0
      %1334 = vmatpush2.bf16.msra.mxu0 0
      %1335 = vmatprep.subr.bf16.mxu0 0
      %1336 = vmatpush2.bf16.msra.mxu0 0
      %1337 = vmatprep.subr.bf16.mxu0 0
      %1338 = vmatpush2.bf16.msra.mxu0 0
      %1339 = vmatprep.subr.bf16.mxu0 0
      %1340 = vmatpush2.bf16.msra.mxu0 0
      %1341 = vmatprep.subr.bf16.mxu0 0
      %1342 = vmatpush2.bf16.msra.mxu0 0
      %1343 = vmatprep.subr.bf16.mxu0 0
      %1344 = vmatpush2.bf16.msra.mxu0 0
      %1345 = vmatprep.subr.bf16.mxu0 0
      %1346 = vmatpush2.bf16.msra.mxu0 0
      %1347 = vmatprep.mubr.bf16.mxu0 0
      %1348 = vmatmul.mubr.bf16.gmra.mxu0 %v1310
      %v1349 = vpop.f32.mrf.mxu0
      %v1350 = vadd.f32 0.0, %v1349
      %v1351 = vpop.f32.mrf.mxu0
      %v1352 = vpop.f32.mrf.mxu0
      %v1353 = vpop.f32.mrf.mxu0
      %1354 = vdwg.mxu0
      %s1355 = scalar_lea.vmem %s764, 4
      %v1356 = vld [vmem:[%s1355] sm:$0xf]
      %v1357 = vpack.c.bf16 %v1350, %v1350
      %v1359 = vsel %vm1131, %v1357, 0
      %vm1361 = vcmask 1043456
      %v1363 = vsel %vm1361, %v1356, 0
      %1365 = vmatprep.subr.bf16.mxu0 0
      %1366 = vmatpush1.bf16.msra.mxu0 0
      %1367 = vmatprep.subr.bf16.mxu0 0
      %1368 = vmatpush1.bf16.msra.mxu0 0
      %1369 = vmatprep.subr.bf16.mxu0 0
      %1370 = vmatpush1.bf16.msra.mxu0 0
      %1371 = vmatprep.subr.bf16.mxu0 0
      %1372 = vmatpush1.bf16.msra.mxu0 0
      %1373 = vmatprep.subr.bf16.mxu0 0
      %1374 = vmatpush1.bf16.msra.mxu0 0
      %1375 = vmatprep.subr.bf16.mxu0 0
      %1376 = vmatpush1.bf16.msra.mxu0 0
      %1377 = vmatprep.subr.bf16.mxu0 0
      %1378 = vmatpush1.bf16.msra.mxu0 0
      %1379 = vmatprep.subr.bf16.mxu0 0
      %1380 = vmatpush1.bf16.msra.mxu0 %v1363
      %1381 = vmatprep.subr.bf16.mxu0 0
      %1382 = vmatpush2.bf16.msra.mxu0 0
      %1383 = vmatprep.subr.bf16.mxu0 0
      %1384 = vmatpush2.bf16.msra.mxu0 0
      %1385 = vmatprep.subr.bf16.mxu0 0
      %1386 = vmatpush2.bf16.msra.mxu0 0
      %1387 = vmatprep.subr.bf16.mxu0 0
      %1388 = vmatpush2.bf16.msra.mxu0 0
      %1389 = vmatprep.subr.bf16.mxu0 0
      %1390 = vmatpush2.bf16.msra.mxu0 0
      %1391 = vmatprep.subr.bf16.mxu0 0
      %1392 = vmatpush2.bf16.msra.mxu0 0
      %1393 = vmatprep.subr.bf16.mxu0 0
      %1394 = vmatpush2.bf16.msra.mxu0 0
      %1395 = vmatprep.subr.bf16.mxu0 0
      %1396 = vmatpush2.bf16.msra.mxu0 0
      %1397 = vmatprep.mubr.bf16.mxu0 0
      %1398 = vmatmul.mubr.bf16.gmra.mxu0 %v1359
      %v1399 = vpop.f32.mrf.mxu0
      %v1400 = vadd.f32 0.0, %v1399
      %v1401 = vpop.f32.mrf.mxu0
      %v1402 = vpop.f32.mrf.mxu0
      %v1403 = vpop.f32.mrf.mxu0
      %1404 = vdwg.mxu0
      %v1406 = vsel %vm1131, %v1243, 0
      %v1409 = vsel %vm1361, %v1242, 0
      %1411 = vmatprep.subr.bf16.mxu0 0
      %1412 = vmatpush1.bf16.msra.mxu0 0
      %1413 = vmatprep.subr.bf16.mxu0 0
      %1414 = vmatpush1.bf16.msra.mxu0 0
      %1415 = vmatprep.subr.bf16.mxu0 0
      %1416 = vmatpush1.bf16.msra.mxu0 0
      %1417 = vmatprep.subr.bf16.mxu0 0
      %1418 = vmatpush1.bf16.msra.mxu0 0
      %1419 = vmatprep.subr.bf16.mxu0 0
      %1420 = vmatpush1.bf16.msra.mxu0 0
      %1421 = vmatprep.subr.bf16.mxu0 0
      %1422 = vmatpush1.bf16.msra.mxu0 0
      %1423 = vmatprep.subr.bf16.mxu0 0
      %1424 = vmatpush1.bf16.msra.mxu0 0
      %1425 = vmatprep.subr.bf16.mxu0 0
      %1426 = vmatpush1.bf16.msra.mxu0 %v1409
      %1427 = vmatprep.subr.bf16.mxu0 0
      %1428 = vmatpush2.bf16.msra.mxu0 0
      %1429 = vmatprep.subr.bf16.mxu0 0
      %1430 = vmatpush2.bf16.msra.mxu0 0
      %1431 = vmatprep.subr.bf16.mxu0 0
      %1432 = vmatpush2.bf16.msra.mxu0 0
      %1433 = vmatprep.subr.bf16.mxu0 0
      %1434 = vmatpush2.bf16.msra.mxu0 0
      %1435 = vmatprep.subr.bf16.mxu0 0
      %1436 = vmatpush2.bf16.msra.mxu0 0
      %1437 = vmatprep.subr.bf16.mxu0 0
      %1438 = vmatpush2.bf16.msra.mxu0 0
      %1439 = vmatprep.subr.bf16.mxu0 0
      %1440 = vmatpush2.bf16.msra.mxu0 0
      %1441 = vmatprep.subr.bf16.mxu0 0
      %1442 = vmatpush2.bf16.msra.mxu0 0
      %1443 = vmatprep.mubr.bf16.mxu0 0
      %1444 = vmatmul.mubr.bf16.gmra.mxu0 %v1406
      %v1445 = vpop.f32.mrf.mxu0
      %v1446 = vadd.f32 %v1400, %v1445
      %v1447 = vpop.f32.mrf.mxu0
      %v1448 = vpop.f32.mrf.mxu0
      %v1449 = vpop.f32.mrf.mxu0
      %1450 = vdwg.mxu0
      %1451 = vrot.lane.b32.xlu0 %v1127, 112
      %v1452 = vpop.permute.xlu0 %1451
      %1453 = vrot.lane.b32.xlu0 %v1127, 80
      %v1454 = vpop.permute.xlu0 %1453
      %v1456 = vsel %vm1131, %v1452, 0
      %v1459 = vsel %vm1131, %v1454, 0
      %1461 = vmatprep.subr.bf16.mxu0 0
      %1462 = vmatpush1.bf16.xpose.msra.mxu0 0
      %1463 = vmatprep.subr.bf16.mxu0 0
      %1464 = vmatpush1.bf16.xpose.msra.mxu0 0
      %1465 = vmatprep.subr.bf16.mxu0 0
      %1466 = vmatpush1.bf16.xpose.msra.mxu0 0
      %1467 = vmatprep.subr.bf16.mxu0 0
      %1468 = vmatpush1.bf16.xpose.msra.mxu0 0
      %1469 = vmatprep.subr.bf16.mxu0 0
      %1470 = vmatpush1.bf16.xpose.msra.mxu0 0
      %1471 = vmatprep.subr.bf16.mxu0 0
      %1472 = vmatpush1.bf16.xpose.msra.mxu0 0
      %1473 = vmatprep.subr.bf16.mxu0 0
      %1474 = vmatpush1.bf16.xpose.msra.mxu0 0
      %1475 = vmatprep.subr.bf16.mxu0 0
      %1476 = vmatpush1.bf16.xpose.msra.mxu0 %v1459
      %1477 = vmatprep.subr.bf16.mxu0 0
      %1478 = vmatpush2.bf16.xpose.msra.mxu0 0
      %1479 = vmatprep.subr.bf16.mxu0 0
      %1480 = vmatpush2.bf16.xpose.msra.mxu0 0
      %1481 = vmatprep.subr.bf16.mxu0 0
      %1482 = vmatpush2.bf16.xpose.msra.mxu0 0
      %1483 = vmatprep.subr.bf16.mxu0 0
      %1484 = vmatpush2.bf16.xpose.msra.mxu0 0
      %1485 = vmatprep.subr.bf16.mxu0 0
      %1486 = vmatpush2.bf16.xpose.msra.mxu0 0
      %1487 = vmatprep.subr.bf16.mxu0 0
      %1488 = vmatpush2.bf16.xpose.msra.mxu0 0
      %1489 = vmatprep.subr.bf16.mxu0 0
      %1490 = vmatpush2.bf16.xpose.msra.mxu0 0
      %1491 = vmatprep.subr.bf16.mxu0 0
      %1492 = vmatpush2.bf16.xpose.msra.mxu0 0
      %1493 = vmatprep.mubr.bf16.mxu0 0
      %1494 = vmatmul.mubr.bf16.gmra.mxu0 %v1456
      %v1495 = vpop.f32.mrf.mxu0
      %v1496 = vadd.f32 0.0, %v1495
      %v1497 = vpop.f32.mrf.mxu0
      %v1498 = vpop.f32.mrf.mxu0
      %v1499 = vpop.f32.mrf.mxu0
      %1500 = vdwg.mxu0
      %v1501 = vmul.f32 %v1496, 0.35355338
      %v1502 = vsel %vm1179, %v1501, -inf
      %1503 = vmax.xlane.f32.xlu0 %v1502
      %v1504 = vpop.xlane.xlu0 %1503
      %v1505 = vsub.f32 %v1501, %v1504
      %v1506 = vmul.f32 %v1505, 1.442695
      %v1507 = vpow.pop %v1506
      %v1508 = vsel %vm1179, %v1507, 0.0
      %1509 = vadd.xlane.f32.xlu0 %v1508
      %v1510 = vpop.xlane.xlu0 %1509
      %v1511 = vrcp.pop %v1510
      %v1512 = vmul.f32 %v1507, %v1511
      %v1513 = vpack.c.bf16 %v1512, %v1512
      %1514 = vrot.lane.b32.xlu0 %v1127, 48
      %v1515 = vpop.permute.xlu0 %1514
      %v1517 = vsel %vm1194, %v1513, 0
      %v1520 = vsel %vm1198, %v1515, 0
      %1522 = vmatprep.subr.bf16.mxu0 0
      %1523 = vmatpush1.bf16.msra.mxu0 0
      %1524 = vmatprep.subr.bf16.mxu0 0
      %1525 = vmatpush1.bf16.msra.mxu0 0
      %1526 = vmatprep.subr.bf16.mxu0 0
      %1527 = vmatpush1.bf16.msra.mxu0 0
      %1528 = vmatprep.subr.bf16.mxu0 0
      %1529 = vmatpush1.bf16.msra.mxu0 0
      %1530 = vmatprep.subr.bf16.mxu0 0
      %1531 = vmatpush1.bf16.msra.mxu0 0
      %1532 = vmatprep.subr.bf16.mxu0 0
      %1533 = vmatpush1.bf16.msra.mxu0 0
      %1534 = vmatprep.subr.bf16.mxu0 0
      %1535 = vmatpush1.bf16.msra.mxu0 0
      %1536 = vmatprep.subr.bf16.mxu0 0
      %1537 = vmatpush1.bf16.msra.mxu0 %v1520
      %1538 = vmatprep.subr.bf16.mxu0 0
      %1539 = vmatpush2.bf16.msra.mxu0 0
      %1540 = vmatprep.subr.bf16.mxu0 0
      %1541 = vmatpush2.bf16.msra.mxu0 0
      %1542 = vmatprep.subr.bf16.mxu0 0
      %1543 = vmatpush2.bf16.msra.mxu0 0
      %1544 = vmatprep.subr.bf16.mxu0 0
      %1545 = vmatpush2.bf16.msra.mxu0 0
      %1546 = vmatprep.subr.bf16.mxu0 0
      %1547 = vmatpush2.bf16.msra.mxu0 0
      %1548 = vmatprep.subr.bf16.mxu0 0
      %1549 = vmatpush2.bf16.msra.mxu0 0
      %1550 = vmatprep.subr.bf16.mxu0 0
      %1551 = vmatpush2.bf16.msra.mxu0 0
      %1552 = vmatprep.subr.bf16.mxu0 0
      %1553 = vmatpush2.bf16.msra.mxu0 0
      %1554 = vmatprep.mubr.bf16.mxu0 0
      %1555 = vmatmul.mubr.bf16.gmra.mxu0 %v1517
      %v1556 = vpop.f32.mrf.mxu0
      %v1557 = vadd.f32 0.0, %v1556
      %v1558 = vpop.f32.mrf.mxu0
      %v1559 = vpop.f32.mrf.mxu0
      %v1560 = vpop.f32.mrf.mxu0
      %1561 = vdwg.mxu0
      %s1562 = scalar_lea.vmem %s764, 8
      %v1563 = vld [vmem:[%s1562] sm:$0xf]
      %v1564 = vpack.c.bf16 %v1557, %v1557
      %v1566 = vsel %vm1131, %v1564, 0
      %v1569 = vsel %vm1361, %v1563, 0
      %1571 = vmatprep.subr.bf16.mxu0 0
      %1572 = vmatpush1.bf16.msra.mxu0 0
      %1573 = vmatprep.subr.bf16.mxu0 0
      %1574 = vmatpush1.bf16.msra.mxu0 0
      %1575 = vmatprep.subr.bf16.mxu0 0
      %1576 = vmatpush1.bf16.msra.mxu0 0
      %1577 = vmatprep.subr.bf16.mxu0 0
      %1578 = vmatpush1.bf16.msra.mxu0 0
      %1579 = vmatprep.subr.bf16.mxu0 0
      %1580 = vmatpush1.bf16.msra.mxu0 0
      %1581 = vmatprep.subr.bf16.mxu0 0
      %1582 = vmatpush1.bf16.msra.mxu0 0
      %1583 = vmatprep.subr.bf16.mxu0 0
      %1584 = vmatpush1.bf16.msra.mxu0 0
      %1585 = vmatprep.subr.bf16.mxu0 0
      %1586 = vmatpush1.bf16.msra.mxu0 %v1569
      %1587 = vmatprep.subr.bf16.mxu0 0
      %1588 = vmatpush2.bf16.msra.mxu0 0
      %1589 = vmatprep.subr.bf16.mxu0 0
      %1590 = vmatpush2.bf16.msra.mxu0 0
      %1591 = vmatprep.subr.bf16.mxu0 0
      %1592 = vmatpush2.bf16.msra.mxu0 0
      %1593 = vmatprep.subr.bf16.mxu0 0
      %1594 = vmatpush2.bf16.msra.mxu0 0
      %1595 = vmatprep.subr.bf16.mxu0 0
      %1596 = vmatpush2.bf16.msra.mxu0 0
      %1597 = vmatprep.subr.bf16.mxu0 0
      %1598 = vmatpush2.bf16.msra.mxu0 0
      %1599 = vmatprep.subr.bf16.mxu0 0
      %1600 = vmatpush2.bf16.msra.mxu0 0
      %1601 = vmatprep.subr.bf16.mxu0 0
      %1602 = vmatpush2.bf16.msra.mxu0 0
      %1603 = vmatprep.mubr.bf16.mxu0 0
      %1604 = vmatmul.mubr.bf16.gmra.mxu0 %v1566
      %v1605 = vpop.f32.mrf.mxu0
      %v1606 = vadd.f32 0.0, %v1605
      %v1607 = vpop.f32.mrf.mxu0
      %v1608 = vpop.f32.mrf.mxu0
      %v1609 = vpop.f32.mrf.mxu0
      %1610 = vdwg.mxu0
      %v1611 = vadd.f32 %v1446, %v1606
      %1612 = vrot.lane.b32.xlu0 %v1127, 104
      %v1613 = vpop.permute.xlu0 %1612
      %1614 = vrot.lane.b32.xlu0 %v1127, 72
      %v1615 = vpop.permute.xlu0 %1614
      %v1617 = vsel %vm1131, %v1613, 0
      %v1620 = vsel %vm1131, %v1615, 0
      %1622 = vmatprep.subr.bf16.mxu0 0
      %1623 = vmatpush1.bf16.xpose.msra.mxu0 0
      %1624 = vmatprep.subr.bf16.mxu0 0
      %1625 = vmatpush1.bf16.xpose.msra.mxu0 0
      %1626 = vmatprep.subr.bf16.mxu0 0
      %1627 = vmatpush1.bf16.xpose.msra.mxu0 0
      %1628 = vmatprep.subr.bf16.mxu0 0
      %1629 = vmatpush1.bf16.xpose.msra.mxu0 0
      %1630 = vmatprep.subr.bf16.mxu0 0
      %1631 = vmatpush1.bf16.xpose.msra.mxu0 0
      %1632 = vmatprep.subr.bf16.mxu0 0
      %1633 = vmatpush1.bf16.xpose.msra.mxu0 0
      %1634 = vmatprep.subr.bf16.mxu0 0
      %1635 = vmatpush1.bf16.xpose.msra.mxu0 0
      %1636 = vmatprep.subr.bf16.mxu0 0
      %1637 = vmatpush1.bf16.xpose.msra.mxu0 %v1620
      %1638 = vmatprep.subr.bf16.mxu0 0
      %1639 = vmatpush2.bf16.xpose.msra.mxu0 0
      %1640 = vmatprep.subr.bf16.mxu0 0
      %1641 = vmatpush2.bf16.xpose.msra.mxu0 0
      %1642 = vmatprep.subr.bf16.mxu0 0
      %1643 = vmatpush2.bf16.xpose.msra.mxu0 0
      %1644 = vmatprep.subr.bf16.mxu0 0
      %1645 = vmatpush2.bf16.xpose.msra.mxu0 0
      %1646 = vmatprep.subr.bf16.mxu0 0
      %1647 = vmatpush2.bf16.xpose.msra.mxu0 0
      %1648 = vmatprep.subr.bf16.mxu0 0
      %1649 = vmatpush2.bf16.xpose.msra.mxu0 0
      %1650 = vmatprep.subr.bf16.mxu0 0
      %1651 = vmatpush2.bf16.xpose.msra.mxu0 0
      %1652 = vmatprep.subr.bf16.mxu0 0
      %1653 = vmatpush2.bf16.xpose.msra.mxu0 0
      %1654 = vmatprep.mubr.bf16.mxu0 0
      %1655 = vmatmul.mubr.bf16.gmra.mxu0 %v1617
      %v1656 = vpop.f32.mrf.mxu0
      %v1657 = vadd.f32 0.0, %v1656
      %v1658 = vpop.f32.mrf.mxu0
      %v1659 = vpop.f32.mrf.mxu0
      %v1660 = vpop.f32.mrf.mxu0
      %1661 = vdwg.mxu0
      %v1662 = vmul.f32 %v1657, 0.35355338
      %v1663 = vsel %vm1179, %v1662, -inf
      %1664 = vmax.xlane.f32.xlu0 %v1663
      %v1665 = vpop.xlane.xlu0 %1664
      %v1666 = vsub.f32 %v1662, %v1665
      %v1667 = vmul.f32 %v1666, 1.442695
      %v1668 = vpow.pop %v1667
      %v1669 = vsel %vm1179, %v1668, 0.0
      %1670 = vadd.xlane.f32.xlu0 %v1669
      %v1671 = vpop.xlane.xlu0 %1670
      %v1672 = vrcp.pop %v1671
      %v1673 = vmul.f32 %v1668, %v1672
      %v1674 = vpack.c.bf16 %v1673, %v1673
      %1675 = vrot.lane.b32.xlu0 %v1127, 40
      %v1676 = vpop.permute.xlu0 %1675
      %v1678 = vsel %vm1194, %v1674, 0
      %v1681 = vsel %vm1198, %v1676, 0
      %1683 = vmatprep.subr.bf16.mxu0 0
      %1684 = vmatpush1.bf16.msra.mxu0 0
      %1685 = vmatprep.subr.bf16.mxu0 0
      %1686 = vmatpush1.bf16.msra.mxu0 0
      %1687 = vmatprep.subr.bf16.mxu0 0
      %1688 = vmatpush1.bf16.msra.mxu0 0
      %1689 = vmatprep.subr.bf16.mxu0 0
      %1690 = vmatpush1.bf16.msra.mxu0 0
      %1691 = vmatprep.subr.bf16.mxu0 0
      %1692 = vmatpush1.bf16.msra.mxu0 0
      %1693 = vmatprep.subr.bf16.mxu0 0
      %1694 = vmatpush1.bf16.msra.mxu0 0
      %1695 = vmatprep.subr.bf16.mxu0 0
      %1696 = vmatpush1.bf16.msra.mxu0 0
      %1697 = vmatprep.subr.bf16.mxu0 0
      %1698 = vmatpush1.bf16.msra.mxu0 %v1681
      %1699 = vmatprep.subr.bf16.mxu0 0
      %1700 = vmatpush2.bf16.msra.mxu0 0
      %1701 = vmatprep.subr.bf16.mxu0 0
      %1702 = vmatpush2.bf16.msra.mxu0 0
      %1703 = vmatprep.subr.bf16.mxu0 0
      %1704 = vmatpush2.bf16.msra.mxu0 0
      %1705 = vmatprep.subr.bf16.mxu0 0
      %1706 = vmatpush2.bf16.msra.mxu0 0
      %1707 = vmatprep.subr.bf16.mxu0 0
      %1708 = vmatpush2.bf16.msra.mxu0 0
      %1709 = vmatprep.subr.bf16.mxu0 0
      %1710 = vmatpush2.bf16.msra.mxu0 0
      %1711 = vmatprep.subr.bf16.mxu0 0
      %1712 = vmatpush2.bf16.msra.mxu0 0
      %1713 = vmatprep.subr.bf16.mxu0 0
      %1714 = vmatpush2.bf16.msra.mxu0 0
      %1715 = vmatprep.mubr.bf16.mxu0 0
      %1716 = vmatmul.mubr.bf16.gmra.mxu0 %v1678
      %v1717 = vpop.f32.mrf.mxu0
      %v1718 = vadd.f32 0.0, %v1717
      %v1719 = vpop.f32.mrf.mxu0
      %v1720 = vpop.f32.mrf.mxu0
      %v1721 = vpop.f32.mrf.mxu0
      %1722 = vdwg.mxu0
      %s1723 = scalar_lea.vmem %s764, 12
      %v1724 = vld [vmem:[%s1723] sm:$0xf]
      %v1725 = vpack.c.bf16 %v1718, %v1718
      %v1727 = vsel %vm1131, %v1725, 0
      %v1730 = vsel %vm1361, %v1724, 0
      %1732 = vmatprep.subr.bf16.mxu0 0
      %1733 = vmatpush1.bf16.msra.mxu0 0
      %1734 = vmatprep.subr.bf16.mxu0 0
      %1735 = vmatpush1.bf16.msra.mxu0 0
      %1736 = vmatprep.subr.bf16.mxu0 0
      %1737 = vmatpush1.bf16.msra.mxu0 0
      %1738 = vmatprep.subr.bf16.mxu0 0
      %1739 = vmatpush1.bf16.msra.mxu0 0
      %1740 = vmatprep.subr.bf16.mxu0 0
      %1741 = vmatpush1.bf16.msra.mxu0 0
      %1742 = vmatprep.subr.bf16.mxu0 0
      %1743 = vmatpush1.bf16.msra.mxu0 0
      %1744 = vmatprep.subr.bf16.mxu0 0
      %1745 = vmatpush1.bf16.msra.mxu0 0
      %1746 = vmatprep.subr.bf16.mxu0 0
      %1747 = vmatpush1.bf16.msra.mxu0 %v1730
      %1748 = vmatprep.subr.bf16.mxu0 0
      %1749 = vmatpush2.bf16.msra.mxu0 0
      %1750 = vmatprep.subr.bf16.mxu0 0
      %1751 = vmatpush2.bf16.msra.mxu0 0
      %1752 = vmatprep.subr.bf16.mxu0 0
      %1753 = vmatpush2.bf16.msra.mxu0 0
      %1754 = vmatprep.subr.bf16.mxu0 0
      %1755 = vmatpush2.bf16.msra.mxu0 0
      %1756 = vmatprep.subr.bf16.mxu0 0
      %1757 = vmatpush2.bf16.msra.mxu0 0
      %1758 = vmatprep.subr.bf16.mxu0 0
      %1759 = vmatpush2.bf16.msra.mxu0 0
      %1760 = vmatprep.subr.bf16.mxu0 0
      %1761 = vmatpush2.bf16.msra.mxu0 0
      %1762 = vmatprep.subr.bf16.mxu0 0
      %1763 = vmatpush2.bf16.msra.mxu0 0
      %1764 = vmatprep.mubr.bf16.mxu0 0
      %1765 = vmatmul.mubr.bf16.gmra.mxu0 %v1727
      %v1766 = vpop.f32.mrf.mxu0
      %v1767 = vadd.f32 0.0, %v1766
      %v1768 = vpop.f32.mrf.mxu0
      %v1769 = vpop.f32.mrf.mxu0
      %v1770 = vpop.f32.mrf.mxu0
      %1771 = vdwg.mxu0
      %v1772 = vadd.f32 %v1611, %v1767
      %v1773 = vadd.f32 %v1027, %v1772
      %v1774 = vld [vmem:[%s767] sm:$0x1]
      %v1776 = vlaneseq
      %v1777 = vshrl.u32 %v1776, 7
      %v1778 = vsub.s32 0, %v1777
      %v1779 = vrot.slane %v1774, %v1778
      %v1781 = vadd.f32 %v1773, %v1779
      %v1782 = vld [vmem:[%s770] sm:$0x1]
      %v1783 = vld [vmem:[%s773] sm:$0x1]
      %v1784 = vsel %vm1030, %v1781, 0.0
      %1785 = vadd.xlane.f32.xlu0 %v1784
      %v1786 = vpop.xlane.xlu0 %1785
      %v1787 = vmul.f32 %v1786, %v1034
      %v1788 = vsub.f32 %v1781, %v1787
      %v1789 = vmul.f32 %v1788, %v1788
      %v1790 = vsel %vm1030, %v1789, 0.0
      %1791 = vadd.xlane.f32.xlu0 %v1790
      %v1792 = vpop.xlane.xlu0 %1791
      %v1793 = vmul.f32 %v1792, %v1034
      %v1794 = vadd.f32 %v1793, 1e-05
      %v1795 = vrsqrt.pop %v1794
      %v1796 = vmul.f32 %v1788, %v1795
      %v1798 = vlaneseq
      %v1799 = vshrl.u32 %v1798, 7
      %v1800 = vsub.s32 0, %v1799
      %v1801 = vrot.slane %v1782, %v1800
      %v1803 = vmul.f32 %v1796, %v1801
      %v1805 = vlaneseq
      %v1806 = vshrl.u32 %v1805, 7
      %v1807 = vsub.s32 0, %v1806
      %v1808 = vrot.slane %v1783, %v1807
      %v1810 = vadd.f32 %v1803, %v1808
      %v1811 = vld [vmem:[%s778] sm:$0xf]
      %v1812 = vld [vmem:[%s778 + $0x4] sm:$0xf]
      %v1813 = vld [vmem:[%s778 + $0x8] sm:$0xf]
      %v1814 = vld [vmem:[%s778 + $0xc] sm:$0xf]
      %v1815 = vpack.c.bf16 %v1810, %v1810
      %v1816 = vld [vmem:[%s781] sm:$0x1]
      %v1818 = vlaneseq
      %v1819 = vshrl.u32 %v1818, 7
      %v1820 = vsub.s32 0, %v1819
      %v1821 = vrot.slane %v1816, %v1820
      %v1827 = vunpack.c.l.b16 %v1811
      %v1828 = vunpack.c.l.b16 %v1812
      %v1829 = vunpack.c.l.b16 %v1813
      %v1830 = vunpack.c.l.b16 %v1814
      %v1831 = vpack.c.b16 %v1828, %v1827
      %v1832 = vpack.c.b16 %v1830, %v1829
      %v1836 = vsel %vm1083, %v1815, 0
      %1838 = vmatprep.subr.bf16.mxu0 0
      %1839 = vmatpush1.bf16.msra.mxu0 0
      %1840 = vmatprep.subr.bf16.mxu0 0
      %1841 = vmatpush1.bf16.msra.mxu0 0
      %1842 = vmatprep.subr.bf16.mxu0 0
      %1843 = vmatpush1.bf16.msra.mxu0 0
      %1844 = vmatprep.subr.bf16.mxu0 0
      %1845 = vmatpush1.bf16.msra.mxu0 0
      %1846 = vmatprep.subr.bf16.mxu0 0
      %1847 = vmatpush1.bf16.msra.mxu0 0
      %1848 = vmatprep.subr.bf16.mxu0 0
      %1849 = vmatpush1.bf16.msra.mxu0 0
      %1850 = vmatprep.subr.bf16.mxu0 0
      %1851 = vmatpush1.bf16.msra.mxu0 %v1832
      %1852 = vmatprep.subr.bf16.mxu0 0
      %1853 = vmatpush1.bf16.msra.mxu0 %v1831
      %1854 = vmatprep.subr.bf16.mxu0 0
      %1855 = vmatpush2.bf16.msra.mxu0 0
      %1856 = vmatprep.subr.bf16.mxu0 0
      %1857 = vmatpush2.bf16.msra.mxu0 0
      %1858 = vmatprep.subr.bf16.mxu0 0
      %1859 = vmatpush2.bf16.msra.mxu0 0
      %1860 = vmatprep.subr.bf16.mxu0 0
      %1861 = vmatpush2.bf16.msra.mxu0 0
      %1862 = vmatprep.subr.bf16.mxu0 0
      %1863 = vmatpush2.bf16.msra.mxu0 0
      %1864 = vmatprep.subr.bf16.mxu0 0
      %1865 = vmatpush2.bf16.msra.mxu0 0
      %1866 = vmatprep.subr.bf16.mxu0 0
      %1867 = vmatpush2.bf16.msra.mxu0 0
      %1868 = vmatprep.subr.bf16.mxu0 0
      %1869 = vmatpush2.bf16.msra.mxu0 0
      %1870 = vmatprep.mubr.bf16.mxu0 0
      %1871 = vmatmul.mubr.bf16.gmra.mxu0 %v1836
      %v1872 = vpop.f32.mrf.mxu0
      %v1873 = vadd.f32 %v1821, %v1872
      %v1874 = vpop.f32.mrf.mxu0
      %v1875 = vpop.f32.mrf.mxu0
      %v1876 = vpop.f32.mrf.mxu0
      %1877 = vdwg.mxu0
      %v1878 = vmul.f32 %v1873, 0.5
      %v1879 = vmul.f32 %v1873, 0.70710677
      %v1880 = verf.f32.pop %v1879
      %v1881 = vadd.f32 %v1880, 1.0
      %v1882 = vmul.f32 %v1878, %v1881
      %v1883 = vld [vmem:[%s786] sm:$0xf]
      %v1884 = vld [vmem:[%s786 + $0x4] sm:$0xf]
      %v1885 = vld [vmem:[%s786 + $0x8] sm:$0xf]
      %v1886 = vld [vmem:[%s786 + $0xc] sm:$0xf]
      %v1887 = vld [vmem:[%s786 + $0x10] sm:$0xf]
      %v1888 = vld [vmem:[%s786 + $0x14] sm:$0xf]
      %v1889 = vld [vmem:[%s786 + $0x18] sm:$0xf]
      %v1890 = vld [vmem:[%s786 + $0x1c] sm:$0xf]
      %v1891 = vld [vmem:[%s786 + $0x20] sm:$0xf]
      %v1892 = vld [vmem:[%s786 + $0x24] sm:$0xf]
      %v1893 = vld [vmem:[%s786 + $0x28] sm:$0xf]
      %v1894 = vld [vmem:[%s786 + $0x2c] sm:$0xf]
      %v1895 = vld [vmem:[%s786 + $0x30] sm:$0xf]
      %v1896 = vld [vmem:[%s786 + $0x34] sm:$0xf]
      %v1897 = vld [vmem:[%s786 + $0x38] sm:$0xf]
      %v1898 = vld [vmem:[%s786 + $0x3c] sm:$0xf]
      %v1899 = vpack.c.bf16 %v1882, %v1882
      %v1900 = vld [vmem:[%s789] sm:$0x1]
      %v1902 = vlaneseq
      %v1903 = vshrl.u32 %v1902, 7
      %v1904 = vsub.s32 0, %v1903
      %v1905 = vrot.slane %v1900, %v1904
      %v1923 = vunpack.c.l.b16 %v1883
      %v1924 = vunpack.c.l.b16 %v1884
      %v1925 = vunpack.c.l.b16 %v1885
      %v1926 = vunpack.c.l.b16 %v1886
      %v1927 = vunpack.c.l.b16 %v1887
      %v1928 = vunpack.c.l.b16 %v1888
      %v1929 = vunpack.c.l.b16 %v1889
      %v1930 = vunpack.c.l.b16 %v1890
      %v1931 = vunpack.c.l.b16 %v1891
      %v1932 = vunpack.c.l.b16 %v1892
      %v1933 = vunpack.c.l.b16 %v1893
      %v1934 = vunpack.c.l.b16 %v1894
      %v1935 = vunpack.c.l.b16 %v1895
      %v1936 = vunpack.c.l.b16 %v1896
      %v1937 = vunpack.c.l.b16 %v1897
      %v1938 = vunpack.c.l.b16 %v1898
      %v1939 = vpack.c.b16 %v1924, %v1923
      %v1940 = vpack.c.b16 %v1926, %v1925
      %v1941 = vpack.c.b16 %v1928, %v1927
      %v1942 = vpack.c.b16 %v1930, %v1929
      %v1943 = vpack.c.b16 %v1932, %v1931
      %v1944 = vpack.c.b16 %v1934, %v1933
      %v1945 = vpack.c.b16 %v1936, %v1935
      %v1946 = vpack.c.b16 %v1938, %v1937
      %1955 = vmatprep.subr.bf16.mxu0 0
      %1956 = vmatpush1.bf16.msra.mxu0 %v1946
      %1957 = vmatprep.subr.bf16.mxu0 0
      %1958 = vmatpush1.bf16.msra.mxu0 %v1945
      %1959 = vmatprep.subr.bf16.mxu0 0
      %1960 = vmatpush1.bf16.msra.mxu0 %v1944
      %1961 = vmatprep.subr.bf16.mxu0 0
      %1962 = vmatpush1.bf16.msra.mxu0 %v1943
      %1963 = vmatprep.subr.bf16.mxu0 0
      %1964 = vmatpush1.bf16.msra.mxu0 %v1942
      %1965 = vmatprep.subr.bf16.mxu0 0
      %1966 = vmatpush1.bf16.msra.mxu0 %v1941
      %1967 = vmatprep.subr.bf16.mxu0 0
      %1968 = vmatpush1.bf16.msra.mxu0 %v1940
      %1969 = vmatprep.subr.bf16.mxu0 0
      %1970 = vmatpush1.bf16.msra.mxu0 %v1939
      %1971 = vmatprep.subr.bf16.mxu0 0
      %1972 = vmatpush2.bf16.msra.mxu0 0
      %1973 = vmatprep.subr.bf16.mxu0 0
      %1974 = vmatpush2.bf16.msra.mxu0 0
      %1975 = vmatprep.subr.bf16.mxu0 0
      %1976 = vmatpush2.bf16.msra.mxu0 0
      %1977 = vmatprep.subr.bf16.mxu0 0
      %1978 = vmatpush2.bf16.msra.mxu0 0
      %1979 = vmatprep.subr.bf16.mxu0 0
      %1980 = vmatpush2.bf16.msra.mxu0 0
      %1981 = vmatprep.subr.bf16.mxu0 0
      %1982 = vmatpush2.bf16.msra.mxu0 0
      %1983 = vmatprep.subr.bf16.mxu0 0
      %1984 = vmatpush2.bf16.msra.mxu0 0
      %1985 = vmatprep.subr.bf16.mxu0 0
      %1986 = vmatpush2.bf16.msra.mxu0 0
      %1987 = vmatprep.mubr.bf16.mxu0 0
      %1988 = vmatmul.mubr.bf16.gmra.mxu0 %v1899
      %v1989 = vpop.f32.mrf.mxu0
      %v1990 = vadd.f32 %v1905, %v1989
      %v1991 = vpop.f32.mrf.mxu0
      %v1992 = vpop.f32.mrf.mxu0
      %v1993 = vpop.f32.mrf.mxu0
      %1994 = vdwg.mxu0
      %v1995 = vadd.f32 %v1781, %v1990
      %v1996 = vld [vmem:[%s792] sm:$0x1]
      %v1997 = vld [vmem:[%s795] sm:$0x1]
      %v1998 = vsel %vm1030, %v1995, 0.0
      %1999 = vadd.xlane.f32.xlu0 %v1998
      %v2000 = vpop.xlane.xlu0 %1999
      %v2001 = vmul.f32 %v2000, %v1034
      %v2002 = vsub.f32 %v1995, %v2001
      %v2003 = vmul.f32 %v2002, %v2002
      %v2004 = vsel %vm1030, %v2003, 0.0
      %2005 = vadd.xlane.f32.xlu0 %v2004
      %v2006 = vpop.xlane.xlu0 %2005
      %v2007 = vmul.f32 %v2006, %v1034
      %v2008 = vadd.f32 %v2007, 1e-05
      %v2009 = vrsqrt.pop %v2008
      %v2010 = vmul.f32 %v2002, %v2009
      %v2012 = vlaneseq
      %v2013 = vshrl.u32 %v2012, 7
      %v2014 = vsub.s32 0, %v2013
      %v2015 = vrot.slane %v1996, %v2014
      %v2017 = vmul.f32 %v2010, %v2015
      %v2019 = vlaneseq
      %v2020 = vshrl.u32 %v2019, 7
      %v2021 = vsub.s32 0, %v2020
      %v2022 = vrot.slane %v1997, %v2021
      %v2024 = vadd.f32 %v2017, %v2022
      %2025 = vst.msk [vmem:[#allocation2] sm:$0xf] %vm1030, %v2024
      %2026 = vst.msk [vmem:[%s799] sm:$0xf] %vm1030, %v2024
      %p2027 = scmp.lt.s32.totalorder %s33, 1
      %s2028 = scalar_select %p2027, %s33, 1
      %s2029 = smul.addr %s2028, 4
      %s2030 = scalar_lea.vmem %s18, %s2029
      // Predicated region
      $region97: #{transformer_csnet_forward.2} parent=91 // pred_check
        %p2031 = pneg %p512
      $region98: #{transformer_csnet_forward.2} parent=91 // pred_check_branch
        %2033 = sbr.rel (%p2031) target = $region100
      $region99: #{transformer_csnet_forward.2} parent=91 // pred_region
        _
      $region100: #{transformer_csnet_forward.2} parent=91 // pred_fallthru
        _
    $region92: #{transformer_csnet_forward.2} parent=5 // pred_fallthru
      _
    %p2034 = scmp.le.s32.totalorder 2, %s24
    // Predicated region
    $region101: #{transformer_csnet_forward.2} parent=5 // pred_check
      %p2035 = pneg %p2034
    $region102: #{transformer_csnet_forward.2} parent=5 // pred_check_branch
      %2037 = sbr.rel (%p2035) target = $region104
    $region103: #{transformer_csnet_forward.2} parent=5 // pred_region
      %s2038 = ssub.s32 %s24, 2
      // Predicated region
      $region105: #{transformer_csnet_forward.2} parent=103 // pred_check
        %p2039 = pneg %p518
      $region106: #{transformer_csnet_forward.2} parent=103 // pred_check_branch
        %2041 = sbr.rel (%p2039) target = $region108
      $region107: #{transformer_csnet_forward.2} parent=103 // pred_region
        %p2042 = scmp.lt.s32.totalorder %s35, 1
        %s2043 = scalar_select %p2042, %s35, 1
        %s2044 = smul.addr %s2043, 4
        %s2045 = scalar_lea.vmem %s18, %s2044
      $region108: #{transformer_csnet_forward.2} parent=103 // pred_fallthru
        _
    $region104: #{transformer_csnet_forward.2} parent=5 // pred_fallthru
      _
  $region6: #{transformer_csnet_forward.2} parent=0 // loop_footer
    %s28 = sadd.s32 1, %s24
  $region7: #{transformer_csnet_forward.2} parent=0 // loop_footer_branch
    %23 = sbr.rel target = $region3
  $region8: #{transformer_csnet_forward.2} parent=0 // loop_exit
    _

// kernel: transformer_csnet_forward.3
$region0: #{transformer_csnet_forward.3}
  #allocation0 [shape = 'u32[]', space=smem, size = 0x4, offset = 0x4, fixed_abs, tag = 'smem constant byte address 0x4 - core index']
  #allocation1 [shape = 'u32[144,128]{1,0:T(1,128)}', space=vmem, size = 0x12000, scoped, tag = 'internal scratch']
  %s0 = inlined_call_operand.vmem [shape: f32[8,32], index: 0, kind: input, shape index: {}]
  %s1 = inlined_call_operand.vmem [shape: bf16[32,1024], index: 1, kind: input, shape index: {}]
  %s2 = inlined_call_operand.vmem [shape: f32[1,1024], index: 2, kind: input, shape index: {}]
  %s3 = inlined_call_operand.hbm [shape: bf16[256,512], index: 3, kind: input, shape index: {}]
  %s4 = inlined_call_operand.vmem [shape: f32[1,512], index: 4, kind: input, shape index: {}]
  %s5 = inlined_call_operand.vmem [shape: bf16[128,256], index: 5, kind: input, shape index: {}]
  %s6 = inlined_call_operand.vmem [shape: f32[1,256], index: 6, kind: input, shape index: {}]
  %s7 = inlined_call_operand.hbm [shape: bf16[2048,128], index: 7, kind: input, shape index: {}]
  %s8 = inlined_call_operand.vmem [shape: f32[1,128], index: 8, kind: input, shape index: {}]
  %s9 = inlined_call_operand.vmem [shape: f32[8,256], index: 9, kind: output, shape index: {}]
  %s10 = sld [smem:[#allocation0]]
  $region54: #{transformer_csnet_forward.3} parent=0
    _
  %s12 = ssub.s32 1, %s10
  %s13 = scalar_select 0, %s12, %s10
  $region1: #{transformer_csnet_forward.3} parent=0
    #allocation2 [shape = 'u8[262144]{0}', space=vmem, size = 0x40000, scoped, tag = 'input window, operand 3, single buffered']
    #allocation3 [shape = 's32[1]{0}', space=sflag, size = 0x4, scoped, tag = 'scoped memory for transformer_csnet_forward.3']
    #allocation4 [shape = 'u8[524288]{0}', space=vmem, size = 0x80000, scoped, tag = 'input window, operand 7, single buffered']
    #allocation5 [shape = 's32[1]{0}', space=sflag, size = 0x4, scoped, tag = 'scoped memory for transformer_csnet_forward.3']
    %14 = vsyncpa [#allocation3], 0
    %15 = vsyncpa [#allocation5], 0
    // Predicated region
    $region2: #{transformer_csnet_forward.3} parent=1 // pred_check
      _
    $region3: #{transformer_csnet_forward.3} parent=1 // pred_check_branch
      %17 = sbr.rel (0) target = $region5
    $region4: #{transformer_csnet_forward.3} parent=1 // pred_region
      _
    $region5: #{transformer_csnet_forward.3} parent=1 // pred_fallthru
      _
    // Predicated region
    $region6: #{transformer_csnet_forward.3} parent=1 // pred_check
      _
    $region7: #{transformer_csnet_forward.3} parent=1 // pred_check_branch
      %19 = sbr.rel (0) target = $region9
    $region8: #{transformer_csnet_forward.3} parent=1 // pred_region
      _
    $region9: #{transformer_csnet_forward.3} parent=1 // pred_fallthru
      _
    // Predicated region
    $region10: #{transformer_csnet_forward.3} parent=1 // pred_check
      _
    $region11: #{transformer_csnet_forward.3} parent=1 // pred_check_branch
      %21 = sbr.rel (0) target = $region13
    $region12: #{transformer_csnet_forward.3} parent=1 // pred_region
      _
    $region13: #{transformer_csnet_forward.3} parent=1 // pred_fallthru
      _
    // Predicated region
    $region14: #{transformer_csnet_forward.3} parent=1 // pred_check
      _
    $region15: #{transformer_csnet_forward.3} parent=1 // pred_check_branch
      %23 = sbr.rel (0) target = $region17
    $region16: #{transformer_csnet_forward.3} parent=1 // pred_region
      %s25 = ssub.s32 8192, 8192
      %26 = vsyncadd [#allocation3], %s25
      %s27 = sshll.u32 [#allocation2], 4
      %s28 = int_to_ptr.vmem [resolvable:$true] %s27
      %33 = dma.hbm_to_vmem [thread:$0]  %s3, 8192, %s28, [#allocation3], 256, 256, 16
    $region17: #{transformer_csnet_forward.3} parent=1 // pred_fallthru
      _
    // Predicated region
    $region18: #{transformer_csnet_forward.3} parent=1 // pred_check
      _
    $region19: #{transformer_csnet_forward.3} parent=1 // pred_check_branch
      %35 = sbr.rel (0) target = $region21
    $region20: #{transformer_csnet_forward.3} parent=1 // pred_region
      _
    $region21: #{transformer_csnet_forward.3} parent=1 // pred_fallthru
      _
    // Predicated region
    $region22: #{transformer_csnet_forward.3} parent=1 // pred_check
      _
    $region23: #{transformer_csnet_forward.3} parent=1 // pred_check_branch
      %37 = sbr.rel (0) target = $region25
    $region24: #{transformer_csnet_forward.3} parent=1 // pred_region
      _
    $region25: #{transformer_csnet_forward.3} parent=1 // pred_fallthru
      _
    // Predicated region
    $region26: #{transformer_csnet_forward.3} parent=1 // pred_check
      _
    $region27: #{transformer_csnet_forward.3} parent=1 // pred_check_branch
      %39 = sbr.rel (0) target = $region29
    $region28: #{transformer_csnet_forward.3} parent=1 // pred_region
      _
    $region29: #{transformer_csnet_forward.3} parent=1 // pred_fallthru
      _
    // Predicated region
    $region30: #{transformer_csnet_forward.3} parent=1 // pred_check
      _
    $region31: #{transformer_csnet_forward.3} parent=1 // pred_check_branch
      %41 = sbr.rel (0) target = $region33
    $region32: #{transformer_csnet_forward.3} parent=1 // pred_region
      %s43 = ssub.s32 16384, 16384
      %44 = vsyncadd [#allocation5], %s43
      %s45 = sshll.u32 [#allocation4], 4
      %s46 = int_to_ptr.vmem [resolvable:$true] %s45
      %51 = dma.hbm_to_vmem [thread:$0]  %s7, 16384, %s46, [#allocation5], 64, 64, 4
    $region33: #{transformer_csnet_forward.3} parent=1 // pred_fallthru
      _
    // Predicated region
    $region34: #{transformer_csnet_forward.3} parent=1 // pred_check
      _
    $region35: #{transformer_csnet_forward.3} parent=1 // pred_check_branch
      %53 = sbr.rel (0) target = $region37
    $region36: #{transformer_csnet_forward.3} parent=1 // pred_region
      _
    $region37: #{transformer_csnet_forward.3} parent=1 // pred_fallthru
      _
    // Predicated region
    $region38: #{transformer_csnet_forward.3} parent=1 // pred_check
      _
    $region39: #{transformer_csnet_forward.3} parent=1 // pred_check_branch
      %55 = sbr.rel (0) target = $region41
    $region40: #{transformer_csnet_forward.3} parent=1 // pred_region
      %56 = dma.done [#allocation3], 8192
    $region41: #{transformer_csnet_forward.3} parent=1 // pred_fallthru
      _
    // Predicated region
    $region42: #{transformer_csnet_forward.3} parent=1 // pred_check
      _
    $region43: #{transformer_csnet_forward.3} parent=1 // pred_check_branch
      %58 = sbr.rel (0) target = $region45
    $region44: #{transformer_csnet_forward.3} parent=1 // pred_region
      %59 = dma.done [#allocation5], 16384
    $region45: #{transformer_csnet_forward.3} parent=1 // pred_fallthru
      _
    %v61 = vld [vmem:[%s0] sm:$0xff]
    %v62 = vld [vmem:[%s1] sm:$0xff]
    %v63 = vld [vmem:[%s1 + $0x8] sm:$0xff]
    %v64 = vld [vmem:[%s1 + $0x10] sm:$0xff]
    %v65 = vld [vmem:[%s1 + $0x18] sm:$0xff]
    %v66 = vld [vmem:[%s1 + $0x20] sm:$0xff]
    %v67 = vld [vmem:[%s1 + $0x28] sm:$0xff]
    %v68 = vld [vmem:[%s1 + $0x30] sm:$0xff]
    %v69 = vld [vmem:[%s1 + $0x38] sm:$0xff]
    %v70 = vld [vmem:[%s1 + $0x40] sm:$0xff]
    %v71 = vld [vmem:[%s1 + $0x48] sm:$0xff]
    %v72 = vld [vmem:[%s1 + $0x50] sm:$0xff]
    %v73 = vld [vmem:[%s1 + $0x58] sm:$0xff]
    %v74 = vld [vmem:[%s1 + $0x60] sm:$0xff]
    %v75 = vld [vmem:[%s1 + $0x68] sm:$0xff]
    %v76 = vld [vmem:[%s1 + $0x70] sm:$0xff]
    %v77 = vld [vmem:[%s1 + $0x78] sm:$0xff]
    %v78 = vpack.c.bf16 %v61, %v61
    %v79 = vld [vmem:[%s2] sm:$0xff]
    %v81 = vlaneseq
    %v82 = vshrl.u32 %v81, 7
    %v83 = vsub.s32 0, %v82
    %v84 = vrot.slane %v79, %v83
    %v85 = vlaneseq
    %v86 = vshrl.u32 %v85, 7
    %v87 = vsub.s32 1, %v86
    %v88 = vrot.slane %v79, %v87
    %v89 = vlaneseq
    %v90 = vshrl.u32 %v89, 7
    %v91 = vsub.s32 2, %v90
    %v92 = vrot.slane %v79, %v91
    %v93 = vlaneseq
    %v94 = vshrl.u32 %v93, 7
    %v95 = vsub.s32 3, %v94
    %v96 = vrot.slane %v79, %v95
    %v97 = vlaneseq
    %v98 = vshrl.u32 %v97, 7
    %v99 = vsub.s32 4, %v98
    %v100 = vrot.slane %v79, %v99
    %v101 = vlaneseq
    %v102 = vshrl.u32 %v101, 7
    %v103 = vsub.s32 5, %v102
    %v104 = vrot.slane %v79, %v103
    %v105 = vlaneseq
    %v106 = vshrl.u32 %v105, 7
    %v107 = vsub.s32 6, %v106
    %v108 = vrot.slane %v79, %v107
    %v109 = vlaneseq
    %v110 = vshrl.u32 %v109, 7
    %v111 = vsub.s32 7, %v110
    %v112 = vrot.slane %v79, %v111
    %v137 = vunpack.c.l.b16 %v62
    %v138 = vunpack.c.h.b16 %v62
    %v139 = vunpack.c.l.b16 %v63
    %v140 = vunpack.c.h.b16 %v63
    %v141 = vunpack.c.l.b16 %v64
    %v142 = vunpack.c.h.b16 %v64
    %v143 = vunpack.c.l.b16 %v65
    %v144 = vunpack.c.h.b16 %v65
    %v145 = vunpack.c.l.b16 %v66
    %v146 = vunpack.c.h.b16 %v66
    %v147 = vunpack.c.l.b16 %v67
    %v148 = vunpack.c.h.b16 %v67
    %v149 = vunpack.c.l.b16 %v68
    %v150 = vunpack.c.h.b16 %v68
    %v151 = vunpack.c.l.b16 %v69
    %v152 = vunpack.c.h.b16 %v69
    %v153 = vunpack.c.l.b16 %v70
    %v154 = vunpack.c.h.b16 %v70
    %v155 = vunpack.c.l.b16 %v71
    %v156 = vunpack.c.h.b16 %v71
    %v157 = vunpack.c.l.b16 %v72
    %v158 = vunpack.c.h.b16 %v72
    %v159 = vunpack.c.l.b16 %v73
    %v160 = vunpack.c.h.b16 %v73
    %v161 = vunpack.c.l.b16 %v74
    %v162 = vunpack.c.h.b16 %v74
    %v163 = vunpack.c.l.b16 %v75
    %v164 = vunpack.c.h.b16 %v75
    %v165 = vunpack.c.l.b16 %v76
    %v166 = vunpack.c.h.b16 %v76
    %v167 = vunpack.c.l.b16 %v77
    %v168 = vunpack.c.h.b16 %v77
    %v169 = vpack.c.b16 %v145, %v137
    %v170 = vpack.c.b16 %v146, %v138
    %v171 = vpack.c.b16 %v147, %v139
    %v172 = vpack.c.b16 %v148, %v140
    %v173 = vpack.c.b16 %v149, %v141
    %v174 = vpack.c.b16 %v150, %v142
    %v175 = vpack.c.b16 %v151, %v143
    %v176 = vpack.c.b16 %v152, %v144
    %v177 = vpack.c.b16 %v161, %v153
    %v178 = vpack.c.b16 %v162, %v154
    %v179 = vpack.c.b16 %v163, %v155
    %v180 = vpack.c.b16 %v164, %v156
    %v181 = vpack.c.b16 %v165, %v157
    %v182 = vpack.c.b16 %v166, %v158
    %v183 = vpack.c.b16 %v167, %v159
    %v184 = vpack.c.b16 %v168, %v160
    %vm201 = vcmask 261120
    %v203 = vsel %vm201, %v78, 0
    %205 = vmatprep.subr.bf16.mxu0 0
    %206 = vmatpush1.bf16.msra.mxu0 0
    %207 = vmatprep.subr.bf16.mxu0 0
    %208 = vmatpush1.bf16.msra.mxu0 0
    %209 = vmatprep.subr.bf16.mxu0 0
    %210 = vmatpush1.bf16.msra.mxu0 0
    %211 = vmatprep.subr.bf16.mxu0 0
    %212 = vmatpush1.bf16.msra.mxu0 0
    %213 = vmatprep.subr.bf16.mxu0 0
    %214 = vmatpush1.bf16.msra.mxu0 0
    %215 = vmatprep.subr.bf16.mxu0 0
    %216 = vmatpush1.bf16.msra.mxu0 0
    %217 = vmatprep.subr.bf16.mxu0 %v178
    %218 = vmatpush1.bf16.msra.mxu0 %v177
    %219 = vmatprep.subr.bf16.mxu0 %v170
    %220 = vmatpush1.bf16.msra.mxu0 %v169
    %221 = vmatprep.subr.bf16.mxu0 0
    %222 = vmatpush2.bf16.msra.mxu0 0
    %223 = vmatprep.subr.bf16.mxu0 0
    %224 = vmatpush2.bf16.msra.mxu0 0
    %225 = vmatprep.subr.bf16.mxu0 0
    %226 = vmatpush2.bf16.msra.mxu0 0
    %227 = vmatprep.subr.bf16.mxu0 0
    %228 = vmatpush2.bf16.msra.mxu0 0
    %229 = vmatprep.subr.bf16.mxu0 0
    %230 = vmatpush2.bf16.msra.mxu0 0
    %231 = vmatprep.subr.bf16.mxu0 0
    %232 = vmatpush2.bf16.msra.mxu0 0
    %233 = vmatprep.subr.bf16.mxu0 0
    %234 = vmatpush2.bf16.msra.mxu0 0
    %235 = vmatprep.subr.bf16.mxu0 0
    %236 = vmatpush2.bf16.msra.mxu0 0
    %237 = vmatprep.mubr.bf16.mxu0 0
    %238 = vmatmul.mubr.bf16.gmra.mxu0 %v203
    %v239 = vpop.f32.mrf.mxu0
    %v240 = vadd.f32 %v84, %v239
    %v241 = vpop.f32.mrf.mxu0
    %v242 = vadd.f32 %v88, %v241
    %v243 = vpop.f32.mrf.mxu0
    %v244 = vpop.f32.mrf.mxu0
    %245 = vdwg.mxu0
    %246 = vmatprep.subr.bf16.mxu0 0
    %247 = vmatpush1.bf16.msra.mxu0 0
    %248 = vmatprep.subr.bf16.mxu0 0
    %249 = vmatpush1.bf16.msra.mxu0 0
    %250 = vmatprep.subr.bf16.mxu0 0
    %251 = vmatpush1.bf16.msra.mxu0 0
    %252 = vmatprep.subr.bf16.mxu0 0
    %253 = vmatpush1.bf16.msra.mxu0 0
    %254 = vmatprep.subr.bf16.mxu0 0
    %255 = vmatpush1.bf16.msra.mxu0 0
    %256 = vmatprep.subr.bf16.mxu0 0
    %257 = vmatpush1.bf16.msra.mxu0 0
    %258 = vmatprep.subr.bf16.mxu0 %v180
    %259 = vmatpush1.bf16.msra.mxu0 %v179
    %260 = vmatprep.subr.bf16.mxu0 %v172
    %261 = vmatpush1.bf16.msra.mxu0 %v171
    %262 = vmatprep.subr.bf16.mxu0 0
    %263 = vmatpush2.bf16.msra.mxu0 0
    %264 = vmatprep.subr.bf16.mxu0 0
    %265 = vmatpush2.bf16.msra.mxu0 0
    %266 = vmatprep.subr.bf16.mxu0 0
    %267 = vmatpush2.bf16.msra.mxu0 0
    %268 = vmatprep.subr.bf16.mxu0 0
    %269 = vmatpush2.bf16.msra.mxu0 0
    %270 = vmatprep.subr.bf16.mxu0 0
    %271 = vmatpush2.bf16.msra.mxu0 0
    %272 = vmatprep.subr.bf16.mxu0 0
    %273 = vmatpush2.bf16.msra.mxu0 0
    %274 = vmatprep.subr.bf16.mxu0 0
    %275 = vmatpush2.bf16.msra.mxu0 0
    %276 = vmatprep.subr.bf16.mxu0 0
    %277 = vmatpush2.bf16.msra.mxu0 0
    %278 = vmatprep.mubr.bf16.mxu0 0
    %279 = vmatmul.mubr.bf16.gmra.mxu0 %v203
    %v280 = vpop.f32.mrf.mxu0
    %v281 = vadd.f32 %v92, %v280
    %v282 = vpop.f32.mrf.mxu0
    %v283 = vadd.f32 %v96, %v282
    %v284 = vpop.f32.mrf.mxu0
    %v285 = vpop.f32.mrf.mxu0
    %286 = vdwg.mxu0
    %287 = vmatprep.subr.bf16.mxu0 0
    %288 = vmatpush1.bf16.msra.mxu0 0
    %289 = vmatprep.subr.bf16.mxu0 0
    %290 = vmatpush1.bf16.msra.mxu0 0
    %291 = vmatprep.subr.bf16.mxu0 0
    %292 = vmatpush1.bf16.msra.mxu0 0
    %293 = vmatprep.subr.bf16.mxu0 0
    %294 = vmatpush1.bf16.msra.mxu0 0
    %295 = vmatprep.subr.bf16.mxu0 0
    %296 = vmatpush1.bf16.msra.mxu0 0
    %297 = vmatprep.subr.bf16.mxu0 0
    %298 = vmatpush1.bf16.msra.mxu0 0
    %299 = vmatprep.subr.bf16.mxu0 %v182
    %300 = vmatpush1.bf16.msra.mxu0 %v181
    %301 = vmatprep.subr.bf16.mxu0 %v174
    %302 = vmatpush1.bf16.msra.mxu0 %v173
    %303 = vmatprep.subr.bf16.mxu0 0
    %304 = vmatpush2.bf16.msra.mxu0 0
    %305 = vmatprep.subr.bf16.mxu0 0
    %306 = vmatpush2.bf16.msra.mxu0 0
    %307 = vmatprep.subr.bf16.mxu0 0
    %308 = vmatpush2.bf16.msra.mxu0 0
    %309 = vmatprep.subr.bf16.mxu0 0
    %310 = vmatpush2.bf16.msra.mxu0 0
    %311 = vmatprep.subr.bf16.mxu0 0
    %312 = vmatpush2.bf16.msra.mxu0 0
    %313 = vmatprep.subr.bf16.mxu0 0
    %314 = vmatpush2.bf16.msra.mxu0 0
    %315 = vmatprep.subr.bf16.mxu0 0
    %316 = vmatpush2.bf16.msra.mxu0 0
    %317 = vmatprep.subr.bf16.mxu0 0
    %318 = vmatpush2.bf16.msra.mxu0 0
    %319 = vmatprep.mubr.bf16.mxu0 0
    %320 = vmatmul.mubr.bf16.gmra.mxu0 %v203
    %v321 = vpop.f32.mrf.mxu0
    %v322 = vadd.f32 %v100, %v321
    %v323 = vpop.f32.mrf.mxu0
    %v324 = vadd.f32 %v104, %v323
    %v325 = vpop.f32.mrf.mxu0
    %v326 = vpop.f32.mrf.mxu0
    %327 = vdwg.mxu0
    %328 = vmatprep.subr.bf16.mxu0 0
    %329 = vmatpush1.bf16.msra.mxu0 0
    %330 = vmatprep.subr.bf16.mxu0 0
    %331 = vmatpush1.bf16.msra.mxu0 0
    %332 = vmatprep.subr.bf16.mxu0 0
    %333 = vmatpush1.bf16.msra.mxu0 0
    %334 = vmatprep.subr.bf16.mxu0 0
    %335 = vmatpush1.bf16.msra.mxu0 0
    %336 = vmatprep.subr.bf16.mxu0 0
    %337 = vmatpush1.bf16.msra.mxu0 0
    %338 = vmatprep.subr.bf16.mxu0 0
    %339 = vmatpush1.bf16.msra.mxu0 0
    %340 = vmatprep.subr.bf16.mxu0 %v184
    %341 = vmatpush1.bf16.msra.mxu0 %v183
    %342 = vmatprep.subr.bf16.mxu0 %v176
    %343 = vmatpush1.bf16.msra.mxu0 %v175
    %344 = vmatprep.subr.bf16.mxu0 0
    %345 = vmatpush2.bf16.msra.mxu0 0
    %346 = vmatprep.subr.bf16.mxu0 0
    %347 = vmatpush2.bf16.msra.mxu0 0
    %348 = vmatprep.subr.bf16.mxu0 0
    %349 = vmatpush2.bf16.msra.mxu0 0
    %350 = vmatprep.subr.bf16.mxu0 0
    %351 = vmatpush2.bf16.msra.mxu0 0
    %352 = vmatprep.subr.bf16.mxu0 0
    %353 = vmatpush2.bf16.msra.mxu0 0
    %354 = vmatprep.subr.bf16.mxu0 0
    %355 = vmatpush2.bf16.msra.mxu0 0
    %356 = vmatprep.subr.bf16.mxu0 0
    %357 = vmatpush2.bf16.msra.mxu0 0
    %358 = vmatprep.subr.bf16.mxu0 0
    %359 = vmatpush2.bf16.msra.mxu0 0
    %360 = vmatprep.mubr.bf16.mxu0 0
    %361 = vmatmul.mubr.bf16.gmra.mxu0 %v203
    %v362 = vpop.f32.mrf.mxu0
    %v363 = vadd.f32 %v108, %v362
    %v364 = vpop.f32.mrf.mxu0
    %v365 = vadd.f32 %v112, %v364
    %v366 = vpop.f32.mrf.mxu0
    %v367 = vpop.f32.mrf.mxu0
    %368 = vdwg.mxu0
    %v369 = vmax.f32 %v240, 0.0
    %v370 = vmax.f32 %v242, 0.0
    %v371 = vmax.f32 %v281, 0.0
    %v372 = vmax.f32 %v283, 0.0
    %v373 = vmax.f32 %v322, 0.0
    %v374 = vmax.f32 %v324, 0.0
    %v375 = vmax.f32 %v363, 0.0
    %v376 = vmax.f32 %v365, 0.0
    %v377 = vld [vmem:[#allocation2] sm:$0xff]
    %v378 = vld [vmem:[#allocation2 + $0x8] sm:$0xff]
    %v379 = vld [vmem:[#allocation2 + $0x10] sm:$0xff]
    %v380 = vld [vmem:[#allocation2 + $0x18] sm:$0xff]
    %v381 = vld [vmem:[#allocation2 + $0x20] sm:$0xff]
    %v382 = vld [vmem:[#allocation2 + $0x28] sm:$0xff]
    %v383 = vld [vmem:[#allocation2 + $0x30] sm:$0xff]
    %v384 = vld [vmem:[#allocation2 + $0x38] sm:$0xff]
    %v385 = vld [vmem:[#allocation2 + $0x40] sm:$0xff]
    %v386 = vld [vmem:[#allocation2 + $0x48] sm:$0xff]
    %v387 = vld [vmem:[#allocation2 + $0x50] sm:$0xff]
    %v388 = vld [vmem:[#allocation2 + $0x58] sm:$0xff]
    %v389 = vld [vmem:[#allocation2 + $0x60] sm:$0xff]
    %v390 = vld [vmem:[#allocation2 + $0x68] sm:$0xff]
    %v391 = vld [vmem:[#allocation2 + $0x70] sm:$0xff]
    %v392 = vld [vmem:[#allocation2 + $0x78] sm:$0xff]
    %v393 = vld [vmem:[#allocation2 + $0x80] sm:$0xff]
    %v394 = vld [vmem:[#allocation2 + $0x88] sm:$0xff]
    %v395 = vld [vmem:[#allocation2 + $0x90] sm:$0xff]
    %v396 = vld [vmem:[#allocation2 + $0x98] sm:$0xff]
    %v397 = vld [vmem:[#allocation2 + $0xa0] sm:$0xff]
    %v398 = vld [vmem:[#allocation2 + $0xa8] sm:$0xff]
    %v399 = vld [vmem:[#allocation2 + $0xb0] sm:$0xff]
    %v400 = vld [vmem:[#allocation2 + $0xb8] sm:$0xff]
    %v401 = vld [vmem:[#allocation2 + $0xc0] sm:$0xff]
    %v402 = vld [vmem:[#allocation2 + $0xc8] sm:$0xff]
    %v403 = vld [vmem:[#allocation2 + $0xd0] sm:$0xff]
    %v404 = vld [vmem:[#allocation2 + $0xd8] sm:$0xff]
    %v405 = vld [vmem:[#allocation2 + $0xe0] sm:$0xff]
    %v406 = vld [vmem:[#allocation2 + $0xe8] sm:$0xff]
    %v407 = vld [vmem:[#allocation2 + $0xf0] sm:$0xff]
    %v408 = vld [vmem:[#allocation2 + $0xf8] sm:$0xff]
    %v409 = vld [vmem:[#allocation2 + $0x100] sm:$0xff]
    %v410 = vld [vmem:[#allocation2 + $0x108] sm:$0xff]
    %v411 = vld [vmem:[#allocation2 + $0x110] sm:$0xff]
    %v412 = vld [vmem:[#allocation2 + $0x118] sm:$0xff]
    %v413 = vld [vmem:[#allocation2 + $0x120] sm:$0xff]
    %v414 = vld [vmem:[#allocation2 + $0x128] sm:$0xff]
    %v415 = vld [vmem:[#allocation2 + $0x130] sm:$0xff]
    %v416 = vld [vmem:[#allocation2 + $0x138] sm:$0xff]
    %v417 = vld [vmem:[#allocation2 + $0x140] sm:$0xff]
    %v418 = vld [vmem:[#allocation2 + $0x148] sm:$0xff]
    %v419 = vld [vmem:[#allocation2 + $0x150] sm:$0xff]
    %v420 = vld [vmem:[#allocation2 + $0x158] sm:$0xff]
    %v421 = vld [vmem:[#allocation2 + $0x160] sm:$0xff]
    %v422 = vld [vmem:[#allocation2 + $0x168] sm:$0xff]
    %v423 = vld [vmem:[#allocation2 + $0x170] sm:$0xff]
    %v424 = vld [vmem:[#allocation2 + $0x178] sm:$0xff]
    %v425 = vld [vmem:[#allocation2 + $0x180] sm:$0xff]
    %v426 = vld [vmem:[#allocation2 + $0x188] sm:$0xff]
    %v427 = vld [vmem:[#allocation2 + $0x190] sm:$0xff]
    %v428 = vld [vmem:[#allocation2 + $0x198] sm:$0xff]
    %v429 = vld [vmem:[#allocation2 + $0x1a0] sm:$0xff]
    %v430 = vld [vmem:[#allocation2 + $0x1a8] sm:$0xff]
    %v431 = vld [vmem:[#allocation2 + $0x1b0] sm:$0xff]
    %v432 = vld [vmem:[#allocation2 + $0x1b8] sm:$0xff]
    %v433 = vld [vmem:[#allocation2 + $0x1c0] sm:$0xff]
    %v434 = vld [vmem:[#allocation2 + $0x1c8] sm:$0xff]
    %v435 = vld [vmem:[#allocation2 + $0x1d0] sm:$0xff]
    %v436 = vld [vmem:[#allocation2 + $0x1d8] sm:$0xff]
    %v437 = vld [vmem:[#allocation2 + $0x1e0] sm:$0xff]
    %v438 = vld [vmem:[#allocation2 + $0x1e8] sm:$0xff]
    %v439 = vld [vmem:[#allocation2 + $0x1f0] sm:$0xff]
    %v440 = vld [vmem:[#allocation2 + $0x1f8] sm:$0xff]
    %v441 = vld [vmem:[%s4] sm:$0xf]
    %v442 = vpack.c.bf16 %v369, %v369
    %v443 = vpack.c.bf16 %v370, %v370
    %v445 = vlaneseq
    %v446 = vshrl.u32 %v445, 7
    %v447 = vsub.s32 0, %v446
    %v448 = vrot.slane %v441, %v447
    %v449 = vlaneseq
    %v450 = vshrl.u32 %v449, 7
    %v451 = vsub.s32 1, %v450
    %v452 = vrot.slane %v441, %v451
    %v453 = vlaneseq
    %v454 = vshrl.u32 %v453, 7
    %v455 = vsub.s32 2, %v454
    %v456 = vrot.slane %v441, %v455
    %v457 = vlaneseq
    %v458 = vshrl.u32 %v457, 7
    %v459 = vsub.s32 3, %v458
    %v460 = vrot.slane %v441, %v459
    %v529 = vunpack.c.l.b16 %v377
    %v530 = vunpack.c.h.b16 %v377
    %v531 = vunpack.c.l.b16 %v378
    %v532 = vunpack.c.h.b16 %v378
    %v533 = vunpack.c.l.b16 %v379
    %v534 = vunpack.c.h.b16 %v379
    %v535 = vunpack.c.l.b16 %v380
    %v536 = vunpack.c.h.b16 %v380
    %v537 = vunpack.c.l.b16 %v381
    %v538 = vunpack.c.h.b16 %v381
    %v539 = vunpack.c.l.b16 %v382
    %v540 = vunpack.c.h.b16 %v382
    %v541 = vunpack.c.l.b16 %v383
    %v542 = vunpack.c.h.b16 %v383
    %v543 = vunpack.c.l.b16 %v384
    %v544 = vunpack.c.h.b16 %v384
    %v545 = vunpack.c.l.b16 %v385
    %v546 = vunpack.c.h.b16 %v385
    %v547 = vunpack.c.l.b16 %v386
    %v548 = vunpack.c.h.b16 %v386
    %v549 = vunpack.c.l.b16 %v387
    %v550 = vunpack.c.h.b16 %v387
    %v551 = vunpack.c.l.b16 %v388
    %v552 = vunpack.c.h.b16 %v388
    %v553 = vunpack.c.l.b16 %v389
    %v554 = vunpack.c.h.b16 %v389
    %v555 = vunpack.c.l.b16 %v390
    %v556 = vunpack.c.h.b16 %v390
    %v557 = vunpack.c.l.b16 %v391
    %v558 = vunpack.c.h.b16 %v391
    %v559 = vunpack.c.l.b16 %v392
    %v560 = vunpack.c.h.b16 %v392
    %v561 = vunpack.c.l.b16 %v393
    %v562 = vunpack.c.h.b16 %v393
    %v563 = vunpack.c.l.b16 %v394
    %v564 = vunpack.c.h.b16 %v394
    %v565 = vunpack.c.l.b16 %v395
    %v566 = vunpack.c.h.b16 %v395
    %v567 = vunpack.c.l.b16 %v396
    %v568 = vunpack.c.h.b16 %v396
    %v569 = vunpack.c.l.b16 %v397
    %v570 = vunpack.c.h.b16 %v397
    %v571 = vunpack.c.l.b16 %v398
    %v572 = vunpack.c.h.b16 %v398
    %v573 = vunpack.c.l.b16 %v399
    %v574 = vunpack.c.h.b16 %v399
    %v575 = vunpack.c.l.b16 %v400
    %v576 = vunpack.c.h.b16 %v400
    %v577 = vunpack.c.l.b16 %v401
    %v578 = vunpack.c.h.b16 %v401
    %v579 = vunpack.c.l.b16 %v402
    %v580 = vunpack.c.h.b16 %v402
    %v581 = vunpack.c.l.b16 %v403
    %v582 = vunpack.c.h.b16 %v403
    %v583 = vunpack.c.l.b16 %v404
    %v584 = vunpack.c.h.b16 %v404
    %v585 = vunpack.c.l.b16 %v405
    %v586 = vunpack.c.h.b16 %v405
    %v587 = vunpack.c.l.b16 %v406
    %v588 = vunpack.c.h.b16 %v406
    %v589 = vunpack.c.l.b16 %v407
    %v590 = vunpack.c.h.b16 %v407
    %v591 = vunpack.c.l.b16 %v408
    %v592 = vunpack.c.h.b16 %v408
    %v593 = vunpack.c.l.b16 %v409
    %v594 = vunpack.c.h.b16 %v409
    %v595 = vunpack.c.l.b16 %v410
    %v596 = vunpack.c.h.b16 %v410
    %v597 = vunpack.c.l.b16 %v411
    %v598 = vunpack.c.h.b16 %v411
    %v599 = vunpack.c.l.b16 %v412
    %v600 = vunpack.c.h.b16 %v412
    %v601 = vunpack.c.l.b16 %v413
    %v602 = vunpack.c.h.b16 %v413
    %v603 = vunpack.c.l.b16 %v414
    %v604 = vunpack.c.h.b16 %v414
    %v605 = vunpack.c.l.b16 %v415
    %v606 = vunpack.c.h.b16 %v415
    %v607 = vunpack.c.l.b16 %v416
    %v608 = vunpack.c.h.b16 %v416
    %v609 = vunpack.c.l.b16 %v417
    %v610 = vunpack.c.h.b16 %v417
    %v611 = vunpack.c.l.b16 %v418
    %v612 = vunpack.c.h.b16 %v418
    %v613 = vunpack.c.l.b16 %v419
    %v614 = vunpack.c.h.b16 %v419
    %v615 = vunpack.c.l.b16 %v420
    %v616 = vunpack.c.h.b16 %v420
    %v617 = vunpack.c.l.b16 %v421
    %v618 = vunpack.c.h.b16 %v421
    %v619 = vunpack.c.l.b16 %v422
    %v620 = vunpack.c.h.b16 %v422
    %v621 = vunpack.c.l.b16 %v423
    %v622 = vunpack.c.h.b16 %v423
    %v623 = vunpack.c.l.b16 %v424
    %v624 = vunpack.c.h.b16 %v424
    %v625 = vunpack.c.l.b16 %v425
    %v626 = vunpack.c.h.b16 %v425
    %v627 = vunpack.c.l.b16 %v426
    %v628 = vunpack.c.h.b16 %v426
    %v629 = vunpack.c.l.b16 %v427
    %v630 = vunpack.c.h.b16 %v427
    %v631 = vunpack.c.l.b16 %v428
    %v632 = vunpack.c.h.b16 %v428
    %v633 = vunpack.c.l.b16 %v429
    %v634 = vunpack.c.h.b16 %v429
    %v635 = vunpack.c.l.b16 %v430
    %v636 = vunpack.c.h.b16 %v430
    %v637 = vunpack.c.l.b16 %v431
    %v638 = vunpack.c.h.b16 %v431
    %v639 = vunpack.c.l.b16 %v432
    %v640 = vunpack.c.h.b16 %v432
    %v641 = vunpack.c.l.b16 %v433
    %v642 = vunpack.c.h.b16 %v433
    %v643 = vunpack.c.l.b16 %v434
    %v644 = vunpack.c.h.b16 %v434
    %v645 = vunpack.c.l.b16 %v435
    %v646 = vunpack.c.h.b16 %v435
    %v647 = vunpack.c.l.b16 %v436
    %v648 = vunpack.c.h.b16 %v436
    %v649 = vunpack.c.l.b16 %v437
    %v650 = vunpack.c.h.b16 %v437
    %v651 = vunpack.c.l.b16 %v438
    %v652 = vunpack.c.h.b16 %v438
    %v653 = vunpack.c.l.b16 %v439
    %v654 = vunpack.c.h.b16 %v439
    %v655 = vunpack.c.l.b16 %v440
    %v656 = vunpack.c.h.b16 %v440
    %v657 = vpack.c.b16 %v533, %v529
    %v658 = vpack.c.b16 %v534, %v530
    %v659 = vpack.c.b16 %v535, %v531
    %v660 = vpack.c.b16 %v536, %v532
    %v661 = vpack.c.b16 %v541, %v537
    %v662 = vpack.c.b16 %v542, %v538
    %v663 = vpack.c.b16 %v543, %v539
    %v664 = vpack.c.b16 %v544, %v540
    %v665 = vpack.c.b16 %v549, %v545
    %v666 = vpack.c.b16 %v550, %v546
    %v667 = vpack.c.b16 %v551, %v547
    %v668 = vpack.c.b16 %v552, %v548
    %v669 = vpack.c.b16 %v557, %v553
    %v670 = vpack.c.b16 %v558, %v554
    %v671 = vpack.c.b16 %v559, %v555
    %v672 = vpack.c.b16 %v560, %v556
    %v673 = vpack.c.b16 %v565, %v561
    %v674 = vpack.c.b16 %v566, %v562
    %v675 = vpack.c.b16 %v567, %v563
    %v676 = vpack.c.b16 %v568, %v564
    %v677 = vpack.c.b16 %v573, %v569
    %v678 = vpack.c.b16 %v574, %v570
    %v679 = vpack.c.b16 %v575, %v571
    %v680 = vpack.c.b16 %v576, %v572
    %v681 = vpack.c.b16 %v581, %v577
    %v682 = vpack.c.b16 %v582, %v578
    %v683 = vpack.c.b16 %v583, %v579
    %v684 = vpack.c.b16 %v584, %v580
    %v685 = vpack.c.b16 %v589, %v585
    %v686 = vpack.c.b16 %v590, %v586
    %v687 = vpack.c.b16 %v591, %v587
    %v688 = vpack.c.b16 %v592, %v588
    %v689 = vpack.c.b16 %v597, %v593
    %v690 = vpack.c.b16 %v598, %v594
    %v691 = vpack.c.b16 %v599, %v595
    %v692 = vpack.c.b16 %v600, %v596
    %v693 = vpack.c.b16 %v605, %v601
    %v694 = vpack.c.b16 %v606, %v602
    %v695 = vpack.c.b16 %v607, %v603
    %v696 = vpack.c.b16 %v608, %v604
    %v697 = vpack.c.b16 %v613, %v609
    %v698 = vpack.c.b16 %v614, %v610
    %v699 = vpack.c.b16 %v615, %v611
    %v700 = vpack.c.b16 %v616, %v612
    %v701 = vpack.c.b16 %v621, %v617
    %v702 = vpack.c.b16 %v622, %v618
    %v703 = vpack.c.b16 %v623, %v619
    %v704 = vpack.c.b16 %v624, %v620
    %v705 = vpack.c.b16 %v629, %v625
    %v706 = vpack.c.b16 %v630, %v626
    %v707 = vpack.c.b16 %v631, %v627
    %v708 = vpack.c.b16 %v632, %v628
    %v709 = vpack.c.b16 %v637, %v633
    %v710 = vpack.c.b16 %v638, %v634
    %v711 = vpack.c.b16 %v639, %v635
    %v712 = vpack.c.b16 %v640, %v636
    %v713 = vpack.c.b16 %v645, %v641
    %v714 = vpack.c.b16 %v646, %v642
    %v715 = vpack.c.b16 %v647, %v643
    %v716 = vpack.c.b16 %v648, %v644
    %v717 = vpack.c.b16 %v653, %v649
    %v718 = vpack.c.b16 %v654, %v650
    %v719 = vpack.c.b16 %v655, %v651
    %v720 = vpack.c.b16 %v656, %v652
    %785 = vmatprep.subr.bf16.mxu0 %v686
    %786 = vmatpush1.bf16.msra.mxu0 %v685
    %787 = vmatprep.subr.bf16.mxu0 %v682
    %788 = vmatpush1.bf16.msra.mxu0 %v681
    %789 = vmatprep.subr.bf16.mxu0 %v678
    %790 = vmatpush1.bf16.msra.mxu0 %v677
    %791 = vmatprep.subr.bf16.mxu0 %v674
    %792 = vmatpush1.bf16.msra.mxu0 %v673
    %793 = vmatprep.subr.bf16.mxu0 %v670
    %794 = vmatpush1.bf16.msra.mxu0 %v669
    %795 = vmatprep.subr.bf16.mxu0 %v666
    %796 = vmatpush1.bf16.msra.mxu0 %v665
    %797 = vmatprep.subr.bf16.mxu0 %v662
    %798 = vmatpush1.bf16.msra.mxu0 %v661
    %799 = vmatprep.subr.bf16.mxu0 %v658
    %800 = vmatpush1.bf16.msra.mxu0 %v657
    %801 = vmatprep.subr.bf16.mxu0 %v718
    %802 = vmatpush2.bf16.msra.mxu0 %v717
    %803 = vmatprep.subr.bf16.mxu0 %v714
    %804 = vmatpush2.bf16.msra.mxu0 %v713
    %805 = vmatprep.subr.bf16.mxu0 %v710
    %806 = vmatpush2.bf16.msra.mxu0 %v709
    %807 = vmatprep.subr.bf16.mxu0 %v706
    %808 = vmatpush2.bf16.msra.mxu0 %v705
    %809 = vmatprep.subr.bf16.mxu0 %v702
    %810 = vmatpush2.bf16.msra.mxu0 %v701
    %811 = vmatprep.subr.bf16.mxu0 %v698
    %812 = vmatpush2.bf16.msra.mxu0 %v697
    %813 = vmatprep.subr.bf16.mxu0 %v694
    %814 = vmatpush2.bf16.msra.mxu0 %v693
    %815 = vmatprep.subr.bf16.mxu0 %v690
    %816 = vmatpush2.bf16.msra.mxu0 %v689
    %817 = vmatprep.mubr.bf16.mxu0 %v443
    %818 = vmatmul.mubr.bf16.gmra.mxu0 %v442
    %v819 = vpop.f32.mrf.mxu0
    %v820 = vadd.f32 %v448, %v819
    %v821 = vpop.f32.mrf.mxu0
    %v822 = vadd.f32 %v452, %v821
    %v823 = vpop.f32.mrf.mxu0
    %v824 = vpop.f32.mrf.mxu0
    %825 = vdwg.mxu0
    %826 = vmatprep.subr.bf16.mxu0 %v688
    %827 = vmatpush1.bf16.msra.mxu0 %v687
    %828 = vmatprep.subr.bf16.mxu0 %v684
    %829 = vmatpush1.bf16.msra.mxu0 %v683
    %830 = vmatprep.subr.bf16.mxu0 %v680
    %831 = vmatpush1.bf16.msra.mxu0 %v679
    %832 = vmatprep.subr.bf16.mxu0 %v676
    %833 = vmatpush1.bf16.msra.mxu0 %v675
    %834 = vmatprep.subr.bf16.mxu0 %v672
    %835 = vmatpush1.bf16.msra.mxu0 %v671
    %836 = vmatprep.subr.bf16.mxu0 %v668
    %837 = vmatpush1.bf16.msra.mxu0 %v667
    %838 = vmatprep.subr.bf16.mxu0 %v664
    %839 = vmatpush1.bf16.msra.mxu0 %v663
    %840 = vmatprep.subr.bf16.mxu0 %v660
    %841 = vmatpush1.bf16.msra.mxu0 %v659
    %842 = vmatprep.subr.bf16.mxu0 %v720
    %843 = vmatpush2.bf16.msra.mxu0 %v719
    %844 = vmatprep.subr.bf16.mxu0 %v716
    %845 = vmatpush2.bf16.msra.mxu0 %v715
    %846 = vmatprep.subr.bf16.mxu0 %v712
    %847 = vmatpush2.bf16.msra.mxu0 %v711
    %848 = vmatprep.subr.bf16.mxu0 %v708
    %849 = vmatpush2.bf16.msra.mxu0 %v707
    %850 = vmatprep.subr.bf16.mxu0 %v704
    %851 = vmatpush2.bf16.msra.mxu0 %v703
    %852 = vmatprep.subr.bf16.mxu0 %v700
    %853 = vmatpush2.bf16.msra.mxu0 %v699
    %854 = vmatprep.subr.bf16.mxu0 %v696
    %855 = vmatpush2.bf16.msra.mxu0 %v695
    %856 = vmatprep.subr.bf16.mxu0 %v692
    %857 = vmatpush2.bf16.msra.mxu0 %v691
    %858 = vmatprep.mubr.bf16.mxu0 %v443
    %859 = vmatmul.mubr.bf16.gmra.mxu0 %v442
    %v860 = vpop.f32.mrf.mxu0
    %v861 = vadd.f32 %v456, %v860
    %v862 = vpop.f32.mrf.mxu0
    %v863 = vadd.f32 %v460, %v862
    %v864 = vpop.f32.mrf.mxu0
    %v865 = vpop.f32.mrf.mxu0
    %866 = vdwg.mxu0
    %v867 = vmax.f32 %v820, 0.0
    %v868 = vmax.f32 %v822, 0.0
    %v869 = vmax.f32 %v861, 0.0
    %v870 = vmax.f32 %v863, 0.0
    %v871 = vpack.c.bf16 %v371, %v371
    %v872 = vpack.c.bf16 %v372, %v372
    %873 = vmatprep.subr.bf16.mxu0 %v686
    %874 = vmatpush1.bf16.msra.mxu0 %v685
    %875 = vmatprep.subr.bf16.mxu0 %v682
    %876 = vmatpush1.bf16.msra.mxu0 %v681
    %877 = vmatprep.subr.bf16.mxu0 %v678
    %878 = vmatpush1.bf16.msra.mxu0 %v677
    %879 = vmatprep.subr.bf16.mxu0 %v674
    %880 = vmatpush1.bf16.msra.mxu0 %v673
    %881 = vmatprep.subr.bf16.mxu0 %v670
    %882 = vmatpush1.bf16.msra.mxu0 %v669
    %883 = vmatprep.subr.bf16.mxu0 %v666
    %884 = vmatpush1.bf16.msra.mxu0 %v665
    %885 = vmatprep.subr.bf16.mxu0 %v662
    %886 = vmatpush1.bf16.msra.mxu0 %v661
    %887 = vmatprep.subr.bf16.mxu0 %v658
    %888 = vmatpush1.bf16.msra.mxu0 %v657
    %889 = vmatprep.subr.bf16.mxu0 %v718
    %890 = vmatpush2.bf16.msra.mxu0 %v717
    %891 = vmatprep.subr.bf16.mxu0 %v714
    %892 = vmatpush2.bf16.msra.mxu0 %v713
    %893 = vmatprep.subr.bf16.mxu0 %v710
    %894 = vmatpush2.bf16.msra.mxu0 %v709
    %895 = vmatprep.subr.bf16.mxu0 %v706
    %896 = vmatpush2.bf16.msra.mxu0 %v705
    %897 = vmatprep.subr.bf16.mxu0 %v702
    %898 = vmatpush2.bf16.msra.mxu0 %v701
    %899 = vmatprep.subr.bf16.mxu0 %v698
    %900 = vmatpush2.bf16.msra.mxu0 %v697
    %901 = vmatprep.subr.bf16.mxu0 %v694
    %902 = vmatpush2.bf16.msra.mxu0 %v693
    %903 = vmatprep.subr.bf16.mxu0 %v690
    %904 = vmatpush2.bf16.msra.mxu0 %v689
    %905 = vmatprep.mubr.bf16.mxu0 %v872
    %906 = vmatmul.mubr.bf16.gmra.mxu0 %v871
    %v907 = vpop.f32.mrf.mxu0
    %v908 = vadd.f32 %v448, %v907
    %v909 = vpop.f32.mrf.mxu0
    %v910 = vadd.f32 %v452, %v909
    %v911 = vpop.f32.mrf.mxu0
    %v912 = vpop.f32.mrf.mxu0
    %913 = vdwg.mxu0
    %914 = vmatprep.subr.bf16.mxu0 %v688
    %915 = vmatpush1.bf16.msra.mxu0 %v687
    %916 = vmatprep.subr.bf16.mxu0 %v684
    %917 = vmatpush1.bf16.msra.mxu0 %v683
    %918 = vmatprep.subr.bf16.mxu0 %v680
    %919 = vmatpush1.bf16.msra.mxu0 %v679
    %920 = vmatprep.subr.bf16.mxu0 %v676
    %921 = vmatpush1.bf16.msra.mxu0 %v675
    %922 = vmatprep.subr.bf16.mxu0 %v672
    %923 = vmatpush1.bf16.msra.mxu0 %v671
    %924 = vmatprep.subr.bf16.mxu0 %v668
    %925 = vmatpush1.bf16.msra.mxu0 %v667
    %926 = vmatprep.subr.bf16.mxu0 %v664
    %927 = vmatpush1.bf16.msra.mxu0 %v663
    %928 = vmatprep.subr.bf16.mxu0 %v660
    %929 = vmatpush1.bf16.msra.mxu0 %v659
    %930 = vmatprep.subr.bf16.mxu0 %v720
    %931 = vmatpush2.bf16.msra.mxu0 %v719
    %932 = vmatprep.subr.bf16.mxu0 %v716
    %933 = vmatpush2.bf16.msra.mxu0 %v715
    %934 = vmatprep.subr.bf16.mxu0 %v712
    %935 = vmatpush2.bf16.msra.mxu0 %v711
    %936 = vmatprep.subr.bf16.mxu0 %v708
    %937 = vmatpush2.bf16.msra.mxu0 %v707
    %938 = vmatprep.subr.bf16.mxu0 %v704
    %939 = vmatpush2.bf16.msra.mxu0 %v703
    %940 = vmatprep.subr.bf16.mxu0 %v700
    %941 = vmatpush2.bf16.msra.mxu0 %v699
    %942 = vmatprep.subr.bf16.mxu0 %v696
    %943 = vmatpush2.bf16.msra.mxu0 %v695
    %944 = vmatprep.subr.bf16.mxu0 %v692
    %945 = vmatpush2.bf16.msra.mxu0 %v691
    %946 = vmatprep.mubr.bf16.mxu0 %v872
    %947 = vmatmul.mubr.bf16.gmra.mxu0 %v871
    %v948 = vpop.f32.mrf.mxu0
    %v949 = vadd.f32 %v456, %v948
    %v950 = vpop.f32.mrf.mxu0
    %v951 = vadd.f32 %v460, %v950
    %v952 = vpop.f32.mrf.mxu0
    %v953 = vpop.f32.mrf.mxu0
    %954 = vdwg.mxu0
    %v955 = vmax.f32 %v908, 0.0
    %v956 = vmax.f32 %v910, 0.0
    %v957 = vmax.f32 %v949, 0.0
    %v958 = vmax.f32 %v951, 0.0
    %v959 = vpack.c.bf16 %v373, %v373
    %v960 = vpack.c.bf16 %v374, %v374
    %961 = vmatprep.subr.bf16.mxu0 %v686
    %962 = vmatpush1.bf16.msra.mxu0 %v685
    %963 = vmatprep.subr.bf16.mxu0 %v682
    %964 = vmatpush1.bf16.msra.mxu0 %v681
    %965 = vmatprep.subr.bf16.mxu0 %v678
    %966 = vmatpush1.bf16.msra.mxu0 %v677
    %967 = vmatprep.subr.bf16.mxu0 %v674
    %968 = vmatpush1.bf16.msra.mxu0 %v673
    %969 = vmatprep.subr.bf16.mxu0 %v670
    %970 = vmatpush1.bf16.msra.mxu0 %v669
    %971 = vmatprep.subr.bf16.mxu0 %v666
    %972 = vmatpush1.bf16.msra.mxu0 %v665
    %973 = vmatprep.subr.bf16.mxu0 %v662
    %974 = vmatpush1.bf16.msra.mxu0 %v661
    %975 = vmatprep.subr.bf16.mxu0 %v658
    %976 = vmatpush1.bf16.msra.mxu0 %v657
    %977 = vmatprep.subr.bf16.mxu0 %v718
    %978 = vmatpush2.bf16.msra.mxu0 %v717
    %979 = vmatprep.subr.bf16.mxu0 %v714
    %980 = vmatpush2.bf16.msra.mxu0 %v713
    %981 = vmatprep.subr.bf16.mxu0 %v710
    %982 = vmatpush2.bf16.msra.mxu0 %v709
    %983 = vmatprep.subr.bf16.mxu0 %v706
    %984 = vmatpush2.bf16.msra.mxu0 %v705
    %985 = vmatprep.subr.bf16.mxu0 %v702
    %986 = vmatpush2.bf16.msra.mxu0 %v701
    %987 = vmatprep.subr.bf16.mxu0 %v698
    %988 = vmatpush2.bf16.msra.mxu0 %v697
    %989 = vmatprep.subr.bf16.mxu0 %v694
    %990 = vmatpush2.bf16.msra.mxu0 %v693
    %991 = vmatprep.subr.bf16.mxu0 %v690
    %992 = vmatpush2.bf16.msra.mxu0 %v689
    %993 = vmatprep.mubr.bf16.mxu0 %v960
    %994 = vmatmul.mubr.bf16.gmra.mxu0 %v959
    %v995 = vpop.f32.mrf.mxu0
    %v996 = vadd.f32 %v448, %v995
    %v997 = vpop.f32.mrf.mxu0
    %v998 = vadd.f32 %v452, %v997
    %v999 = vpop.f32.mrf.mxu0
    %v1000 = vpop.f32.mrf.mxu0
    %1001 = vdwg.mxu0
    %1002 = vmatprep.subr.bf16.mxu0 %v688
    %1003 = vmatpush1.bf16.msra.mxu0 %v687
    %1004 = vmatprep.subr.bf16.mxu0 %v684
    %1005 = vmatpush1.bf16.msra.mxu0 %v683
    %1006 = vmatprep.subr.bf16.mxu0 %v680
    %1007 = vmatpush1.bf16.msra.mxu0 %v679
    %1008 = vmatprep.subr.bf16.mxu0 %v676
    %1009 = vmatpush1.bf16.msra.mxu0 %v675
    %1010 = vmatprep.subr.bf16.mxu0 %v672
    %1011 = vmatpush1.bf16.msra.mxu0 %v671
    %1012 = vmatprep.subr.bf16.mxu0 %v668
    %1013 = vmatpush1.bf16.msra.mxu0 %v667
    %1014 = vmatprep.subr.bf16.mxu0 %v664
    %1015 = vmatpush1.bf16.msra.mxu0 %v663
    %1016 = vmatprep.subr.bf16.mxu0 %v660
    %1017 = vmatpush1.bf16.msra.mxu0 %v659
    %1018 = vmatprep.subr.bf16.mxu0 %v720
    %1019 = vmatpush2.bf16.msra.mxu0 %v719
    %1020 = vmatprep.subr.bf16.mxu0 %v716
    %1021 = vmatpush2.bf16.msra.mxu0 %v715
    %1022 = vmatprep.subr.bf16.mxu0 %v712
    %1023 = vmatpush2.bf16.msra.mxu0 %v711
    %1024 = vmatprep.subr.bf16.mxu0 %v708
    %1025 = vmatpush2.bf16.msra.mxu0 %v707
    %1026 = vmatprep.subr.bf16.mxu0 %v704
    %1027 = vmatpush2.bf16.msra.mxu0 %v703
    %1028 = vmatprep.subr.bf16.mxu0 %v700
    %1029 = vmatpush2.bf16.msra.mxu0 %v699
    %1030 = vmatprep.subr.bf16.mxu0 %v696
    %1031 = vmatpush2.bf16.msra.mxu0 %v695
    %1032 = vmatprep.subr.bf16.mxu0 %v692
    %1033 = vmatpush2.bf16.msra.mxu0 %v691
    %1034 = vmatprep.mubr.bf16.mxu0 %v960
    %1035 = vmatmul.mubr.bf16.gmra.mxu0 %v959
    %v1036 = vpop.f32.mrf.mxu0
    %v1037 = vadd.f32 %v456, %v1036
    %v1038 = vpop.f32.mrf.mxu0
    %v1039 = vadd.f32 %v460, %v1038
    %v1040 = vpop.f32.mrf.mxu0
    %v1041 = vpop.f32.mrf.mxu0
    %1042 = vdwg.mxu0
    %v1043 = vmax.f32 %v996, 0.0
    %v1044 = vmax.f32 %v998, 0.0
    %v1045 = vmax.f32 %v1037, 0.0
    %v1046 = vmax.f32 %v1039, 0.0
    %v1047 = vpack.c.bf16 %v375, %v375
    %v1048 = vpack.c.bf16 %v376, %v376
    %1049 = vmatprep.subr.bf16.mxu0 %v686
    %1050 = vmatpush1.bf16.msra.mxu0 %v685
    %1051 = vmatprep.subr.bf16.mxu0 %v682
    %1052 = vmatpush1.bf16.msra.mxu0 %v681
    %1053 = vmatprep.subr.bf16.mxu0 %v678
    %1054 = vmatpush1.bf16.msra.mxu0 %v677
    %1055 = vmatprep.subr.bf16.mxu0 %v674
    %1056 = vmatpush1.bf16.msra.mxu0 %v673
    %1057 = vmatprep.subr.bf16.mxu0 %v670
    %1058 = vmatpush1.bf16.msra.mxu0 %v669
    %1059 = vmatprep.subr.bf16.mxu0 %v666
    %1060 = vmatpush1.bf16.msra.mxu0 %v665
    %1061 = vmatprep.subr.bf16.mxu0 %v662
    %1062 = vmatpush1.bf16.msra.mxu0 %v661
    %1063 = vmatprep.subr.bf16.mxu0 %v658
    %1064 = vmatpush1.bf16.msra.mxu0 %v657
    %1065 = vmatprep.subr.bf16.mxu0 %v718
    %1066 = vmatpush2.bf16.msra.mxu0 %v717
    %1067 = vmatprep.subr.bf16.mxu0 %v714
    %1068 = vmatpush2.bf16.msra.mxu0 %v713
    %1069 = vmatprep.subr.bf16.mxu0 %v710
    %1070 = vmatpush2.bf16.msra.mxu0 %v709
    %1071 = vmatprep.subr.bf16.mxu0 %v706
    %1072 = vmatpush2.bf16.msra.mxu0 %v705
    %1073 = vmatprep.subr.bf16.mxu0 %v702
    %1074 = vmatpush2.bf16.msra.mxu0 %v701
    %1075 = vmatprep.subr.bf16.mxu0 %v698
    %1076 = vmatpush2.bf16.msra.mxu0 %v697
    %1077 = vmatprep.subr.bf16.mxu0 %v694
    %1078 = vmatpush2.bf16.msra.mxu0 %v693
    %1079 = vmatprep.subr.bf16.mxu0 %v690
    %1080 = vmatpush2.bf16.msra.mxu0 %v689
    %1081 = vmatprep.mubr.bf16.mxu0 %v1048
    %1082 = vmatmul.mubr.bf16.gmra.mxu0 %v1047
    %v1083 = vpop.f32.mrf.mxu0
    %v1084 = vadd.f32 %v448, %v1083
    %v1085 = vpop.f32.mrf.mxu0
    %v1086 = vadd.f32 %v452, %v1085
    %v1087 = vpop.f32.mrf.mxu0
    %v1088 = vpop.f32.mrf.mxu0
    %1089 = vdwg.mxu0
    %1090 = vmatprep.subr.bf16.mxu0 %v688
    %1091 = vmatpush1.bf16.msra.mxu0 %v687
    %1092 = vmatprep.subr.bf16.mxu0 %v684
    %1093 = vmatpush1.bf16.msra.mxu0 %v683
    %1094 = vmatprep.subr.bf16.mxu0 %v680
    %1095 = vmatpush1.bf16.msra.mxu0 %v679
    %1096 = vmatprep.subr.bf16.mxu0 %v676
    %1097 = vmatpush1.bf16.msra.mxu0 %v675
    %1098 = vmatprep.subr.bf16.mxu0 %v672
    %1099 = vmatpush1.bf16.msra.mxu0 %v671
    %1100 = vmatprep.subr.bf16.mxu0 %v668
    %1101 = vmatpush1.bf16.msra.mxu0 %v667
    %1102 = vmatprep.subr.bf16.mxu0 %v664
    %1103 = vmatpush1.bf16.msra.mxu0 %v663
    %1104 = vmatprep.subr.bf16.mxu0 %v660
    %1105 = vmatpush1.bf16.msra.mxu0 %v659
    %1106 = vmatprep.subr.bf16.mxu0 %v720
    %1107 = vmatpush2.bf16.msra.mxu0 %v719
    %1108 = vmatprep.subr.bf16.mxu0 %v716
    %1109 = vmatpush2.bf16.msra.mxu0 %v715
    %1110 = vmatprep.subr.bf16.mxu0 %v712
    %1111 = vmatpush2.bf16.msra.mxu0 %v711
    %1112 = vmatprep.subr.bf16.mxu0 %v708
    %1113 = vmatpush2.bf16.msra.mxu0 %v707
    %1114 = vmatprep.subr.bf16.mxu0 %v704
    %1115 = vmatpush2.bf16.msra.mxu0 %v703
    %1116 = vmatprep.subr.bf16.mxu0 %v700
    %1117 = vmatpush2.bf16.msra.mxu0 %v699
    %1118 = vmatprep.subr.bf16.mxu0 %v696
    %1119 = vmatpush2.bf16.msra.mxu0 %v695
    %1120 = vmatprep.subr.bf16.mxu0 %v692
    %1121 = vmatpush2.bf16.msra.mxu0 %v691
    %1122 = vmatprep.mubr.bf16.mxu0 %v1048
    %1123 = vmatmul.mubr.bf16.gmra.mxu0 %v1047
    %v1124 = vpop.f32.mrf.mxu0
    %v1125 = vadd.f32 %v456, %v1124
    %v1126 = vpop.f32.mrf.mxu0
    %v1127 = vadd.f32 %v460, %v1126
    %v1128 = vpop.f32.mrf.mxu0
    %v1129 = vpop.f32.mrf.mxu0
    %1130 = vdwg.mxu0
    %v1131 = vmax.f32 %v1084, 0.0
    %v1132 = vmax.f32 %v1086, 0.0
    %v1133 = vmax.f32 %v1125, 0.0
    %v1134 = vmax.f32 %v1127, 0.0
    %v1135 = vld [vmem:[%s5] sm:$0xff]
    %v1136 = vld [vmem:[%s5 + $0x8] sm:$0xff]
    %v1137 = vld [vmem:[%s5 + $0x10] sm:$0xff]
    %v1138 = vld [vmem:[%s5 + $0x18] sm:$0xff]
    %v1139 = vld [vmem:[%s5 + $0x20] sm:$0xff]
    %v1140 = vld [vmem:[%s5 + $0x28] sm:$0xff]
    %v1141 = vld [vmem:[%s5 + $0x30] sm:$0xff]
    %v1142 = vld [vmem:[%s5 + $0x38] sm:$0xff]
    %v1143 = vld [vmem:[%s5 + $0x40] sm:$0xff]
    %v1144 = vld [vmem:[%s5 + $0x48] sm:$0xff]
    %v1145 = vld [vmem:[%s5 + $0x50] sm:$0xff]
    %v1146 = vld [vmem:[%s5 + $0x58] sm:$0xff]
    %v1147 = vld [vmem:[%s5 + $0x60] sm:$0xff]
    %v1148 = vld [vmem:[%s5 + $0x68] sm:$0xff]
    %v1149 = vld [vmem:[%s5 + $0x70] sm:$0xff]
    %v1150 = vld [vmem:[%s5 + $0x78] sm:$0xff]
    %v1151 = vld [vmem:[%s6] sm:$0x3]
    %v1152 = vpack.c.bf16 %v867, %v867
    %v1154 = vlaneseq
    %v1155 = vshrl.u32 %v1154, 7
    %v1156 = vsub.s32 0, %v1155
    %v1157 = vrot.slane %v1151, %v1156
    %v1158 = vlaneseq
    %v1159 = vshrl.u32 %v1158, 7
    %v1160 = vsub.s32 1, %v1159
    %v1161 = vrot.slane %v1151, %v1160
    %v1180 = vunpack.c.l.b16 %v1135
    %v1181 = vunpack.c.h.b16 %v1135
    %v1182 = vunpack.c.l.b16 %v1136
    %v1183 = vunpack.c.h.b16 %v1136
    %v1184 = vunpack.c.l.b16 %v1137
    %v1185 = vunpack.c.h.b16 %v1137
    %v1186 = vunpack.c.l.b16 %v1138
    %v1187 = vunpack.c.h.b16 %v1138
    %v1188 = vunpack.c.l.b16 %v1139
    %v1189 = vunpack.c.h.b16 %v1139
    %v1190 = vunpack.c.l.b16 %v1140
    %v1191 = vunpack.c.h.b16 %v1140
    %v1192 = vunpack.c.l.b16 %v1141
    %v1193 = vunpack.c.h.b16 %v1141
    %v1194 = vunpack.c.l.b16 %v1142
    %v1195 = vunpack.c.h.b16 %v1142
    %v1196 = vunpack.c.l.b16 %v1143
    %v1197 = vunpack.c.h.b16 %v1143
    %v1198 = vunpack.c.l.b16 %v1144
    %v1199 = vunpack.c.h.b16 %v1144
    %v1200 = vunpack.c.l.b16 %v1145
    %v1201 = vunpack.c.h.b16 %v1145
    %v1202 = vunpack.c.l.b16 %v1146
    %v1203 = vunpack.c.h.b16 %v1146
    %v1204 = vunpack.c.l.b16 %v1147
    %v1205 = vunpack.c.h.b16 %v1147
    %v1206 = vunpack.c.l.b16 %v1148
    %v1207 = vunpack.c.h.b16 %v1148
    %v1208 = vunpack.c.l.b16 %v1149
    %v1209 = vunpack.c.h.b16 %v1149
    %v1210 = vunpack.c.l.b16 %v1150
    %v1211 = vunpack.c.h.b16 %v1150
    %v1212 = vpack.c.b16 %v1182, %v1180
    %v1213 = vpack.c.b16 %v1183, %v1181
    %v1214 = vpack.c.b16 %v1186, %v1184
    %v1215 = vpack.c.b16 %v1187, %v1185
    %v1216 = vpack.c.b16 %v1190, %v1188
    %v1217 = vpack.c.b16 %v1191, %v1189
    %v1218 = vpack.c.b16 %v1194, %v1192
    %v1219 = vpack.c.b16 %v1195, %v1193
    %v1220 = vpack.c.b16 %v1198, %v1196
    %v1221 = vpack.c.b16 %v1199, %v1197
    %v1222 = vpack.c.b16 %v1202, %v1200
    %v1223 = vpack.c.b16 %v1203, %v1201
    %v1224 = vpack.c.b16 %v1206, %v1204
    %v1225 = vpack.c.b16 %v1207, %v1205
    %v1226 = vpack.c.b16 %v1210, %v1208
    %v1227 = vpack.c.b16 %v1211, %v1209
    %1244 = vmatprep.subr.bf16.mxu0 %v1227
    %1245 = vmatpush1.bf16.msra.mxu0 %v1226
    %1246 = vmatprep.subr.bf16.mxu0 %v1225
    %1247 = vmatpush1.bf16.msra.mxu0 %v1224
    %1248 = vmatprep.subr.bf16.mxu0 %v1223
    %1249 = vmatpush1.bf16.msra.mxu0 %v1222
    %1250 = vmatprep.subr.bf16.mxu0 %v1221
    %1251 = vmatpush1.bf16.msra.mxu0 %v1220
    %1252 = vmatprep.subr.bf16.mxu0 %v1219
    %1253 = vmatpush1.bf16.msra.mxu0 %v1218
    %1254 = vmatprep.subr.bf16.mxu0 %v1217
    %1255 = vmatpush1.bf16.msra.mxu0 %v1216
    %1256 = vmatprep.subr.bf16.mxu0 %v1215
    %1257 = vmatpush1.bf16.msra.mxu0 %v1214
    %1258 = vmatprep.subr.bf16.mxu0 %v1213
    %1259 = vmatpush1.bf16.msra.mxu0 %v1212
    %1260 = vmatprep.subr.bf16.mxu0 0
    %1261 = vmatpush2.bf16.msra.mxu0 0
    %1262 = vmatprep.subr.bf16.mxu0 0
    %1263 = vmatpush2.bf16.msra.mxu0 0
    %1264 = vmatprep.subr.bf16.mxu0 0
    %1265 = vmatpush2.bf16.msra.mxu0 0
    %1266 = vmatprep.subr.bf16.mxu0 0
    %1267 = vmatpush2.bf16.msra.mxu0 0
    %1268 = vmatprep.subr.bf16.mxu0 0
    %1269 = vmatpush2.bf16.msra.mxu0 0
    %1270 = vmatprep.subr.bf16.mxu0 0
    %1271 = vmatpush2.bf16.msra.mxu0 0
    %1272 = vmatprep.subr.bf16.mxu0 0
    %1273 = vmatpush2.bf16.msra.mxu0 0
    %1274 = vmatprep.subr.bf16.mxu0 0
    %1275 = vmatpush2.bf16.msra.mxu0 0
    %1276 = vmatprep.mubr.bf16.mxu0 0
    %1277 = vmatmul.mubr.bf16.gmra.mxu0 %v1152
    %v1278 = vpop.f32.mrf.mxu0
    %v1279 = vadd.f32 %v1157, %v1278
    %v1280 = vpop.f32.mrf.mxu0
    %v1281 = vadd.f32 %v1161, %v1280
    %v1282 = vpop.f32.mrf.mxu0
    %v1283 = vpop.f32.mrf.mxu0
    %1284 = vdwg.mxu0
    %v1285 = vmax.f32 %v1279, 0.0
    %v1286 = vmax.f32 %v1281, 0.0
    %v1287 = vpack.c.bf16 %v868, %v868
    %1288 = vmatprep.subr.bf16.mxu0 %v1227
    %1289 = vmatpush1.bf16.msra.mxu0 %v1226
    %1290 = vmatprep.subr.bf16.mxu0 %v1225
    %1291 = vmatpush1.bf16.msra.mxu0 %v1224
    %1292 = vmatprep.subr.bf16.mxu0 %v1223
    %1293 = vmatpush1.bf16.msra.mxu0 %v1222
    %1294 = vmatprep.subr.bf16.mxu0 %v1221
    %1295 = vmatpush1.bf16.msra.mxu0 %v1220
    %1296 = vmatprep.subr.bf16.mxu0 %v1219
    %1297 = vmatpush1.bf16.msra.mxu0 %v1218
    %1298 = vmatprep.subr.bf16.mxu0 %v1217
    %1299 = vmatpush1.bf16.msra.mxu0 %v1216
    %1300 = vmatprep.subr.bf16.mxu0 %v1215
    %1301 = vmatpush1.bf16.msra.mxu0 %v1214
    %1302 = vmatprep.subr.bf16.mxu0 %v1213
    %1303 = vmatpush1.bf16.msra.mxu0 %v1212
    %1304 = vmatprep.subr.bf16.mxu0 0
    %1305 = vmatpush2.bf16.msra.mxu0 0
    %1306 = vmatprep.subr.bf16.mxu0 0
    %1307 = vmatpush2.bf16.msra.mxu0 0
    %1308 = vmatprep.subr.bf16.mxu0 0
    %1309 = vmatpush2.bf16.msra.mxu0 0
    %1310 = vmatprep.subr.bf16.mxu0 0
    %1311 = vmatpush2.bf16.msra.mxu0 0
    %1312 = vmatprep.subr.bf16.mxu0 0
    %1313 = vmatpush2.bf16.msra.mxu0 0
    %1314 = vmatprep.subr.bf16.mxu0 0
    %1315 = vmatpush2.bf16.msra.mxu0 0
    %1316 = vmatprep.subr.bf16.mxu0 0
    %1317 = vmatpush2.bf16.msra.mxu0 0
    %1318 = vmatprep.subr.bf16.mxu0 0
    %1319 = vmatpush2.bf16.msra.mxu0 0
    %1320 = vmatprep.mubr.bf16.mxu0 0
    %1321 = vmatmul.mubr.bf16.gmra.mxu0 %v1287
    %v1322 = vpop.f32.mrf.mxu0
    %v1323 = vadd.f32 %v1157, %v1322
    %v1324 = vpop.f32.mrf.mxu0
    %v1325 = vadd.f32 %v1161, %v1324
    %v1326 = vpop.f32.mrf.mxu0
    %v1327 = vpop.f32.mrf.mxu0
    %1328 = vdwg.mxu0
    %v1329 = vmax.f32 %v1323, 0.0
    %v1330 = vmax.f32 %v1325, 0.0
    %v1331 = vpack.c.bf16 %v869, %v869
    %1332 = vmatprep.subr.bf16.mxu0 %v1227
    %1333 = vmatpush1.bf16.msra.mxu0 %v1226
    %1334 = vmatprep.subr.bf16.mxu0 %v1225
    %1335 = vmatpush1.bf16.msra.mxu0 %v1224
    %1336 = vmatprep.subr.bf16.mxu0 %v1223
    %1337 = vmatpush1.bf16.msra.mxu0 %v1222
    %1338 = vmatprep.subr.bf16.mxu0 %v1221
    %1339 = vmatpush1.bf16.msra.mxu0 %v1220
    %1340 = vmatprep.subr.bf16.mxu0 %v1219
    %1341 = vmatpush1.bf16.msra.mxu0 %v1218
    %1342 = vmatprep.subr.bf16.mxu0 %v1217
    %1343 = vmatpush1.bf16.msra.mxu0 %v1216
    %1344 = vmatprep.subr.bf16.mxu0 %v1215
    %1345 = vmatpush1.bf16.msra.mxu0 %v1214
    %1346 = vmatprep.subr.bf16.mxu0 %v1213
    %1347 = vmatpush1.bf16.msra.mxu0 %v1212
    %1348 = vmatprep.subr.bf16.mxu0 0
    %1349 = vmatpush2.bf16.msra.mxu0 0
    %1350 = vmatprep.subr.bf16.mxu0 0
    %1351 = vmatpush2.bf16.msra.mxu0 0
    %1352 = vmatprep.subr.bf16.mxu0 0
    %1353 = vmatpush2.bf16.msra.mxu0 0
    %1354 = vmatprep.subr.bf16.mxu0 0
    %1355 = vmatpush2.bf16.msra.mxu0 0
    %1356 = vmatprep.subr.bf16.mxu0 0
    %1357 = vmatpush2.bf16.msra.mxu0 0
    %1358 = vmatprep.subr.bf16.mxu0 0
    %1359 = vmatpush2.bf16.msra.mxu0 0
    %1360 = vmatprep.subr.bf16.mxu0 0
    %1361 = vmatpush2.bf16.msra.mxu0 0
    %1362 = vmatprep.subr.bf16.mxu0 0
    %1363 = vmatpush2.bf16.msra.mxu0 0
    %1364 = vmatprep.mubr.bf16.mxu0 0
    %1365 = vmatmul.mubr.bf16.gmra.mxu0 %v1331
    %v1366 = vpop.f32.mrf.mxu0
    %v1367 = vadd.f32 %v1157, %v1366
    %v1368 = vpop.f32.mrf.mxu0
    %v1369 = vadd.f32 %v1161, %v1368
    %v1370 = vpop.f32.mrf.mxu0
    %v1371 = vpop.f32.mrf.mxu0
    %1372 = vdwg.mxu0
    %v1373 = vmax.f32 %v1367, 0.0
    %v1374 = vmax.f32 %v1369, 0.0
    %v1375 = vpack.c.bf16 %v870, %v870
    %1376 = vmatprep.subr.bf16.mxu0 %v1227
    %1377 = vmatpush1.bf16.msra.mxu0 %v1226
    %1378 = vmatprep.subr.bf16.mxu0 %v1225
    %1379 = vmatpush1.bf16.msra.mxu0 %v1224
    %1380 = vmatprep.subr.bf16.mxu0 %v1223
    %1381 = vmatpush1.bf16.msra.mxu0 %v1222
    %1382 = vmatprep.subr.bf16.mxu0 %v1221
    %1383 = vmatpush1.bf16.msra.mxu0 %v1220
    %1384 = vmatprep.subr.bf16.mxu0 %v1219
    %1385 = vmatpush1.bf16.msra.mxu0 %v1218
    %1386 = vmatprep.subr.bf16.mxu0 %v1217
    %1387 = vmatpush1.bf16.msra.mxu0 %v1216
    %1388 = vmatprep.subr.bf16.mxu0 %v1215
    %1389 = vmatpush1.bf16.msra.mxu0 %v1214
    %1390 = vmatprep.subr.bf16.mxu0 %v1213
    %1391 = vmatpush1.bf16.msra.mxu0 %v1212
    %1392 = vmatprep.subr.bf16.mxu0 0
    %1393 = vmatpush2.bf16.msra.mxu0 0
    %1394 = vmatprep.subr.bf16.mxu0 0
    %1395 = vmatpush2.bf16.msra.mxu0 0
    %1396 = vmatprep.subr.bf16.mxu0 0
    %1397 = vmatpush2.bf16.msra.mxu0 0
    %1398 = vmatprep.subr.bf16.mxu0 0
    %1399 = vmatpush2.bf16.msra.mxu0 0
    %1400 = vmatprep.subr.bf16.mxu0 0
    %1401 = vmatpush2.bf16.msra.mxu0 0
    %1402 = vmatprep.subr.bf16.mxu0 0
    %1403 = vmatpush2.bf16.msra.mxu0 0
    %1404 = vmatprep.subr.bf16.mxu0 0
    %1405 = vmatpush2.bf16.msra.mxu0 0
    %1406 = vmatprep.subr.bf16.mxu0 0
    %1407 = vmatpush2.bf16.msra.mxu0 0
    %1408 = vmatprep.mubr.bf16.mxu0 0
    %1409 = vmatmul.mubr.bf16.gmra.mxu0 %v1375
    %v1410 = vpop.f32.mrf.mxu0
    %v1411 = vadd.f32 %v1157, %v1410
    %v1412 = vpop.f32.mrf.mxu0
    %v1413 = vadd.f32 %v1161, %v1412
    %v1414 = vpop.f32.mrf.mxu0
    %v1415 = vpop.f32.mrf.mxu0
    %1416 = vdwg.mxu0
    %v1417 = vmax.f32 %v1411, 0.0
    %v1418 = vmax.f32 %v1413, 0.0
    %v1419 = vpack.c.bf16 %v955, %v955
    %1420 = vmatprep.subr.bf16.mxu0 %v1227
    %1421 = vmatpush1.bf16.msra.mxu0 %v1226
    %1422 = vmatprep.subr.bf16.mxu0 %v1225
    %1423 = vmatpush1.bf16.msra.mxu0 %v1224
    %1424 = vmatprep.subr.bf16.mxu0 %v1223
    %1425 = vmatpush1.bf16.msra.mxu0 %v1222
    %1426 = vmatprep.subr.bf16.mxu0 %v1221
    %1427 = vmatpush1.bf16.msra.mxu0 %v1220
    %1428 = vmatprep.subr.bf16.mxu0 %v1219
    %1429 = vmatpush1.bf16.msra.mxu0 %v1218
    %1430 = vmatprep.subr.bf16.mxu0 %v1217
    %1431 = vmatpush1.bf16.msra.mxu0 %v1216
    %1432 = vmatprep.subr.bf16.mxu0 %v1215
    %1433 = vmatpush1.bf16.msra.mxu0 %v1214
    %1434 = vmatprep.subr.bf16.mxu0 %v1213
    %1435 = vmatpush1.bf16.msra.mxu0 %v1212
    %1436 = vmatprep.subr.bf16.mxu0 0
    %1437 = vmatpush2.bf16.msra.mxu0 0
    %1438 = vmatprep.subr.bf16.mxu0 0
    %1439 = vmatpush2.bf16.msra.mxu0 0
    %1440 = vmatprep.subr.bf16.mxu0 0
    %1441 = vmatpush2.bf16.msra.mxu0 0
    %1442 = vmatprep.subr.bf16.mxu0 0
    %1443 = vmatpush2.bf16.msra.mxu0 0
    %1444 = vmatprep.subr.bf16.mxu0 0
    %1445 = vmatpush2.bf16.msra.mxu0 0
    %1446 = vmatprep.subr.bf16.mxu0 0
    %1447 = vmatpush2.bf16.msra.mxu0 0
    %1448 = vmatprep.subr.bf16.mxu0 0
    %1449 = vmatpush2.bf16.msra.mxu0 0
    %1450 = vmatprep.subr.bf16.mxu0 0
    %1451 = vmatpush2.bf16.msra.mxu0 0
    %1452 = vmatprep.mubr.bf16.mxu0 0
    %1453 = vmatmul.mubr.bf16.gmra.mxu0 %v1419
    %v1454 = vpop.f32.mrf.mxu0
    %v1455 = vadd.f32 %v1157, %v1454
    %v1456 = vpop.f32.mrf.mxu0
    %v1457 = vadd.f32 %v1161, %v1456
    %v1458 = vpop.f32.mrf.mxu0
    %v1459 = vpop.f32.mrf.mxu0
    %1460 = vdwg.mxu0
    %v1461 = vmax.f32 %v1455, 0.0
    %v1462 = vmax.f32 %v1457, 0.0
    %v1463 = vpack.c.bf16 %v956, %v956
    %1464 = vmatprep.subr.bf16.mxu0 %v1227
    %1465 = vmatpush1.bf16.msra.mxu0 %v1226
    %1466 = vmatprep.subr.bf16.mxu0 %v1225
    %1467 = vmatpush1.bf16.msra.mxu0 %v1224
    %1468 = vmatprep.subr.bf16.mxu0 %v1223
    %1469 = vmatpush1.bf16.msra.mxu0 %v1222
    %1470 = vmatprep.subr.bf16.mxu0 %v1221
    %1471 = vmatpush1.bf16.msra.mxu0 %v1220
    %1472 = vmatprep.subr.bf16.mxu0 %v1219
    %1473 = vmatpush1.bf16.msra.mxu0 %v1218
    %1474 = vmatprep.subr.bf16.mxu0 %v1217
    %1475 = vmatpush1.bf16.msra.mxu0 %v1216
    %1476 = vmatprep.subr.bf16.mxu0 %v1215
    %1477 = vmatpush1.bf16.msra.mxu0 %v1214
    %1478 = vmatprep.subr.bf16.mxu0 %v1213
    %1479 = vmatpush1.bf16.msra.mxu0 %v1212
    %1480 = vmatprep.subr.bf16.mxu0 0
    %1481 = vmatpush2.bf16.msra.mxu0 0
    %1482 = vmatprep.subr.bf16.mxu0 0
    %1483 = vmatpush2.bf16.msra.mxu0 0
    %1484 = vmatprep.subr.bf16.mxu0 0
    %1485 = vmatpush2.bf16.msra.mxu0 0
    %1486 = vmatprep.subr.bf16.mxu0 0
    %1487 = vmatpush2.bf16.msra.mxu0 0
    %1488 = vmatprep.subr.bf16.mxu0 0
    %1489 = vmatpush2.bf16.msra.mxu0 0
    %1490 = vmatprep.subr.bf16.mxu0 0
    %1491 = vmatpush2.bf16.msra.mxu0 0
    %1492 = vmatprep.subr.bf16.mxu0 0
    %1493 = vmatpush2.bf16.msra.mxu0 0
    %1494 = vmatprep.subr.bf16.mxu0 0
    %1495 = vmatpush2.bf16.msra.mxu0 0
    %1496 = vmatprep.mubr.bf16.mxu0 0
    %1497 = vmatmul.mubr.bf16.gmra.mxu0 %v1463
    %v1498 = vpop.f32.mrf.mxu0
    %v1499 = vadd.f32 %v1157, %v1498
    %v1500 = vpop.f32.mrf.mxu0
    %v1501 = vadd.f32 %v1161, %v1500
    %v1502 = vpop.f32.mrf.mxu0
    %v1503 = vpop.f32.mrf.mxu0
    %1504 = vdwg.mxu0
    %v1505 = vmax.f32 %v1499, 0.0
    %v1506 = vmax.f32 %v1501, 0.0
    %v1507 = vpack.c.bf16 %v957, %v957
    %1508 = vmatprep.subr.bf16.mxu0 %v1227
    %1509 = vmatpush1.bf16.msra.mxu0 %v1226
    %1510 = vmatprep.subr.bf16.mxu0 %v1225
    %1511 = vmatpush1.bf16.msra.mxu0 %v1224
    %1512 = vmatprep.subr.bf16.mxu0 %v1223
    %1513 = vmatpush1.bf16.msra.mxu0 %v1222
    %1514 = vmatprep.subr.bf16.mxu0 %v1221
    %1515 = vmatpush1.bf16.msra.mxu0 %v1220
    %1516 = vmatprep.subr.bf16.mxu0 %v1219
    %1517 = vmatpush1.bf16.msra.mxu0 %v1218
    %1518 = vmatprep.subr.bf16.mxu0 %v1217
    %1519 = vmatpush1.bf16.msra.mxu0 %v1216
    %1520 = vmatprep.subr.bf16.mxu0 %v1215
    %1521 = vmatpush1.bf16.msra.mxu0 %v1214
    %1522 = vmatprep.subr.bf16.mxu0 %v1213
    %1523 = vmatpush1.bf16.msra.mxu0 %v1212
    %1524 = vmatprep.subr.bf16.mxu0 0
    %1525 = vmatpush2.bf16.msra.mxu0 0
    %1526 = vmatprep.subr.bf16.mxu0 0
    %1527 = vmatpush2.bf16.msra.mxu0 0
    %1528 = vmatprep.subr.bf16.mxu0 0
    %1529 = vmatpush2.bf16.msra.mxu0 0
    %1530 = vmatprep.subr.bf16.mxu0 0
    %1531 = vmatpush2.bf16.msra.mxu0 0
    %1532 = vmatprep.subr.bf16.mxu0 0
    %1533 = vmatpush2.bf16.msra.mxu0 0
    %1534 = vmatprep.subr.bf16.mxu0 0
    %1535 = vmatpush2.bf16.msra.mxu0 0
    %1536 = vmatprep.subr.bf16.mxu0 0
    %1537 = vmatpush2.bf16.msra.mxu0 0
    %1538 = vmatprep.subr.bf16.mxu0 0
    %1539 = vmatpush2.bf16.msra.mxu0 0
    %1540 = vmatprep.mubr.bf16.mxu0 0
    %1541 = vmatmul.mubr.bf16.gmra.mxu0 %v1507
    %v1542 = vpop.f32.mrf.mxu0
    %v1543 = vadd.f32 %v1157, %v1542
    %v1544 = vpop.f32.mrf.mxu0
    %v1545 = vadd.f32 %v1161, %v1544
    %v1546 = vpop.f32.mrf.mxu0
    %v1547 = vpop.f32.mrf.mxu0
    %1548 = vdwg.mxu0
    %v1549 = vmax.f32 %v1543, 0.0
    %v1550 = vmax.f32 %v1545, 0.0
    %v1551 = vpack.c.bf16 %v958, %v958
    %1552 = vmatprep.subr.bf16.mxu0 %v1227
    %1553 = vmatpush1.bf16.msra.mxu0 %v1226
    %1554 = vmatprep.subr.bf16.mxu0 %v1225
    %1555 = vmatpush1.bf16.msra.mxu0 %v1224
    %1556 = vmatprep.subr.bf16.mxu0 %v1223
    %1557 = vmatpush1.bf16.msra.mxu0 %v1222
    %1558 = vmatprep.subr.bf16.mxu0 %v1221
    %1559 = vmatpush1.bf16.msra.mxu0 %v1220
    %1560 = vmatprep.subr.bf16.mxu0 %v1219
    %1561 = vmatpush1.bf16.msra.mxu0 %v1218
    %1562 = vmatprep.subr.bf16.mxu0 %v1217
    %1563 = vmatpush1.bf16.msra.mxu0 %v1216
    %1564 = vmatprep.subr.bf16.mxu0 %v1215
    %1565 = vmatpush1.bf16.msra.mxu0 %v1214
    %1566 = vmatprep.subr.bf16.mxu0 %v1213
    %1567 = vmatpush1.bf16.msra.mxu0 %v1212
    %1568 = vmatprep.subr.bf16.mxu0 0
    %1569 = vmatpush2.bf16.msra.mxu0 0
    %1570 = vmatprep.subr.bf16.mxu0 0
    %1571 = vmatpush2.bf16.msra.mxu0 0
    %1572 = vmatprep.subr.bf16.mxu0 0
    %1573 = vmatpush2.bf16.msra.mxu0 0
    %1574 = vmatprep.subr.bf16.mxu0 0
    %1575 = vmatpush2.bf16.msra.mxu0 0
    %1576 = vmatprep.subr.bf16.mxu0 0
    %1577 = vmatpush2.bf16.msra.mxu0 0
    %1578 = vmatprep.subr.bf16.mxu0 0
    %1579 = vmatpush2.bf16.msra.mxu0 0
    %1580 = vmatprep.subr.bf16.mxu0 0
    %1581 = vmatpush2.bf16.msra.mxu0 0
    %1582 = vmatprep.subr.bf16.mxu0 0
    %1583 = vmatpush2.bf16.msra.mxu0 0
    %1584 = vmatprep.mubr.bf16.mxu0 0
    %1585 = vmatmul.mubr.bf16.gmra.mxu0 %v1551
    %v1586 = vpop.f32.mrf.mxu0
    %v1587 = vadd.f32 %v1157, %v1586
    %v1588 = vpop.f32.mrf.mxu0
    %v1589 = vadd.f32 %v1161, %v1588
    %v1590 = vpop.f32.mrf.mxu0
    %v1591 = vpop.f32.mrf.mxu0
    %1592 = vdwg.mxu0
    %v1593 = vmax.f32 %v1587, 0.0
    %v1594 = vmax.f32 %v1589, 0.0
    %v1595 = vpack.c.bf16 %v1043, %v1043
    %1596 = vmatprep.subr.bf16.mxu0 %v1227
    %1597 = vmatpush1.bf16.msra.mxu0 %v1226
    %1598 = vmatprep.subr.bf16.mxu0 %v1225
    %1599 = vmatpush1.bf16.msra.mxu0 %v1224
    %1600 = vmatprep.subr.bf16.mxu0 %v1223
    %1601 = vmatpush1.bf16.msra.mxu0 %v1222
    %1602 = vmatprep.subr.bf16.mxu0 %v1221
    %1603 = vmatpush1.bf16.msra.mxu0 %v1220
    %1604 = vmatprep.subr.bf16.mxu0 %v1219
    %1605 = vmatpush1.bf16.msra.mxu0 %v1218
    %1606 = vmatprep.subr.bf16.mxu0 %v1217
    %1607 = vmatpush1.bf16.msra.mxu0 %v1216
    %1608 = vmatprep.subr.bf16.mxu0 %v1215
    %1609 = vmatpush1.bf16.msra.mxu0 %v1214
    %1610 = vmatprep.subr.bf16.mxu0 %v1213
    %1611 = vmatpush1.bf16.msra.mxu0 %v1212
    %1612 = vmatprep.subr.bf16.mxu0 0
    %1613 = vmatpush2.bf16.msra.mxu0 0
    %1614 = vmatprep.subr.bf16.mxu0 0
    %1615 = vmatpush2.bf16.msra.mxu0 0
    %1616 = vmatprep.subr.bf16.mxu0 0
    %1617 = vmatpush2.bf16.msra.mxu0 0
    %1618 = vmatprep.subr.bf16.mxu0 0
    %1619 = vmatpush2.bf16.msra.mxu0 0
    %1620 = vmatprep.subr.bf16.mxu0 0
    %1621 = vmatpush2.bf16.msra.mxu0 0
    %1622 = vmatprep.subr.bf16.mxu0 0
    %1623 = vmatpush2.bf16.msra.mxu0 0
    %1624 = vmatprep.subr.bf16.mxu0 0
    %1625 = vmatpush2.bf16.msra.mxu0 0
    %1626 = vmatprep.subr.bf16.mxu0 0
    %1627 = vmatpush2.bf16.msra.mxu0 0
    %1628 = vmatprep.mubr.bf16.mxu0 0
    %1629 = vmatmul.mubr.bf16.gmra.mxu0 %v1595
    %v1630 = vpop.f32.mrf.mxu0
    %v1631 = vadd.f32 %v1157, %v1630
    %v1632 = vpop.f32.mrf.mxu0
    %v1633 = vadd.f32 %v1161, %v1632
    %v1634 = vpop.f32.mrf.mxu0
    %v1635 = vpop.f32.mrf.mxu0
    %1636 = vdwg.mxu0
    %v1637 = vmax.f32 %v1631, 0.0
    %v1638 = vmax.f32 %v1633, 0.0
    %v1639 = vpack.c.bf16 %v1044, %v1044
    %1640 = vmatprep.subr.bf16.mxu0 %v1227
    %1641 = vmatpush1.bf16.msra.mxu0 %v1226
    %1642 = vmatprep.subr.bf16.mxu0 %v1225
    %1643 = vmatpush1.bf16.msra.mxu0 %v1224
    %1644 = vmatprep.subr.bf16.mxu0 %v1223
    %1645 = vmatpush1.bf16.msra.mxu0 %v1222
    %1646 = vmatprep.subr.bf16.mxu0 %v1221
    %1647 = vmatpush1.bf16.msra.mxu0 %v1220
    %1648 = vmatprep.subr.bf16.mxu0 %v1219
    %1649 = vmatpush1.bf16.msra.mxu0 %v1218
    %1650 = vmatprep.subr.bf16.mxu0 %v1217
    %1651 = vmatpush1.bf16.msra.mxu0 %v1216
    %1652 = vmatprep.subr.bf16.mxu0 %v1215
    %1653 = vmatpush1.bf16.msra.mxu0 %v1214
    %1654 = vmatprep.subr.bf16.mxu0 %v1213
    %1655 = vmatpush1.bf16.msra.mxu0 %v1212
    %1656 = vmatprep.subr.bf16.mxu0 0
    %1657 = vmatpush2.bf16.msra.mxu0 0
    %1658 = vmatprep.subr.bf16.mxu0 0
    %1659 = vmatpush2.bf16.msra.mxu0 0
    %1660 = vmatprep.subr.bf16.mxu0 0
    %1661 = vmatpush2.bf16.msra.mxu0 0
    %1662 = vmatprep.subr.bf16.mxu0 0
    %1663 = vmatpush2.bf16.msra.mxu0 0
    %1664 = vmatprep.subr.bf16.mxu0 0
    %1665 = vmatpush2.bf16.msra.mxu0 0
    %1666 = vmatprep.subr.bf16.mxu0 0
    %1667 = vmatpush2.bf16.msra.mxu0 0
    %1668 = vmatprep.subr.bf16.mxu0 0
    %1669 = vmatpush2.bf16.msra.mxu0 0
    %1670 = vmatprep.subr.bf16.mxu0 0
    %1671 = vmatpush2.bf16.msra.mxu0 0
    %1672 = vmatprep.mubr.bf16.mxu0 0
    %1673 = vmatmul.mubr.bf16.gmra.mxu0 %v1639
    %v1674 = vpop.f32.mrf.mxu0
    %v1675 = vadd.f32 %v1157, %v1674
    %v1676 = vpop.f32.mrf.mxu0
    %v1677 = vadd.f32 %v1161, %v1676
    %v1678 = vpop.f32.mrf.mxu0
    %v1679 = vpop.f32.mrf.mxu0
    %1680 = vdwg.mxu0
    %v1681 = vmax.f32 %v1675, 0.0
    %v1682 = vmax.f32 %v1677, 0.0
    %v1683 = vpack.c.bf16 %v1045, %v1045
    %1684 = vmatprep.subr.bf16.mxu0 %v1227
    %1685 = vmatpush1.bf16.msra.mxu0 %v1226
    %1686 = vmatprep.subr.bf16.mxu0 %v1225
    %1687 = vmatpush1.bf16.msra.mxu0 %v1224
    %1688 = vmatprep.subr.bf16.mxu0 %v1223
    %1689 = vmatpush1.bf16.msra.mxu0 %v1222
    %1690 = vmatprep.subr.bf16.mxu0 %v1221
    %1691 = vmatpush1.bf16.msra.mxu0 %v1220
    %1692 = vmatprep.subr.bf16.mxu0 %v1219
    %1693 = vmatpush1.bf16.msra.mxu0 %v1218
    %1694 = vmatprep.subr.bf16.mxu0 %v1217
    %1695 = vmatpush1.bf16.msra.mxu0 %v1216
    %1696 = vmatprep.subr.bf16.mxu0 %v1215
    %1697 = vmatpush1.bf16.msra.mxu0 %v1214
    %1698 = vmatprep.subr.bf16.mxu0 %v1213
    %1699 = vmatpush1.bf16.msra.mxu0 %v1212
    %1700 = vmatprep.subr.bf16.mxu0 0
    %1701 = vmatpush2.bf16.msra.mxu0 0
    %1702 = vmatprep.subr.bf16.mxu0 0
    %1703 = vmatpush2.bf16.msra.mxu0 0
    %1704 = vmatprep.subr.bf16.mxu0 0
    %1705 = vmatpush2.bf16.msra.mxu0 0
    %1706 = vmatprep.subr.bf16.mxu0 0
    %1707 = vmatpush2.bf16.msra.mxu0 0
    %1708 = vmatprep.subr.bf16.mxu0 0
    %1709 = vmatpush2.bf16.msra.mxu0 0
    %1710 = vmatprep.subr.bf16.mxu0 0
    %1711 = vmatpush2.bf16.msra.mxu0 0
    %1712 = vmatprep.subr.bf16.mxu0 0
    %1713 = vmatpush2.bf16.msra.mxu0 0
    %1714 = vmatprep.subr.bf16.mxu0 0
    %1715 = vmatpush2.bf16.msra.mxu0 0
    %1716 = vmatprep.mubr.bf16.mxu0 0
    %1717 = vmatmul.mubr.bf16.gmra.mxu0 %v1683
    %v1718 = vpop.f32.mrf.mxu0
    %v1719 = vadd.f32 %v1157, %v1718
    %v1720 = vpop.f32.mrf.mxu0
    %v1721 = vadd.f32 %v1161, %v1720
    %v1722 = vpop.f32.mrf.mxu0
    %v1723 = vpop.f32.mrf.mxu0
    %1724 = vdwg.mxu0
    %v1725 = vmax.f32 %v1719, 0.0
    %v1726 = vmax.f32 %v1721, 0.0
    %v1727 = vpack.c.bf16 %v1046, %v1046
    %1728 = vmatprep.subr.bf16.mxu0 %v1227
    %1729 = vmatpush1.bf16.msra.mxu0 %v1226
    %1730 = vmatprep.subr.bf16.mxu0 %v1225
    %1731 = vmatpush1.bf16.msra.mxu0 %v1224
    %1732 = vmatprep.subr.bf16.mxu0 %v1223
    %1733 = vmatpush1.bf16.msra.mxu0 %v1222
    %1734 = vmatprep.subr.bf16.mxu0 %v1221
    %1735 = vmatpush1.bf16.msra.mxu0 %v1220
    %1736 = vmatprep.subr.bf16.mxu0 %v1219
    %1737 = vmatpush1.bf16.msra.mxu0 %v1218
    %1738 = vmatprep.subr.bf16.mxu0 %v1217
    %1739 = vmatpush1.bf16.msra.mxu0 %v1216
    %1740 = vmatprep.subr.bf16.mxu0 %v1215
    %1741 = vmatpush1.bf16.msra.mxu0 %v1214
    %1742 = vmatprep.subr.bf16.mxu0 %v1213
    %1743 = vmatpush1.bf16.msra.mxu0 %v1212
    %1744 = vmatprep.subr.bf16.mxu0 0
    %1745 = vmatpush2.bf16.msra.mxu0 0
    %1746 = vmatprep.subr.bf16.mxu0 0
    %1747 = vmatpush2.bf16.msra.mxu0 0
    %1748 = vmatprep.subr.bf16.mxu0 0
    %1749 = vmatpush2.bf16.msra.mxu0 0
    %1750 = vmatprep.subr.bf16.mxu0 0
    %1751 = vmatpush2.bf16.msra.mxu0 0
    %1752 = vmatprep.subr.bf16.mxu0 0
    %1753 = vmatpush2.bf16.msra.mxu0 0
    %1754 = vmatprep.subr.bf16.mxu0 0
    %1755 = vmatpush2.bf16.msra.mxu0 0
    %1756 = vmatprep.subr.bf16.mxu0 0
    %1757 = vmatpush2.bf16.msra.mxu0 0
    %1758 = vmatprep.subr.bf16.mxu0 0
    %1759 = vmatpush2.bf16.msra.mxu0 0
    %1760 = vmatprep.mubr.bf16.mxu0 0
    %1761 = vmatmul.mubr.bf16.gmra.mxu0 %v1727
    %v1762 = vpop.f32.mrf.mxu0
    %v1763 = vadd.f32 %v1157, %v1762
    %v1764 = vpop.f32.mrf.mxu0
    %v1765 = vadd.f32 %v1161, %v1764
    %v1766 = vpop.f32.mrf.mxu0
    %v1767 = vpop.f32.mrf.mxu0
    %1768 = vdwg.mxu0
    %v1769 = vmax.f32 %v1763, 0.0
    %v1770 = vmax.f32 %v1765, 0.0
    %v1771 = vpack.c.bf16 %v1131, %v1131
    %1772 = vmatprep.subr.bf16.mxu0 %v1227
    %1773 = vmatpush1.bf16.msra.mxu0 %v1226
    %1774 = vmatprep.subr.bf16.mxu0 %v1225
    %1775 = vmatpush1.bf16.msra.mxu0 %v1224
    %1776 = vmatprep.subr.bf16.mxu0 %v1223
    %1777 = vmatpush1.bf16.msra.mxu0 %v1222
    %1778 = vmatprep.subr.bf16.mxu0 %v1221
    %1779 = vmatpush1.bf16.msra.mxu0 %v1220
    %1780 = vmatprep.subr.bf16.mxu0 %v1219
    %1781 = vmatpush1.bf16.msra.mxu0 %v1218
    %1782 = vmatprep.subr.bf16.mxu0 %v1217
    %1783 = vmatpush1.bf16.msra.mxu0 %v1216
    %1784 = vmatprep.subr.bf16.mxu0 %v1215
    %1785 = vmatpush1.bf16.msra.mxu0 %v1214
    %1786 = vmatprep.subr.bf16.mxu0 %v1213
    %1787 = vmatpush1.bf16.msra.mxu0 %v1212
    %1788 = vmatprep.subr.bf16.mxu0 0
    %1789 = vmatpush2.bf16.msra.mxu0 0
    %1790 = vmatprep.subr.bf16.mxu0 0
    %1791 = vmatpush2.bf16.msra.mxu0 0
    %1792 = vmatprep.subr.bf16.mxu0 0
    %1793 = vmatpush2.bf16.msra.mxu0 0
    %1794 = vmatprep.subr.bf16.mxu0 0
    %1795 = vmatpush2.bf16.msra.mxu0 0
    %1796 = vmatprep.subr.bf16.mxu0 0
    %1797 = vmatpush2.bf16.msra.mxu0 0
    %1798 = vmatprep.subr.bf16.mxu0 0
    %1799 = vmatpush2.bf16.msra.mxu0 0
    %1800 = vmatprep.subr.bf16.mxu0 0
    %1801 = vmatpush2.bf16.msra.mxu0 0
    %1802 = vmatprep.subr.bf16.mxu0 0
    %1803 = vmatpush2.bf16.msra.mxu0 0
    %1804 = vmatprep.mubr.bf16.mxu0 0
    %1805 = vmatmul.mubr.bf16.gmra.mxu0 %v1771
    %v1806 = vpop.f32.mrf.mxu0
    %v1807 = vadd.f32 %v1157, %v1806
    %v1808 = vpop.f32.mrf.mxu0
    %v1809 = vadd.f32 %v1161, %v1808
    %v1810 = vpop.f32.mrf.mxu0
    %v1811 = vpop.f32.mrf.mxu0
    %1812 = vdwg.mxu0
    %v1813 = vmax.f32 %v1807, 0.0
    %v1814 = vmax.f32 %v1809, 0.0
    %v1815 = vpack.c.bf16 %v1132, %v1132
    %1816 = vmatprep.subr.bf16.mxu0 %v1227
    %1817 = vmatpush1.bf16.msra.mxu0 %v1226
    %1818 = vmatprep.subr.bf16.mxu0 %v1225
    %1819 = vmatpush1.bf16.msra.mxu0 %v1224
    %1820 = vmatprep.subr.bf16.mxu0 %v1223
    %1821 = vmatpush1.bf16.msra.mxu0 %v1222
    %1822 = vmatprep.subr.bf16.mxu0 %v1221
    %1823 = vmatpush1.bf16.msra.mxu0 %v1220
    %1824 = vmatprep.subr.bf16.mxu0 %v1219
    %1825 = vmatpush1.bf16.msra.mxu0 %v1218
    %1826 = vmatprep.subr.bf16.mxu0 %v1217
    %1827 = vmatpush1.bf16.msra.mxu0 %v1216
    %1828 = vmatprep.subr.bf16.mxu0 %v1215
    %1829 = vmatpush1.bf16.msra.mxu0 %v1214
    %1830 = vmatprep.subr.bf16.mxu0 %v1213
    %1831 = vmatpush1.bf16.msra.mxu0 %v1212
    %1832 = vmatprep.subr.bf16.mxu0 0
    %1833 = vmatpush2.bf16.msra.mxu0 0
    %1834 = vmatprep.subr.bf16.mxu0 0
    %1835 = vmatpush2.bf16.msra.mxu0 0
    %1836 = vmatprep.subr.bf16.mxu0 0
    %1837 = vmatpush2.bf16.msra.mxu0 0
    %1838 = vmatprep.subr.bf16.mxu0 0
    %1839 = vmatpush2.bf16.msra.mxu0 0
    %1840 = vmatprep.subr.bf16.mxu0 0
    %1841 = vmatpush2.bf16.msra.mxu0 0
    %1842 = vmatprep.subr.bf16.mxu0 0
    %1843 = vmatpush2.bf16.msra.mxu0 0
    %1844 = vmatprep.subr.bf16.mxu0 0
    %1845 = vmatpush2.bf16.msra.mxu0 0
    %1846 = vmatprep.subr.bf16.mxu0 0
    %1847 = vmatpush2.bf16.msra.mxu0 0
    %1848 = vmatprep.mubr.bf16.mxu0 0
    %1849 = vmatmul.mubr.bf16.gmra.mxu0 %v1815
    %v1850 = vpop.f32.mrf.mxu0
    %v1851 = vadd.f32 %v1157, %v1850
    %v1852 = vpop.f32.mrf.mxu0
    %v1853 = vadd.f32 %v1161, %v1852
    %v1854 = vpop.f32.mrf.mxu0
    %v1855 = vpop.f32.mrf.mxu0
    %1856 = vdwg.mxu0
    %v1857 = vmax.f32 %v1851, 0.0
    %v1858 = vmax.f32 %v1853, 0.0
    %v1859 = vpack.c.bf16 %v1133, %v1133
    %1860 = vmatprep.subr.bf16.mxu0 %v1227
    %1861 = vmatpush1.bf16.msra.mxu0 %v1226
    %1862 = vmatprep.subr.bf16.mxu0 %v1225
    %1863 = vmatpush1.bf16.msra.mxu0 %v1224
    %1864 = vmatprep.subr.bf16.mxu0 %v1223
    %1865 = vmatpush1.bf16.msra.mxu0 %v1222
    %1866 = vmatprep.subr.bf16.mxu0 %v1221
    %1867 = vmatpush1.bf16.msra.mxu0 %v1220
    %1868 = vmatprep.subr.bf16.mxu0 %v1219
    %1869 = vmatpush1.bf16.msra.mxu0 %v1218
    %1870 = vmatprep.subr.bf16.mxu0 %v1217
    %1871 = vmatpush1.bf16.msra.mxu0 %v1216
    %1872 = vmatprep.subr.bf16.mxu0 %v1215
    %1873 = vmatpush1.bf16.msra.mxu0 %v1214
    %1874 = vmatprep.subr.bf16.mxu0 %v1213
    %1875 = vmatpush1.bf16.msra.mxu0 %v1212
    %1876 = vmatprep.subr.bf16.mxu0 0
    %1877 = vmatpush2.bf16.msra.mxu0 0
    %1878 = vmatprep.subr.bf16.mxu0 0
    %1879 = vmatpush2.bf16.msra.mxu0 0
    %1880 = vmatprep.subr.bf16.mxu0 0
    %1881 = vmatpush2.bf16.msra.mxu0 0
    %1882 = vmatprep.subr.bf16.mxu0 0
    %1883 = vmatpush2.bf16.msra.mxu0 0
    %1884 = vmatprep.subr.bf16.mxu0 0
    %1885 = vmatpush2.bf16.msra.mxu0 0
    %1886 = vmatprep.subr.bf16.mxu0 0
    %1887 = vmatpush2.bf16.msra.mxu0 0
    %1888 = vmatprep.subr.bf16.mxu0 0
    %1889 = vmatpush2.bf16.msra.mxu0 0
    %1890 = vmatprep.subr.bf16.mxu0 0
    %1891 = vmatpush2.bf16.msra.mxu0 0
    %1892 = vmatprep.mubr.bf16.mxu0 0
    %1893 = vmatmul.mubr.bf16.gmra.mxu0 %v1859
    %v1894 = vpop.f32.mrf.mxu0
    %v1895 = vadd.f32 %v1157, %v1894
    %v1896 = vpop.f32.mrf.mxu0
    %v1897 = vadd.f32 %v1161, %v1896
    %v1898 = vpop.f32.mrf.mxu0
    %v1899 = vpop.f32.mrf.mxu0
    %1900 = vdwg.mxu0
    %v1901 = vmax.f32 %v1895, 0.0
    %v1902 = vmax.f32 %v1897, 0.0
    %v1903 = vpack.c.bf16 %v1134, %v1134
    %1904 = vmatprep.subr.bf16.mxu0 %v1227
    %1905 = vmatpush1.bf16.msra.mxu0 %v1226
    %1906 = vmatprep.subr.bf16.mxu0 %v1225
    %1907 = vmatpush1.bf16.msra.mxu0 %v1224
    %1908 = vmatprep.subr.bf16.mxu0 %v1223
    %1909 = vmatpush1.bf16.msra.mxu0 %v1222
    %1910 = vmatprep.subr.bf16.mxu0 %v1221
    %1911 = vmatpush1.bf16.msra.mxu0 %v1220
    %1912 = vmatprep.subr.bf16.mxu0 %v1219
    %1913 = vmatpush1.bf16.msra.mxu0 %v1218
    %1914 = vmatprep.subr.bf16.mxu0 %v1217
    %1915 = vmatpush1.bf16.msra.mxu0 %v1216
    %1916 = vmatprep.subr.bf16.mxu0 %v1215
    %1917 = vmatpush1.bf16.msra.mxu0 %v1214
    %1918 = vmatprep.subr.bf16.mxu0 %v1213
    %1919 = vmatpush1.bf16.msra.mxu0 %v1212
    %1920 = vmatprep.subr.bf16.mxu0 0
    %1921 = vmatpush2.bf16.msra.mxu0 0
    %1922 = vmatprep.subr.bf16.mxu0 0
    %1923 = vmatpush2.bf16.msra.mxu0 0
    %1924 = vmatprep.subr.bf16.mxu0 0
    %1925 = vmatpush2.bf16.msra.mxu0 0
    %1926 = vmatprep.subr.bf16.mxu0 0
    %1927 = vmatpush2.bf16.msra.mxu0 0
    %1928 = vmatprep.subr.bf16.mxu0 0
    %1929 = vmatpush2.bf16.msra.mxu0 0
    %1930 = vmatprep.subr.bf16.mxu0 0
    %1931 = vmatpush2.bf16.msra.mxu0 0
    %1932 = vmatprep.subr.bf16.mxu0 0
    %1933 = vmatpush2.bf16.msra.mxu0 0
    %1934 = vmatprep.subr.bf16.mxu0 0
    %1935 = vmatpush2.bf16.msra.mxu0 0
    %1936 = vmatprep.mubr.bf16.mxu0 0
    %1937 = vmatmul.mubr.bf16.gmra.mxu0 %v1903
    %v1938 = vpop.f32.mrf.mxu0
    %v1939 = vadd.f32 %v1157, %v1938
    %v1940 = vpop.f32.mrf.mxu0
    %v1941 = vadd.f32 %v1161, %v1940
    %v1942 = vpop.f32.mrf.mxu0
    %v1943 = vpop.f32.mrf.mxu0
    %1944 = vdwg.mxu0
    %v1945 = vmax.f32 %v1939, 0.0
    %v1946 = vmax.f32 %v1941, 0.0
    %v1947 = vld [vmem:[#allocation4] sm:$0xf]
    %v1948 = vld [vmem:[#allocation4 + $0x4] sm:$0xf]
    %v1949 = vld [vmem:[#allocation4 + $0x8] sm:$0xf]
    %v1950 = vld [vmem:[#allocation4 + $0xc] sm:$0xf]
    %v1951 = vld [vmem:[#allocation4 + $0x10] sm:$0xf]
    %v1952 = vld [vmem:[#allocation4 + $0x14] sm:$0xf]
    %v1953 = vld [vmem:[#allocation4 + $0x18] sm:$0xf]
    %v1954 = vld [vmem:[#allocation4 + $0x1c] sm:$0xf]
    %v1955 = vld [vmem:[#allocation4 + $0x20] sm:$0xf]
    %v1956 = vld [vmem:[#allocation4 + $0x24] sm:$0xf]
    %v1957 = vld [vmem:[#allocation4 + $0x28] sm:$0xf]
    %v1958 = vld [vmem:[#allocation4 + $0x2c] sm:$0xf]
    %v1959 = vld [vmem:[#allocation4 + $0x30] sm:$0xf]
    %v1960 = vld [vmem:[#allocation4 + $0x34] sm:$0xf]
    %v1961 = vld [vmem:[#allocation4 + $0x38] sm:$0xf]
    %v1962 = vld [vmem:[#allocation4 + $0x3c] sm:$0xf]
    %v1963 = vld [vmem:[#allocation4 + $0x40] sm:$0xf]
    %v1964 = vld [vmem:[#allocation4 + $0x44] sm:$0xf]
    %v1965 = vld [vmem:[#allocation4 + $0x48] sm:$0xf]
    %v1966 = vld [vmem:[#allocation4 + $0x4c] sm:$0xf]
    %v1967 = vld [vmem:[#allocation4 + $0x50] sm:$0xf]
    %v1968 = vld [vmem:[#allocation4 + $0x54] sm:$0xf]
    %v1969 = vld [vmem:[#allocation4 + $0x58] sm:$0xf]
    %v1970 = vld [vmem:[#allocation4 + $0x5c] sm:$0xf]
    %v1971 = vld [vmem:[#allocation4 + $0x60] sm:$0xf]
    %v1972 = vld [vmem:[#allocation4 + $0x64] sm:$0xf]
    %v1973 = vld [vmem:[#allocation4 + $0x68] sm:$0xf]
    %v1974 = vld [vmem:[#allocation4 + $0x6c] sm:$0xf]
    %v1975 = vld [vmem:[#allocation4 + $0x70] sm:$0xf]
    %v1976 = vld [vmem:[#allocation4 + $0x74] sm:$0xf]
    %v1977 = vld [vmem:[#allocation4 + $0x78] sm:$0xf]
    %v1978 = vld [vmem:[#allocation4 + $0x7c] sm:$0xf]
    %v1979 = vld [vmem:[#allocation4 + $0x80] sm:$0xf]
    %v1980 = vld [vmem:[#allocation4 + $0x84] sm:$0xf]
    %v1981 = vld [vmem:[#allocation4 + $0x88] sm:$0xf]
    %v1982 = vld [vmem:[#allocation4 + $0x8c] sm:$0xf]
    %v1983 = vld [vmem:[#allocation4 + $0x90] sm:$0xf]
    %v1984 = vld [vmem:[#allocation4 + $0x94] sm:$0xf]
    %v1985 = vld [vmem:[#allocation4 + $0x98] sm:$0xf]
    %v1986 = vld [vmem:[#allocation4 + $0x9c] sm:$0xf]
    %v1987 = vld [vmem:[#allocation4 + $0xa0] sm:$0xf]
    %v1988 = vld [vmem:[#allocation4 + $0xa4] sm:$0xf]
    %v1989 = vld [vmem:[#allocation4 + $0xa8] sm:$0xf]
    %v1990 = vld [vmem:[#allocation4 + $0xac] sm:$0xf]
    %v1991 = vld [vmem:[#allocation4 + $0xb0] sm:$0xf]
    %v1992 = vld [vmem:[#allocation4 + $0xb4] sm:$0xf]
    %v1993 = vld [vmem:[#allocation4 + $0xb8] sm:$0xf]
    %v1994 = vld [vmem:[#allocation4 + $0xbc] sm:$0xf]
    %v1995 = vld [vmem:[#allocation4 + $0xc0] sm:$0xf]
    %v1996 = vld [vmem:[#allocation4 + $0xc4] sm:$0xf]
    %v1997 = vld [vmem:[#allocation4 + $0xc8] sm:$0xf]
    %v1998 = vld [vmem:[#allocation4 + $0xcc] sm:$0xf]
    %v1999 = vld [vmem:[#allocation4 + $0xd0] sm:$0xf]
    %v2000 = vld [vmem:[#allocation4 + $0xd4] sm:$0xf]
    %v2001 = vld [vmem:[#allocation4 + $0xd8] sm:$0xf]
    %v2002 = vld [vmem:[#allocation4 + $0xdc] sm:$0xf]
    %v2003 = vld [vmem:[#allocation4 + $0xe0] sm:$0xf]
    %v2004 = vld [vmem:[#allocation4 + $0xe4] sm:$0xf]
    %v2005 = vld [vmem:[#allocation4 + $0xe8] sm:$0xf]
    %v2006 = vld [vmem:[#allocation4 + $0xec] sm:$0xf]
    %v2007 = vld [vmem:[#allocation4 + $0xf0] sm:$0xf]
    %v2008 = vld [vmem:[#allocation4 + $0xf4] sm:$0xf]
    %v2009 = vld [vmem:[#allocation4 + $0xf8] sm:$0xf]
    %v2010 = vld [vmem:[#allocation4 + $0xfc] sm:$0xf]
    %v2011 = vld [vmem:[#allocation4 + $0x100] sm:$0xf]
    %v2012 = vld [vmem:[#allocation4 + $0x104] sm:$0xf]
    %v2013 = vld [vmem:[#allocation4 + $0x108] sm:$0xf]
    %v2014 = vld [vmem:[#allocation4 + $0x10c] sm:$0xf]
    %v2015 = vld [vmem:[#allocation4 + $0x110] sm:$0xf]
    %v2016 = vld [vmem:[#allocation4 + $0x114] sm:$0xf]
    %v2017 = vld [vmem:[#allocation4 + $0x118] sm:$0xf]
    %v2018 = vld [vmem:[#allocation4 + $0x11c] sm:$0xf]
    %v2019 = vld [vmem:[#allocation4 + $0x120] sm:$0xf]
    %v2020 = vld [vmem:[#allocation4 + $0x124] sm:$0xf]
    %v2021 = vld [vmem:[#allocation4 + $0x128] sm:$0xf]
    %v2022 = vld [vmem:[#allocation4 + $0x12c] sm:$0xf]
    %v2023 = vld [vmem:[#allocation4 + $0x130] sm:$0xf]
    %v2024 = vld [vmem:[#allocation4 + $0x134] sm:$0xf]
    %v2025 = vld [vmem:[#allocation4 + $0x138] sm:$0xf]
    %v2026 = vld [vmem:[#allocation4 + $0x13c] sm:$0xf]
    %v2027 = vld [vmem:[#allocation4 + $0x140] sm:$0xf]
    %v2028 = vld [vmem:[#allocation4 + $0x144] sm:$0xf]
    %v2029 = vld [vmem:[#allocation4 + $0x148] sm:$0xf]
    %v2030 = vld [vmem:[#allocation4 + $0x14c] sm:$0xf]
    %v2031 = vld [vmem:[#allocation4 + $0x150] sm:$0xf]
    %v2032 = vld [vmem:[#allocation4 + $0x154] sm:$0xf]
    %v2033 = vld [vmem:[#allocation4 + $0x158] sm:$0xf]
    %v2034 = vld [vmem:[#allocation4 + $0x15c] sm:$0xf]
    %v2035 = vld [vmem:[#allocation4 + $0x160] sm:$0xf]
    %v2036 = vld [vmem:[#allocation4 + $0x164] sm:$0xf]
    %v2037 = vld [vmem:[#allocation4 + $0x168] sm:$0xf]
    %v2038 = vld [vmem:[#allocation4 + $0x16c] sm:$0xf]
    %v2039 = vld [vmem:[#allocation4 + $0x170] sm:$0xf]
    %v2040 = vld [vmem:[#allocation4 + $0x174] sm:$0xf]
    %v2041 = vld [vmem:[#allocation4 + $0x178] sm:$0xf]
    %v2042 = vld [vmem:[#allocation4 + $0x17c] sm:$0xf]
    %v2043 = vld [vmem:[#allocation4 + $0x180] sm:$0xf]
    %v2044 = vld [vmem:[#allocation4 + $0x184] sm:$0xf]
    %v2045 = vld [vmem:[#allocation4 + $0x188] sm:$0xf]
    %v2046 = vld [vmem:[#allocation4 + $0x18c] sm:$0xf]
    %v2047 = vld [vmem:[#allocation4 + $0x190] sm:$0xf]
    %v2048 = vld [vmem:[#allocation4 + $0x194] sm:$0xf]
    %v2049 = vld [vmem:[#allocation4 + $0x198] sm:$0xf]
    %v2050 = vld [vmem:[#allocation4 + $0x19c] sm:$0xf]
    %v2051 = vld [vmem:[#allocation4 + $0x1a0] sm:$0xf]
    %v2052 = vld [vmem:[#allocation4 + $0x1a4] sm:$0xf]
    %v2053 = vld [vmem:[#allocation4 + $0x1a8] sm:$0xf]
    %v2054 = vld [vmem:[#allocation4 + $0x1ac] sm:$0xf]
    %v2055 = vld [vmem:[#allocation4 + $0x1b0] sm:$0xf]
    %v2056 = vld [vmem:[#allocation4 + $0x1b4] sm:$0xf]
    %v2057 = vld [vmem:[#allocation4 + $0x1b8] sm:$0xf]
    %v2058 = vld [vmem:[#allocation4 + $0x1bc] sm:$0xf]
    %v2059 = vld [vmem:[#allocation4 + $0x1c0] sm:$0xf]
    %v2060 = vld [vmem:[#allocation4 + $0x1c4] sm:$0xf]
    %v2061 = vld [vmem:[#allocation4 + $0x1c8] sm:$0xf]
    %v2062 = vld [vmem:[#allocation4 + $0x1cc] sm:$0xf]
    %v2063 = vld [vmem:[#allocation4 + $0x1d0] sm:$0xf]
    %v2064 = vld [vmem:[#allocation4 + $0x1d4] sm:$0xf]
    %v2065 = vld [vmem:[#allocation4 + $0x1d8] sm:$0xf]
    %v2066 = vld [vmem:[#allocation4 + $0x1dc] sm:$0xf]
    %v2067 = vld [vmem:[#allocation4 + $0x1e0] sm:$0xf]
    %v2068 = vld [vmem:[#allocation4 + $0x1e4] sm:$0xf]
    %v2069 = vld [vmem:[#allocation4 + $0x1e8] sm:$0xf]
    %v2070 = vld [vmem:[#allocation4 + $0x1ec] sm:$0xf]
    %v2071 = vld [vmem:[#allocation4 + $0x1f0] sm:$0xf]
    %v2072 = vld [vmem:[#allocation4 + $0x1f4] sm:$0xf]
    %v2073 = vld [vmem:[#allocation4 + $0x1f8] sm:$0xf]
    %v2074 = vld [vmem:[#allocation4 + $0x1fc] sm:$0xf]
    %v2075 = vld [vmem:[#allocation4 + $0x200] sm:$0xf]
    %v2076 = vld [vmem:[#allocation4 + $0x204] sm:$0xf]
    %v2077 = vld [vmem:[#allocation4 + $0x208] sm:$0xf]
    %v2078 = vld [vmem:[#allocation4 + $0x20c] sm:$0xf]
    %v2079 = vld [vmem:[#allocation4 + $0x210] sm:$0xf]
    %v2080 = vld [vmem:[#allocation4 + $0x214] sm:$0xf]
    %v2081 = vld [vmem:[#allocation4 + $0x218] sm:$0xf]
    %v2082 = vld [vmem:[#allocation4 + $0x21c] sm:$0xf]
    %v2083 = vld [vmem:[#allocation4 + $0x220] sm:$0xf]
    %v2084 = vld [vmem:[#allocation4 + $0x224] sm:$0xf]
    %v2085 = vld [vmem:[#allocation4 + $0x228] sm:$0xf]
    %v2086 = vld [vmem:[#allocation4 + $0x22c] sm:$0xf]
    %v2087 = vld [vmem:[#allocation4 + $0x230] sm:$0xf]
    %v2088 = vld [vmem:[#allocation4 + $0x234] sm:$0xf]
    %v2089 = vld [vmem:[#allocation4 + $0x238] sm:$0xf]
    %v2090 = vld [vmem:[#allocation4 + $0x23c] sm:$0xf]
    %v2091 = vld [vmem:[#allocation4 + $0x240] sm:$0xf]
    %v2092 = vld [vmem:[#allocation4 + $0x244] sm:$0xf]
    %v2093 = vld [vmem:[#allocation4 + $0x248] sm:$0xf]
    %v2094 = vld [vmem:[#allocation4 + $0x24c] sm:$0xf]
    %v2095 = vld [vmem:[#allocation4 + $0x250] sm:$0xf]
    %v2096 = vld [vmem:[#allocation4 + $0x254] sm:$0xf]
    %v2097 = vld [vmem:[#allocation4 + $0x258] sm:$0xf]
    %v2098 = vld [vmem:[#allocation4 + $0x25c] sm:$0xf]
    %v2099 = vld [vmem:[#allocation4 + $0x260] sm:$0xf]
    %v2100 = vld [vmem:[#allocation4 + $0x264] sm:$0xf]
    %v2101 = vld [vmem:[#allocation4 + $0x268] sm:$0xf]
    %v2102 = vld [vmem:[#allocation4 + $0x26c] sm:$0xf]
    %v2103 = vld [vmem:[#allocation4 + $0x270] sm:$0xf]
    %v2104 = vld [vmem:[#allocation4 + $0x274] sm:$0xf]
    %v2105 = vld [vmem:[#allocation4 + $0x278] sm:$0xf]
    %v2106 = vld [vmem:[#allocation4 + $0x27c] sm:$0xf]
    %v2107 = vld [vmem:[#allocation4 + $0x280] sm:$0xf]
    %v2108 = vld [vmem:[#allocation4 + $0x284] sm:$0xf]
    %v2109 = vld [vmem:[#allocation4 + $0x288] sm:$0xf]
    %v2110 = vld [vmem:[#allocation4 + $0x28c] sm:$0xf]
    %v2111 = vld [vmem:[#allocation4 + $0x290] sm:$0xf]
    %v2112 = vld [vmem:[#allocation4 + $0x294] sm:$0xf]
    %v2113 = vld [vmem:[#allocation4 + $0x298] sm:$0xf]
    %v2114 = vld [vmem:[#allocation4 + $0x29c] sm:$0xf]
    %v2115 = vld [vmem:[#allocation4 + $0x2a0] sm:$0xf]
    %v2116 = vld [vmem:[#allocation4 + $0x2a4] sm:$0xf]
    %v2117 = vld [vmem:[#allocation4 + $0x2a8] sm:$0xf]
    %v2118 = vld [vmem:[#allocation4 + $0x2ac] sm:$0xf]
    %v2119 = vld [vmem:[#allocation4 + $0x2b0] sm:$0xf]
    %v2120 = vld [vmem:[#allocation4 + $0x2b4] sm:$0xf]
    %v2121 = vld [vmem:[#allocation4 + $0x2b8] sm:$0xf]
    %v2122 = vld [vmem:[#allocation4 + $0x2bc] sm:$0xf]
    %v2123 = vld [vmem:[#allocation4 + $0x2c0] sm:$0xf]
    %v2124 = vld [vmem:[#allocation4 + $0x2c4] sm:$0xf]
    %v2125 = vld [vmem:[#allocation4 + $0x2c8] sm:$0xf]
    %v2126 = vld [vmem:[#allocation4 + $0x2cc] sm:$0xf]
    %v2127 = vld [vmem:[#allocation4 + $0x2d0] sm:$0xf]
    %v2128 = vld [vmem:[#allocation4 + $0x2d4] sm:$0xf]
    %v2129 = vld [vmem:[#allocation4 + $0x2d8] sm:$0xf]
    %v2130 = vld [vmem:[#allocation4 + $0x2dc] sm:$0xf]
    %v2131 = vld [vmem:[#allocation4 + $0x2e0] sm:$0xf]
    %v2132 = vld [vmem:[#allocation4 + $0x2e4] sm:$0xf]
    %v2133 = vld [vmem:[#allocation4 + $0x2e8] sm:$0xf]
    %v2134 = vld [vmem:[#allocation4 + $0x2ec] sm:$0xf]
    %v2135 = vld [vmem:[#allocation4 + $0x2f0] sm:$0xf]
    %v2136 = vld [vmem:[#allocation4 + $0x2f4] sm:$0xf]
    %v2137 = vld [vmem:[#allocation4 + $0x2f8] sm:$0xf]
    %v2138 = vld [vmem:[#allocation4 + $0x2fc] sm:$0xf]
    %v2139 = vld [vmem:[#allocation4 + $0x300] sm:$0xf]
    %v2140 = vld [vmem:[#allocation4 + $0x304] sm:$0xf]
    %v2141 = vld [vmem:[#allocation4 + $0x308] sm:$0xf]
    %v2142 = vld [vmem:[#allocation4 + $0x30c] sm:$0xf]
    %v2143 = vld [vmem:[#allocation4 + $0x310] sm:$0xf]
    %v2144 = vld [vmem:[#allocation4 + $0x314] sm:$0xf]
    %v2145 = vld [vmem:[#allocation4 + $0x318] sm:$0xf]
    %v2146 = vld [vmem:[#allocation4 + $0x31c] sm:$0xf]
    %v2147 = vld [vmem:[#allocation4 + $0x320] sm:$0xf]
    %v2148 = vld [vmem:[#allocation4 + $0x324] sm:$0xf]
    %v2149 = vld [vmem:[#allocation4 + $0x328] sm:$0xf]
    %v2150 = vld [vmem:[#allocation4 + $0x32c] sm:$0xf]
    %v2151 = vld [vmem:[#allocation4 + $0x330] sm:$0xf]
    %v2152 = vld [vmem:[#allocation4 + $0x334] sm:$0xf]
    %v2153 = vld [vmem:[#allocation4 + $0x338] sm:$0xf]
    %v2154 = vld [vmem:[#allocation4 + $0x33c] sm:$0xf]
    %v2155 = vld [vmem:[#allocation4 + $0x340] sm:$0xf]
    %v2156 = vld [vmem:[#allocation4 + $0x344] sm:$0xf]
    %v2157 = vld [vmem:[#allocation4 + $0x348] sm:$0xf]
    %v2158 = vld [vmem:[#allocation4 + $0x34c] sm:$0xf]
    %v2159 = vld [vmem:[#allocation4 + $0x350] sm:$0xf]
    %v2160 = vld [vmem:[#allocation4 + $0x354] sm:$0xf]
    %v2161 = vld [vmem:[#allocation4 + $0x358] sm:$0xf]
    %v2162 = vld [vmem:[#allocation4 + $0x35c] sm:$0xf]
    %v2163 = vld [vmem:[#allocation4 + $0x360] sm:$0xf]
    %v2164 = vld [vmem:[#allocation4 + $0x364] sm:$0xf]
    %v2165 = vld [vmem:[#allocation4 + $0x368] sm:$0xf]
    %v2166 = vld [vmem:[#allocation4 + $0x36c] sm:$0xf]
    %v2167 = vld [vmem:[#allocation4 + $0x370] sm:$0xf]
    %v2168 = vld [vmem:[#allocation4 + $0x374] sm:$0xf]
    %v2169 = vld [vmem:[#allocation4 + $0x378] sm:$0xf]
    %v2170 = vld [vmem:[#allocation4 + $0x37c] sm:$0xf]
    %v2171 = vld [vmem:[#allocation4 + $0x380] sm:$0xf]
    %v2172 = vld [vmem:[#allocation4 + $0x384] sm:$0xf]
    %v2173 = vld [vmem:[#allocation4 + $0x388] sm:$0xf]
    %v2174 = vld [vmem:[#allocation4 + $0x38c] sm:$0xf]
    %v2175 = vld [vmem:[#allocation4 + $0x390] sm:$0xf]
    %v2176 = vld [vmem:[#allocation4 + $0x394] sm:$0xf]
    %v2177 = vld [vmem:[#allocation4 + $0x398] sm:$0xf]
    %v2178 = vld [vmem:[#allocation4 + $0x39c] sm:$0xf]
    %v2179 = vld [vmem:[#allocation4 + $0x3a0] sm:$0xf]
    %v2180 = vld [vmem:[#allocation4 + $0x3a4] sm:$0xf]
    %v2181 = vld [vmem:[#allocation4 + $0x3a8] sm:$0xf]
    %v2182 = vld [vmem:[#allocation4 + $0x3ac] sm:$0xf]
    %v2183 = vld [vmem:[#allocation4 + $0x3b0] sm:$0xf]
    %v2184 = vld [vmem:[#allocation4 + $0x3b4] sm:$0xf]
    %v2185 = vld [vmem:[#allocation4 + $0x3b8] sm:$0xf]
    %v2186 = vld [vmem:[#allocation4 + $0x3bc] sm:$0xf]
    %v2187 = vld [vmem:[#allocation4 + $0x3c0] sm:$0xf]
    %v2188 = vld [vmem:[#allocation4 + $0x3c4] sm:$0xf]
    %v2189 = vld [vmem:[#allocation4 + $0x3c8] sm:$0xf]
    %v2190 = vld [vmem:[#allocation4 + $0x3cc] sm:$0xf]
    %v2191 = vld [vmem:[#allocation4 + $0x3d0] sm:$0xf]
    %v2192 = vld [vmem:[#allocation4 + $0x3d4] sm:$0xf]
    %v2193 = vld [vmem:[#allocation4 + $0x3d8] sm:$0xf]
    %v2194 = vld [vmem:[#allocation4 + $0x3dc] sm:$0xf]
    %v2195 = vld [vmem:[#allocation4 + $0x3e0] sm:$0xf]
    %v2196 = vld [vmem:[#allocation4 + $0x3e4] sm:$0xf]
    %v2197 = vld [vmem:[#allocation4 + $0x3e8] sm:$0xf]
    %v2198 = vld [vmem:[#allocation4 + $0x3ec] sm:$0xf]
    %v2199 = vld [vmem:[#allocation4 + $0x3f0] sm:$0xf]
    %v2200 = vld [vmem:[#allocation4 + $0x3f4] sm:$0xf]
    %v2201 = vld [vmem:[#allocation4 + $0x3f8] sm:$0xf]
    %v2202 = vld [vmem:[#allocation4 + $0x3fc] sm:$0xf]
    %v2203 = vld [vmem:[%s8] sm:$0x1]
    %v2204 = vpack.c.bf16 %v1285, %v1285
    %v2205 = vpack.c.bf16 %v1286, %v1286
    %v2206 = vpack.c.bf16 %v1329, %v1329
    %v2207 = vpack.c.bf16 %v1330, %v1330
    %v2208 = vpack.c.bf16 %v1373, %v1373
    %v2209 = vpack.c.bf16 %v1374, %v1374
    %v2210 = vpack.c.bf16 %v1417, %v1417
    %v2211 = vpack.c.bf16 %v1418, %v1418
    %v2212 = vpack.c.bf16 %v1461, %v1461
    %v2213 = vpack.c.bf16 %v1462, %v1462
    %v2214 = vpack.c.bf16 %v1505, %v1505
    %v2215 = vpack.c.bf16 %v1506, %v1506
    %v2216 = vpack.c.bf16 %v1549, %v1549
    %v2217 = vpack.c.bf16 %v1550, %v1550
    %v2218 = vpack.c.bf16 %v1593, %v1593
    %v2219 = vpack.c.bf16 %v1594, %v1594
    %v2221 = vlaneseq
    %v2222 = vshrl.u32 %v2221, 7
    %v2223 = vsub.s32 0, %v2222
    %v2224 = vrot.slane %v2203, %v2223
    %v2482 = vunpack.c.l.b16 %v1947
    %v2483 = vunpack.c.l.b16 %v1948
    %v2484 = vunpack.c.l.b16 %v1949
    %v2485 = vunpack.c.l.b16 %v1950
    %v2486 = vunpack.c.l.b16 %v1951
    %v2487 = vunpack.c.l.b16 %v1952
    %v2488 = vunpack.c.l.b16 %v1953
    %v2489 = vunpack.c.l.b16 %v1954
    %v2490 = vunpack.c.l.b16 %v1955
    %v2491 = vunpack.c.l.b16 %v1956
    %v2492 = vunpack.c.l.b16 %v1957
    %v2493 = vunpack.c.l.b16 %v1958
    %v2494 = vunpack.c.l.b16 %v1959
    %v2495 = vunpack.c.l.b16 %v1960
    %v2496 = vunpack.c.l.b16 %v1961
    %v2497 = vunpack.c.l.b16 %v1962
    %v2498 = vunpack.c.l.b16 %v1963
    %v2499 = vunpack.c.l.b16 %v1964
    %v2500 = vunpack.c.l.b16 %v1965
    %v2501 = vunpack.c.l.b16 %v1966
    %v2502 = vunpack.c.l.b16 %v1967
    %v2503 = vunpack.c.l.b16 %v1968
    %v2504 = vunpack.c.l.b16 %v1969
    %v2505 = vunpack.c.l.b16 %v1970
    %v2506 = vunpack.c.l.b16 %v1971
    %v2507 = vunpack.c.l.b16 %v1972
    %v2508 = vunpack.c.l.b16 %v1973
    %v2509 = vunpack.c.l.b16 %v1974
    %v2510 = vunpack.c.l.b16 %v1975
    %v2511 = vunpack.c.l.b16 %v1976
    %v2512 = vunpack.c.l.b16 %v1977
    %v2513 = vunpack.c.l.b16 %v1978
    %v2514 = vunpack.c.l.b16 %v1979
    %v2515 = vunpack.c.l.b16 %v1980
    %v2516 = vunpack.c.l.b16 %v1981
    %v2517 = vunpack.c.l.b16 %v1982
    %v2518 = vunpack.c.l.b16 %v1983
    %v2519 = vunpack.c.l.b16 %v1984
    %v2520 = vunpack.c.l.b16 %v1985
    %v2521 = vunpack.c.l.b16 %v1986
    %v2522 = vunpack.c.l.b16 %v1987
    %v2523 = vunpack.c.l.b16 %v1988
    %v2524 = vunpack.c.l.b16 %v1989
    %v2525 = vunpack.c.l.b16 %v1990
    %v2526 = vunpack.c.l.b16 %v1991
    %v2527 = vunpack.c.l.b16 %v1992
    %v2528 = vunpack.c.l.b16 %v1993
    %v2529 = vunpack.c.l.b16 %v1994
    %v2530 = vunpack.c.l.b16 %v1995
    %v2531 = vunpack.c.l.b16 %v1996
    %v2532 = vunpack.c.l.b16 %v1997
    %v2533 = vunpack.c.l.b16 %v1998
    %v2534 = vunpack.c.l.b16 %v1999
    %v2535 = vunpack.c.l.b16 %v2000
    %v2536 = vunpack.c.l.b16 %v2001
    %v2537 = vunpack.c.l.b16 %v2002
    %v2538 = vunpack.c.l.b16 %v2003
    %v2539 = vunpack.c.l.b16 %v2004
    %v2540 = vunpack.c.l.b16 %v2005
    %v2541 = vunpack.c.l.b16 %v2006
    %v2542 = vunpack.c.l.b16 %v2007
    %v2543 = vunpack.c.l.b16 %v2008
    %v2544 = vunpack.c.l.b16 %v2009
    %v2545 = vunpack.c.l.b16 %v2010
    %v2546 = vunpack.c.l.b16 %v2011
    %v2547 = vunpack.c.l.b16 %v2012
    %v2548 = vunpack.c.l.b16 %v2013
    %v2549 = vunpack.c.l.b16 %v2014
    %v2550 = vunpack.c.l.b16 %v2015
    %v2551 = vunpack.c.l.b16 %v2016
    %v2552 = vunpack.c.l.b16 %v2017
    %v2553 = vunpack.c.l.b16 %v2018
    %v2554 = vunpack.c.l.b16 %v2019
    %v2555 = vunpack.c.l.b16 %v2020
    %v2556 = vunpack.c.l.b16 %v2021
    %v2557 = vunpack.c.l.b16 %v2022
    %v2558 = vunpack.c.l.b16 %v2023
    %v2559 = vunpack.c.l.b16 %v2024
    %v2560 = vunpack.c.l.b16 %v2025
    %v2561 = vunpack.c.l.b16 %v2026
    %v2562 = vunpack.c.l.b16 %v2027
    %v2563 = vunpack.c.l.b16 %v2028
    %v2564 = vunpack.c.l.b16 %v2029
    %v2565 = vunpack.c.l.b16 %v2030
    %v2566 = vunpack.c.l.b16 %v2031
    %v2567 = vunpack.c.l.b16 %v2032
    %v2568 = vunpack.c.l.b16 %v2033
    %v2569 = vunpack.c.l.b16 %v2034
    %v2570 = vunpack.c.l.b16 %v2035
    %v2571 = vunpack.c.l.b16 %v2036
    %v2572 = vunpack.c.l.b16 %v2037
    %v2573 = vunpack.c.l.b16 %v2038
    %v2574 = vunpack.c.l.b16 %v2039
    %v2575 = vunpack.c.l.b16 %v2040
    %v2576 = vunpack.c.l.b16 %v2041
    %v2577 = vunpack.c.l.b16 %v2042
    %v2578 = vunpack.c.l.b16 %v2043
    %v2579 = vunpack.c.l.b16 %v2044
    %v2580 = vunpack.c.l.b16 %v2045
    %v2581 = vunpack.c.l.b16 %v2046
    %v2582 = vunpack.c.l.b16 %v2047
    %v2583 = vunpack.c.l.b16 %v2048
    %v2584 = vunpack.c.l.b16 %v2049
    %v2585 = vunpack.c.l.b16 %v2050
    %v2586 = vunpack.c.l.b16 %v2051
    %v2587 = vunpack.c.l.b16 %v2052
    %v2588 = vunpack.c.l.b16 %v2053
    %v2589 = vunpack.c.l.b16 %v2054
    %v2590 = vunpack.c.l.b16 %v2055
    %v2591 = vunpack.c.l.b16 %v2056
    %v2592 = vunpack.c.l.b16 %v2057
    %v2593 = vunpack.c.l.b16 %v2058
    %v2594 = vunpack.c.l.b16 %v2059
    %v2595 = vunpack.c.l.b16 %v2060
    %v2596 = vunpack.c.l.b16 %v2061
    %v2597 = vunpack.c.l.b16 %v2062
    %v2598 = vunpack.c.l.b16 %v2063
    %v2599 = vunpack.c.l.b16 %v2064
    %v2600 = vunpack.c.l.b16 %v2065
    %v2601 = vunpack.c.l.b16 %v2066
    %v2602 = vunpack.c.l.b16 %v2067
    %v2603 = vunpack.c.l.b16 %v2068
    %v2604 = vunpack.c.l.b16 %v2069
    %v2605 = vunpack.c.l.b16 %v2070
    %v2606 = vunpack.c.l.b16 %v2071
    %v2607 = vunpack.c.l.b16 %v2072
    %v2608 = vunpack.c.l.b16 %v2073
    %v2609 = vunpack.c.l.b16 %v2074
    %v2610 = vunpack.c.l.b16 %v2075
    %v2611 = vunpack.c.l.b16 %v2076
    %v2612 = vunpack.c.l.b16 %v2077
    %v2613 = vunpack.c.l.b16 %v2078
    %v2614 = vunpack.c.l.b16 %v2079
    %v2615 = vunpack.c.l.b16 %v2080
    %v2616 = vunpack.c.l.b16 %v2081
    %v2617 = vunpack.c.l.b16 %v2082
    %v2618 = vunpack.c.l.b16 %v2083
    %v2619 = vunpack.c.l.b16 %v2084
    %v2620 = vunpack.c.l.b16 %v2085
    %v2621 = vunpack.c.l.b16 %v2086
    %v2622 = vunpack.c.l.b16 %v2087
    %v2623 = vunpack.c.l.b16 %v2088
    %v2624 = vunpack.c.l.b16 %v2089
    %v2625 = vunpack.c.l.b16 %v2090
    %v2626 = vunpack.c.l.b16 %v2091
    %v2627 = vunpack.c.l.b16 %v2092
    %v2628 = vunpack.c.l.b16 %v2093
    %v2629 = vunpack.c.l.b16 %v2094
    %v2630 = vunpack.c.l.b16 %v2095
    %v2631 = vunpack.c.l.b16 %v2096
    %v2632 = vunpack.c.l.b16 %v2097
    %v2633 = vunpack.c.l.b16 %v2098
    %v2634 = vunpack.c.l.b16 %v2099
    %v2635 = vunpack.c.l.b16 %v2100
    %v2636 = vunpack.c.l.b16 %v2101
    %v2637 = vunpack.c.l.b16 %v2102
    %v2638 = vunpack.c.l.b16 %v2103
    %v2639 = vunpack.c.l.b16 %v2104
    %v2640 = vunpack.c.l.b16 %v2105
    %v2641 = vunpack.c.l.b16 %v2106
    %v2642 = vunpack.c.l.b16 %v2107
    %v2643 = vunpack.c.l.b16 %v2108
    %v2644 = vunpack.c.l.b16 %v2109
    %v2645 = vunpack.c.l.b16 %v2110
    %v2646 = vunpack.c.l.b16 %v2111
    %v2647 = vunpack.c.l.b16 %v2112
    %v2648 = vunpack.c.l.b16 %v2113
    %v2649 = vunpack.c.l.b16 %v2114
    %v2650 = vunpack.c.l.b16 %v2115
    %v2651 = vunpack.c.l.b16 %v2116
    %v2652 = vunpack.c.l.b16 %v2117
    %v2653 = vunpack.c.l.b16 %v2118
    %v2654 = vunpack.c.l.b16 %v2119
    %v2655 = vunpack.c.l.b16 %v2120
    %v2656 = vunpack.c.l.b16 %v2121
    %v2657 = vunpack.c.l.b16 %v2122
    %v2658 = vunpack.c.l.b16 %v2123
    %v2659 = vunpack.c.l.b16 %v2124
    %v2660 = vunpack.c.l.b16 %v2125
    %v2661 = vunpack.c.l.b16 %v2126
    %v2662 = vunpack.c.l.b16 %v2127
    %v2663 = vunpack.c.l.b16 %v2128
    %v2664 = vunpack.c.l.b16 %v2129
    %v2665 = vunpack.c.l.b16 %v2130
    %v2666 = vunpack.c.l.b16 %v2131
    %v2667 = vunpack.c.l.b16 %v2132
    %v2668 = vunpack.c.l.b16 %v2133
    %v2669 = vunpack.c.l.b16 %v2134
    %v2670 = vunpack.c.l.b16 %v2135
    %v2671 = vunpack.c.l.b16 %v2136
    %v2672 = vunpack.c.l.b16 %v2137
    %v2673 = vunpack.c.l.b16 %v2138
    %v2674 = vunpack.c.l.b16 %v2139
    %v2675 = vunpack.c.l.b16 %v2140
    %v2676 = vunpack.c.l.b16 %v2141
    %v2677 = vunpack.c.l.b16 %v2142
    %v2678 = vunpack.c.l.b16 %v2143
    %v2679 = vunpack.c.l.b16 %v2144
    %v2680 = vunpack.c.l.b16 %v2145
    %v2681 = vunpack.c.l.b16 %v2146
    %v2682 = vunpack.c.l.b16 %v2147
    %v2683 = vunpack.c.l.b16 %v2148
    %v2684 = vunpack.c.l.b16 %v2149
    %v2685 = vunpack.c.l.b16 %v2150
    %v2686 = vunpack.c.l.b16 %v2151
    %v2687 = vunpack.c.l.b16 %v2152
    %v2688 = vunpack.c.l.b16 %v2153
    %v2689 = vunpack.c.l.b16 %v2154
    %v2690 = vunpack.c.l.b16 %v2155
    %v2691 = vunpack.c.l.b16 %v2156
    %v2692 = vunpack.c.l.b16 %v2157
    %v2693 = vunpack.c.l.b16 %v2158
    %v2694 = vunpack.c.l.b16 %v2159
    %v2695 = vunpack.c.l.b16 %v2160
    %v2696 = vunpack.c.l.b16 %v2161
    %v2697 = vunpack.c.l.b16 %v2162
    %v2698 = vunpack.c.l.b16 %v2163
    %v2699 = vunpack.c.l.b16 %v2164
    %v2700 = vunpack.c.l.b16 %v2165
    %v2701 = vunpack.c.l.b16 %v2166
    %v2702 = vunpack.c.l.b16 %v2167
    %v2703 = vunpack.c.l.b16 %v2168
    %v2704 = vunpack.c.l.b16 %v2169
    %v2705 = vunpack.c.l.b16 %v2170
    %v2706 = vunpack.c.l.b16 %v2171
    %v2707 = vunpack.c.l.b16 %v2172
    %v2708 = vunpack.c.l.b16 %v2173
    %v2709 = vunpack.c.l.b16 %v2174
    %v2710 = vunpack.c.l.b16 %v2175
    %v2711 = vunpack.c.l.b16 %v2176
    %v2712 = vunpack.c.l.b16 %v2177
    %v2713 = vunpack.c.l.b16 %v2178
    %v2714 = vunpack.c.l.b16 %v2179
    %v2715 = vunpack.c.l.b16 %v2180
    %v2716 = vunpack.c.l.b16 %v2181
    %v2717 = vunpack.c.l.b16 %v2182
    %v2718 = vunpack.c.l.b16 %v2183
    %v2719 = vunpack.c.l.b16 %v2184
    %v2720 = vunpack.c.l.b16 %v2185
    %v2721 = vunpack.c.l.b16 %v2186
    %v2722 = vunpack.c.l.b16 %v2187
    %v2723 = vunpack.c.l.b16 %v2188
    %v2724 = vunpack.c.l.b16 %v2189
    %v2725 = vunpack.c.l.b16 %v2190
    %v2726 = vunpack.c.l.b16 %v2191
    %v2727 = vunpack.c.l.b16 %v2192
    %v2728 = vunpack.c.l.b16 %v2193
    %v2729 = vunpack.c.l.b16 %v2194
    %v2730 = vunpack.c.l.b16 %v2195
    %v2731 = vunpack.c.l.b16 %v2196
    %v2732 = vunpack.c.l.b16 %v2197
    %v2733 = vunpack.c.l.b16 %v2198
    %v2734 = vunpack.c.l.b16 %v2199
    %v2735 = vunpack.c.l.b16 %v2200
    %v2736 = vunpack.c.l.b16 %v2201
    %v2737 = vunpack.c.l.b16 %v2202
    %v2738 = vpack.c.b16 %v2483, %v2482
    %v2739 = vpack.c.b16 %v2485, %v2484
    %v2740 = vpack.c.b16 %v2487, %v2486
    %v2741 = vpack.c.b16 %v2489, %v2488
    %v2742 = vpack.c.b16 %v2491, %v2490
    %v2743 = vpack.c.b16 %v2493, %v2492
    %v2744 = vpack.c.b16 %v2495, %v2494
    %v2745 = vpack.c.b16 %v2497, %v2496
    %v2746 = vpack.c.b16 %v2499, %v2498
    %v2747 = vpack.c.b16 %v2501, %v2500
    %v2748 = vpack.c.b16 %v2503, %v2502
    %v2749 = vpack.c.b16 %v2505, %v2504
    %v2750 = vpack.c.b16 %v2507, %v2506
    %v2751 = vpack.c.b16 %v2509, %v2508
    %v2752 = vpack.c.b16 %v2511, %v2510
    %v2753 = vpack.c.b16 %v2513, %v2512
    %v2754 = vpack.c.b16 %v2515, %v2514
    %v2755 = vpack.c.b16 %v2517, %v2516
    %v2756 = vpack.c.b16 %v2519, %v2518
    %v2757 = vpack.c.b16 %v2521, %v2520
    %v2758 = vpack.c.b16 %v2523, %v2522
    %v2759 = vpack.c.b16 %v2525, %v2524
    %v2760 = vpack.c.b16 %v2527, %v2526
    %v2761 = vpack.c.b16 %v2529, %v2528
    %v2762 = vpack.c.b16 %v2531, %v2530
    %v2763 = vpack.c.b16 %v2533, %v2532
    %v2764 = vpack.c.b16 %v2535, %v2534
    %v2765 = vpack.c.b16 %v2537, %v2536
    %v2766 = vpack.c.b16 %v2539, %v2538
    %v2767 = vpack.c.b16 %v2541, %v2540
    %v2768 = vpack.c.b16 %v2543, %v2542
    %v2769 = vpack.c.b16 %v2545, %v2544
    %v2770 = vpack.c.b16 %v2547, %v2546
    %v2771 = vpack.c.b16 %v2549, %v2548
    %v2772 = vpack.c.b16 %v2551, %v2550
    %v2773 = vpack.c.b16 %v2553, %v2552
    %v2774 = vpack.c.b16 %v2555, %v2554
    %v2775 = vpack.c.b16 %v2557, %v2556
    %v2776 = vpack.c.b16 %v2559, %v2558
    %v2777 = vpack.c.b16 %v2561, %v2560
    %v2778 = vpack.c.b16 %v2563, %v2562
    %v2779 = vpack.c.b16 %v2565, %v2564
    %v2780 = vpack.c.b16 %v2567, %v2566
    %v2781 = vpack.c.b16 %v2569, %v2568
    %v2782 = vpack.c.b16 %v2571, %v2570
    %v2783 = vpack.c.b16 %v2573, %v2572
    %v2784 = vpack.c.b16 %v2575, %v2574
    %v2785 = vpack.c.b16 %v2577, %v2576
    %v2786 = vpack.c.b16 %v2579, %v2578
    %v2787 = vpack.c.b16 %v2581, %v2580
    %v2788 = vpack.c.b16 %v2583, %v2582
    %v2789 = vpack.c.b16 %v2585, %v2584
    %v2790 = vpack.c.b16 %v2587, %v2586
    %v2791 = vpack.c.b16 %v2589, %v2588
    %v2792 = vpack.c.b16 %v2591, %v2590
    %v2793 = vpack.c.b16 %v2593, %v2592
    %v2794 = vpack.c.b16 %v2595, %v2594
    %v2795 = vpack.c.b16 %v2597, %v2596
    %v2796 = vpack.c.b16 %v2599, %v2598
    %v2797 = vpack.c.b16 %v2601, %v2600
    %v2798 = vpack.c.b16 %v2603, %v2602
    %v2799 = vpack.c.b16 %v2605, %v2604
    %v2800 = vpack.c.b16 %v2607, %v2606
    %v2801 = vpack.c.b16 %v2609, %v2608
    %v2802 = vpack.c.b16 %v2611, %v2610
    %v2803 = vpack.c.b16 %v2613, %v2612
    %v2804 = vpack.c.b16 %v2615, %v2614
    %v2805 = vpack.c.b16 %v2617, %v2616
    %v2806 = vpack.c.b16 %v2619, %v2618
    %v2807 = vpack.c.b16 %v2621, %v2620
    %v2808 = vpack.c.b16 %v2623, %v2622
    %v2809 = vpack.c.b16 %v2625, %v2624
    %v2810 = vpack.c.b16 %v2627, %v2626
    %v2811 = vpack.c.b16 %v2629, %v2628
    %v2812 = vpack.c.b16 %v2631, %v2630
    %v2813 = vpack.c.b16 %v2633, %v2632
    %v2814 = vpack.c.b16 %v2635, %v2634
    %v2815 = vpack.c.b16 %v2637, %v2636
    %v2816 = vpack.c.b16 %v2639, %v2638
    %v2817 = vpack.c.b16 %v2641, %v2640
    %v2818 = vpack.c.b16 %v2643, %v2642
    %v2819 = vpack.c.b16 %v2645, %v2644
    %v2820 = vpack.c.b16 %v2647, %v2646
    %v2821 = vpack.c.b16 %v2649, %v2648
    %v2822 = vpack.c.b16 %v2651, %v2650
    %v2823 = vpack.c.b16 %v2653, %v2652
    %v2824 = vpack.c.b16 %v2655, %v2654
    %v2825 = vpack.c.b16 %v2657, %v2656
    %v2826 = vpack.c.b16 %v2659, %v2658
    %v2827 = vpack.c.b16 %v2661, %v2660
    %v2828 = vpack.c.b16 %v2663, %v2662
    %v2829 = vpack.c.b16 %v2665, %v2664
    %v2830 = vpack.c.b16 %v2667, %v2666
    %v2831 = vpack.c.b16 %v2669, %v2668
    %v2832 = vpack.c.b16 %v2671, %v2670
    %v2833 = vpack.c.b16 %v2673, %v2672
    %v2834 = vpack.c.b16 %v2675, %v2674
    %v2835 = vpack.c.b16 %v2677, %v2676
    %v2836 = vpack.c.b16 %v2679, %v2678
    %v2837 = vpack.c.b16 %v2681, %v2680
    %v2838 = vpack.c.b16 %v2683, %v2682
    %v2839 = vpack.c.b16 %v2685, %v2684
    %v2840 = vpack.c.b16 %v2687, %v2686
    %v2841 = vpack.c.b16 %v2689, %v2688
    %v2842 = vpack.c.b16 %v2691, %v2690
    %v2843 = vpack.c.b16 %v2693, %v2692
    %v2844 = vpack.c.b16 %v2695, %v2694
    %v2845 = vpack.c.b16 %v2697, %v2696
    %v2846 = vpack.c.b16 %v2699, %v2698
    %v2847 = vpack.c.b16 %v2701, %v2700
    %v2848 = vpack.c.b16 %v2703, %v2702
    %v2849 = vpack.c.b16 %v2705, %v2704
    %v2850 = vpack.c.b16 %v2707, %v2706
    %v2851 = vpack.c.b16 %v2709, %v2708
    %v2852 = vpack.c.b16 %v2711, %v2710
    %v2853 = vpack.c.b16 %v2713, %v2712
    %v2854 = vpack.c.b16 %v2715, %v2714
    %v2855 = vpack.c.b16 %v2717, %v2716
    %v2856 = vpack.c.b16 %v2719, %v2718
    %v2857 = vpack.c.b16 %v2721, %v2720
    %v2858 = vpack.c.b16 %v2723, %v2722
    %v2859 = vpack.c.b16 %v2725, %v2724
    %v2860 = vpack.c.b16 %v2727, %v2726
    %v2861 = vpack.c.b16 %v2729, %v2728
    %v2862 = vpack.c.b16 %v2731, %v2730
    %v2863 = vpack.c.b16 %v2733, %v2732
    %v2864 = vpack.c.b16 %v2735, %v2734
    %v2865 = vpack.c.b16 %v2737, %v2736
    %2994 = vmatprep.subr.bf16.mxu0 0
    %2995 = vmatpush1.bf16.msra.mxu0 %v2745
    %2996 = vmatprep.subr.bf16.mxu0 0
    %2997 = vmatpush1.bf16.msra.mxu0 %v2744
    %2998 = vmatprep.subr.bf16.mxu0 0
    %2999 = vmatpush1.bf16.msra.mxu0 %v2743
    %3000 = vmatprep.subr.bf16.mxu0 0
    %3001 = vmatpush1.bf16.msra.mxu0 %v2742
    %3002 = vmatprep.subr.bf16.mxu0 0
    %3003 = vmatpush1.bf16.msra.mxu0 %v2741
    %3004 = vmatprep.subr.bf16.mxu0 0
    %3005 = vmatpush1.bf16.msra.mxu0 %v2740
    %3006 = vmatprep.subr.bf16.mxu0 0
    %3007 = vmatpush1.bf16.msra.mxu0 %v2739
    %3008 = vmatprep.subr.bf16.mxu0 0
    %3009 = vmatpush1.bf16.msra.mxu0 %v2738
    %3010 = vmatprep.subr.bf16.mxu0 0
    %3011 = vmatpush2.bf16.msra.mxu0 %v2753
    %3012 = vmatprep.subr.bf16.mxu0 0
    %3013 = vmatpush2.bf16.msra.mxu0 %v2752
    %3014 = vmatprep.subr.bf16.mxu0 0
    %3015 = vmatpush2.bf16.msra.mxu0 %v2751
    %3016 = vmatprep.subr.bf16.mxu0 0
    %3017 = vmatpush2.bf16.msra.mxu0 %v2750
    %3018 = vmatprep.subr.bf16.mxu0 0
    %3019 = vmatpush2.bf16.msra.mxu0 %v2749
    %3020 = vmatprep.subr.bf16.mxu0 0
    %3021 = vmatpush2.bf16.msra.mxu0 %v2748
    %3022 = vmatprep.subr.bf16.mxu0 0
    %3023 = vmatpush2.bf16.msra.mxu0 %v2747
    %3024 = vmatprep.subr.bf16.mxu0 0
    %3025 = vmatpush2.bf16.msra.mxu0 %v2746
    %3026 = vmatprep.mubr.bf16.mxu0 %v2205
    %3027 = vmatmul.mubr.bf16.gmra.mxu0 %v2204
    %v3028 = vpop.f32.mrf.mxu0
    %v3029 = vadd.f32 %v2224, %v3028
    %v3030 = vpop.f32.mrf.mxu0
    %v3031 = vpop.f32.mrf.mxu0
    %v3032 = vpop.f32.mrf.mxu0
    %3033 = vdwg.mxu0
    %3034 = vmatprep.subr.bf16.mxu0 0
    %3035 = vmatpush1.bf16.msra.mxu0 %v2761
    %3036 = vmatprep.subr.bf16.mxu0 0
    %3037 = vmatpush1.bf16.msra.mxu0 %v2760
    %3038 = vmatprep.subr.bf16.mxu0 0
    %3039 = vmatpush1.bf16.msra.mxu0 %v2759
    %3040 = vmatprep.subr.bf16.mxu0 0
    %3041 = vmatpush1.bf16.msra.mxu0 %v2758
    %3042 = vmatprep.subr.bf16.mxu0 0
    %3043 = vmatpush1.bf16.msra.mxu0 %v2757
    %3044 = vmatprep.subr.bf16.mxu0 0
    %3045 = vmatpush1.bf16.msra.mxu0 %v2756
    %3046 = vmatprep.subr.bf16.mxu0 0
    %3047 = vmatpush1.bf16.msra.mxu0 %v2755
    %3048 = vmatprep.subr.bf16.mxu0 0
    %3049 = vmatpush1.bf16.msra.mxu0 %v2754
    %3050 = vmatprep.subr.bf16.mxu0 0
    %3051 = vmatpush2.bf16.msra.mxu0 %v2769
    %3052 = vmatprep.subr.bf16.mxu0 0
    %3053 = vmatpush2.bf16.msra.mxu0 %v2768
    %3054 = vmatprep.subr.bf16.mxu0 0
    %3055 = vmatpush2.bf16.msra.mxu0 %v2767
    %3056 = vmatprep.subr.bf16.mxu0 0
    %3057 = vmatpush2.bf16.msra.mxu0 %v2766
    %3058 = vmatprep.subr.bf16.mxu0 0
    %3059 = vmatpush2.bf16.msra.mxu0 %v2765
    %3060 = vmatprep.subr.bf16.mxu0 0
    %3061 = vmatpush2.bf16.msra.mxu0 %v2764
    %3062 = vmatprep.subr.bf16.mxu0 0
    %3063 = vmatpush2.bf16.msra.mxu0 %v2763
    %3064 = vmatprep.subr.bf16.mxu0 0
    %3065 = vmatpush2.bf16.msra.mxu0 %v2762
    %3066 = vmatprep.mubr.bf16.mxu0 %v2207
    %3067 = vmatmul.mubr.bf16.gmra.mxu0 %v2206
    %v3068 = vpop.f32.mrf.mxu0
    %v3069 = vadd.f32 %v3029, %v3068
    %v3070 = vpop.f32.mrf.mxu0
    %v3071 = vpop.f32.mrf.mxu0
    %v3072 = vpop.f32.mrf.mxu0
    %3073 = vdwg.mxu0
    %3074 = vmatprep.subr.bf16.mxu0 0
    %3075 = vmatpush1.bf16.msra.mxu0 %v2777
    %3076 = vmatprep.subr.bf16.mxu0 0
    %3077 = vmatpush1.bf16.msra.mxu0 %v2776
    %3078 = vmatprep.subr.bf16.mxu0 0
    %3079 = vmatpush1.bf16.msra.mxu0 %v2775
    %3080 = vmatprep.subr.bf16.mxu0 0
    %3081 = vmatpush1.bf16.msra.mxu0 %v2774
    %3082 = vmatprep.subr.bf16.mxu0 0
    %3083 = vmatpush1.bf16.msra.mxu0 %v2773
    %3084 = vmatprep.subr.bf16.mxu0 0
    %3085 = vmatpush1.bf16.msra.mxu0 %v2772
    %3086 = vmatprep.subr.bf16.mxu0 0
    %3087 = vmatpush1.bf16.msra.mxu0 %v2771
    %3088 = vmatprep.subr.bf16.mxu0 0
    %3089 = vmatpush1.bf16.msra.mxu0 %v2770
    %3090 = vmatprep.subr.bf16.mxu0 0
    %3091 = vmatpush2.bf16.msra.mxu0 %v2785
    %3092 = vmatprep.subr.bf16.mxu0 0
    %3093 = vmatpush2.bf16.msra.mxu0 %v2784
    %3094 = vmatprep.subr.bf16.mxu0 0
    %3095 = vmatpush2.bf16.msra.mxu0 %v2783
    %3096 = vmatprep.subr.bf16.mxu0 0
    %3097 = vmatpush2.bf16.msra.mxu0 %v2782
    %3098 = vmatprep.subr.bf16.mxu0 0
    %3099 = vmatpush2.bf16.msra.mxu0 %v2781
    %3100 = vmatprep.subr.bf16.mxu0 0
    %3101 = vmatpush2.bf16.msra.mxu0 %v2780
    %3102 = vmatprep.subr.bf16.mxu0 0
    %3103 = vmatpush2.bf16.msra.mxu0 %v2779
    %3104 = vmatprep.subr.bf16.mxu0 0
    %3105 = vmatpush2.bf16.msra.mxu0 %v2778
    %3106 = vmatprep.mubr.bf16.mxu0 %v2209
    %3107 = vmatmul.mubr.bf16.gmra.mxu0 %v2208
    %v3108 = vpop.f32.mrf.mxu0
    %v3109 = vadd.f32 %v3069, %v3108
    %v3110 = vpop.f32.mrf.mxu0
    %v3111 = vpop.f32.mrf.mxu0
    %v3112 = vpop.f32.mrf.mxu0
    %3113 = vdwg.mxu0
    %3114 = vmatprep.subr.bf16.mxu0 0
    %3115 = vmatpush1.bf16.msra.mxu0 %v2793
    %3116 = vmatprep.subr.bf16.mxu0 0
    %3117 = vmatpush1.bf16.msra.mxu0 %v2792
    %3118 = vmatprep.subr.bf16.mxu0 0
    %3119 = vmatpush1.bf16.msra.mxu0 %v2791
    %3120 = vmatprep.subr.bf16.mxu0 0
    %3121 = vmatpush1.bf16.msra.mxu0 %v2790
    %3122 = vmatprep.subr.bf16.mxu0 0
    %3123 = vmatpush1.bf16.msra.mxu0 %v2789
    %3124 = vmatprep.subr.bf16.mxu0 0
    %3125 = vmatpush1.bf16.msra.mxu0 %v2788
    %3126 = vmatprep.subr.bf16.mxu0 0
    %3127 = vmatpush1.bf16.msra.mxu0 %v2787
    %3128 = vmatprep.subr.bf16.mxu0 0
    %3129 = vmatpush1.bf16.msra.mxu0 %v2786
    %3130 = vmatprep.subr.bf16.mxu0 0
    %3131 = vmatpush2.bf16.msra.mxu0 %v2801
    %3132 = vmatprep.subr.bf16.mxu0 0
    %3133 = vmatpush2.bf16.msra.mxu0 %v2800
    %3134 = vmatprep.subr.bf16.mxu0 0
    %3135 = vmatpush2.bf16.msra.mxu0 %v2799
    %3136 = vmatprep.subr.bf16.mxu0 0
    %3137 = vmatpush2.bf16.msra.mxu0 %v2798
    %3138 = vmatprep.subr.bf16.mxu0 0
    %3139 = vmatpush2.bf16.msra.mxu0 %v2797
    %3140 = vmatprep.subr.bf16.mxu0 0
    %3141 = vmatpush2.bf16.msra.mxu0 %v2796
    %3142 = vmatprep.subr.bf16.mxu0 0
    %3143 = vmatpush2.bf16.msra.mxu0 %v2795
    %3144 = vmatprep.subr.bf16.mxu0 0
    %3145 = vmatpush2.bf16.msra.mxu0 %v2794
    %3146 = vmatprep.mubr.bf16.mxu0 %v2211
    %3147 = vmatmul.mubr.bf16.gmra.mxu0 %v2210
    %v3148 = vpop.f32.mrf.mxu0
    %v3149 = vadd.f32 %v3109, %v3148
    %v3150 = vpop.f32.mrf.mxu0
    %v3151 = vpop.f32.mrf.mxu0
    %v3152 = vpop.f32.mrf.mxu0
    %3153 = vdwg.mxu0
    %3154 = vmatprep.subr.bf16.mxu0 0
    %3155 = vmatpush1.bf16.msra.mxu0 %v2809
    %3156 = vmatprep.subr.bf16.mxu0 0
    %3157 = vmatpush1.bf16.msra.mxu0 %v2808
    %3158 = vmatprep.subr.bf16.mxu0 0
    %3159 = vmatpush1.bf16.msra.mxu0 %v2807
    %3160 = vmatprep.subr.bf16.mxu0 0
    %3161 = vmatpush1.bf16.msra.mxu0 %v2806
    %3162 = vmatprep.subr.bf16.mxu0 0
    %3163 = vmatpush1.bf16.msra.mxu0 %v2805
    %3164 = vmatprep.subr.bf16.mxu0 0
    %3165 = vmatpush1.bf16.msra.mxu0 %v2804
    %3166 = vmatprep.subr.bf16.mxu0 0
    %3167 = vmatpush1.bf16.msra.mxu0 %v2803
    %3168 = vmatprep.subr.bf16.mxu0 0
    %3169 = vmatpush1.bf16.msra.mxu0 %v2802
    %3170 = vmatprep.subr.bf16.mxu0 0
    %3171 = vmatpush2.bf16.msra.mxu0 %v2817
    %3172 = vmatprep.subr.bf16.mxu0 0
    %3173 = vmatpush2.bf16.msra.mxu0 %v2816
    %3174 = vmatprep.subr.bf16.mxu0 0
    %3175 = vmatpush2.bf16.msra.mxu0 %v2815
    %3176 = vmatprep.subr.bf16.mxu0 0
    %3177 = vmatpush2.bf16.msra.mxu0 %v2814
    %3178 = vmatprep.subr.bf16.mxu0 0
    %3179 = vmatpush2.bf16.msra.mxu0 %v2813
    %3180 = vmatprep.subr.bf16.mxu0 0
    %3181 = vmatpush2.bf16.msra.mxu0 %v2812
    %3182 = vmatprep.subr.bf16.mxu0 0
    %3183 = vmatpush2.bf16.msra.mxu0 %v2811
    %3184 = vmatprep.subr.bf16.mxu0 0
    %3185 = vmatpush2.bf16.msra.mxu0 %v2810
    %3186 = vmatprep.mubr.bf16.mxu0 %v2213
    %3187 = vmatmul.mubr.bf16.gmra.mxu0 %v2212
    %v3188 = vpop.f32.mrf.mxu0
    %v3189 = vadd.f32 %v3149, %v3188
    %v3190 = vpop.f32.mrf.mxu0
    %v3191 = vpop.f32.mrf.mxu0
    %v3192 = vpop.f32.mrf.mxu0
    %3193 = vdwg.mxu0
    %3194 = vmatprep.subr.bf16.mxu0 0
    %3195 = vmatpush1.bf16.msra.mxu0 %v2825
    %3196 = vmatprep.subr.bf16.mxu0 0
    %3197 = vmatpush1.bf16.msra.mxu0 %v2824
    %3198 = vmatprep.subr.bf16.mxu0 0
    %3199 = vmatpush1.bf16.msra.mxu0 %v2823
    %3200 = vmatprep.subr.bf16.mxu0 0
    %3201 = vmatpush1.bf16.msra.mxu0 %v2822
    %3202 = vmatprep.subr.bf16.mxu0 0
    %3203 = vmatpush1.bf16.msra.mxu0 %v2821
    %3204 = vmatprep.subr.bf16.mxu0 0
    %3205 = vmatpush1.bf16.msra.mxu0 %v2820
    %3206 = vmatprep.subr.bf16.mxu0 0
    %3207 = vmatpush1.bf16.msra.mxu0 %v2819
    %3208 = vmatprep.subr.bf16.mxu0 0
    %3209 = vmatpush1.bf16.msra.mxu0 %v2818
    %3210 = vmatprep.subr.bf16.mxu0 0
    %3211 = vmatpush2.bf16.msra.mxu0 %v2833
    %3212 = vmatprep.subr.bf16.mxu0 0
    %3213 = vmatpush2.bf16.msra.mxu0 %v2832
    %3214 = vmatprep.subr.bf16.mxu0 0
    %3215 = vmatpush2.bf16.msra.mxu0 %v2831
    %3216 = vmatprep.subr.bf16.mxu0 0
    %3217 = vmatpush2.bf16.msra.mxu0 %v2830
    %3218 = vmatprep.subr.bf16.mxu0 0
    %3219 = vmatpush2.bf16.msra.mxu0 %v2829
    %3220 = vmatprep.subr.bf16.mxu0 0
    %3221 = vmatpush2.bf16.msra.mxu0 %v2828
    %3222 = vmatprep.subr.bf16.mxu0 0
    %3223 = vmatpush2.bf16.msra.mxu0 %v2827
    %3224 = vmatprep.subr.bf16.mxu0 0
    %3225 = vmatpush2.bf16.msra.mxu0 %v2826
    %3226 = vmatprep.mubr.bf16.mxu0 %v2215
    %3227 = vmatmul.mubr.bf16.gmra.mxu0 %v2214
    %v3228 = vpop.f32.mrf.mxu0
    %v3229 = vadd.f32 %v3189, %v3228
    %v3230 = vpop.f32.mrf.mxu0
    %v3231 = vpop.f32.mrf.mxu0
    %v3232 = vpop.f32.mrf.mxu0
    %3233 = vdwg.mxu0
    %3234 = vmatprep.subr.bf16.mxu0 0
    %3235 = vmatpush1.bf16.msra.mxu0 %v2841
    %3236 = vmatprep.subr.bf16.mxu0 0
    %3237 = vmatpush1.bf16.msra.mxu0 %v2840
    %3238 = vmatprep.subr.bf16.mxu0 0
    %3239 = vmatpush1.bf16.msra.mxu0 %v2839
    %3240 = vmatprep.subr.bf16.mxu0 0
    %3241 = vmatpush1.bf16.msra.mxu0 %v2838
    %3242 = vmatprep.subr.bf16.mxu0 0
    %3243 = vmatpush1.bf16.msra.mxu0 %v2837
    %3244 = vmatprep.subr.bf16.mxu0 0
    %3245 = vmatpush1.bf16.msra.mxu0 %v2836
    %3246 = vmatprep.subr.bf16.mxu0 0
    %3247 = vmatpush1.bf16.msra.mxu0 %v2835
    %3248 = vmatprep.subr.bf16.mxu0 0
    %3249 = vmatpush1.bf16.msra.mxu0 %v2834
    %3250 = vmatprep.subr.bf16.mxu0 0
    %3251 = vmatpush2.bf16.msra.mxu0 %v2849
    %3252 = vmatprep.subr.bf16.mxu0 0
    %3253 = vmatpush2.bf16.msra.mxu0 %v2848
    %3254 = vmatprep.subr.bf16.mxu0 0
    %3255 = vmatpush2.bf16.msra.mxu0 %v2847
    %3256 = vmatprep.subr.bf16.mxu0 0
    %3257 = vmatpush2.bf16.msra.mxu0 %v2846
    %3258 = vmatprep.subr.bf16.mxu0 0
    %3259 = vmatpush2.bf16.msra.mxu0 %v2845
    %3260 = vmatprep.subr.bf16.mxu0 0
    %3261 = vmatpush2.bf16.msra.mxu0 %v2844
    %3262 = vmatprep.subr.bf16.mxu0 0
    %3263 = vmatpush2.bf16.msra.mxu0 %v2843
    %3264 = vmatprep.subr.bf16.mxu0 0
    %3265 = vmatpush2.bf16.msra.mxu0 %v2842
    %3266 = vmatprep.mubr.bf16.mxu0 %v2217
    %3267 = vmatmul.mubr.bf16.gmra.mxu0 %v2216
    %v3268 = vpop.f32.mrf.mxu0
    %v3269 = vadd.f32 %v3229, %v3268
    %v3270 = vpop.f32.mrf.mxu0
    %v3271 = vpop.f32.mrf.mxu0
    %v3272 = vpop.f32.mrf.mxu0
    %3273 = vdwg.mxu0
    %3274 = vmatprep.subr.bf16.mxu0 0
    %3275 = vmatpush1.bf16.msra.mxu0 %v2857
    %3276 = vmatprep.subr.bf16.mxu0 0
    %3277 = vmatpush1.bf16.msra.mxu0 %v2856
    %3278 = vmatprep.subr.bf16.mxu0 0
    %3279 = vmatpush1.bf16.msra.mxu0 %v2855
    %3280 = vmatprep.subr.bf16.mxu0 0
    %3281 = vmatpush1.bf16.msra.mxu0 %v2854
    %3282 = vmatprep.subr.bf16.mxu0 0
    %3283 = vmatpush1.bf16.msra.mxu0 %v2853
    %3284 = vmatprep.subr.bf16.mxu0 0
    %3285 = vmatpush1.bf16.msra.mxu0 %v2852
    %3286 = vmatprep.subr.bf16.mxu0 0
    %3287 = vmatpush1.bf16.msra.mxu0 %v2851
    %3288 = vmatprep.subr.bf16.mxu0 0
    %3289 = vmatpush1.bf16.msra.mxu0 %v2850
    %3290 = vmatprep.subr.bf16.mxu0 0
    %3291 = vmatpush2.bf16.msra.mxu0 %v2865
    %3292 = vmatprep.subr.bf16.mxu0 0
    %3293 = vmatpush2.bf16.msra.mxu0 %v2864
    %3294 = vmatprep.subr.bf16.mxu0 0
    %3295 = vmatpush2.bf16.msra.mxu0 %v2863
    %3296 = vmatprep.subr.bf16.mxu0 0
    %3297 = vmatpush2.bf16.msra.mxu0 %v2862
    %3298 = vmatprep.subr.bf16.mxu0 0
    %3299 = vmatpush2.bf16.msra.mxu0 %v2861
    %3300 = vmatprep.subr.bf16.mxu0 0
    %3301 = vmatpush2.bf16.msra.mxu0 %v2860
    %3302 = vmatprep.subr.bf16.mxu0 0
    %3303 = vmatpush2.bf16.msra.mxu0 %v2859
    %3304 = vmatprep.subr.bf16.mxu0 0
    %3305 = vmatpush2.bf16.msra.mxu0 %v2858
    %3306 = vmatprep.mubr.bf16.mxu0 %v2219
    %3307 = vmatmul.mubr.bf16.gmra.mxu0 %v2218
    %v3308 = vpop.f32.mrf.mxu0
    %v3309 = vadd.f32 %v3269, %v3308
    %v3310 = vpop.f32.mrf.mxu0
    %v3311 = vpop.f32.mrf.mxu0
    %v3312 = vpop.f32.mrf.mxu0
    %3313 = vdwg.mxu0
    %v3314 = vmul.f32 %v3309, 0.5
    %v3315 = vtanh.pop %v3314
    %v3316 = vadd.f32 %v3315, 1.0
    %v3317 = vmul.f32 %v3316, 0.5
    %v3318 = vpack.c.bf16 %v1637, %v1637
    %v3319 = vpack.c.bf16 %v1638, %v1638
    %v3320 = vpack.c.bf16 %v1681, %v1681
    %v3321 = vpack.c.bf16 %v1682, %v1682
    %v3322 = vpack.c.bf16 %v1725, %v1725
    %v3323 = vpack.c.bf16 %v1726, %v1726
    %v3324 = vpack.c.bf16 %v1769, %v1769
    %v3325 = vpack.c.bf16 %v1770, %v1770
    %v3326 = vpack.c.bf16 %v1813, %v1813
    %v3327 = vpack.c.bf16 %v1814, %v1814
    %v3328 = vpack.c.bf16 %v1857, %v1857
    %v3329 = vpack.c.bf16 %v1858, %v1858
    %v3330 = vpack.c.bf16 %v1901, %v1901
    %v3331 = vpack.c.bf16 %v1902, %v1902
    %v3332 = vpack.c.bf16 %v1945, %v1945
    %v3333 = vpack.c.bf16 %v1946, %v1946
    %3334 = vmatprep.subr.bf16.mxu0 0
    %3335 = vmatpush1.bf16.msra.mxu0 %v2745
    %3336 = vmatprep.subr.bf16.mxu0 0
    %3337 = vmatpush1.bf16.msra.mxu0 %v2744
    %3338 = vmatprep.subr.bf16.mxu0 0
    %3339 = vmatpush1.bf16.msra.mxu0 %v2743
    %3340 = vmatprep.subr.bf16.mxu0 0
    %3341 = vmatpush1.bf16.msra.mxu0 %v2742
    %3342 = vmatprep.subr.bf16.mxu0 0
    %3343 = vmatpush1.bf16.msra.mxu0 %v2741
    %3344 = vmatprep.subr.bf16.mxu0 0
    %3345 = vmatpush1.bf16.msra.mxu0 %v2740
    %3346 = vmatprep.subr.bf16.mxu0 0
    %3347 = vmatpush1.bf16.msra.mxu0 %v2739
    %3348 = vmatprep.subr.bf16.mxu0 0
    %3349 = vmatpush1.bf16.msra.mxu0 %v2738
    %3350 = vmatprep.subr.bf16.mxu0 0
    %3351 = vmatpush2.bf16.msra.mxu0 %v2753
    %3352 = vmatprep.subr.bf16.mxu0 0
    %3353 = vmatpush2.bf16.msra.mxu0 %v2752
    %3354 = vmatprep.subr.bf16.mxu0 0
    %3355 = vmatpush2.bf16.msra.mxu0 %v2751
    %3356 = vmatprep.subr.bf16.mxu0 0
    %3357 = vmatpush2.bf16.msra.mxu0 %v2750
    %3358 = vmatprep.subr.bf16.mxu0 0
    %3359 = vmatpush2.bf16.msra.mxu0 %v2749
    %3360 = vmatprep.subr.bf16.mxu0 0
    %3361 = vmatpush2.bf16.msra.mxu0 %v2748
    %3362 = vmatprep.subr.bf16.mxu0 0
    %3363 = vmatpush2.bf16.msra.mxu0 %v2747
    %3364 = vmatprep.subr.bf16.mxu0 0
    %3365 = vmatpush2.bf16.msra.mxu0 %v2746
    %3366 = vmatprep.mubr.bf16.mxu0 %v3319
    %3367 = vmatmul.mubr.bf16.gmra.mxu0 %v3318
    %v3368 = vpop.f32.mrf.mxu0
    %v3369 = vadd.f32 %v2224, %v3368
    %v3370 = vpop.f32.mrf.mxu0
    %v3371 = vpop.f32.mrf.mxu0
    %v3372 = vpop.f32.mrf.mxu0
    %3373 = vdwg.mxu0
    %3374 = vmatprep.subr.bf16.mxu0 0
    %3375 = vmatpush1.bf16.msra.mxu0 %v2761
    %3376 = vmatprep.subr.bf16.mxu0 0
    %3377 = vmatpush1.bf16.msra.mxu0 %v2760
    %3378 = vmatprep.subr.bf16.mxu0 0
    %3379 = vmatpush1.bf16.msra.mxu0 %v2759
    %3380 = vmatprep.subr.bf16.mxu0 0
    %3381 = vmatpush1.bf16.msra.mxu0 %v2758
    %3382 = vmatprep.subr.bf16.mxu0 0
    %3383 = vmatpush1.bf16.msra.mxu0 %v2757
    %3384 = vmatprep.subr.bf16.mxu0 0
    %3385 = vmatpush1.bf16.msra.mxu0 %v2756
    %3386 = vmatprep.subr.bf16.mxu0 0
    %3387 = vmatpush1.bf16.msra.mxu0 %v2755
    %3388 = vmatprep.subr.bf16.mxu0 0
    %3389 = vmatpush1.bf16.msra.mxu0 %v2754
    %3390 = vmatprep.subr.bf16.mxu0 0
    %3391 = vmatpush2.bf16.msra.mxu0 %v2769
    %3392 = vmatprep.subr.bf16.mxu0 0
    %3393 = vmatpush2.bf16.msra.mxu0 %v2768
    %3394 = vmatprep.subr.bf16.mxu0 0
    %3395 = vmatpush2.bf16.msra.mxu0 %v2767
    %3396 = vmatprep.subr.bf16.mxu0 0
    %3397 = vmatpush2.bf16.msra.mxu0 %v2766
    %3398 = vmatprep.subr.bf16.mxu0 0
    %3399 = vmatpush2.bf16.msra.mxu0 %v2765
    %3400 = vmatprep.subr.bf16.mxu0 0
    %3401 = vmatpush2.bf16.msra.mxu0 %v2764
    %3402 = vmatprep.subr.bf16.mxu0 0
    %3403 = vmatpush2.bf16.msra.mxu0 %v2763
    %3404 = vmatprep.subr.bf16.mxu0 0
    %3405 = vmatpush2.bf16.msra.mxu0 %v2762
    %3406 = vmatprep.mubr.bf16.mxu0 %v3321
    %3407 = vmatmul.mubr.bf16.gmra.mxu0 %v3320
    %v3408 = vpop.f32.mrf.mxu0
    %v3409 = vadd.f32 %v3369, %v3408
    %v3410 = vpop.f32.mrf.mxu0
    %v3411 = vpop.f32.mrf.mxu0
    %v3412 = vpop.f32.mrf.mxu0
    %3413 = vdwg.mxu0
    %3414 = vmatprep.subr.bf16.mxu0 0
    %3415 = vmatpush1.bf16.msra.mxu0 %v2777
    %3416 = vmatprep.subr.bf16.mxu0 0
    %3417 = vmatpush1.bf16.msra.mxu0 %v2776
    %3418 = vmatprep.subr.bf16.mxu0 0
    %3419 = vmatpush1.bf16.msra.mxu0 %v2775
    %3420 = vmatprep.subr.bf16.mxu0 0
    %3421 = vmatpush1.bf16.msra.mxu0 %v2774
    %3422 = vmatprep.subr.bf16.mxu0 0
    %3423 = vmatpush1.bf16.msra.mxu0 %v2773
    %3424 = vmatprep.subr.bf16.mxu0 0
    %3425 = vmatpush1.bf16.msra.mxu0 %v2772
    %3426 = vmatprep.subr.bf16.mxu0 0
    %3427 = vmatpush1.bf16.msra.mxu0 %v2771
    %3428 = vmatprep.subr.bf16.mxu0 0
    %3429 = vmatpush1.bf16.msra.mxu0 %v2770
    %3430 = vmatprep.subr.bf16.mxu0 0
    %3431 = vmatpush2.bf16.msra.mxu0 %v2785
    %3432 = vmatprep.subr.bf16.mxu0 0
    %3433 = vmatpush2.bf16.msra.mxu0 %v2784
    %3434 = vmatprep.subr.bf16.mxu0 0
    %3435 = vmatpush2.bf16.msra.mxu0 %v2783
    %3436 = vmatprep.subr.bf16.mxu0 0
    %3437 = vmatpush2.bf16.msra.mxu0 %v2782
    %3438 = vmatprep.subr.bf16.mxu0 0
    %3439 = vmatpush2.bf16.msra.mxu0 %v2781
    %3440 = vmatprep.subr.bf16.mxu0 0
    %3441 = vmatpush2.bf16.msra.mxu0 %v2780
    %3442 = vmatprep.subr.bf16.mxu0 0
    %3443 = vmatpush2.bf16.msra.mxu0 %v2779
    %3444 = vmatprep.subr.bf16.mxu0 0
    %3445 = vmatpush2.bf16.msra.mxu0 %v2778
    %3446 = vmatprep.mubr.bf16.mxu0 %v3323
    %3447 = vmatmul.mubr.bf16.gmra.mxu0 %v3322
    %v3448 = vpop.f32.mrf.mxu0
    %v3449 = vadd.f32 %v3409, %v3448
    %v3450 = vpop.f32.mrf.mxu0
    %v3451 = vpop.f32.mrf.mxu0
    %v3452 = vpop.f32.mrf.mxu0
    %3453 = vdwg.mxu0
    %3454 = vmatprep.subr.bf16.mxu0 0
    %3455 = vmatpush1.bf16.msra.mxu0 %v2793
    %3456 = vmatprep.subr.bf16.mxu0 0
    %3457 = vmatpush1.bf16.msra.mxu0 %v2792
    %3458 = vmatprep.subr.bf16.mxu0 0
    %3459 = vmatpush1.bf16.msra.mxu0 %v2791
    %3460 = vmatprep.subr.bf16.mxu0 0
    %3461 = vmatpush1.bf16.msra.mxu0 %v2790
    %3462 = vmatprep.subr.bf16.mxu0 0
    %3463 = vmatpush1.bf16.msra.mxu0 %v2789
    %3464 = vmatprep.subr.bf16.mxu0 0
    %3465 = vmatpush1.bf16.msra.mxu0 %v2788
    %3466 = vmatprep.subr.bf16.mxu0 0
    %3467 = vmatpush1.bf16.msra.mxu0 %v2787
    %3468 = vmatprep.subr.bf16.mxu0 0
    %3469 = vmatpush1.bf16.msra.mxu0 %v2786
    %3470 = vmatprep.subr.bf16.mxu0 0
    %3471 = vmatpush2.bf16.msra.mxu0 %v2801
    %3472 = vmatprep.subr.bf16.mxu0 0
    %3473 = vmatpush2.bf16.msra.mxu0 %v2800
    %3474 = vmatprep.subr.bf16.mxu0 0
    %3475 = vmatpush2.bf16.msra.mxu0 %v2799
    %3476 = vmatprep.subr.bf16.mxu0 0
    %3477 = vmatpush2.bf16.msra.mxu0 %v2798
    %3478 = vmatprep.subr.bf16.mxu0 0
    %3479 = vmatpush2.bf16.msra.mxu0 %v2797
    %3480 = vmatprep.subr.bf16.mxu0 0
    %3481 = vmatpush2.bf16.msra.mxu0 %v2796
    %3482 = vmatprep.subr.bf16.mxu0 0
    %3483 = vmatpush2.bf16.msra.mxu0 %v2795
    %3484 = vmatprep.subr.bf16.mxu0 0
    %3485 = vmatpush2.bf16.msra.mxu0 %v2794
    %3486 = vmatprep.mubr.bf16.mxu0 %v3325
    %3487 = vmatmul.mubr.bf16.gmra.mxu0 %v3324
    %v3488 = vpop.f32.mrf.mxu0
    %v3489 = vadd.f32 %v3449, %v3488
    %v3490 = vpop.f32.mrf.mxu0
    %v3491 = vpop.f32.mrf.mxu0
    %v3492 = vpop.f32.mrf.mxu0
    %3493 = vdwg.mxu0
    %3494 = vmatprep.subr.bf16.mxu0 0
    %3495 = vmatpush1.bf16.msra.mxu0 %v2809
    %3496 = vmatprep.subr.bf16.mxu0 0
    %3497 = vmatpush1.bf16.msra.mxu0 %v2808
    %3498 = vmatprep.subr.bf16.mxu0 0
    %3499 = vmatpush1.bf16.msra.mxu0 %v2807
    %3500 = vmatprep.subr.bf16.mxu0 0
    %3501 = vmatpush1.bf16.msra.mxu0 %v2806
    %3502 = vmatprep.subr.bf16.mxu0 0
    %3503 = vmatpush1.bf16.msra.mxu0 %v2805
    %3504 = vmatprep.subr.bf16.mxu0 0
    %3505 = vmatpush1.bf16.msra.mxu0 %v2804
    %3506 = vmatprep.subr.bf16.mxu0 0
    %3507 = vmatpush1.bf16.msra.mxu0 %v2803
    %3508 = vmatprep.subr.bf16.mxu0 0
    %3509 = vmatpush1.bf16.msra.mxu0 %v2802
    %3510 = vmatprep.subr.bf16.mxu0 0
    %3511 = vmatpush2.bf16.msra.mxu0 %v2817
    %3512 = vmatprep.subr.bf16.mxu0 0
    %3513 = vmatpush2.bf16.msra.mxu0 %v2816
    %3514 = vmatprep.subr.bf16.mxu0 0
    %3515 = vmatpush2.bf16.msra.mxu0 %v2815
    %3516 = vmatprep.subr.bf16.mxu0 0
    %3517 = vmatpush2.bf16.msra.mxu0 %v2814
    %3518 = vmatprep.subr.bf16.mxu0 0
    %3519 = vmatpush2.bf16.msra.mxu0 %v2813
    %3520 = vmatprep.subr.bf16.mxu0 0
    %3521 = vmatpush2.bf16.msra.mxu0 %v2812
    %3522 = vmatprep.subr.bf16.mxu0 0
    %3523 = vmatpush2.bf16.msra.mxu0 %v2811
    %3524 = vmatprep.subr.bf16.mxu0 0
    %3525 = vmatpush2.bf16.msra.mxu0 %v2810
    %3526 = vmatprep.mubr.bf16.mxu0 %v3327
    %3527 = vmatmul.mubr.bf16.gmra.mxu0 %v3326
    %v3528 = vpop.f32.mrf.mxu0
    %v3529 = vadd.f32 %v3489, %v3528
    %v3530 = vpop.f32.mrf.mxu0
    %v3531 = vpop.f32.mrf.mxu0
    %v3532 = vpop.f32.mrf.mxu0
    %3533 = vdwg.mxu0
    %3534 = vmatprep.subr.bf16.mxu0 0
    %3535 = vmatpush1.bf16.msra.mxu0 %v2825
    %3536 = vmatprep.subr.bf16.mxu0 0
    %3537 = vmatpush1.bf16.msra.mxu0 %v2824
    %3538 = vmatprep.subr.bf16.mxu0 0
    %3539 = vmatpush1.bf16.msra.mxu0 %v2823
    %3540 = vmatprep.subr.bf16.mxu0 0
    %3541 = vmatpush1.bf16.msra.mxu0 %v2822
    %3542 = vmatprep.subr.bf16.mxu0 0
    %3543 = vmatpush1.bf16.msra.mxu0 %v2821
    %3544 = vmatprep.subr.bf16.mxu0 0
    %3545 = vmatpush1.bf16.msra.mxu0 %v2820
    %3546 = vmatprep.subr.bf16.mxu0 0
    %3547 = vmatpush1.bf16.msra.mxu0 %v2819
    %3548 = vmatprep.subr.bf16.mxu0 0
    %3549 = vmatpush1.bf16.msra.mxu0 %v2818
    %3550 = vmatprep.subr.bf16.mxu0 0
    %3551 = vmatpush2.bf16.msra.mxu0 %v2833
    %3552 = vmatprep.subr.bf16.mxu0 0
    %3553 = vmatpush2.bf16.msra.mxu0 %v2832
    %3554 = vmatprep.subr.bf16.mxu0 0
    %3555 = vmatpush2.bf16.msra.mxu0 %v2831
    %3556 = vmatprep.subr.bf16.mxu0 0
    %3557 = vmatpush2.bf16.msra.mxu0 %v2830
    %3558 = vmatprep.subr.bf16.mxu0 0
    %3559 = vmatpush2.bf16.msra.mxu0 %v2829
    %3560 = vmatprep.subr.bf16.mxu0 0
    %3561 = vmatpush2.bf16.msra.mxu0 %v2828
    %3562 = vmatprep.subr.bf16.mxu0 0
    %3563 = vmatpush2.bf16.msra.mxu0 %v2827
    %3564 = vmatprep.subr.bf16.mxu0 0
    %3565 = vmatpush2.bf16.msra.mxu0 %v2826
    %3566 = vmatprep.mubr.bf16.mxu0 %v3329
    %3567 = vmatmul.mubr.bf16.gmra.mxu0 %v3328
    %v3568 = vpop.f32.mrf.mxu0
    %v3569 = vadd.f32 %v3529, %v3568
    %v3570 = vpop.f32.mrf.mxu0
    %v3571 = vpop.f32.mrf.mxu0
    %v3572 = vpop.f32.mrf.mxu0
    %3573 = vdwg.mxu0
    %3574 = vmatprep.subr.bf16.mxu0 0
    %3575 = vmatpush1.bf16.msra.mxu0 %v2841
    %3576 = vmatprep.subr.bf16.mxu0 0
    %3577 = vmatpush1.bf16.msra.mxu0 %v2840
    %3578 = vmatprep.subr.bf16.mxu0 0
    %3579 = vmatpush1.bf16.msra.mxu0 %v2839
    %3580 = vmatprep.subr.bf16.mxu0 0
    %3581 = vmatpush1.bf16.msra.mxu0 %v2838
    %3582 = vmatprep.subr.bf16.mxu0 0
    %3583 = vmatpush1.bf16.msra.mxu0 %v2837
    %3584 = vmatprep.subr.bf16.mxu0 0
    %3585 = vmatpush1.bf16.msra.mxu0 %v2836
    %3586 = vmatprep.subr.bf16.mxu0 0
    %3587 = vmatpush1.bf16.msra.mxu0 %v2835
    %3588 = vmatprep.subr.bf16.mxu0 0
    %3589 = vmatpush1.bf16.msra.mxu0 %v2834
    %3590 = vmatprep.subr.bf16.mxu0 0
    %3591 = vmatpush2.bf16.msra.mxu0 %v2849
    %3592 = vmatprep.subr.bf16.mxu0 0
    %3593 = vmatpush2.bf16.msra.mxu0 %v2848
    %3594 = vmatprep.subr.bf16.mxu0 0
    %3595 = vmatpush2.bf16.msra.mxu0 %v2847
    %3596 = vmatprep.subr.bf16.mxu0 0
    %3597 = vmatpush2.bf16.msra.mxu0 %v2846
    %3598 = vmatprep.subr.bf16.mxu0 0
    %3599 = vmatpush2.bf16.msra.mxu0 %v2845
    %3600 = vmatprep.subr.bf16.mxu0 0
    %3601 = vmatpush2.bf16.msra.mxu0 %v2844
    %3602 = vmatprep.subr.bf16.mxu0 0
    %3603 = vmatpush2.bf16.msra.mxu0 %v2843
    %3604 = vmatprep.subr.bf16.mxu0 0
    %3605 = vmatpush2.bf16.msra.mxu0 %v2842
    %3606 = vmatprep.mubr.bf16.mxu0 %v3331
    %3607 = vmatmul.mubr.bf16.gmra.mxu0 %v3330
    %v3608 = vpop.f32.mrf.mxu0
    %v3609 = vadd.f32 %v3569, %v3608
    %v3610 = vpop.f32.mrf.mxu0
    %v3611 = vpop.f32.mrf.mxu0
    %v3612 = vpop.f32.mrf.mxu0
    %3613 = vdwg.mxu0
    %3614 = vmatprep.subr.bf16.mxu0 0
    %3615 = vmatpush1.bf16.msra.mxu0 %v2857
    %3616 = vmatprep.subr.bf16.mxu0 0
    %3617 = vmatpush1.bf16.msra.mxu0 %v2856
    %3618 = vmatprep.subr.bf16.mxu0 0
    %3619 = vmatpush1.bf16.msra.mxu0 %v2855
    %3620 = vmatprep.subr.bf16.mxu0 0
    %3621 = vmatpush1.bf16.msra.mxu0 %v2854
    %3622 = vmatprep.subr.bf16.mxu0 0
    %3623 = vmatpush1.bf16.msra.mxu0 %v2853
    %3624 = vmatprep.subr.bf16.mxu0 0
    %3625 = vmatpush1.bf16.msra.mxu0 %v2852
    %3626 = vmatprep.subr.bf16.mxu0 0
    %3627 = vmatpush1.bf16.msra.mxu0 %v2851
    %3628 = vmatprep.subr.bf16.mxu0 0
    %3629 = vmatpush1.bf16.msra.mxu0 %v2850
    %3630 = vmatprep.subr.bf16.mxu0 0
    %3631 = vmatpush2.bf16.msra.mxu0 %v2865
    %3632 = vmatprep.subr.bf16.mxu0 0
    %3633 = vmatpush2.bf16.msra.mxu0 %v2864
    %3634 = vmatprep.subr.bf16.mxu0 0
    %3635 = vmatpush2.bf16.msra.mxu0 %v2863
    %3636 = vmatprep.subr.bf16.mxu0 0
    %3637 = vmatpush2.bf16.msra.mxu0 %v2862
    %3638 = vmatprep.subr.bf16.mxu0 0
    %3639 = vmatpush2.bf16.msra.mxu0 %v2861
    %3640 = vmatprep.subr.bf16.mxu0 0
    %3641 = vmatpush2.bf16.msra.mxu0 %v2860
    %3642 = vmatprep.subr.bf16.mxu0 0
    %3643 = vmatpush2.bf16.msra.mxu0 %v2859
    %3644 = vmatprep.subr.bf16.mxu0 0
    %3645 = vmatpush2.bf16.msra.mxu0 %v2858
    %3646 = vmatprep.mubr.bf16.mxu0 %v3333
    %3647 = vmatmul.mubr.bf16.gmra.mxu0 %v3332
    %v3648 = vpop.f32.mrf.mxu0
    %v3649 = vadd.f32 %v3609, %v3648
    %v3650 = vpop.f32.mrf.mxu0
    %v3651 = vpop.f32.mrf.mxu0
    %v3652 = vpop.f32.mrf.mxu0
    %3653 = vdwg.mxu0
    %v3654 = vmul.f32 %v3649, 0.5
    %v3655 = vtanh.pop %v3654
    %v3656 = vadd.f32 %v3655, 1.0
    %v3657 = vmul.f32 %v3656, 0.5
    %3658 = vst [vmem:[%s9] sm:$0xff] %v3317
    %3659 = vst [vmem:[%s9 + $0x8] sm:$0xff] %v3657
    // Predicated region
    $region46: #{transformer_csnet_forward.3} parent=1 // pred_check
      _
    $region47: #{transformer_csnet_forward.3} parent=1 // pred_check_branch
      %3661 = sbr.rel (0) target = $region49
    $region48: #{transformer_csnet_forward.3} parent=1 // pred_region
      _
    $region49: #{transformer_csnet_forward.3} parent=1 // pred_fallthru
      _
    // Predicated region
    $region50: #{transformer_csnet_forward.3} parent=1 // pred_check
      _
    $region51: #{transformer_csnet_forward.3} parent=1 // pred_check_branch
      %3663 = sbr.rel (0) target = $region53
    $region52: #{transformer_csnet_forward.3} parent=1 // pred_region
      _
    $region53: #{transformer_csnet_forward.3} parent=1 // pred_fallthru
      _
    %3664 = vsyncpa [#allocation3], 1
    %3665 = vsyncpa [#allocation5], 1

</llo_original>
